<compile_context>
chip_gen: v6e
topology: v6e:2x2x1
jax: 0.10.0
libtpu: 0.0.40
codegen_flags: <defaults>
</compile_context>

<pallas_src>
import functools

import jax
import jax.numpy as jnp
from jax import lax
from jax.experimental import pallas as pl
from jax.experimental.pallas import tpu as pltpu

# Module default kernel_size=(3, 3) with "same" padding (1, 1).
_KH = 3
_KW = 3


def _build_kernel(T, S1, S2, H, L, pad):
    """Builds the fused ConvLSTM kernel for static shapes.

    Layout inside the kernel (per batch element):
      x_ref    : (T, Cin, Mp)        f32   channel-major, column-padded spatial
      comb_ref : (L, 2H, Wtot)       bf16  zero-guarded [x_t | h_{t-1}] per layer
      c_ref    : (L, H, Mp)          f32   cell state per layer
      hsum_ref : (H, Mp)             f32   sum_t h_t of the last layer
      slab_ref : (9*2H, Mp)          bf16  im2col patch slab
    where Mp = S1*(S2+2) is the flattened spatial dim (2 conv-pad columns per
    image row) and `pad` is the left guard offset inside comb_ref.
    """
    S2p = S2 + (_KW - 1)
    Mp = S1 * S2p
    twoH = 2 * H

    def kernel(mask_ref, x_ref, ew_ref, eb_ref, cw_ref, cb_ref, enw_ref,
               enb_ref, out_ref, comb_ref, c_ref, hsum_ref, slab_ref):
        # Fresh recurrence for this batch element (one grid step per element).
        comb_ref[...] = jnp.zeros_like(comb_ref)
        c_ref[...] = jnp.zeros_like(c_ref)
        hsum_ref[...] = jnp.zeros_like(hsum_ref)

        def time_step(t, carry):
            mask = mask_ref[...]                                  # (1, Mp) f32
            x_t = x_ref[t]                                        # (Cin, Mp) f32

            # Fused embed Linear (tiny K = Cin); mask keeps the per-row conv
            # padding columns exactly zero.
            emb = jnp.dot(ew_ref[...], x_t,
                          preferred_element_type=jnp.float32)
            layer_in = (emb + eb_ref[...]) * mask                 # (H, Mp) f32

            for l in range(L):
                # x-half of the combined buffer; the h-half already holds
                # h_{t-1} of this layer (written at the end of the previous
                # step), the guard region / pad columns stay zero.
                comb_ref[l, 0:H, pad:pad + Mp] = layer_in.astype(jnp.bfloat16)

                # im2col slab: tap (ky, kx) == the combined map shifted by
                # (ky-1)*S2p + (kx-1) in the flattened padded spatial index.
                for k in range(_KH * _KW):
                    ky, kx = divmod(k, _KW)
                    s = pad + (ky - 1) * S2p + (kx - 1)
                    slab_ref[k * twoH:(k + 1) * twoH, :] = \
                        comb_ref[l, :, s:s + Mp]

                # One MXU matmul per cell step: (4H, 9*2H) x (9*2H, Mp).
                acc = jnp.dot(cw_ref[l], slab_ref[...],
                              preferred_element_type=jnp.float32) + cb_ref[l]

                # Gates as sublane blocks -> full-lane-width elementwise math.
                gi = jax.nn.sigmoid(acc[0 * H:1 * H])
                gf = jax.nn.sigmoid(acc[1 * H:2 * H])
                go = jax.nn.sigmoid(acc[2 * H:3 * H])
                gg = jnp.tanh(acc[3 * H:4 * H])

                c_next = gf * c_ref[l] + gi * gg
                h_next = (go * jnp.tanh(c_next)) * mask           # keep pads 0
                c_ref[l] = c_next
                comb_ref[l, H:twoH, pad:pad + Mp] = h_next.astype(jnp.bfloat16)
                layer_in = h_next                                  # next layer

            # return_all_layers=False: only the last layer feeds the mean.
            hsum_ref[...] = hsum_ref[...] + layer_in
            return carry

        lax.fori_loop(0, T, time_step, 0)

        # Fused time-mean + end_conv (Conv2d(1, c_out, kernel=(1, H)) == a
        # (H -> c_out) linear over the hidden dim after the mean).
        mean_h = hsum_ref[...] * (1.0 / T)
        out_ref[...] = (jnp.dot(enw_ref[...], mean_h,
                                preferred_element_type=jnp.float32)
                        + enb_ref[...])

    return kernel


@functools.partial(jax.jit, static_argnames=("hidden_dim", "num_layers",
                                              "output_dim"))
def convlstm_forward(x, params, hidden_dim, num_layers, output_dim):
    """x: (B, T, S1, S2, C_in) -> (B, S1, S2, output_dim)."""
    B, T, S1, S2, Cin = x.shape
    H = hidden_dim
    L = num_layers
    c_out = output_dim
    S2p = S2 + (_KW - 1)          # 2 conv-pad columns per image row
    Mp = S1 * S2p                  # flattened padded spatial dim (lane axis)
    PAD = 128                      # left guard (>= S2p+1), lane-aligned writes
    RPAD = S2p + 16                # right guard (>= S2p+1)
    Wtot = PAD + Mp + RPAD
    twoH = 2 * H
    K9 = _KH * _KW * twoH

    # ---------------- XLA-side layout prep (tiny, one-off) ----------------
    # Raw input -> channel-major, zero-padded columns, flattened spatial.
    x_chw = jnp.transpose(x, (0, 1, 4, 2, 3)).astype(jnp.float32)
    x_pad = jnp.pad(x_chw, ((0, 0), (0, 0), (0, 0), (0, 0), (0, S2p - S2)))
    x_flat = x_pad.reshape(B, T, Cin, Mp)

    ew_t = params["embed_w"].T.astype(jnp.float32)                 # (H, Cin)
    eb = params["embed_b"].reshape(H, 1).astype(jnp.float32)       # (H, 1)
    # HWIO (3,3,2H,4H) -> im2col rows ((ky*3+kx)*2H + cin) -> transposed
    # (4H, 9*2H) bf16 MXU operand; row/column order matches the slab build.
    cw_t = jnp.stack([params["cell_w"][l].reshape(K9, 4 * H).T
                      for l in range(L)]).astype(jnp.bfloat16)      # (L,4H,9*2H)
    cb = jnp.stack([params["cell_b"][l].reshape(4 * H, 1)
                    for l in range(L)]).astype(jnp.float32)         # (L,4H,1)
    en_t = params["end_w"].T.astype(jnp.float32)                    # (c_out, H)
    enb = params["end_b"].reshape(c_out, 1).astype(jnp.float32)     # (c_out, 1)

    # 1.0 on real image columns, 0.0 on the per-row conv-padding columns.
    mask = (jnp.arange(Mp) % S2p < S2).astype(jnp.float32).reshape(1, Mp)

    kernel = _build_kernel(T, S1, S2, H, L, PAD)

    out_flat = pl.pallas_call(
        kernel,
        out_shape=jax.ShapeDtypeStruct((B, c_out, Mp), jnp.float32),
        grid=(B,),
        in_specs=[
            pl.BlockSpec((1, Mp), lambda b: (0, 0)),                   # mask
            pl.BlockSpec((None, T, Cin, Mp), lambda b: (b, 0, 0, 0)),  # x
            pl.BlockSpec((H, Cin), lambda b: (0, 0)),                  # embed W^T
            pl.BlockSpec((H, 1), lambda b: (0, 0)),                    # embed b
            pl.BlockSpec((L, 4 * H, K9), lambda b: (0, 0, 0)),         # cell W^T
            pl.BlockSpec((L, 4 * H, 1), lambda b: (0, 0, 0)),          # cell b
            pl.BlockSpec((c_out, H), lambda b: (0, 0)),                # end W^T
            pl.BlockSpec((c_out, 1), lambda b: (0, 0)),                # end b
        ],
        out_specs=pl.BlockSpec((None, c_out, Mp), lambda b: (b, 0, 0)),
        scratch_shapes=[
            pltpu.VMEM((L, twoH, Wtot), jnp.bfloat16),  # zero-guarded [x|h]
            pltpu.VMEM((L, H, Mp), jnp.float32),        # cell state c
            pltpu.VMEM((H, Mp), jnp.float32),           # sum_t h (last layer)
            pltpu.VMEM((K9, Mp), jnp.bfloat16),         # im2col slab
        ],
        compiler_params=pltpu.CompilerParams(
            dimension_semantics=("parallel",),
        ),
    )(mask, x_flat, ew_t, eb, cw_t, cb, en_t, enb)

    # (B, c_out, Mp) -> (B, S1, S2, c_out): drop the conv-pad columns -> NHWC.
    out = out_flat.reshape(B, c_out, S1, S2p)[..., :S2]
    return jnp.transpose(out, (0, 2, 3, 1))


# ---------------------------------------------------------------------------
# Deterministic parameter init (shapes follow the PyTorch module's __init__;
# conv weights kept in HWIO, i.e. torch OIHW weights transposed (2,3,1,0)).
# ---------------------------------------------------------------------------
def init_params(key, input_dim, hidden_dim, num_layers, kernel_size=(3, 3)):
    H = hidden_dim
    kh, kw = kernel_size
    keys = jax.random.split(key, 4 + 2 * num_layers)
    params = {
        "embed_w": 0.1 * jax.random.normal(keys[0], (input_dim, H), jnp.float32),
        "embed_b": 0.1 * jax.random.normal(keys[1], (H,), jnp.float32),
        # end_conv: Conv2d(1, output_dim, kernel=(1, H)) == (H, output_dim) map.
        "end_w": 0.1 * jax.random.normal(keys[2], (H, input_dim), jnp.float32),
        "end_b": 0.05 * jax.random.normal(keys[3], (1, input_dim), jnp.float32),
        "cell_w": [],
        "cell_b": [],
    }
    for i in range(num_layers):
        # Conv2d(2H -> 4H, kernel (3,3)) in HWIO; out-channel blocks [i,f,o,g].
        params["cell_w"].append(
            0.05 * jax.random.normal(keys[4 + 2 * i],
                                     (kh, kw, 2 * H, 4 * H), jnp.float32))
        params["cell_b"].append(
            0.05 * jax.random.normal(keys[5 + 2 * i], (1, 4 * H), jnp.float32))
    params["cell_w"] = tuple(params["cell_w"])
    params["cell_b"] = tuple(params["cell_b"])
    return params


if __name__ == "__main__":
    B, T, S1, S2, C_IN = 2, 8, 16, 16, 4
    HIDDEN, NUM_LAYERS = 32, 2

    key = jax.random.PRNGKey(0)
    kx, kp = jax.random.split(key)
    x = jax.random.normal(kx, (B, T, S1, S2, C_IN), jnp.float32)
    params = init_params(kp, C_IN, HIDDEN, NUM_LAYERS)

    out = convlstm_forward(x, params, hidden_dim=HIDDEN,
                           num_layers=NUM_LAYERS, output_dim=C_IN)
    out = jax.block_until_ready(out)

    assert out.shape == (B, S1, S2, C_IN), out.shape
    assert out.dtype == jnp.float32
    assert bool(jnp.all(jnp.isfinite(out)))
    print("KERNEL_OK")
</pallas_src>

<mosaic_0001>
module attributes {stable_mosaic.version = 11 : i64} {
  func.func @kernel(%arg0: i32, %arg1: memref<1x288xf32, #tpu.memory_space<vmem>>, %arg2: memref<1x8x4x288xf32, #tpu.memory_space<vmem>>, %arg3: memref<32x4xf32, #tpu.memory_space<vmem>>, %arg4: memref<32x1xf32, #tpu.memory_space<vmem>>, %arg5: memref<2x128x576xbf16, #tpu.memory_space<vmem>>, %arg6: memref<2x128x1xf32, #tpu.memory_space<vmem>>, %arg7: memref<4x32xf32, #tpu.memory_space<vmem>>, %arg8: memref<4x1xf32, #tpu.memory_space<vmem>>, %arg9: memref<1x4x288xf32, #tpu.memory_space<vmem>>, %arg10: memref<2x64x450xbf16, #tpu.memory_space<vmem>>, %arg11: memref<2x32x288xf32, #tpu.memory_space<vmem>>, %arg12: memref<32x288xf32, #tpu.memory_space<vmem>>, %arg13: memref<576x288xbf16, #tpu.memory_space<vmem>>) attributes {dimension_semantics = [#tpu.dimension_semantics<parallel>], iteration_bounds = array<i64: 2>, scalar_prefetch = 0 : i64, scratch_operands = 4 : i64, tpu.core_type = #tpu.core_type<tc>, window_params = [{pipeline_mode = #tpu.pipeline_mode<synchronous>, transform_indices = @transform_0, window_bounds = array<i64: 1, 288>}, {transform_indices = @transform_1, window_bounds = array<i64: 1, 8, 4, 288>}, {pipeline_mode = #tpu.pipeline_mode<synchronous>, transform_indices = @transform_2, window_bounds = array<i64: 32, 4>}, {pipeline_mode = #tpu.pipeline_mode<synchronous>, transform_indices = @transform_3, window_bounds = array<i64: 32, 1>}, {pipeline_mode = #tpu.pipeline_mode<synchronous>, transform_indices = @transform_4, window_bounds = array<i64: 2, 128, 576>}, {pipeline_mode = #tpu.pipeline_mode<synchronous>, transform_indices = @transform_5, window_bounds = array<i64: 2, 128, 1>}, {pipeline_mode = #tpu.pipeline_mode<synchronous>, transform_indices = @transform_6, window_bounds = array<i64: 4, 32>}, {pipeline_mode = #tpu.pipeline_mode<synchronous>, transform_indices = @transform_7, window_bounds = array<i64: 4, 1>}, {transform_indices = @transform_8, window_bounds = array<i64: 1, 4, 288>}]} {
    %cst = arith.constant 0.000000e+00 : bf16
    %0 = vector.broadcast %cst : bf16 to vector<2x64x450xbf16>
    %c0 = arith.constant 0 : index
    %c0_0 = arith.constant 0 : index
    %c0_1 = arith.constant 0 : index
    %1 = vector.load %arg10[%c0, %c0_0, %c0_1] : memref<2x64x450xbf16, #tpu.memory_space<vmem>>, vector<2x64x450xbf16>
    tpu.vector_store %arg10[%c0, %c0_0, %c0_1], %0 {strides = array<i32>} : memref<2x64x450xbf16, #tpu.memory_space<vmem>>, vector<2x64x450xbf16>,
    %cst_2 = arith.constant 0.000000e+00 : f32
    %2 = vector.broadcast %cst_2 : f32 to vector<2x32x288xf32>
    %c0_3 = arith.constant 0 : index
    %c0_4 = arith.constant 0 : index
    %c0_5 = arith.constant 0 : index
    %3 = vector.load %arg11[%c0_3, %c0_4, %c0_5] : memref<2x32x288xf32, #tpu.memory_space<vmem>>, vector<2x32x288xf32>
    tpu.vector_store %arg11[%c0_3, %c0_4, %c0_5], %2 {strides = array<i32>} : memref<2x32x288xf32, #tpu.memory_space<vmem>>, vector<2x32x288xf32>,
    %cst_6 = arith.constant 0.000000e+00 : f32
    %4 = vector.broadcast %cst_6 : f32 to vector<32x288xf32>
    %c0_7 = arith.constant 0 : index
    %c0_8 = arith.constant 0 : index
    %5 = vector.load %arg12[%c0_7, %c0_8] : memref<32x288xf32, #tpu.memory_space<vmem>>, vector<32x288xf32>
    tpu.vector_store %arg12[%c0_7, %c0_8], %4 {strides = array<i32>} : memref<32x288xf32, #tpu.memory_space<vmem>>, vector<32x288xf32>,
    %c0_i32 = arith.constant 0 : i32
    %c8_i32 = arith.constant 8 : i32
    %6 = arith.addi %c0_i32, %c8_i32 : i32
    %c1_i32 = arith.constant 1 : i32
    scf.for %arg14 = %c0_i32 to %6 step %c1_i32  : i32 {
      %c0_21 = arith.constant 0 : index
      %c0_22 = arith.constant 0 : index
      %18 = vector.load %arg1[%c0_21, %c0_22] : memref<1x288xf32, #tpu.memory_space<vmem>>, vector<1x288xf32>
      %c0_23 = arith.constant 0 : index
      %19 = arith.index_cast %arg14 : i32 to index
      %c0_24 = arith.constant 0 : index
      %c0_25 = arith.constant 0 : index
      %20 = vector.load %arg2[%c0_23, %19, %c0_24, %c0_25] : memref<1x8x4x288xf32, #tpu.memory_space<vmem>>, vector<1x1x4x288xf32>
      %21 = vector.shape_cast %20 : vector<1x1x4x288xf32> to vector<4x288xf32>
      %c0_26 = arith.constant 0 : index
      %c0_27 = arith.constant 0 : index
      %22 = vector.load %arg3[%c0_26, %c0_27] : memref<32x4xf32, #tpu.memory_space<vmem>>, vector<32x4xf32>
      %cst_28 = arith.constant dense<0.000000e+00> : vector<32x288xf32>
      %23 = tpu.matmul %22, %21, %cst_28 {dimension_numbers = #tpu.dot_dimension_numbers<[1], [0], [0], [1], [0, 0, 1, 1], [], []>} : vector<32x4xf32>, vector<4x288xf32>, vector<32x288xf32> -> vector<32x288xf32>
      %c0_29 = arith.constant 0 : index
      %c0_30 = arith.constant 0 : index
      %24 = vector.load %arg4[%c0_29, %c0_30] : memref<32x1xf32, #tpu.memory_space<vmem>>, vector<32x1xf32>
      %25 = vector.broadcast %24 : vector<32x1xf32> to vector<32x288xf32>
      %26 = arith.addf %23, %25 : vector<32x288xf32>
      %27 = vector.broadcast %18 : vector<1x288xf32> to vector<32x288xf32>
      %28 = arith.mulf %26, %27 : vector<32x288xf32>
      %29 = arith.truncf %28 : vector<32x288xf32> to vector<32x288xbf16>
      %c0_31 = arith.constant 0 : index
      %c0_32 = arith.constant 0 : index
      %c128 = arith.constant 128 : index
      %30 = vector.load %arg10[%c0_31, %c0_32, %c128] : memref<2x64x450xbf16, #tpu.memory_space<vmem>>, vector<1x32x288xbf16>
      %31 = vector.shape_cast %30 : vector<1x32x288xbf16> to vector<32x288xbf16>
      %32 = vector.shape_cast %29 : vector<32x288xbf16> to vector<1x32x288xbf16>
      tpu.vector_store %arg10[%c0_31, %c0_32, %c128], %32 {strides = array<i32>} : memref<2x64x450xbf16, #tpu.memory_space<vmem>>, vector<1x32x288xbf16>,
      %c0_33 = arith.constant 0 : index
      %c0_34 = arith.constant 0 : index
      %c109 = arith.constant 109 : index
      %33 = vector.load %arg10[%c0_33, %c0_34, %c109] : memref<2x64x450xbf16, #tpu.memory_space<vmem>>, vector<1x64x288xbf16>
      %34 = vector.shape_cast %33 : vector<1x64x288xbf16> to vector<64x288xbf16>
      %c0_35 = arith.constant 0 : index
      %c0_36 = arith.constant 0 : index
      %35 = vector.load %arg13[%c0_35, %c0_36] : memref<576x288xbf16, #tpu.memory_space<vmem>>, vector<64x288xbf16>
      tpu.vector_store %arg13[%c0_35, %c0_36], %34 {strides = array<i32>} : memref<576x288xbf16, #tpu.memory_space<vmem>>, vector<64x288xbf16>,
      %c0_37 = arith.constant 0 : index
      %c0_38 = arith.constant 0 : index
      %c110 = arith.constant 110 : index
      %36 = vector.load %arg10[%c0_37, %c0_38, %c110] : memref<2x64x450xbf16, #tpu.memory_space<vmem>>, vector<1x64x288xbf16>
      %37 = vector.shape_cast %36 : vector<1x64x288xbf16> to vector<64x288xbf16>
      %c64 = arith.constant 64 : index
      %c0_39 = arith.constant 0 : index
      %38 = vector.load %arg13[%c64, %c0_39] : memref<576x288xbf16, #tpu.memory_space<vmem>>, vector<64x288xbf16>
      tpu.vector_store %arg13[%c64, %c0_39], %37 {strides = array<i32>} : memref<576x288xbf16, #tpu.memory_space<vmem>>, vector<64x288xbf16>,
      %c0_40 = arith.constant 0 : index
      %c0_41 = arith.constant 0 : index
      %c111 = arith.constant 111 : index
      %39 = vector.load %arg10[%c0_40, %c0_41, %c111] : memref<2x64x450xbf16, #tpu.memory_space<vmem>>, vector<1x64x288xbf16>
      %40 = vector.shape_cast %39 : vector<1x64x288xbf16> to vector<64x288xbf16>
      %c128_42 = arith.constant 128 : index
      %c0_43 = arith.constant 0 : index
      %41 = vector.load %arg13[%c128_42, %c0_43] : memref<576x288xbf16, #tpu.memory_space<vmem>>, vector<64x288xbf16>
      tpu.vector_store %arg13[%c128_42, %c0_43], %40 {strides = array<i32>} : memref<576x288xbf16, #tpu.memory_space<vmem>>, vector<64x288xbf16>,
      %c0_44 = arith.constant 0 : index
      %c0_45 = arith.constant 0 : index
      %c127 = arith.constant 127 : index
      %42 = vector.load %arg10[%c0_44, %c0_45, %c127] : memref<2x64x450xbf16, #tpu.memory_space<vmem>>, vector<1x64x288xbf16>
      %43 = vector.shape_cast %42 : vector<1x64x288xbf16> to vector<64x288xbf16>
      %c192 = arith.constant 192 : index
      %c0_46 = arith.constant 0 : index
      %44 = vector.load %arg13[%c192, %c0_46] : memref<576x288xbf16, #tpu.memory_space<vmem>>, vector<64x288xbf16>
      tpu.vector_store %arg13[%c192, %c0_46], %43 {strides = array<i32>} : memref<576x288xbf16, #tpu.memory_space<vmem>>, vector<64x288xbf16>,
      %c0_47 = arith.constant 0 : index
      %c0_48 = arith.constant 0 : index
      %c128_49 = arith.constant 128 : index
      %45 = vector.load %arg10[%c0_47, %c0_48, %c128_49] : memref<2x64x450xbf16, #tpu.memory_space<vmem>>, vector<1x64x288xbf16>
      %46 = vector.shape_cast %45 : vector<1x64x288xbf16> to vector<64x288xbf16>
      %c256 = arith.constant 256 : index
      %c0_50 = arith.constant 0 : index
      %47 = vector.load %arg13[%c256, %c0_50] : memref<576x288xbf16, #tpu.memory_space<vmem>>, vector<64x288xbf16>
      tpu.vector_store %arg13[%c256, %c0_50], %46 {strides = array<i32>} : memref<576x288xbf16, #tpu.memory_space<vmem>>, vector<64x288xbf16>,
      %c0_51 = arith.constant 0 : index
      %c0_52 = arith.constant 0 : index
      %c129 = arith.constant 129 : index
      %48 = vector.load %arg10[%c0_51, %c0_52, %c129] : memref<2x64x450xbf16, #tpu.memory_space<vmem>>, vector<1x64x288xbf16>
      %49 = vector.shape_cast %48 : vector<1x64x288xbf16> to vector<64x288xbf16>
      %c320 = arith.constant 320 : index
      %c0_53 = arith.constant 0 : index
      %50 = vector.load %arg13[%c320, %c0_53] : memref<576x288xbf16, #tpu.memory_space<vmem>>, vector<64x288xbf16>
      tpu.vector_store %arg13[%c320, %c0_53], %49 {strides = array<i32>} : memref<576x288xbf16, #tpu.memory_space<vmem>>, vector<64x288xbf16>,
      %c0_54 = arith.constant 0 : index
      %c0_55 = arith.constant 0 : index
      %c145 = arith.constant 145 : index
      %51 = vector.load %arg10[%c0_54, %c0_55, %c145] : memref<2x64x450xbf16, #tpu.memory_space<vmem>>, vector<1x64x288xbf16>
      %52 = vector.shape_cast %51 : vector<1x64x288xbf16> to vector<64x288xbf16>
      %c384 = arith.constant 384 : index
      %c0_56 = arith.constant 0 : index
      %53 = vector.load %arg13[%c384, %c0_56] : memref<576x288xbf16, #tpu.memory_space<vmem>>, vector<64x288xbf16>
      tpu.vector_store %arg13[%c384, %c0_56], %52 {strides = array<i32>} : memref<576x288xbf16, #tpu.memory_space<vmem>>, vector<64x288xbf16>,
      %c0_57 = arith.constant 0 : index
      %c0_58 = arith.constant 0 : index
      %c146 = arith.constant 146 : index
      %54 = vector.load %arg10[%c0_57, %c0_58, %c146] : memref<2x64x450xbf16, #tpu.memory_space<vmem>>, vector<1x64x288xbf16>
      %55 = vector.shape_cast %54 : vector<1x64x288xbf16> to vector<64x288xbf16>
      %c448 = arith.constant 448 : index
      %c0_59 = arith.constant 0 : index
      %56 = vector.load %arg13[%c448, %c0_59] : memref<576x288xbf16, #tpu.memory_space<vmem>>, vector<64x288xbf16>
      tpu.vector_store %arg13[%c448, %c0_59], %55 {strides = array<i32>} : memref<576x288xbf16, #tpu.memory_space<vmem>>, vector<64x288xbf16>,
      %c0_60 = arith.constant 0 : index
      %c0_61 = arith.constant 0 : index
      %c147 = arith.constant 147 : index
      %57 = vector.load %arg10[%c0_60, %c0_61, %c147] : memref<2x64x450xbf16, #tpu.memory_space<vmem>>, vector<1x64x288xbf16>
      %58 = vector.shape_cast %57 : vector<1x64x288xbf16> to vector<64x288xbf16>
      %c512 = arith.constant 512 : index
      %c0_62 = arith.constant 0 : index
      %59 = vector.load %arg13[%c512, %c0_62] : memref<576x288xbf16, #tpu.memory_space<vmem>>, vector<64x288xbf16>
      tpu.vector_store %arg13[%c512, %c0_62], %58 {strides = array<i32>} : memref<576x288xbf16, #tpu.memory_space<vmem>>, vector<64x288xbf16>,
      %c0_63 = arith.constant 0 : index
      %c0_64 = arith.constant 0 : index
      %c0_65 = arith.constant 0 : index
      %60 = vector.load %arg5[%c0_63, %c0_64, %c0_65] : memref<2x128x576xbf16, #tpu.memory_space<vmem>>, vector<1x128x576xbf16>
      %61 = vector.shape_cast %60 : vector<1x128x576xbf16> to vector<128x576xbf16>
      %c0_66 = arith.constant 0 : index
      %c0_67 = arith.constant 0 : index
      %62 = vector.load %arg13[%c0_66, %c0_67] : memref<576x288xbf16, #tpu.memory_space<vmem>>, vector<576x288xbf16>
      %cst_68 = arith.constant dense<0.000000e+00> : vector<128x288xf32>
      %63 = tpu.matmul %61, %62, %cst_68 {dimension_numbers = #tpu.dot_dimension_numbers<[1], [0], [0], [1], [0, 0, 1, 1], [], []>} : vector<128x576xbf16>, vector<576x288xbf16>, vector<128x288xf32> -> vector<128x288xf32>
      %c0_69 = arith.constant 0 : index
      %c0_70 = arith.constant 0 : index
      %c0_71 = arith.constant 0 : index
      %64 = vector.load %arg6[%c0_69, %c0_70, %c0_71] : memref<2x128x1xf32, #tpu.memory_space<vmem>>, vector<1x128x1xf32>
      %65 = vector.shape_cast %64 : vector<1x128x1xf32> to vector<128x1xf32>
      %66 = vector.broadcast %65 : vector<128x1xf32> to vector<128x288xf32>
      %67 = arith.addf %63, %66 : vector<128x288xf32>
      %68 = vector.extract_strided_slice %67 {offsets = [0, 0], sizes = [32, 288], strides = [1, 1]} : vector<128x288xf32> to vector<32x288xf32>
      %69 = arith.negf %68 : vector<32x288xf32>
      %70 = math.exp %69 : vector<32x288xf32>
      %cst_72 = arith.constant 1.000000e+00 : f32
      %71 = vector.broadcast %cst_72 : f32 to vector<32x288xf32>
      %72 = arith.addf %71, %70 : vector<32x288xf32>
      %73 = arith.divf %71, %72 : vector<32x288xf32>
      %74 = vector.extract_strided_slice %67 {offsets = [32, 0], sizes = [32, 288], strides = [1, 1]} : vector<128x288xf32> to vector<32x288xf32>
      %75 = arith.negf %74 : vector<32x288xf32>
      %76 = math.exp %75 : vector<32x288xf32>
      %cst_73 = arith.constant 1.000000e+00 : f32
      %77 = vector.broadcast %cst_73 : f32 to vector<32x288xf32>
      %78 = arith.addf %77, %76 : vector<32x288xf32>
      %79 = arith.divf %77, %78 : vector<32x288xf32>
      %80 = vector.extract_strided_slice %67 {offsets = [64, 0], sizes = [32, 288], strides = [1, 1]} : vector<128x288xf32> to vector<32x288xf32>
      %81 = arith.negf %80 : vector<32x288xf32>
      %82 = math.exp %81 : vector<32x288xf32>
      %cst_74 = arith.constant 1.000000e+00 : f32
      %83 = vector.broadcast %cst_74 : f32 to vector<32x288xf32>
      %84 = arith.addf %83, %82 : vector<32x288xf32>
      %85 = arith.divf %83, %84 : vector<32x288xf32>
      %86 = vector.extract_strided_slice %67 {offsets = [96, 0], sizes = [32, 288], strides = [1, 1]} : vector<128x288xf32> to vector<32x288xf32>
      %87 = math.tanh %86 : vector<32x288xf32>
      %c0_75 = arith.constant 0 : index
      %c0_76 = arith.constant 0 : index
      %c0_77 = arith.constant 0 : index
      %88 = vector.load %arg11[%c0_75, %c0_76, %c0_77] : memref<2x32x288xf32, #tpu.memory_space<vmem>>, vector<1x32x288xf32>
      %89 = vector.shape_cast %88 : vector<1x32x288xf32> to vector<32x288xf32>
      %90 = arith.mulf %79, %89 : vector<32x288xf32>
      %91 = arith.mulf %73, %87 : vector<32x288xf32>
      %92 = arith.addf %90, %91 : vector<32x288xf32>
      %93 = math.tanh %92 : vector<32x288xf32>
      %94 = arith.mulf %85, %93 : vector<32x288xf32>
      %95 = vector.broadcast %18 : vector<1x288xf32> to vector<32x288xf32>
      %96 = arith.mulf %94, %95 : vector<32x288xf32>
      %c0_78 = arith.constant 0 : index
      %c0_79 = arith.constant 0 : index
      %c0_80 = arith.constant 0 : index
      %97 = vector.load %arg11[%c0_78, %c0_79, %c0_80] : memref<2x32x288xf32, #tpu.memory_space<vmem>>, vector<1x32x288xf32>
      %98 = vector.shape_cast %97 : vector<1x32x288xf32> to vector<32x288xf32>
      %99 = vector.shape_cast %92 : vector<32x288xf32> to vector<1x32x288xf32>
      tpu.vector_store %arg11[%c0_78, %c0_79, %c0_80], %99 {strides = array<i32>} : memref<2x32x288xf32, #tpu.memory_space<vmem>>, vector<1x32x288xf32>,
      %100 = arith.truncf %96 : vector<32x288xf32> to vector<32x288xbf16>
      %c0_81 = arith.constant 0 : index
      %c32 = arith.constant 32 : index
      %c128_82 = arith.constant 128 : index
      %101 = vector.load %arg10[%c0_81, %c32, %c128_82] : memref<2x64x450xbf16, #tpu.memory_space<vmem>>, vector<1x32x288xbf16>
      %102 = vector.shape_cast %101 : vector<1x32x288xbf16> to vector<32x288xbf16>
      %103 = vector.shape_cast %100 : vector<32x288xbf16> to vector<1x32x288xbf16>
      tpu.vector_store %arg10[%c0_81, %c32, %c128_82], %103 {strides = array<i32>} : memref<2x64x450xbf16, #tpu.memory_space<vmem>>, vector<1x32x288xbf16>,
      %104 = arith.truncf %96 : vector<32x288xf32> to vector<32x288xbf16>
      %c1 = arith.constant 1 : index
      %c0_83 = arith.constant 0 : index
      %c128_84 = arith.constant 128 : index
      %105 = vector.load %arg10[%c1, %c0_83, %c128_84] : memref<2x64x450xbf16, #tpu.memory_space<vmem>>, vector<1x32x288xbf16>
      %106 = vector.shape_cast %105 : vector<1x32x288xbf16> to vector<32x288xbf16>
      %107 = vector.shape_cast %104 : vector<32x288xbf16> to vector<1x32x288xbf16>
      tpu.vector_store %arg10[%c1, %c0_83, %c128_84], %107 {strides = array<i32>} : memref<2x64x450xbf16, #tpu.memory_space<vmem>>, vector<1x32x288xbf16>,
      %c1_85 = arith.constant 1 : index
      %c0_86 = arith.constant 0 : index
      %c109_87 = arith.constant 109 : index
      %108 = vector.load %arg10[%c1_85, %c0_86, %c109_87] : memref<2x64x450xbf16, #tpu.memory_space<vmem>>, vector<1x64x288xbf16>
      %109 = vector.shape_cast %108 : vector<1x64x288xbf16> to vector<64x288xbf16>
      %c0_88 = arith.constant 0 : index
      %c0_89 = arith.constant 0 : index
      %110 = vector.load %arg13[%c0_88, %c0_89] : memref<576x288xbf16, #tpu.memory_space<vmem>>, vector<64x288xbf16>
      tpu.vector_store %arg13[%c0_88, %c0_89], %109 {strides = array<i32>} : memref<576x288xbf16, #tpu.memory_space<vmem>>, vector<64x288xbf16>,
      %c1_90 = arith.constant 1 : index
      %c0_91 = arith.constant 0 : index
      %c110_92 = arith.constant 110 : index
      %111 = vector.load %arg10[%c1_90, %c0_91, %c110_92] : memref<2x64x450xbf16, #tpu.memory_space<vmem>>, vector<1x64x288xbf16>
      %112 = vector.shape_cast %111 : vector<1x64x288xbf16> to vector<64x288xbf16>
      %c64_93 = arith.constant 64 : index
      %c0_94 = arith.constant 0 : index
      %113 = vector.load %arg13[%c64_93, %c0_94] : memref<576x288xbf16, #tpu.memory_space<vmem>>, vector<64x288xbf16>
      tpu.vector_store %arg13[%c64_93, %c0_94], %112 {strides = array<i32>} : memref<576x288xbf16, #tpu.memory_space<vmem>>, vector<64x288xbf16>,
      %c1_95 = arith.constant 1 : index
      %c0_96 = arith.constant 0 : index
      %c111_97 = arith.constant 111 : index
      %114 = vector.load %arg10[%c1_95, %c0_96, %c111_97] : memref<2x64x450xbf16, #tpu.memory_space<vmem>>, vector<1x64x288xbf16>
      %115 = vector.shape_cast %114 : vector<1x64x288xbf16> to vector<64x288xbf16>
      %c128_98 = arith.constant 128 : index
      %c0_99 = arith.constant 0 : index
      %116 = vector.load %arg13[%c128_98, %c0_99] : memref<576x288xbf16, #tpu.memory_space<vmem>>, vector<64x288xbf16>
      tpu.vector_store %arg13[%c128_98, %c0_99], %115 {strides = array<i32>} : memref<576x288xbf16, #tpu.memory_space<vmem>>, vector<64x288xbf16>,
      %c1_100 = arith.constant 1 : index
      %c0_101 = arith.constant 0 : index
      %c127_102 = arith.constant 127 : index
      %117 = vector.load %arg10[%c1_100, %c0_101, %c127_102] : memref<2x64x450xbf16, #tpu.memory_space<vmem>>, vector<1x64x288xbf16>
      %118 = vector.shape_cast %117 : vector<1x64x288xbf16> to vector<64x288xbf16>
      %c192_103 = arith.constant 192 : index
      %c0_104 = arith.constant 0 : index
      %119 = vector.load %arg13[%c192_103, %c0_104] : memref<576x288xbf16, #tpu.memory_space<vmem>>, vector<64x288xbf16>
      tpu.vector_store %arg13[%c192_103, %c0_104], %118 {strides = array<i32>} : memref<576x288xbf16, #tpu.memory_space<vmem>>, vector<64x288xbf16>,
      %c1_105 = arith.constant 1 : index
      %c0_106 = arith.constant 0 : index
      %c128_107 = arith.constant 128 : index
      %120 = vector.load %arg10[%c1_105, %c0_106, %c128_107] : memref<2x64x450xbf16, #tpu.memory_space<vmem>>, vector<1x64x288xbf16>
      %121 = vector.shape_cast %120 : vector<1x64x288xbf16> to vector<64x288xbf16>
      %c256_108 = arith.constant 256 : index
      %c0_109 = arith.constant 0 : index
      %122 = vector.load %arg13[%c256_108, %c0_109] : memref<576x288xbf16, #tpu.memory_space<vmem>>, vector<64x288xbf16>
      tpu.vector_store %arg13[%c256_108, %c0_109], %121 {strides = array<i32>} : memref<576x288xbf16, #tpu.memory_space<vmem>>, vector<64x288xbf16>,
      %c1_110 = arith.constant 1 : index
      %c0_111 = arith.constant 0 : index
      %c129_112 = arith.constant 129 : index
      %123 = vector.load %arg10[%c1_110, %c0_111, %c129_112] : memref<2x64x450xbf16, #tpu.memory_space<vmem>>, vector<1x64x288xbf16>
      %124 = vector.shape_cast %123 : vector<1x64x288xbf16> to vector<64x288xbf16>
      %c320_113 = arith.constant 320 : index
      %c0_114 = arith.constant 0 : index
      %125 = vector.load %arg13[%c320_113, %c0_114] : memref<576x288xbf16, #tpu.memory_space<vmem>>, vector<64x288xbf16>
      tpu.vector_store %arg13[%c320_113, %c0_114], %124 {strides = array<i32>} : memref<576x288xbf16, #tpu.memory_space<vmem>>, vector<64x288xbf16>,
      %c1_115 = arith.constant 1 : index
      %c0_116 = arith.constant 0 : index
      %c145_117 = arith.constant 145 : index
      %126 = vector.load %arg10[%c1_115, %c0_116, %c145_117] : memref<2x64x450xbf16, #tpu.memory_space<vmem>>, vector<1x64x288xbf16>
      %127 = vector.shape_cast %126 : vector<1x64x288xbf16> to vector<64x288xbf16>
      %c384_118 = arith.constant 384 : index
      %c0_119 = arith.constant 0 : index
      %128 = vector.load %arg13[%c384_118, %c0_119] : memref<576x288xbf16, #tpu.memory_space<vmem>>, vector<64x288xbf16>
      tpu.vector_store %arg13[%c384_118, %c0_119], %127 {strides = array<i32>} : memref<576x288xbf16, #tpu.memory_space<vmem>>, vector<64x288xbf16>,
      %c1_120 = arith.constant 1 : index
      %c0_121 = arith.constant 0 : index
      %c146_122 = arith.constant 146 : index
      %129 = vector.load %arg10[%c1_120, %c0_121, %c146_122] : memref<2x64x450xbf16, #tpu.memory_space<vmem>>, vector<1x64x288xbf16>
      %130 = vector.shape_cast %129 : vector<1x64x288xbf16> to vector<64x288xbf16>
      %c448_123 = arith.constant 448 : index
      %c0_124 = arith.constant 0 : index
      %131 = vector.load %arg13[%c448_123, %c0_124] : memref<576x288xbf16, #tpu.memory_space<vmem>>, vector<64x288xbf16>
      tpu.vector_store %arg13[%c448_123, %c0_124], %130 {strides = array<i32>} : memref<576x288xbf16, #tpu.memory_space<vmem>>, vector<64x288xbf16>,
      %c1_125 = arith.constant 1 : index
      %c0_126 = arith.constant 0 : index
      %c147_127 = arith.constant 147 : index
      %132 = vector.load %arg10[%c1_125, %c0_126, %c147_127] : memref<2x64x450xbf16, #tpu.memory_space<vmem>>, vector<1x64x288xbf16>
      %133 = vector.shape_cast %132 : vector<1x64x288xbf16> to vector<64x288xbf16>
      %c512_128 = arith.constant 512 : index
      %c0_129 = arith.constant 0 : index
      %134 = vector.load %arg13[%c512_128, %c0_129] : memref<576x288xbf16, #tpu.memory_space<vmem>>, vector<64x288xbf16>
      tpu.vector_store %arg13[%c512_128, %c0_129], %133 {strides = array<i32>} : memref<576x288xbf16, #tpu.memory_space<vmem>>, vector<64x288xbf16>,
      %c1_130 = arith.constant 1 : index
      %c0_131 = arith.constant 0 : index
      %c0_132 = arith.constant 0 : index
      %135 = vector.load %arg5[%c1_130, %c0_131, %c0_132] : memref<2x128x576xbf16, #tpu.memory_space<vmem>>, vector<1x128x576xbf16>
      %136 = vector.shape_cast %135 : vector<1x128x576xbf16> to vector<128x576xbf16>
      %c0_133 = arith.constant 0 : index
      %c0_134 = arith.constant 0 : index
      %137 = vector.load %arg13[%c0_133, %c0_134] : memref<576x288xbf16, #tpu.memory_space<vmem>>, vector<576x288xbf16>
      %cst_135 = arith.constant dense<0.000000e+00> : vector<128x288xf32>
      %138 = tpu.matmul %136, %137, %cst_135 {dimension_numbers = #tpu.dot_dimension_numbers<[1], [0], [0], [1], [0, 0, 1, 1], [], []>} : vector<128x576xbf16>, vector<576x288xbf16>, vector<128x288xf32> -> vector<128x288xf32>
      %c1_136 = arith.constant 1 : index
      %c0_137 = arith.constant 0 : index
      %c0_138 = arith.constant 0 : index
      %139 = vector.load %arg6[%c1_136, %c0_137, %c0_138] : memref<2x128x1xf32, #tpu.memory_space<vmem>>, vector<1x128x1xf32>
      %140 = vector.shape_cast %139 : vector<1x128x1xf32> to vector<128x1xf32>
      %141 = vector.broadcast %140 : vector<128x1xf32> to vector<128x288xf32>
      %142 = arith.addf %138, %141 : vector<128x288xf32>
      %143 = vector.extract_strided_slice %142 {offsets = [0, 0], sizes = [32, 288], strides = [1, 1]} : vector<128x288xf32> to vector<32x288xf32>
      %144 = arith.negf %143 : vector<32x288xf32>
      %145 = math.exp %144 : vector<32x288xf32>
      %cst_139 = arith.constant 1.000000e+00 : f32
      %146 = vector.broadcast %cst_139 : f32 to vector<32x288xf32>
      %147 = arith.addf %146, %145 : vector<32x288xf32>
      %148 = arith.divf %146, %147 : vector<32x288xf32>
      %149 = vector.extract_strided_slice %142 {offsets = [32, 0], sizes = [32, 288], strides = [1, 1]} : vector<128x288xf32> to vector<32x288xf32>
      %150 = arith.negf %149 : vector<32x288xf32>
      %151 = math.exp %150 : vector<32x288xf32>
      %cst_140 = arith.constant 1.000000e+00 : f32
      %152 = vector.broadcast %cst_140 : f32 to vector<32x288xf32>
      %153 = arith.addf %152, %151 : vector<32x288xf32>
      %154 = arith.divf %152, %153 : vector<32x288xf32>
      %155 = vector.extract_strided_slice %142 {offsets = [64, 0], sizes = [32, 288], strides = [1, 1]} : vector<128x288xf32> to vector<32x288xf32>
      %156 = arith.negf %155 : vector<32x288xf32>
      %157 = math.exp %156 : vector<32x288xf32>
      %cst_141 = arith.constant 1.000000e+00 : f32
      %158 = vector.broadcast %cst_141 : f32 to vector<32x288xf32>
      %159 = arith.addf %158, %157 : vector<32x288xf32>
      %160 = arith.divf %158, %159 : vector<32x288xf32>
      %161 = vector.extract_strided_slice %142 {offsets = [96, 0], sizes = [32, 288], strides = [1, 1]} : vector<128x288xf32> to vector<32x288xf32>
      %162 = math.tanh %161 : vector<32x288xf32>
      %c1_142 = arith.constant 1 : index
      %c0_143 = arith.constant 0 : index
      %c0_144 = arith.constant 0 : index
      %163 = vector.load %arg11[%c1_142, %c0_143, %c0_144] : memref<2x32x288xf32, #tpu.memory_space<vmem>>, vector<1x32x288xf32>
      %164 = vector.shape_cast %163 : vector<1x32x288xf32> to vector<32x288xf32>
      %165 = arith.mulf %154, %164 : vector<32x288xf32>
      %166 = arith.mulf %148, %162 : vector<32x288xf32>
      %167 = arith.addf %165, %166 : vector<32x288xf32>
      %168 = math.tanh %167 : vector<32x288xf32>
      %169 = arith.mulf %160, %168 : vector<32x288xf32>
      %170 = vector.broadcast %18 : vector<1x288xf32> to vector<32x288xf32>
      %171 = arith.mulf %169, %170 : vector<32x288xf32>
      %c1_145 = arith.constant 1 : index
      %c0_146 = arith.constant 0 : index
      %c0_147 = arith.constant 0 : index
      %172 = vector.load %arg11[%c1_145, %c0_146, %c0_147] : memref<2x32x288xf32, #tpu.memory_space<vmem>>, vector<1x32x288xf32>
      %173 = vector.shape_cast %172 : vector<1x32x288xf32> to vector<32x288xf32>
      %174 = vector.shape_cast %167 : vector<32x288xf32> to vector<1x32x288xf32>
      tpu.vector_store %arg11[%c1_145, %c0_146, %c0_147], %174 {strides = array<i32>} : memref<2x32x288xf32, #tpu.memory_space<vmem>>, vector<1x32x288xf32>,
      %175 = arith.truncf %171 : vector<32x288xf32> to vector<32x288xbf16>
      %c1_148 = arith.constant 1 : index
      %c32_149 = arith.constant 32 : index
      %c128_150 = arith.constant 128 : index
      %176 = vector.load %arg10[%c1_148, %c32_149, %c128_150] : memref<2x64x450xbf16, #tpu.memory_space<vmem>>, vector<1x32x288xbf16>
      %177 = vector.shape_cast %176 : vector<1x32x288xbf16> to vector<32x288xbf16>
      %178 = vector.shape_cast %175 : vector<32x288xbf16> to vector<1x32x288xbf16>
      tpu.vector_store %arg10[%c1_148, %c32_149, %c128_150], %178 {strides = array<i32>} : memref<2x64x450xbf16, #tpu.memory_space<vmem>>, vector<1x32x288xbf16>,
      %c0_151 = arith.constant 0 : index
      %c0_152 = arith.constant 0 : index
      %179 = vector.load %arg12[%c0_151, %c0_152] : memref<32x288xf32, #tpu.memory_space<vmem>>, vector<32x288xf32>
      %180 = arith.addf %179, %171 : vector<32x288xf32>
      %c0_153 = arith.constant 0 : index
      %c0_154 = arith.constant 0 : index
      %181 = vector.load %arg12[%c0_153, %c0_154] : memref<32x288xf32, #tpu.memory_space<vmem>>, vector<32x288xf32>
      tpu.vector_store %arg12[%c0_153, %c0_154], %180 {strides = array<i32>} : memref<32x288xf32, #tpu.memory_space<vmem>>, vector<32x288xf32>,
    }
    %c8_i32_9 = arith.constant 8 : i32
    %c0_10 = arith.constant 0 : index
    %c0_11 = arith.constant 0 : index
    %7 = vector.load %arg12[%c0_10, %c0_11] : memref<32x288xf32, #tpu.memory_space<vmem>>, vector<32x288xf32>
    %cst_12 = arith.constant 1.250000e-01 : f32
    %8 = vector.broadcast %cst_12 : f32 to vector<32x288xf32>
    %9 = arith.mulf %7, %8 : vector<32x288xf32>
    %c0_13 = arith.constant 0 : index
    %c0_14 = arith.constant 0 : index
    %10 = vector.load %arg7[%c0_13, %c0_14] : memref<4x32xf32, #tpu.memory_space<vmem>>, vector<4x32xf32>
    %cst_15 = arith.constant dense<0.000000e+00> : vector<4x288xf32>
    %11 = tpu.matmul %10, %9, %cst_15 {dimension_numbers = #tpu.dot_dimension_numbers<[1], [0], [0], [1], [0, 0, 1, 1], [], []>} : vector<4x32xf32>, vector<32x288xf32>, vector<4x288xf32> -> vector<4x288xf32>
    %c0_16 = arith.constant 0 : index
    %c0_17 = arith.constant 0 : index
    %12 = vector.load %arg8[%c0_16, %c0_17] : memref<4x1xf32, #tpu.memory_space<vmem>>, vector<4x1xf32>
    %13 = vector.broadcast %12 : vector<4x1xf32> to vector<4x288xf32>
    %14 = arith.addf %11, %13 : vector<4x288xf32>
    %c0_18 = arith.constant 0 : index
    %c0_19 = arith.constant 0 : index
    %c0_20 = arith.constant 0 : index
    %15 = vector.load %arg9[%c0_18, %c0_19, %c0_20] : memref<1x4x288xf32, #tpu.memory_space<vmem>>, vector<1x4x288xf32>
    %16 = vector.shape_cast %15 : vector<1x4x288xf32> to vector<4x288xf32>
    %17 = vector.shape_cast %14 : vector<4x288xf32> to vector<1x4x288xf32>
    tpu.vector_store %arg9[%c0_18, %c0_19, %c0_20], %17 {strides = array<i32>} : memref<1x4x288xf32, #tpu.memory_space<vmem>>, vector<1x4x288xf32>,
    return
  }
  func.func @transform_0(%arg0: i32) -> (i32, i32) {
    %c0_i32 = arith.constant 0 : i32
    %c0_i32_0 = arith.constant 0 : i32
    %c0_i32_1 = arith.constant 0 : i32
    return %c0_i32, %c0_i32_0 : i32, i32
  }
  func.func @transform_1(%arg0: i32) -> (i32, i32, i32, i32) {
    %c0_i32 = arith.constant 0 : i32
    %c0_i32_0 = arith.constant 0 : i32
    %c0_i32_1 = arith.constant 0 : i32
    %c0_i32_2 = arith.constant 0 : i32
    return %arg0, %c0_i32, %c0_i32_0, %c0_i32_1 : i32, i32, i32, i32
  }
  func.func @transform_2(%arg0: i32) -> (i32, i32) {
    %c0_i32 = arith.constant 0 : i32
    %c0_i32_0 = arith.constant 0 : i32
    %c0_i32_1 = arith.constant 0 : i32
    return %c0_i32, %c0_i32_0 : i32, i32
  }
  func.func @transform_3(%arg0: i32) -> (i32, i32) {
    %c0_i32 = arith.constant 0 : i32
    %c0_i32_0 = arith.constant 0 : i32
    %c0_i32_1 = arith.constant 0 : i32
    return %c0_i32, %c0_i32_0 : i32, i32
  }
  func.func @transform_4(%arg0: i32) -> (i32, i32, i32) {
    %c0_i32 = arith.constant 0 : i32
    %c0_i32_0 = arith.constant 0 : i32
    %c0_i32_1 = arith.constant 0 : i32
    %c0_i32_2 = arith.constant 0 : i32
    return %c0_i32, %c0_i32_0, %c0_i32_1 : i32, i32, i32
  }
  func.func @transform_5(%arg0: i32) -> (i32, i32, i32) {
    %c0_i32 = arith.constant 0 : i32
    %c0_i32_0 = arith.constant 0 : i32
    %c0_i32_1 = arith.constant 0 : i32
    %c0_i32_2 = arith.constant 0 : i32
    return %c0_i32, %c0_i32_0, %c0_i32_1 : i32, i32, i32
  }
  func.func @transform_6(%arg0: i32) -> (i32, i32) {
    %c0_i32 = arith.constant 0 : i32
    %c0_i32_0 = arith.constant 0 : i32
    %c0_i32_1 = arith.constant 0 : i32
    return %c0_i32, %c0_i32_0 : i32, i32
  }
  func.func @transform_7(%arg0: i32) -> (i32, i32) {
    %c0_i32 = arith.constant 0 : i32
    %c0_i32_0 = arith.constant 0 : i32
    %c0_i32_1 = arith.constant 0 : i32
    return %c0_i32, %c0_i32_0 : i32, i32
  }
  func.func @transform_8(%arg0: i32) -> (i32, i32, i32) {
    %c0_i32 = arith.constant 0 : i32
    %c0_i32_0 = arith.constant 0 : i32
    %c0_i32_1 = arith.constant 0 : i32
    return %arg0, %c0_i32, %c0_i32_0 : i32, i32, i32
  }
}

</mosaic_0001>

<llo_original>
// kernel: convlstm_forward.1
$region0: #{convlstm_forward.1}
  #allocation0 [shape = 'u32[]', space=smem, size = 0x4, offset = 0x4, fixed_abs, tag = 'smem constant byte address 0x4 - core index']
  #allocation1 [shape = 'u32[144,128]{1,0:T(1,128)}', space=vmem, size = 0x12000, scoped, tag = 'internal scratch']
  #allocation2 [shape = 'bf16[2,64,450]{2,1,0:T(8,128)(2,1)}', space=vmem, size = 0x20000, scoped, tag = 'scratch operand']
  #allocation3 [shape = 'f32[2,32,288]{2,1,0:T(8,128)}', space=vmem, size = 0x18000, scoped, tag = 'scratch operand']
  #allocation4 [shape = 'f32[32,288]{1,0:T(8,128)}', space=vmem, size = 0xc000, scoped, tag = 'scratch operand']
  #allocation5 [shape = 'bf16[576,288]{1,0:T(8,128)(2,1)}', space=vmem, size = 0x6c000, scoped, tag = 'scratch operand']
  %s0 = inlined_call_operand.vmem [shape: f32[1,288], index: 0, kind: input, shape index: {}]
  %s1 = inlined_call_operand.vmem [shape: f32[2,8,4,288], index: 1, kind: input, shape index: {}]
  %s2 = inlined_call_operand.vmem [shape: f32[32,4], index: 2, kind: input, shape index: {}]
  %s3 = inlined_call_operand.vmem [shape: f32[32,1], index: 3, kind: input, shape index: {}]
  %s4 = inlined_call_operand.vmem [shape: bf16[2,128,576], index: 4, kind: input, shape index: {}]
  %s5 = inlined_call_operand.vmem [shape: f32[2,128,1], index: 5, kind: input, shape index: {}]
  %s6 = inlined_call_operand.vmem [shape: f32[4,32], index: 6, kind: input, shape index: {}]
  %s7 = inlined_call_operand.vmem [shape: f32[4,1], index: 7, kind: input, shape index: {}]
  %s8 = inlined_call_operand.vmem [shape: f32[2,4,288], index: 8, kind: output, shape index: {}]
  %s9 = sld [smem:[#allocation0]]
  $region72: #{convlstm_forward.1} parent=0
    _
  %s11 = ssub.s32 1, %s9
  %s12 = scalar_select 0, %s11, %s9
  loop: start=0, step=1, limit=4
  $region2: #{convlstm_forward.1} parent=0 // loop_pre_header
    _
  $region3: #{convlstm_forward.1} parent=0 // loop_header
    %s14 = sphi 0, %s18
    %p15 = scmp.ge.s32.totalorder %s14, 4
    %s22 = sphi 0, %s22
    %s24 = sphi 0, %s22
    %s25 = sphi 0, %s24
    %s39 = sphi 0, %s25
    %s45 = sphi 0, %s47
    %s48 = sphi 0, %s45
    %s49 = sphi 0, %s48
    %s65 = sphi 0, %s49
    %s69 = sphi 0, %s69
    %s71 = sphi 0, %s69
    %s72 = sphi 0, %s71
    %s86 = sphi 0, %s72
    %s90 = sphi 0, %s90
    %s92 = sphi 0, %s90
    %s93 = sphi 0, %s92
    %s107 = sphi 0, %s93
    %s111 = sphi 0, %s111
    %s113 = sphi 0, %s111
    %s114 = sphi 0, %s113
    %s128 = sphi 0, %s114
    %s132 = sphi 0, %s132
    %s134 = sphi 0, %s132
    %s135 = sphi 0, %s134
    %s149 = sphi 0, %s135
    %s153 = sphi 0, %s153
    %s155 = sphi 0, %s153
    %s156 = sphi 0, %s155
    %s170 = sphi 0, %s156
    %s174 = sphi 0, %s174
    %s176 = sphi 0, %s174
    %s177 = sphi 0, %s176
    %s191 = sphi 0, %s177
    %s197 = sphi 0, %s199
    %s200 = sphi 0, %s197
    %s201 = sphi 0, %s200
    %s217 = sphi 0, %s201
  $region4: #{convlstm_forward.1} parent=0 // loop_header_branch
    %17 = sbr.rel (%p15) target = $region8
  $region5: #{convlstm_forward.1} parent=0 // loop_body
    %s19 = ssub.s32 %s14, 1
    %s20 = ssub.s32 %s14, 2
    %s21 = sadd.s32 %s14, 1
    %s23 = sadd.s32 %s22, 1
    %p26 = scmp.eq.s32.totalorder %s14, 1
    %p27 = scmp.ne.s32.totalorder %s22, %s24
    %p28 = scmp.eq.s32.totalorder %s14, 0
    %p29 = por %p27, %p28
    %p30 = scmp.ne.s32.totalorder %s22, %s24
    %p31 = scmp.eq.s32.totalorder %s19, 1
    %p32 = por %p30, %p31
    %p33 = scmp.ne.s32.totalorder %s24, %s25
    %p34 = scmp.eq.s32.totalorder %s19, 0
    %p35 = por %p33, %p34
    %p36 = scmp.ne.s32.totalorder %s24, %s25
    %p37 = scmp.eq.s32.totalorder %s20, 1
    %p38 = por %p36, %p37
    %p40 = scmp.ne.s32.totalorder %s25, %s39
    %p41 = scmp.eq.s32.totalorder %s20, 0
    %p42 = por %p40, %p41
    %s43 = ssub.s32 %s14, %s21
    %p44 = scmp.eq.s32.totalorder %s43, 0
    %s46 = sadd.s32 %s45, 1
    %s47 = scalar_select %p44, %s45, %s46
    %p50 = pneg %p44
    %p51 = scmp.eq.s32.totalorder %s14, 1
    %p52 = por %p50, %p51
    %p53 = scmp.ne.s32.totalorder %s45, %s48
    %p54 = scmp.eq.s32.totalorder %s14, 0
    %p55 = por %p53, %p54
    %p56 = scmp.ne.s32.totalorder %s45, %s48
    %p57 = scmp.eq.s32.totalorder %s19, 1
    %p58 = por %p56, %p57
    %p59 = scmp.ne.s32.totalorder %s48, %s49
    %p60 = scmp.eq.s32.totalorder %s19, 0
    %p61 = por %p59, %p60
    %p62 = scmp.ne.s32.totalorder %s48, %s49
    %p63 = scmp.eq.s32.totalorder %s20, 1
    %p64 = por %p62, %p63
    %p66 = scmp.ne.s32.totalorder %s49, %s65
    %p67 = scmp.eq.s32.totalorder %s20, 0
    %p68 = por %p66, %p67
    %s70 = sadd.s32 %s69, 1
    %p73 = scmp.eq.s32.totalorder %s14, 1
    %p74 = scmp.ne.s32.totalorder %s69, %s71
    %p75 = scmp.eq.s32.totalorder %s14, 0
    %p76 = por %p74, %p75
    %p77 = scmp.ne.s32.totalorder %s69, %s71
    %p78 = scmp.eq.s32.totalorder %s19, 1
    %p79 = por %p77, %p78
    %p80 = scmp.ne.s32.totalorder %s71, %s72
    %p81 = scmp.eq.s32.totalorder %s19, 0
    %p82 = por %p80, %p81
    %p83 = scmp.ne.s32.totalorder %s71, %s72
    %p84 = scmp.eq.s32.totalorder %s20, 1
    %p85 = por %p83, %p84
    %p87 = scmp.ne.s32.totalorder %s72, %s86
    %p88 = scmp.eq.s32.totalorder %s20, 0
    %p89 = por %p87, %p88
    %s91 = sadd.s32 %s90, 1
    %p94 = scmp.eq.s32.totalorder %s14, 1
    %p95 = scmp.ne.s32.totalorder %s90, %s92
    %p96 = scmp.eq.s32.totalorder %s14, 0
    %p97 = por %p95, %p96
    %p98 = scmp.ne.s32.totalorder %s90, %s92
    %p99 = scmp.eq.s32.totalorder %s19, 1
    %p100 = por %p98, %p99
    %p101 = scmp.ne.s32.totalorder %s92, %s93
    %p102 = scmp.eq.s32.totalorder %s19, 0
    %p103 = por %p101, %p102
    %p104 = scmp.ne.s32.totalorder %s92, %s93
    %p105 = scmp.eq.s32.totalorder %s20, 1
    %p106 = por %p104, %p105
    %p108 = scmp.ne.s32.totalorder %s93, %s107
    %p109 = scmp.eq.s32.totalorder %s20, 0
    %p110 = por %p108, %p109
    %s112 = sadd.s32 %s111, 1
    %p115 = scmp.eq.s32.totalorder %s14, 1
    %p116 = scmp.ne.s32.totalorder %s111, %s113
    %p117 = scmp.eq.s32.totalorder %s14, 0
    %p118 = por %p116, %p117
    %p119 = scmp.ne.s32.totalorder %s111, %s113
    %p120 = scmp.eq.s32.totalorder %s19, 1
    %p121 = por %p119, %p120
    %p122 = scmp.ne.s32.totalorder %s113, %s114
    %p123 = scmp.eq.s32.totalorder %s19, 0
    %p124 = por %p122, %p123
    %p125 = scmp.ne.s32.totalorder %s113, %s114
    %p126 = scmp.eq.s32.totalorder %s20, 1
    %p127 = por %p125, %p126
    %p129 = scmp.ne.s32.totalorder %s114, %s128
    %p130 = scmp.eq.s32.totalorder %s20, 0
    %p131 = por %p129, %p130
    %s133 = sadd.s32 %s132, 1
    %p136 = scmp.eq.s32.totalorder %s14, 1
    %p137 = scmp.ne.s32.totalorder %s132, %s134
    %p138 = scmp.eq.s32.totalorder %s14, 0
    %p139 = por %p137, %p138
    %p140 = scmp.ne.s32.totalorder %s132, %s134
    %p141 = scmp.eq.s32.totalorder %s19, 1
    %p142 = por %p140, %p141
    %p143 = scmp.ne.s32.totalorder %s134, %s135
    %p144 = scmp.eq.s32.totalorder %s19, 0
    %p145 = por %p143, %p144
    %p146 = scmp.ne.s32.totalorder %s134, %s135
    %p147 = scmp.eq.s32.totalorder %s20, 1
    %p148 = por %p146, %p147
    %p150 = scmp.ne.s32.totalorder %s135, %s149
    %p151 = scmp.eq.s32.totalorder %s20, 0
    %p152 = por %p150, %p151
    %s154 = sadd.s32 %s153, 1
    %p157 = scmp.eq.s32.totalorder %s14, 1
    %p158 = scmp.ne.s32.totalorder %s153, %s155
    %p159 = scmp.eq.s32.totalorder %s14, 0
    %p160 = por %p158, %p159
    %p161 = scmp.ne.s32.totalorder %s153, %s155
    %p162 = scmp.eq.s32.totalorder %s19, 1
    %p163 = por %p161, %p162
    %p164 = scmp.ne.s32.totalorder %s155, %s156
    %p165 = scmp.eq.s32.totalorder %s19, 0
    %p166 = por %p164, %p165
    %p167 = scmp.ne.s32.totalorder %s155, %s156
    %p168 = scmp.eq.s32.totalorder %s20, 1
    %p169 = por %p167, %p168
    %p171 = scmp.ne.s32.totalorder %s156, %s170
    %p172 = scmp.eq.s32.totalorder %s20, 0
    %p173 = por %p171, %p172
    %s175 = sadd.s32 %s174, 1
    %p178 = scmp.eq.s32.totalorder %s14, 1
    %p179 = scmp.ne.s32.totalorder %s174, %s176
    %p180 = scmp.eq.s32.totalorder %s14, 0
    %p181 = por %p179, %p180
    %p182 = scmp.ne.s32.totalorder %s174, %s176
    %p183 = scmp.eq.s32.totalorder %s19, 1
    %p184 = por %p182, %p183
    %p185 = scmp.ne.s32.totalorder %s176, %s177
    %p186 = scmp.eq.s32.totalorder %s19, 0
    %p187 = por %p185, %p186
    %p188 = scmp.ne.s32.totalorder %s176, %s177
    %p189 = scmp.eq.s32.totalorder %s20, 1
    %p190 = por %p188, %p189
    %p192 = scmp.ne.s32.totalorder %s177, %s191
    %p193 = scmp.eq.s32.totalorder %s20, 0
    %p194 = por %p192, %p193
    %s195 = ssub.s32 %s14, %s21
    %p196 = scmp.eq.s32.totalorder %s195, 0
    %s198 = sadd.s32 %s197, 1
    %s199 = scalar_select %p196, %s197, %s198
    %p202 = pneg %p196
    %p203 = scmp.eq.s32.totalorder %s14, 1
    %p204 = por %p202, %p203
    %p205 = scmp.ne.s32.totalorder %s197, %s200
    %p206 = scmp.eq.s32.totalorder %s14, 0
    %p207 = por %p205, %p206
    %p208 = scmp.ne.s32.totalorder %s197, %s200
    %p209 = scmp.eq.s32.totalorder %s19, 1
    %p210 = por %p208, %p209
    %p211 = scmp.ne.s32.totalorder %s200, %s201
    %p212 = scmp.eq.s32.totalorder %s19, 0
    %p213 = por %p211, %p212
    %p214 = scmp.ne.s32.totalorder %s200, %s201
    %p215 = scmp.eq.s32.totalorder %s20, 1
    %p216 = por %p214, %p215
    %p218 = scmp.ne.s32.totalorder %s201, %s217
    %p219 = scmp.eq.s32.totalorder %s20, 0
    %p220 = por %p218, %p219
    %p221 = scmp.le.s32.totalorder 1, %s14
    %p222 = scmp.lt.s32.totalorder %s14, 3
    %p223 = pnand %p221, %p222
    %p224 = pneg %p223
    // Predicated region
    $region9: #{convlstm_forward.1} parent=5 // pred_check
      _
    $region10: #{convlstm_forward.1} parent=5 // pred_check_branch
      %226 = sbr.rel (%p223) target = $region12
    $region11: #{convlstm_forward.1} parent=5 // pred_region
      %s227 = ssub.s32 %s14, 1
      // Predicated region
      $region13: #{convlstm_forward.1} parent=11 // pred_check
        %p228 = pneg %p35
      $region14: #{convlstm_forward.1} parent=11 // pred_check_branch
        %230 = sbr.rel (%p228) target = $region16
      $region15: #{convlstm_forward.1} parent=11 // pred_region
        _
      $region16: #{convlstm_forward.1} parent=11 // pred_fallthru
        _
      // Predicated region
      $region17: #{convlstm_forward.1} parent=11 // pred_check
        %p231 = pneg %p82
      $region18: #{convlstm_forward.1} parent=11 // pred_check_branch
        %233 = sbr.rel (%p231) target = $region20
      $region19: #{convlstm_forward.1} parent=11 // pred_region
        _
      $region20: #{convlstm_forward.1} parent=11 // pred_fallthru
        _
      // Predicated region
      $region21: #{convlstm_forward.1} parent=11 // pred_check
        %p234 = pneg %p103
      $region22: #{convlstm_forward.1} parent=11 // pred_check_branch
        %236 = sbr.rel (%p234) target = $region24
      $region23: #{convlstm_forward.1} parent=11 // pred_region
        _
      $region24: #{convlstm_forward.1} parent=11 // pred_fallthru
        _
      // Predicated region
      $region25: #{convlstm_forward.1} parent=11 // pred_check
        %p237 = pneg %p124
      $region26: #{convlstm_forward.1} parent=11 // pred_check_branch
        %239 = sbr.rel (%p237) target = $region28
      $region27: #{convlstm_forward.1} parent=11 // pred_region
        _
      $region28: #{convlstm_forward.1} parent=11 // pred_fallthru
        _
      // Predicated region
      $region29: #{convlstm_forward.1} parent=11 // pred_check
        %p240 = pneg %p145
      $region30: #{convlstm_forward.1} parent=11 // pred_check_branch
        %242 = sbr.rel (%p240) target = $region32
      $region31: #{convlstm_forward.1} parent=11 // pred_region
        _
      $region32: #{convlstm_forward.1} parent=11 // pred_fallthru
        _
      // Predicated region
      $region33: #{convlstm_forward.1} parent=11 // pred_check
        %p243 = pneg %p166
      $region34: #{convlstm_forward.1} parent=11 // pred_check_branch
        %245 = sbr.rel (%p243) target = $region36
      $region35: #{convlstm_forward.1} parent=11 // pred_region
        _
      $region36: #{convlstm_forward.1} parent=11 // pred_fallthru
        _
      // Predicated region
      $region37: #{convlstm_forward.1} parent=11 // pred_check
        %p246 = pneg %p187
      $region38: #{convlstm_forward.1} parent=11 // pred_check_branch
        %248 = sbr.rel (%p246) target = $region40
      $region39: #{convlstm_forward.1} parent=11 // pred_region
        _
      $region40: #{convlstm_forward.1} parent=11 // pred_fallthru
        _
    $region12: #{convlstm_forward.1} parent=5 // pred_fallthru
      _
    %p249 = scmp.lt.s32.totalorder %s14, 2
    // Predicated region
    $region41: #{convlstm_forward.1} parent=5 // pred_check
      %p250 = pneg %p249
    $region42: #{convlstm_forward.1} parent=5 // pred_check_branch
      %252 = sbr.rel (%p250) target = $region44
    $region43: #{convlstm_forward.1} parent=5 // pred_region
      // Predicated region
      $region45: #{convlstm_forward.1} parent=43 // pred_check
        %p253 = pneg %p55
      $region46: #{convlstm_forward.1} parent=43 // pred_check_branch
        %255 = sbr.rel (%p253) target = $region48
      $region47: #{convlstm_forward.1} parent=43 // pred_region
        %p256 = scmp.lt.s32.totalorder %s14, 1
        %s257 = scalar_select %p256, %s14, 1
        %s258 = smul.addr %s257, 24
        %s259 = smul.addr %s258, 4
        %s260 = scalar_lea.vmem %s1, %s259
      $region48: #{convlstm_forward.1} parent=43 // pred_fallthru
        _
    $region44: #{convlstm_forward.1} parent=5 // pred_fallthru
      _
    %p261 = scmp.le.s32.totalorder 1, %s14
    %p262 = scmp.lt.s32.totalorder %s14, 3
    %p263 = pnand %p261, %p262
    %p264 = pneg %p263
    // Predicated region
    $region49: #{convlstm_forward.1} parent=5 // pred_check
      _
    $region50: #{convlstm_forward.1} parent=5 // pred_check_branch
      %266 = sbr.rel (%p263) target = $region52
    $region51: #{convlstm_forward.1} parent=5 // pred_region
      %s267 = ssub.s32 %s14, 1
      %p268 = pneg %p35
      %p269 = pneg %p32
      %p270 = scmp.lt.s32.totalorder %s19, 1
      %s271 = scalar_select %p270, %s19, 1
      %s272 = smul.addr %s271, 24
      %s273 = smul.addr %s272, 4
      %s274 = scalar_lea.vmem %s1, %s273
      %p275 = pneg %p61
      %p276 = pneg %p58
      %p277 = pneg %p82
      %p278 = pneg %p79
      %p279 = pneg %p103
      %p280 = pneg %p100
      %p281 = pneg %p124
      %p282 = pneg %p121
      %p283 = pneg %p145
      %p284 = pneg %p142
      %p285 = pneg %p166
      %p286 = pneg %p163
      %p287 = pneg %p187
      %p288 = pneg %p184
      %p289 = pneg %p213
      %p290 = pneg %p210
      %p291 = scmp.lt.s32.totalorder %s19, 1
      %s292 = scalar_select %p291, %s19, 1
      %s293 = smul.addr %s292, 3
      %s294 = smul.addr %s293, 4
      %s295 = scalar_lea.vmem %s8, %s294
      %p296 = scmp.lt.s32.totalorder %s19, 1
      %s297 = scalar_select %p296, %s19, 1
      %s298 = smul.addr %s297, 24
      %s299 = smul.addr %s298, 4
      %s300 = scalar_lea.vmem %s1, %s299
      %p301 = scmp.lt.s32.totalorder %s19, 1
      %s302 = scalar_select %p301, %s19, 1
      %s303 = smul.addr %s302, 3
      %s304 = smul.addr %s303, 4
      %s305 = scalar_lea.vmem %s8, %s304
      %307 = vst [vmem:[#allocation2] sm:$0xff] 0
      %vm308 = vcmask 1043456
      %vm309 = vcmask 539652
      %vm310 = vmor %vm309, %vm308
      %311 = vst.msk [vmem:[#allocation2 + $0x8] sm:$0xff] %vm310, 0
      %312 = vst [vmem:[#allocation2 + $0x10] sm:$0xff] 0
      %313 = vst.msk [vmem:[#allocation2 + $0x18] sm:$0xff] %vm310, 0
      %314 = vst [vmem:[#allocation2 + $0x20] sm:$0xff] 0
      %315 = vst.msk [vmem:[#allocation2 + $0x28] sm:$0xff] %vm310, 0
      %316 = vst [vmem:[#allocation2 + $0x30] sm:$0xff] 0
      %317 = vst.msk [vmem:[#allocation2 + $0x38] sm:$0xff] %vm310, 0
      %318 = vst [vmem:[#allocation2 + $0x40] sm:$0xff] 0
      %319 = vst.msk [vmem:[#allocation2 + $0x48] sm:$0xff] %vm310, 0
      %320 = vst [vmem:[#allocation2 + $0x50] sm:$0xff] 0
      %321 = vst.msk [vmem:[#allocation2 + $0x58] sm:$0xff] %vm310, 0
      %322 = vst [vmem:[#allocation2 + $0x60] sm:$0xff] 0
      %323 = vst.msk [vmem:[#allocation2 + $0x68] sm:$0xff] %vm310, 0
      %324 = vst [vmem:[#allocation2 + $0x70] sm:$0xff] 0
      %325 = vst.msk [vmem:[#allocation2 + $0x78] sm:$0xff] %vm310, 0
      %326 = vst [vmem:[#allocation2 + $0x80] sm:$0xff] 0
      %327 = vst.msk [vmem:[#allocation2 + $0x88] sm:$0xff] %vm310, 0
      %328 = vst [vmem:[#allocation2 + $0x90] sm:$0xff] 0
      %329 = vst.msk [vmem:[#allocation2 + $0x98] sm:$0xff] %vm310, 0
      %330 = vst [vmem:[#allocation2 + $0xa0] sm:$0xff] 0
      %331 = vst.msk [vmem:[#allocation2 + $0xa8] sm:$0xff] %vm310, 0
      %332 = vst [vmem:[#allocation2 + $0xb0] sm:$0xff] 0
      %333 = vst.msk [vmem:[#allocation2 + $0xb8] sm:$0xff] %vm310, 0
      %334 = vst [vmem:[#allocation2 + $0xc0] sm:$0xff] 0
      %335 = vst.msk [vmem:[#allocation2 + $0xc8] sm:$0xff] %vm310, 0
      %336 = vst [vmem:[#allocation2 + $0xd0] sm:$0xff] 0
      %337 = vst.msk [vmem:[#allocation2 + $0xd8] sm:$0xff] %vm310, 0
      %338 = vst [vmem:[#allocation2 + $0xe0] sm:$0xff] 0
      %339 = vst.msk [vmem:[#allocation2 + $0xe8] sm:$0xff] %vm310, 0
      %340 = vst [vmem:[#allocation2 + $0xf0] sm:$0xff] 0
      %341 = vst.msk [vmem:[#allocation2 + $0xf8] sm:$0xff] %vm310, 0
      %342 = vst [vmem:[#allocation3] sm:$0xff] 0.0
      %343 = vst [vmem:[#allocation3 + $0x8] sm:$0xff] 0.0
      %vm344 = vcmask 261120
      %345 = vst.msk [vmem:[#allocation3 + $0x10] sm:$0xff] %vm344, 0.0
      %346 = vst [vmem:[#allocation3 + $0x18] sm:$0xff] 0.0
      %347 = vst [vmem:[#allocation3 + $0x20] sm:$0xff] 0.0
      %348 = vst.msk [vmem:[#allocation3 + $0x28] sm:$0xff] %vm344, 0.0
      %349 = vst [vmem:[#allocation3 + $0x30] sm:$0xff] 0.0
      %350 = vst [vmem:[#allocation3 + $0x38] sm:$0xff] 0.0
      %351 = vst.msk [vmem:[#allocation3 + $0x40] sm:$0xff] %vm344, 0.0
      %352 = vst [vmem:[#allocation3 + $0x48] sm:$0xff] 0.0
      %353 = vst [vmem:[#allocation3 + $0x50] sm:$0xff] 0.0
      %354 = vst.msk [vmem:[#allocation3 + $0x58] sm:$0xff] %vm344, 0.0
      %355 = vst [vmem:[#allocation3 + $0x60] sm:$0xff] 0.0
      %356 = vst [vmem:[#allocation3 + $0x68] sm:$0xff] 0.0
      %357 = vst.msk [vmem:[#allocation3 + $0x70] sm:$0xff] %vm344, 0.0
      %358 = vst [vmem:[#allocation3 + $0x78] sm:$0xff] 0.0
      %359 = vst [vmem:[#allocation3 + $0x80] sm:$0xff] 0.0
      %360 = vst.msk [vmem:[#allocation3 + $0x88] sm:$0xff] %vm344, 0.0
      %361 = vst [vmem:[#allocation3 + $0x90] sm:$0xff] 0.0
      %362 = vst [vmem:[#allocation3 + $0x98] sm:$0xff] 0.0
      %363 = vst.msk [vmem:[#allocation3 + $0xa0] sm:$0xff] %vm344, 0.0
      %364 = vst [vmem:[#allocation3 + $0xa8] sm:$0xff] 0.0
      %365 = vst [vmem:[#allocation3 + $0xb0] sm:$0xff] 0.0
      %366 = vst.msk [vmem:[#allocation3 + $0xb8] sm:$0xff] %vm344, 0.0
      %367 = vst [vmem:[#allocation4] sm:$0xff] 0.0
      %368 = vst [vmem:[#allocation4 + $0x8] sm:$0xff] 0.0
      %369 = vst.msk [vmem:[#allocation4 + $0x10] sm:$0xff] %vm344, 0.0
      %370 = vst [vmem:[#allocation4 + $0x18] sm:$0xff] 0.0
      %371 = vst [vmem:[#allocation4 + $0x20] sm:$0xff] 0.0
      %372 = vst.msk [vmem:[#allocation4 + $0x28] sm:$0xff] %vm344, 0.0
      %373 = vst [vmem:[#allocation4 + $0x30] sm:$0xff] 0.0
      %374 = vst [vmem:[#allocation4 + $0x38] sm:$0xff] 0.0
      %375 = vst.msk [vmem:[#allocation4 + $0x40] sm:$0xff] %vm344, 0.0
      %376 = vst [vmem:[#allocation4 + $0x48] sm:$0xff] 0.0
      %377 = vst [vmem:[#allocation4 + $0x50] sm:$0xff] 0.0
      %378 = vst.msk [vmem:[#allocation4 + $0x58] sm:$0xff] %vm344, 0.0
      loop: start=0, step=1, limit=8
      $region53: #{convlstm_forward.1} parent=51 // loop_pre_header
        _
      $region54: #{convlstm_forward.1} parent=51 // loop_header
        %s380 = sphi 0, %s384
        %p381 = scmp.ge.s32.totalorder %s380, 8
      $region55: #{convlstm_forward.1} parent=51 // loop_header_branch
        %383 = sbr.rel (%p381) target = $region59
      $region56: #{convlstm_forward.1} parent=51 // loop_body
        %v385 = vld [vmem:[%s0] sm:$0x7]
        %s386 = smul.u32 %s380, 3
        %s387 = smul.addr %s386, 4
        %s388 = scalar_lea.vmem %s300, %s387
        %v389 = vld [vmem:[%s388] sm:$0xff]
        %v390 = vld [vmem:[%s388 + $0x8] sm:$0xf]
        %v391 = vld [vmem:[%s2] sm:$0xff]
        %v392 = vld [vmem:[%s2 + $0x8] sm:$0xff]
        %v393 = vld [vmem:[%s2 + $0x10] sm:$0xff]
        %v394 = vld [vmem:[%s2 + $0x18] sm:$0xff]
        %v395 = vld [vmem:[%s3] sm:$0xff]
        %v396 = vld [vmem:[%s3 + $0x8] sm:$0xff]
        %v397 = vld [vmem:[%s3 + $0x10] sm:$0xff]
        %v398 = vld [vmem:[%s3 + $0x18] sm:$0xff]
        %400 = vset.pattern.permute.xlu0 0
        %401 = vperm.xlu0 %400, %v395
        %v402 = vpop.permute.xlu0 %401
        %405 = vset.pattern.permute.xlu0 0
        %406 = vperm.xlu0 %405, %v396
        %v407 = vpop.permute.xlu0 %406
        %410 = vset.pattern.permute.xlu0 0
        %411 = vperm.xlu0 %410, %v397
        %v412 = vpop.permute.xlu0 %411
        %415 = vset.pattern.permute.xlu0 0
        %416 = vperm.xlu0 %415, %v398
        %v417 = vpop.permute.xlu0 %416
        %v421 = vcombine.high %v389, %v389
        %vm422 = vcmask 31744
        %v424 = vsel %vm422, %v391, 0
        %v427 = vsel %vm422, %v392, 0
        %v430 = vsel %vm422, %v393, 0
        %v433 = vsel %vm422, %v394, 0
        %v435 = vsel %vm308, %v389, 0
        %v437 = vsel %vm308, %v421, 0
        %v439 = vsel %vm308, %v390, 0
        %441 = vmatprep.subr.mxu0 0.0
        %442 = vmatpush1.msra.mxu0 0.0
        %443 = vmatprep.subr.mxu0 0.0
        %444 = vmatpush1.msra.mxu0 0.0
        %445 = vmatprep.subr.mxu0 0.0
        %446 = vmatpush1.msra.mxu0 0.0
        %447 = vmatprep.subr.mxu0 0.0
        %448 = vmatpush1.msra.mxu0 0.0
        %449 = vmatprep.subr.mxu0 0.0
        %450 = vmatpush1.msra.mxu0 0.0
        %451 = vmatprep.subr.mxu0 0.0
        %452 = vmatpush1.msra.mxu0 0.0
        %453 = vmatprep.subr.mxu0 0.0
        %454 = vmatpush1.msra.mxu0 0.0
        %455 = vmatprep.subr.mxu0 0.0
        %456 = vmatpush1.msra.mxu0 0.0
        %457 = vmatprep.subr.mxu0 0.0
        %458 = vmatpush1.msra.mxu0 0.0
        %459 = vmatprep.subr.mxu0 0.0
        %460 = vmatpush1.msra.mxu0 0.0
        %461 = vmatprep.subr.mxu0 0.0
        %462 = vmatpush1.msra.mxu0 0.0
        %463 = vmatprep.subr.mxu0 0.0
        %464 = vmatpush1.msra.mxu0 0.0
        %465 = vmatprep.subr.mxu0 0.0
        %466 = vmatpush1.msra.mxu0 0.0
        %467 = vmatprep.subr.mxu0 0.0
        %468 = vmatpush1.msra.mxu0 0.0
        %469 = vmatprep.subr.mxu0 0.0
        %470 = vmatpush1.msra.mxu0 0.0
        %471 = vmatprep.subr.mxu0 %v437
        %472 = vmatpush1.msra.mxu0 %v435
        %473 = vmatprep.subr.mxu0 0.0
        %474 = vmatpush2.msra.mxu0 0.0
        %475 = vmatprep.subr.mxu0 0.0
        %476 = vmatpush2.msra.mxu0 0.0
        %477 = vmatprep.subr.mxu0 0.0
        %478 = vmatpush2.msra.mxu0 0.0
        %479 = vmatprep.subr.mxu0 0.0
        %480 = vmatpush2.msra.mxu0 0.0
        %481 = vmatprep.subr.mxu0 0.0
        %482 = vmatpush2.msra.mxu0 0.0
        %483 = vmatprep.subr.mxu0 0.0
        %484 = vmatpush2.msra.mxu0 0.0
        %485 = vmatprep.subr.mxu0 0.0
        %486 = vmatpush2.msra.mxu0 0.0
        %487 = vmatprep.subr.mxu0 0.0
        %488 = vmatpush2.msra.mxu0 0.0
        %489 = vmatprep.subr.mxu0 0.0
        %490 = vmatpush2.msra.mxu0 0.0
        %491 = vmatprep.subr.mxu0 0.0
        %492 = vmatpush2.msra.mxu0 0.0
        %493 = vmatprep.subr.mxu0 0.0
        %494 = vmatpush2.msra.mxu0 0.0
        %495 = vmatprep.subr.mxu0 0.0
        %496 = vmatpush2.msra.mxu0 0.0
        %497 = vmatprep.subr.mxu0 0.0
        %498 = vmatpush2.msra.mxu0 0.0
        %499 = vmatprep.subr.mxu0 0.0
        %500 = vmatpush2.msra.mxu0 0.0
        %501 = vmatprep.subr.mxu0 0.0
        %502 = vmatpush2.msra.mxu0 0.0
        %503 = vmatprep.subr.mxu0 0.0
        %504 = vmatpush2.msra.mxu0 0.0
        %505 = vmatprep.mubr.f32.mxu0 0.0
        %506 = vmatmul.mubr.f32.gmra.mxu0 %v424
        %v507 = vpop.f32.mrf.mxu0
        %v508 = vadd.f32 %v402, %v507
        %v509 = vpop.f32.mrf.mxu0
        %v510 = vadd.f32 %v402, %v509
        %511 = vmatprep.mubr.f32.mxu0 0.0
        %512 = vmatmul.mubr.f32.gmra.mxu0 %v427
        %v513 = vpop.f32.mrf.mxu0
        %v514 = vadd.f32 %v407, %v513
        %v515 = vpop.f32.mrf.mxu0
        %v516 = vadd.f32 %v407, %v515
        %517 = vmatprep.mubr.f32.mxu0 0.0
        %518 = vmatmul.mubr.f32.gmra.mxu0 %v430
        %v519 = vpop.f32.mrf.mxu0
        %v520 = vadd.f32 %v412, %v519
        %v521 = vpop.f32.mrf.mxu0
        %v522 = vadd.f32 %v412, %v521
        %523 = vmatprep.mubr.f32.mxu0 0.0
        %524 = vmatmul.mubr.f32.gmra.mxu0 %v433
        %v525 = vpop.f32.mrf.mxu0
        %v526 = vadd.f32 %v417, %v525
        %v527 = vpop.f32.mrf.mxu0
        %v528 = vadd.f32 %v417, %v527
        %529 = vdwg.mxu0
        %530 = vmatprep.subr.mxu0 0.0
        %531 = vmatpush1.msra.mxu0 0.0
        %532 = vmatprep.subr.mxu0 0.0
        %533 = vmatpush1.msra.mxu0 0.0
        %534 = vmatprep.subr.mxu0 0.0
        %535 = vmatpush1.msra.mxu0 0.0
        %536 = vmatprep.subr.mxu0 0.0
        %537 = vmatpush1.msra.mxu0 0.0
        %538 = vmatprep.subr.mxu0 0.0
        %539 = vmatpush1.msra.mxu0 0.0
        %540 = vmatprep.subr.mxu0 0.0
        %541 = vmatpush1.msra.mxu0 0.0
        %542 = vmatprep.subr.mxu0 0.0
        %543 = vmatpush1.msra.mxu0 0.0
        %544 = vmatprep.subr.mxu0 0.0
        %545 = vmatpush1.msra.mxu0 0.0
        %546 = vmatprep.subr.mxu0 0.0
        %547 = vmatpush1.msra.mxu0 0.0
        %548 = vmatprep.subr.mxu0 0.0
        %549 = vmatpush1.msra.mxu0 0.0
        %550 = vmatprep.subr.mxu0 0.0
        %551 = vmatpush1.msra.mxu0 0.0
        %552 = vmatprep.subr.mxu0 0.0
        %553 = vmatpush1.msra.mxu0 0.0
        %554 = vmatprep.subr.mxu0 0.0
        %555 = vmatpush1.msra.mxu0 0.0
        %556 = vmatprep.subr.mxu0 0.0
        %557 = vmatpush1.msra.mxu0 0.0
        %558 = vmatprep.subr.mxu0 0.0
        %559 = vmatpush1.msra.mxu0 0.0
        %560 = vmatprep.subr.mxu0 0.0
        %561 = vmatpush1.msra.mxu0 %v439
        %562 = vmatprep.subr.mxu0 0.0
        %563 = vmatpush2.msra.mxu0 0.0
        %564 = vmatprep.subr.mxu0 0.0
        %565 = vmatpush2.msra.mxu0 0.0
        %566 = vmatprep.subr.mxu0 0.0
        %567 = vmatpush2.msra.mxu0 0.0
        %568 = vmatprep.subr.mxu0 0.0
        %569 = vmatpush2.msra.mxu0 0.0
        %570 = vmatprep.subr.mxu0 0.0
        %571 = vmatpush2.msra.mxu0 0.0
        %572 = vmatprep.subr.mxu0 0.0
        %573 = vmatpush2.msra.mxu0 0.0
        %574 = vmatprep.subr.mxu0 0.0
        %575 = vmatpush2.msra.mxu0 0.0
        %576 = vmatprep.subr.mxu0 0.0
        %577 = vmatpush2.msra.mxu0 0.0
        %578 = vmatprep.subr.mxu0 0.0
        %579 = vmatpush2.msra.mxu0 0.0
        %580 = vmatprep.subr.mxu0 0.0
        %581 = vmatpush2.msra.mxu0 0.0
        %582 = vmatprep.subr.mxu0 0.0
        %583 = vmatpush2.msra.mxu0 0.0
        %584 = vmatprep.subr.mxu0 0.0
        %585 = vmatpush2.msra.mxu0 0.0
        %586 = vmatprep.subr.mxu0 0.0
        %587 = vmatpush2.msra.mxu0 0.0
        %588 = vmatprep.subr.mxu0 0.0
        %589 = vmatpush2.msra.mxu0 0.0
        %590 = vmatprep.subr.mxu0 0.0
        %591 = vmatpush2.msra.mxu0 0.0
        %592 = vmatprep.subr.mxu0 0.0
        %593 = vmatpush2.msra.mxu0 0.0
        %594 = vmatprep.mubr.f32.mxu0 0.0
        %595 = vmatmul.mubr.f32.gmra.mxu0 %v424
        %v596 = vpop.f32.mrf.mxu0
        %v597 = vadd.f32 %v402, %v596
        %v598 = vpop.f32.mrf.mxu0
        %599 = vmatprep.mubr.f32.mxu0 0.0
        %600 = vmatmul.mubr.f32.gmra.mxu0 %v427
        %v601 = vpop.f32.mrf.mxu0
        %v602 = vadd.f32 %v407, %v601
        %v603 = vpop.f32.mrf.mxu0
        %604 = vmatprep.mubr.f32.mxu0 0.0
        %605 = vmatmul.mubr.f32.gmra.mxu0 %v430
        %v606 = vpop.f32.mrf.mxu0
        %v607 = vadd.f32 %v412, %v606
        %v608 = vpop.f32.mrf.mxu0
        %609 = vmatprep.mubr.f32.mxu0 0.0
        %610 = vmatmul.mubr.f32.gmra.mxu0 %v433
        %v611 = vpop.f32.mrf.mxu0
        %v612 = vadd.f32 %v417, %v611
        %v613 = vpop.f32.mrf.mxu0
        %614 = vdwg.mxu0
        %v616 = vlaneseq
        %v617 = vshrl.u32 %v616, 7
        %v618 = vsub.s32 0, %v617
        %v619 = vrot.slane %v385, %v618
        %v620 = vlaneseq
        %v621 = vshrl.u32 %v620, 7
        %v622 = vsub.s32 1, %v621
        %v623 = vrot.slane %v385, %v622
        %v624 = vlaneseq
        %v625 = vshrl.u32 %v624, 7
        %v626 = vsub.s32 2, %v625
        %v627 = vrot.slane %v385, %v626
        %v631 = vmul.f32 %v508, %v619
        %v632 = vmul.f32 %v510, %v623
        %v633 = vmul.f32 %v597, %v627
        %v634 = vmul.f32 %v514, %v619
        %v635 = vmul.f32 %v516, %v623
        %v636 = vmul.f32 %v602, %v627
        %v637 = vmul.f32 %v520, %v619
        %v638 = vmul.f32 %v522, %v623
        %v639 = vmul.f32 %v607, %v627
        %v640 = vmul.f32 %v526, %v619
        %v641 = vmul.f32 %v528, %v623
        %v642 = vmul.f32 %v612, %v627
        %v643 = vpack.c.bf16 %v634, %v631
        %v644 = vpack.c.bf16 %v635, %v632
        %v645 = vpack.c.bf16 %v636, %v633
        %v646 = vpack.c.bf16 %v640, %v637
        %v647 = vpack.c.bf16 %v641, %v638
        %v648 = vpack.c.bf16 %v642, %v639
        %v655 = vunpack.c.l.b16 %v643
        %v656 = vunpack.c.l.b16 %v644
        %v657 = vunpack.c.l.b16 %v645
        %v658 = vunpack.c.h.b16 %v643
        %v659 = vunpack.c.h.b16 %v644
        %v660 = vunpack.c.h.b16 %v645
        %v661 = vunpack.c.l.b16 %v646
        %v662 = vunpack.c.l.b16 %v647
        %v663 = vunpack.c.l.b16 %v648
        %v664 = vunpack.c.h.b16 %v646
        %v665 = vunpack.c.h.b16 %v647
        %v666 = vunpack.c.h.b16 %v648
        %v667 = vpack.c.b16 %v656, %v655
        %v668 = vpack.c.b16 %v657, %v657
        %v669 = vpack.c.b16 %v659, %v658
        %v670 = vpack.c.b16 %v660, %v660
        %v671 = vpack.c.b16 %v662, %v661
        %v672 = vpack.c.b16 %v663, %v663
        %v673 = vpack.c.b16 %v665, %v664
        %v674 = vpack.c.b16 %v666, %v666
        %683 = vst [vmem:[#allocation2 + $0x4] sm:$0xff] %v667
        %vm684 = vcmask 257024
        %685 = vst.msk [vmem:[#allocation2 + $0xc] sm:$0xf] %vm684, %v668
        %686 = vst [vmem:[#allocation2 + $0x14] sm:$0xff] %v669
        %687 = vst.msk [vmem:[#allocation2 + $0x1c] sm:$0xf] %vm684, %v670
        %688 = vst [vmem:[#allocation2 + $0x24] sm:$0xff] %v671
        %689 = vst.msk [vmem:[#allocation2 + $0x2c] sm:$0xf] %vm684, %v672
        %690 = vst [vmem:[#allocation2 + $0x34] sm:$0xff] %v673
        %691 = vst.msk [vmem:[#allocation2 + $0x3c] sm:$0xf] %vm684, %v674
        %v692 = vld [vmem:[#allocation2] sm:$0xff]
        %v693 = vld [vmem:[#allocation2 + $0x8] sm:$0xff]
        %v694 = vld [vmem:[#allocation2 + $0x10] sm:$0xff]
        %v695 = vld [vmem:[#allocation2 + $0x18] sm:$0xff]
        %v696 = vld [vmem:[#allocation2 + $0x20] sm:$0xff]
        %v697 = vld [vmem:[#allocation2 + $0x28] sm:$0xff]
        %v698 = vld [vmem:[#allocation2 + $0x30] sm:$0xff]
        %v699 = vld [vmem:[#allocation2 + $0x38] sm:$0xff]
        %v700 = vld [vmem:[#allocation2 + $0x40] sm:$0xff]
        %v701 = vld [vmem:[#allocation2 + $0x48] sm:$0xff]
        %v702 = vld [vmem:[#allocation2 + $0x50] sm:$0xff]
        %v703 = vld [vmem:[#allocation2 + $0x58] sm:$0xff]
        %v704 = vld [vmem:[#allocation2 + $0x60] sm:$0xff]
        %v705 = vld [vmem:[#allocation2 + $0x68] sm:$0xff]
        %v706 = vld [vmem:[#allocation2 + $0x70] sm:$0xff]
        %v707 = vld [vmem:[#allocation2 + $0x78] sm:$0xff]
        %724 = vrot.lane.b32.xlu0 %v692, 19
        %v725 = vpop.permute.xlu0 %724
        %726 = vrot.lane.b32.xlu0 %v693, 19
        %v727 = vpop.permute.xlu0 %726
        %728 = vrot.lane.b32.xlu0 %v694, 19
        %v729 = vpop.permute.xlu0 %728
        %730 = vrot.lane.b32.xlu0 %v695, 19
        %v731 = vpop.permute.xlu0 %730
        %732 = vrot.lane.b32.xlu0 %v696, 19
        %v733 = vpop.permute.xlu0 %732
        %734 = vrot.lane.b32.xlu0 %v697, 19
        %v735 = vpop.permute.xlu0 %734
        %736 = vrot.lane.b32.xlu0 %v698, 19
        %v737 = vpop.permute.xlu0 %736
        %738 = vrot.lane.b32.xlu0 %v699, 19
        %v739 = vpop.permute.xlu0 %738
        %740 = vrot.lane.b32.xlu0 %v700, 19
        %v741 = vpop.permute.xlu0 %740
        %742 = vrot.lane.b32.xlu0 %v701, 19
        %v743 = vpop.permute.xlu0 %742
        %744 = vrot.lane.b32.xlu0 %v702, 19
        %v745 = vpop.permute.xlu0 %744
        %746 = vrot.lane.b32.xlu0 %v703, 19
        %v747 = vpop.permute.xlu0 %746
        %748 = vrot.lane.b32.xlu0 %v704, 19
        %v749 = vpop.permute.xlu0 %748
        %750 = vrot.lane.b32.xlu0 %v705, 19
        %v751 = vpop.permute.xlu0 %750
        %752 = vrot.lane.b32.xlu0 %v706, 19
        %v753 = vpop.permute.xlu0 %752
        %754 = vrot.lane.b32.xlu0 %v707, 19
        %v755 = vpop.permute.xlu0 %754
        %v756 = vrot.slane %v725, 4
        %v757 = vrot.slane %v727, 4
        %v758 = vrot.slane %v729, 4
        %v759 = vrot.slane %v731, 4
        %v760 = vrot.slane %v733, 4
        %v761 = vrot.slane %v735, 4
        %v762 = vrot.slane %v737, 4
        %v763 = vrot.slane %v739, 4
        %v764 = vrot.slane %v741, 4
        %v765 = vrot.slane %v743, 4
        %v766 = vrot.slane %v745, 4
        %v767 = vrot.slane %v747, 4
        %v768 = vrot.slane %v749, 4
        %v769 = vrot.slane %v751, 4
        %v770 = vrot.slane %v753, 4
        %v771 = vrot.slane %v755, 4
        %vm772 = vcmask 1043456
        %v773 = vsel %vm772, %v756, %v757
        %vm774 = vcmask 154624
        %v775 = vsel %vm774, %v725, %v773
        %v776 = vsel %vm774, %v727, %v757
        %v777 = vsel %vm772, %v758, %v759
        %v778 = vsel %vm774, %v729, %v777
        %v779 = vsel %vm774, %v731, %v759
        %v780 = vsel %vm772, %v760, %v761
        %v781 = vsel %vm774, %v733, %v780
        %v782 = vsel %vm774, %v735, %v761
        %v783 = vsel %vm772, %v762, %v763
        %v784 = vsel %vm774, %v737, %v783
        %v785 = vsel %vm774, %v739, %v763
        %v786 = vsel %vm772, %v764, %v765
        %v787 = vsel %vm774, %v741, %v786
        %v788 = vsel %vm774, %v743, %v765
        %v789 = vsel %vm772, %v766, %v767
        %v790 = vsel %vm774, %v745, %v789
        %v791 = vsel %vm774, %v747, %v767
        %v792 = vsel %vm772, %v768, %v769
        %v793 = vsel %vm774, %v749, %v792
        %v794 = vsel %vm774, %v751, %v769
        %v795 = vsel %vm772, %v770, %v771
        %v796 = vsel %vm774, %v753, %v795
        %v797 = vsel %vm774, %v755, %v771
        %814 = vst [vmem:[#allocation5] sm:$0xff] %v775
        %815 = vst.msk [vmem:[#allocation5 + $0x8] sm:$0xf] %vm684, %v776
        %816 = vst [vmem:[#allocation5 + $0xc] sm:$0xff] %v778
        %817 = vst.msk [vmem:[#allocation5 + $0x14] sm:$0xf] %vm684, %v779
        %818 = vst [vmem:[#allocation5 + $0x18] sm:$0xff] %v781
        %819 = vst.msk [vmem:[#allocation5 + $0x20] sm:$0xf] %vm684, %v782
        %820 = vst [vmem:[#allocation5 + $0x24] sm:$0xff] %v784
        %821 = vst.msk [vmem:[#allocation5 + $0x2c] sm:$0xf] %vm684, %v785
        %822 = vst [vmem:[#allocation5 + $0x30] sm:$0xff] %v787
        %823 = vst.msk [vmem:[#allocation5 + $0x38] sm:$0xf] %vm684, %v788
        %824 = vst [vmem:[#allocation5 + $0x3c] sm:$0xff] %v790
        %825 = vst.msk [vmem:[#allocation5 + $0x44] sm:$0xf] %vm684, %v791
        %826 = vst [vmem:[#allocation5 + $0x48] sm:$0xff] %v793
        %827 = vst.msk [vmem:[#allocation5 + $0x50] sm:$0xf] %vm684, %v794
        %828 = vst [vmem:[#allocation5 + $0x54] sm:$0xff] %v796
        %829 = vst.msk [vmem:[#allocation5 + $0x5c] sm:$0xf] %vm684, %v797
        %v830 = vld [vmem:[#allocation2] sm:$0xff]
        %v831 = vld [vmem:[#allocation2 + $0x8] sm:$0xff]
        %v832 = vld [vmem:[#allocation2 + $0x10] sm:$0xff]
        %v833 = vld [vmem:[#allocation2 + $0x18] sm:$0xff]
        %v834 = vld [vmem:[#allocation2 + $0x20] sm:$0xff]
        %v835 = vld [vmem:[#allocation2 + $0x28] sm:$0xff]
        %v836 = vld [vmem:[#allocation2 + $0x30] sm:$0xff]
        %v837 = vld [vmem:[#allocation2 + $0x38] sm:$0xff]
        %v838 = vld [vmem:[#allocation2 + $0x40] sm:$0xff]
        %v839 = vld [vmem:[#allocation2 + $0x48] sm:$0xff]
        %v840 = vld [vmem:[#allocation2 + $0x50] sm:$0xff]
        %v841 = vld [vmem:[#allocation2 + $0x58] sm:$0xff]
        %v842 = vld [vmem:[#allocation2 + $0x60] sm:$0xff]
        %v843 = vld [vmem:[#allocation2 + $0x68] sm:$0xff]
        %v844 = vld [vmem:[#allocation2 + $0x70] sm:$0xff]
        %v845 = vld [vmem:[#allocation2 + $0x78] sm:$0xff]
        %862 = vrot.lane.b32.xlu0 %v830, 18
        %v863 = vpop.permute.xlu0 %862
        %864 = vrot.lane.b32.xlu0 %v831, 18
        %v865 = vpop.permute.xlu0 %864
        %866 = vrot.lane.b32.xlu0 %v832, 18
        %v867 = vpop.permute.xlu0 %866
        %868 = vrot.lane.b32.xlu0 %v833, 18
        %v869 = vpop.permute.xlu0 %868
        %870 = vrot.lane.b32.xlu0 %v834, 18
        %v871 = vpop.permute.xlu0 %870
        %872 = vrot.lane.b32.xlu0 %v835, 18
        %v873 = vpop.permute.xlu0 %872
        %874 = vrot.lane.b32.xlu0 %v836, 18
        %v875 = vpop.permute.xlu0 %874
        %876 = vrot.lane.b32.xlu0 %v837, 18
        %v877 = vpop.permute.xlu0 %876
        %878 = vrot.lane.b32.xlu0 %v838, 18
        %v879 = vpop.permute.xlu0 %878
        %880 = vrot.lane.b32.xlu0 %v839, 18
        %v881 = vpop.permute.xlu0 %880
        %882 = vrot.lane.b32.xlu0 %v840, 18
        %v883 = vpop.permute.xlu0 %882
        %884 = vrot.lane.b32.xlu0 %v841, 18
        %v885 = vpop.permute.xlu0 %884
        %886 = vrot.lane.b32.xlu0 %v842, 18
        %v887 = vpop.permute.xlu0 %886
        %888 = vrot.lane.b32.xlu0 %v843, 18
        %v889 = vpop.permute.xlu0 %888
        %890 = vrot.lane.b32.xlu0 %v844, 18
        %v891 = vpop.permute.xlu0 %890
        %892 = vrot.lane.b32.xlu0 %v845, 18
        %v893 = vpop.permute.xlu0 %892
        %v894 = vrot.slane %v863, 4
        %v895 = vrot.slane %v865, 4
        %v896 = vrot.slane %v867, 4
        %v897 = vrot.slane %v869, 4
        %v898 = vrot.slane %v871, 4
        %v899 = vrot.slane %v873, 4
        %v900 = vrot.slane %v875, 4
        %v901 = vrot.slane %v877, 4
        %v902 = vrot.slane %v879, 4
        %v903 = vrot.slane %v881, 4
        %v904 = vrot.slane %v883, 4
        %v905 = vrot.slane %v885, 4
        %v906 = vrot.slane %v887, 4
        %v907 = vrot.slane %v889, 4
        %v908 = vrot.slane %v891, 4
        %v909 = vrot.slane %v893, 4
        %v910 = vsel %vm772, %v894, %v895
        %vm911 = vcmask 146432
        %v912 = vsel %vm911, %v863, %v910
        %v913 = vsel %vm911, %v865, %v895
        %v914 = vsel %vm772, %v896, %v897
        %v915 = vsel %vm911, %v867, %v914
        %v916 = vsel %vm911, %v869, %v897
        %v917 = vsel %vm772, %v898, %v899
        %v918 = vsel %vm911, %v871, %v917
        %v919 = vsel %vm911, %v873, %v899
        %v920 = vsel %vm772, %v900, %v901
        %v921 = vsel %vm911, %v875, %v920
        %v922 = vsel %vm911, %v877, %v901
        %v923 = vsel %vm772, %v902, %v903
        %v924 = vsel %vm911, %v879, %v923
        %v925 = vsel %vm911, %v881, %v903
        %v926 = vsel %vm772, %v904, %v905
        %v927 = vsel %vm911, %v883, %v926
        %v928 = vsel %vm911, %v885, %v905
        %v929 = vsel %vm772, %v906, %v907
        %v930 = vsel %vm911, %v887, %v929
        %v931 = vsel %vm911, %v889, %v907
        %v932 = vsel %vm772, %v908, %v909
        %v933 = vsel %vm911, %v891, %v932
        %v934 = vsel %vm911, %v893, %v909
        %951 = vst [vmem:[#allocation5 + $0x60] sm:$0xff] %v912
        %952 = vst.msk [vmem:[#allocation5 + $0x68] sm:$0xf] %vm684, %v913
        %953 = vst [vmem:[#allocation5 + $0x6c] sm:$0xff] %v915
        %954 = vst.msk [vmem:[#allocation5 + $0x74] sm:$0xf] %vm684, %v916
        %955 = vst [vmem:[#allocation5 + $0x78] sm:$0xff] %v918
        %956 = vst.msk [vmem:[#allocation5 + $0x80] sm:$0xf] %vm684, %v919
        %957 = vst [vmem:[#allocation5 + $0x84] sm:$0xff] %v921
        %958 = vst.msk [vmem:[#allocation5 + $0x8c] sm:$0xf] %vm684, %v922
        %959 = vst [vmem:[#allocation5 + $0x90] sm:$0xff] %v924
        %960 = vst.msk [vmem:[#allocation5 + $0x98] sm:$0xf] %vm684, %v925
        %961 = vst [vmem:[#allocation5 + $0x9c] sm:$0xff] %v927
        %962 = vst.msk [vmem:[#allocation5 + $0xa4] sm:$0xf] %vm684, %v928
        %963 = vst [vmem:[#allocation5 + $0xa8] sm:$0xff] %v930
        %964 = vst.msk [vmem:[#allocation5 + $0xb0] sm:$0xf] %vm684, %v931
        %965 = vst [vmem:[#allocation5 + $0xb4] sm:$0xff] %v933
        %966 = vst.msk [vmem:[#allocation5 + $0xbc] sm:$0xf] %vm684, %v934
        %v967 = vld [vmem:[#allocation2] sm:$0xff]
        %v968 = vld [vmem:[#allocation2 + $0x8] sm:$0xff]
        %v969 = vld [vmem:[#allocation2 + $0x10] sm:$0xff]
        %v970 = vld [vmem:[#allocation2 + $0x18] sm:$0xff]
        %v971 = vld [vmem:[#allocation2 + $0x20] sm:$0xff]
        %v972 = vld [vmem:[#allocation2 + $0x28] sm:$0xff]
        %v973 = vld [vmem:[#allocation2 + $0x30] sm:$0xff]
        %v974 = vld [vmem:[#allocation2 + $0x38] sm:$0xff]
        %v975 = vld [vmem:[#allocation2 + $0x40] sm:$0xff]
        %v976 = vld [vmem:[#allocation2 + $0x48] sm:$0xff]
        %v977 = vld [vmem:[#allocation2 + $0x50] sm:$0xff]
        %v978 = vld [vmem:[#allocation2 + $0x58] sm:$0xff]
        %v979 = vld [vmem:[#allocation2 + $0x60] sm:$0xff]
        %v980 = vld [vmem:[#allocation2 + $0x68] sm:$0xff]
        %v981 = vld [vmem:[#allocation2 + $0x70] sm:$0xff]
        %v982 = vld [vmem:[#allocation2 + $0x78] sm:$0xff]
        %999 = vrot.lane.b32.xlu0 %v967, 17
        %v1000 = vpop.permute.xlu0 %999
        %1001 = vrot.lane.b32.xlu0 %v968, 17
        %v1002 = vpop.permute.xlu0 %1001
        %1003 = vrot.lane.b32.xlu0 %v969, 17
        %v1004 = vpop.permute.xlu0 %1003
        %1005 = vrot.lane.b32.xlu0 %v970, 17
        %v1006 = vpop.permute.xlu0 %1005
        %1007 = vrot.lane.b32.xlu0 %v971, 17
        %v1008 = vpop.permute.xlu0 %1007
        %1009 = vrot.lane.b32.xlu0 %v972, 17
        %v1010 = vpop.permute.xlu0 %1009
        %1011 = vrot.lane.b32.xlu0 %v973, 17
        %v1012 = vpop.permute.xlu0 %1011
        %1013 = vrot.lane.b32.xlu0 %v974, 17
        %v1014 = vpop.permute.xlu0 %1013
        %1015 = vrot.lane.b32.xlu0 %v975, 17
        %v1016 = vpop.permute.xlu0 %1015
        %1017 = vrot.lane.b32.xlu0 %v976, 17
        %v1018 = vpop.permute.xlu0 %1017
        %1019 = vrot.lane.b32.xlu0 %v977, 17
        %v1020 = vpop.permute.xlu0 %1019
        %1021 = vrot.lane.b32.xlu0 %v978, 17
        %v1022 = vpop.permute.xlu0 %1021
        %1023 = vrot.lane.b32.xlu0 %v979, 17
        %v1024 = vpop.permute.xlu0 %1023
        %1025 = vrot.lane.b32.xlu0 %v980, 17
        %v1026 = vpop.permute.xlu0 %1025
        %1027 = vrot.lane.b32.xlu0 %v981, 17
        %v1028 = vpop.permute.xlu0 %1027
        %1029 = vrot.lane.b32.xlu0 %v982, 17
        %v1030 = vpop.permute.xlu0 %1029
        %v1031 = vrot.slane %v1000, 4
        %v1032 = vrot.slane %v1002, 4
        %v1033 = vrot.slane %v1004, 4
        %v1034 = vrot.slane %v1006, 4
        %v1035 = vrot.slane %v1008, 4
        %v1036 = vrot.slane %v1010, 4
        %v1037 = vrot.slane %v1012, 4
        %v1038 = vrot.slane %v1014, 4
        %v1039 = vrot.slane %v1016, 4
        %v1040 = vrot.slane %v1018, 4
        %v1041 = vrot.slane %v1020, 4
        %v1042 = vrot.slane %v1022, 4
        %v1043 = vrot.slane %v1024, 4
        %v1044 = vrot.slane %v1026, 4
        %v1045 = vrot.slane %v1028, 4
        %v1046 = vrot.slane %v1030, 4
        %v1047 = vsel %vm772, %v1031, %v1032
        %vm1048 = vcmask 138240
        %v1049 = vsel %vm1048, %v1000, %v1047
        %v1050 = vsel %vm1048, %v1002, %v1032
        %v1051 = vsel %vm772, %v1033, %v1034
        %v1052 = vsel %vm1048, %v1004, %v1051
        %v1053 = vsel %vm1048, %v1006, %v1034
        %v1054 = vsel %vm772, %v1035, %v1036
        %v1055 = vsel %vm1048, %v1008, %v1054
        %v1056 = vsel %vm1048, %v1010, %v1036
        %v1057 = vsel %vm772, %v1037, %v1038
        %v1058 = vsel %vm1048, %v1012, %v1057
        %v1059 = vsel %vm1048, %v1014, %v1038
        %v1060 = vsel %vm772, %v1039, %v1040
        %v1061 = vsel %vm1048, %v1016, %v1060
        %v1062 = vsel %vm1048, %v1018, %v1040
        %v1063 = vsel %vm772, %v1041, %v1042
        %v1064 = vsel %vm1048, %v1020, %v1063
        %v1065 = vsel %vm1048, %v1022, %v1042
        %v1066 = vsel %vm772, %v1043, %v1044
        %v1067 = vsel %vm1048, %v1024, %v1066
        %v1068 = vsel %vm1048, %v1026, %v1044
        %v1069 = vsel %vm772, %v1045, %v1046
        %v1070 = vsel %vm1048, %v1028, %v1069
        %v1071 = vsel %vm1048, %v1030, %v1046
        %1088 = vst [vmem:[#allocation5 + $0xc0] sm:$0xff] %v1049
        %1089 = vst.msk [vmem:[#allocation5 + $0xc8] sm:$0xf] %vm684, %v1050
        %1090 = vst [vmem:[#allocation5 + $0xcc] sm:$0xff] %v1052
        %1091 = vst.msk [vmem:[#allocation5 + $0xd4] sm:$0xf] %vm684, %v1053
        %1092 = vst [vmem:[#allocation5 + $0xd8] sm:$0xff] %v1055
        %1093 = vst.msk [vmem:[#allocation5 + $0xe0] sm:$0xf] %vm684, %v1056
        %1094 = vst [vmem:[#allocation5 + $0xe4] sm:$0xff] %v1058
        %1095 = vst.msk [vmem:[#allocation5 + $0xec] sm:$0xf] %vm684, %v1059
        %1096 = vst [vmem:[#allocation5 + $0xf0] sm:$0xff] %v1061
        %1097 = vst.msk [vmem:[#allocation5 + $0xf8] sm:$0xf] %vm684, %v1062
        %1098 = vst [vmem:[#allocation5 + $0xfc] sm:$0xff] %v1064
        %1099 = vst.msk [vmem:[#allocation5 + $0x104] sm:$0xf] %vm684, %v1065
        %1100 = vst [vmem:[#allocation5 + $0x108] sm:$0xff] %v1067
        %1101 = vst.msk [vmem:[#allocation5 + $0x110] sm:$0xf] %vm684, %v1068
        %1102 = vst [vmem:[#allocation5 + $0x114] sm:$0xff] %v1070
        %1103 = vst.msk [vmem:[#allocation5 + $0x11c] sm:$0xf] %vm684, %v1071
        %v1104 = vld [vmem:[#allocation2] sm:$0xff]
        %v1105 = vld [vmem:[#allocation2 + $0x8] sm:$0xff]
        %v1106 = vld [vmem:[#allocation2 + $0x10] sm:$0xff]
        %v1107 = vld [vmem:[#allocation2 + $0x18] sm:$0xff]
        %v1108 = vld [vmem:[#allocation2 + $0x20] sm:$0xff]
        %v1109 = vld [vmem:[#allocation2 + $0x28] sm:$0xff]
        %v1110 = vld [vmem:[#allocation2 + $0x30] sm:$0xff]
        %v1111 = vld [vmem:[#allocation2 + $0x38] sm:$0xff]
        %v1112 = vld [vmem:[#allocation2 + $0x40] sm:$0xff]
        %v1113 = vld [vmem:[#allocation2 + $0x48] sm:$0xff]
        %v1114 = vld [vmem:[#allocation2 + $0x50] sm:$0xff]
        %v1115 = vld [vmem:[#allocation2 + $0x58] sm:$0xff]
        %v1116 = vld [vmem:[#allocation2 + $0x60] sm:$0xff]
        %v1117 = vld [vmem:[#allocation2 + $0x68] sm:$0xff]
        %v1118 = vld [vmem:[#allocation2 + $0x70] sm:$0xff]
        %v1119 = vld [vmem:[#allocation2 + $0x78] sm:$0xff]
        %1136 = vrot.lane.b32.xlu0 %v1104, 1
        %v1137 = vpop.permute.xlu0 %1136
        %1138 = vrot.lane.b32.xlu0 %v1105, 1
        %v1139 = vpop.permute.xlu0 %1138
        %1140 = vrot.lane.b32.xlu0 %v1106, 1
        %v1141 = vpop.permute.xlu0 %1140
        %1142 = vrot.lane.b32.xlu0 %v1107, 1
        %v1143 = vpop.permute.xlu0 %1142
        %1144 = vrot.lane.b32.xlu0 %v1108, 1
        %v1145 = vpop.permute.xlu0 %1144
        %1146 = vrot.lane.b32.xlu0 %v1109, 1
        %v1147 = vpop.permute.xlu0 %1146
        %1148 = vrot.lane.b32.xlu0 %v1110, 1
        %v1149 = vpop.permute.xlu0 %1148
        %1150 = vrot.lane.b32.xlu0 %v1111, 1
        %v1151 = vpop.permute.xlu0 %1150
        %1152 = vrot.lane.b32.xlu0 %v1112, 1
        %v1153 = vpop.permute.xlu0 %1152
        %1154 = vrot.lane.b32.xlu0 %v1113, 1
        %v1155 = vpop.permute.xlu0 %1154
        %1156 = vrot.lane.b32.xlu0 %v1114, 1
        %v1157 = vpop.permute.xlu0 %1156
        %1158 = vrot.lane.b32.xlu0 %v1115, 1
        %v1159 = vpop.permute.xlu0 %1158
        %1160 = vrot.lane.b32.xlu0 %v1116, 1
        %v1161 = vpop.permute.xlu0 %1160
        %1162 = vrot.lane.b32.xlu0 %v1117, 1
        %v1163 = vpop.permute.xlu0 %1162
        %1164 = vrot.lane.b32.xlu0 %v1118, 1
        %v1165 = vpop.permute.xlu0 %1164
        %1166 = vrot.lane.b32.xlu0 %v1119, 1
        %v1167 = vpop.permute.xlu0 %1166
        %v1168 = vrot.slane %v1137, 4
        %v1169 = vrot.slane %v1139, 4
        %v1170 = vrot.slane %v1141, 4
        %v1171 = vrot.slane %v1143, 4
        %v1172 = vrot.slane %v1145, 4
        %v1173 = vrot.slane %v1147, 4
        %v1174 = vrot.slane %v1149, 4
        %v1175 = vrot.slane %v1151, 4
        %v1176 = vrot.slane %v1153, 4
        %v1177 = vrot.slane %v1155, 4
        %v1178 = vrot.slane %v1157, 4
        %v1179 = vrot.slane %v1159, 4
        %v1180 = vrot.slane %v1161, 4
        %v1181 = vrot.slane %v1163, 4
        %v1182 = vrot.slane %v1165, 4
        %v1183 = vrot.slane %v1167, 4
        %v1184 = vsel %vm772, %v1168, %v1169
        %vm1185 = vcmask 7168
        %v1186 = vsel %vm1185, %v1137, %v1184
        %v1187 = vsel %vm1185, %v1139, %v1169
        %v1188 = vsel %vm772, %v1170, %v1171
        %v1189 = vsel %vm1185, %v1141, %v1188
        %v1190 = vsel %vm1185, %v1143, %v1171
        %v1191 = vsel %vm772, %v1172, %v1173
        %v1192 = vsel %vm1185, %v1145, %v1191
        %v1193 = vsel %vm1185, %v1147, %v1173
        %v1194 = vsel %vm772, %v1174, %v1175
        %v1195 = vsel %vm1185, %v1149, %v1194
        %v1196 = vsel %vm1185, %v1151, %v1175
        %v1197 = vsel %vm772, %v1176, %v1177
        %v1198 = vsel %vm1185, %v1153, %v1197
        %v1199 = vsel %vm1185, %v1155, %v1177
        %v1200 = vsel %vm772, %v1178, %v1179
        %v1201 = vsel %vm1185, %v1157, %v1200
        %v1202 = vsel %vm1185, %v1159, %v1179
        %v1203 = vsel %vm772, %v1180, %v1181
        %v1204 = vsel %vm1185, %v1161, %v1203
        %v1205 = vsel %vm1185, %v1163, %v1181
        %v1206 = vsel %vm772, %v1182, %v1183
        %v1207 = vsel %vm1185, %v1165, %v1206
        %v1208 = vsel %vm1185, %v1167, %v1183
        %1225 = vst [vmem:[#allocation5 + $0x120] sm:$0xff] %v1186
        %1226 = vst.msk [vmem:[#allocation5 + $0x128] sm:$0xf] %vm684, %v1187
        %1227 = vst [vmem:[#allocation5 + $0x12c] sm:$0xff] %v1189
        %1228 = vst.msk [vmem:[#allocation5 + $0x134] sm:$0xf] %vm684, %v1190
        %1229 = vst [vmem:[#allocation5 + $0x138] sm:$0xff] %v1192
        %1230 = vst.msk [vmem:[#allocation5 + $0x140] sm:$0xf] %vm684, %v1193
        %1231 = vst [vmem:[#allocation5 + $0x144] sm:$0xff] %v1195
        %1232 = vst.msk [vmem:[#allocation5 + $0x14c] sm:$0xf] %vm684, %v1196
        %1233 = vst [vmem:[#allocation5 + $0x150] sm:$0xff] %v1198
        %1234 = vst.msk [vmem:[#allocation5 + $0x158] sm:$0xf] %vm684, %v1199
        %1235 = vst [vmem:[#allocation5 + $0x15c] sm:$0xff] %v1201
        %1236 = vst.msk [vmem:[#allocation5 + $0x164] sm:$0xf] %vm684, %v1202
        %1237 = vst [vmem:[#allocation5 + $0x168] sm:$0xff] %v1204
        %1238 = vst.msk [vmem:[#allocation5 + $0x170] sm:$0xf] %vm684, %v1205
        %1239 = vst [vmem:[#allocation5 + $0x174] sm:$0xff] %v1207
        %1240 = vst.msk [vmem:[#allocation5 + $0x17c] sm:$0xf] %vm684, %v1208
        %v1241 = vld [vmem:[#allocation2 + $0x4] sm:$0xff]
        %v1242 = vld [vmem:[#allocation2 + $0xc] sm:$0xf]
        %v1243 = vld [vmem:[#allocation2 + $0x14] sm:$0xff]
        %v1244 = vld [vmem:[#allocation2 + $0x1c] sm:$0xf]
        %v1245 = vld [vmem:[#allocation2 + $0x24] sm:$0xff]
        %v1246 = vld [vmem:[#allocation2 + $0x2c] sm:$0xf]
        %v1247 = vld [vmem:[#allocation2 + $0x34] sm:$0xff]
        %v1248 = vld [vmem:[#allocation2 + $0x3c] sm:$0xf]
        %v1249 = vld [vmem:[#allocation2 + $0x44] sm:$0xff]
        %v1250 = vld [vmem:[#allocation2 + $0x4c] sm:$0xf]
        %v1251 = vld [vmem:[#allocation2 + $0x54] sm:$0xff]
        %v1252 = vld [vmem:[#allocation2 + $0x5c] sm:$0xf]
        %v1253 = vld [vmem:[#allocation2 + $0x64] sm:$0xff]
        %v1254 = vld [vmem:[#allocation2 + $0x6c] sm:$0xf]
        %v1255 = vld [vmem:[#allocation2 + $0x74] sm:$0xff]
        %v1256 = vld [vmem:[#allocation2 + $0x7c] sm:$0xf]
        %1257 = vst [vmem:[#allocation5 + $0x180] sm:$0xff] %v1241
        %1258 = vst.msk [vmem:[#allocation5 + $0x188] sm:$0xf] %vm684, %v1242
        %1259 = vst [vmem:[#allocation5 + $0x18c] sm:$0xff] %v1243
        %1260 = vst.msk [vmem:[#allocation5 + $0x194] sm:$0xf] %vm684, %v1244
        %1261 = vst [vmem:[#allocation5 + $0x198] sm:$0xff] %v1245
        %1262 = vst.msk [vmem:[#allocation5 + $0x1a0] sm:$0xf] %vm684, %v1246
        %1263 = vst [vmem:[#allocation5 + $0x1a4] sm:$0xff] %v1247
        %1264 = vst.msk [vmem:[#allocation5 + $0x1ac] sm:$0xf] %vm684, %v1248
        %1265 = vst [vmem:[#allocation5 + $0x1b0] sm:$0xff] %v1249
        %1266 = vst.msk [vmem:[#allocation5 + $0x1b8] sm:$0xf] %vm684, %v1250
        %1267 = vst [vmem:[#allocation5 + $0x1bc] sm:$0xff] %v1251
        %1268 = vst.msk [vmem:[#allocation5 + $0x1c4] sm:$0xf] %vm684, %v1252
        %1269 = vst [vmem:[#allocation5 + $0x1c8] sm:$0xff] %v1253
        %1270 = vst.msk [vmem:[#allocation5 + $0x1d0] sm:$0xf] %vm684, %v1254
        %1271 = vst [vmem:[#allocation5 + $0x1d4] sm:$0xff] %v1255
        %1272 = vst.msk [vmem:[#allocation5 + $0x1dc] sm:$0xf] %vm684, %v1256
        %v1273 = vld [vmem:[#allocation2 + $0x4] sm:$0xff]
        %v1274 = vld [vmem:[#allocation2 + $0xc] sm:$0xf]
        %v1275 = vld [vmem:[#allocation2 + $0x14] sm:$0xff]
        %v1276 = vld [vmem:[#allocation2 + $0x1c] sm:$0xf]
        %v1277 = vld [vmem:[#allocation2 + $0x24] sm:$0xff]
        %v1278 = vld [vmem:[#allocation2 + $0x2c] sm:$0xf]
        %v1279 = vld [vmem:[#allocation2 + $0x34] sm:$0xff]
        %v1280 = vld [vmem:[#allocation2 + $0x3c] sm:$0xf]
        %v1281 = vld [vmem:[#allocation2 + $0x44] sm:$0xff]
        %v1282 = vld [vmem:[#allocation2 + $0x4c] sm:$0xf]
        %v1283 = vld [vmem:[#allocation2 + $0x54] sm:$0xff]
        %v1284 = vld [vmem:[#allocation2 + $0x5c] sm:$0xf]
        %v1285 = vld [vmem:[#allocation2 + $0x64] sm:$0xff]
        %v1286 = vld [vmem:[#allocation2 + $0x6c] sm:$0xf]
        %v1287 = vld [vmem:[#allocation2 + $0x74] sm:$0xff]
        %v1288 = vld [vmem:[#allocation2 + $0x7c] sm:$0xf]
        %1305 = vrot.lane.b32.xlu0 %v1273, 127
        %v1306 = vpop.permute.xlu0 %1305
        %1307 = vrot.lane.b32.xlu0 %v1274, 127
        %v1308 = vpop.permute.xlu0 %1307
        %1309 = vrot.lane.b32.xlu0 %v1275, 127
        %v1310 = vpop.permute.xlu0 %1309
        %1311 = vrot.lane.b32.xlu0 %v1276, 127
        %v1312 = vpop.permute.xlu0 %1311
        %1313 = vrot.lane.b32.xlu0 %v1277, 127
        %v1314 = vpop.permute.xlu0 %1313
        %1315 = vrot.lane.b32.xlu0 %v1278, 127
        %v1316 = vpop.permute.xlu0 %1315
        %1317 = vrot.lane.b32.xlu0 %v1279, 127
        %v1318 = vpop.permute.xlu0 %1317
        %1319 = vrot.lane.b32.xlu0 %v1280, 127
        %v1320 = vpop.permute.xlu0 %1319
        %1321 = vrot.lane.b32.xlu0 %v1281, 127
        %v1322 = vpop.permute.xlu0 %1321
        %1323 = vrot.lane.b32.xlu0 %v1282, 127
        %v1324 = vpop.permute.xlu0 %1323
        %1325 = vrot.lane.b32.xlu0 %v1283, 127
        %v1326 = vpop.permute.xlu0 %1325
        %1327 = vrot.lane.b32.xlu0 %v1284, 127
        %v1328 = vpop.permute.xlu0 %1327
        %1329 = vrot.lane.b32.xlu0 %v1285, 127
        %v1330 = vpop.permute.xlu0 %1329
        %1331 = vrot.lane.b32.xlu0 %v1286, 127
        %v1332 = vpop.permute.xlu0 %1331
        %1333 = vrot.lane.b32.xlu0 %v1287, 127
        %v1334 = vpop.permute.xlu0 %1333
        %1335 = vrot.lane.b32.xlu0 %v1288, 127
        %v1336 = vpop.permute.xlu0 %1335
        %v1337 = vrot.slane %v1306, 4
        %v1338 = vrot.slane %v1308, 4
        %v1339 = vrot.slane %v1310, 4
        %v1340 = vrot.slane %v1312, 4
        %v1341 = vrot.slane %v1314, 4
        %v1342 = vrot.slane %v1316, 4
        %v1343 = vrot.slane %v1318, 4
        %v1344 = vrot.slane %v1320, 4
        %v1345 = vrot.slane %v1322, 4
        %v1346 = vrot.slane %v1324, 4
        %v1347 = vrot.slane %v1326, 4
        %v1348 = vrot.slane %v1328, 4
        %v1349 = vrot.slane %v1330, 4
        %v1350 = vrot.slane %v1332, 4
        %v1351 = vrot.slane %v1334, 4
        %v1352 = vrot.slane %v1336, 4
        %v1353 = vsel %vm772, %v1337, %v1338
        %vm1354 = vcmask 1039360
        %v1355 = vsel %vm1354, %v1306, %v1353
        %v1356 = vsel %vm772, %v1339, %v1340
        %v1357 = vsel %vm1354, %v1310, %v1356
        %v1358 = vsel %vm772, %v1341, %v1342
        %v1359 = vsel %vm1354, %v1314, %v1358
        %v1360 = vsel %vm772, %v1343, %v1344
        %v1361 = vsel %vm1354, %v1318, %v1360
        %v1362 = vsel %vm772, %v1345, %v1346
        %v1363 = vsel %vm1354, %v1322, %v1362
        %v1364 = vsel %vm772, %v1347, %v1348
        %v1365 = vsel %vm1354, %v1326, %v1364
        %v1366 = vsel %vm772, %v1349, %v1350
        %v1367 = vsel %vm1354, %v1330, %v1366
        %v1368 = vsel %vm772, %v1351, %v1352
        %v1369 = vsel %vm1354, %v1334, %v1368
        %1386 = vst [vmem:[#allocation5 + $0x1e0] sm:$0xff] %v1355
        %1387 = vst.msk [vmem:[#allocation5 + $0x1e8] sm:$0xf] %vm684, %v1308
        %1388 = vst [vmem:[#allocation5 + $0x1ec] sm:$0xff] %v1357
        %1389 = vst.msk [vmem:[#allocation5 + $0x1f4] sm:$0xf] %vm684, %v1312
        %1390 = vst [vmem:[#allocation5 + $0x1f8] sm:$0xff] %v1359
        %1391 = vst.msk [vmem:[#allocation5 + $0x200] sm:$0xf] %vm684, %v1316
        %1392 = vst [vmem:[#allocation5 + $0x204] sm:$0xff] %v1361
        %1393 = vst.msk [vmem:[#allocation5 + $0x20c] sm:$0xf] %vm684, %v1320
        %1394 = vst [vmem:[#allocation5 + $0x210] sm:$0xff] %v1363
        %1395 = vst.msk [vmem:[#allocation5 + $0x218] sm:$0xf] %vm684, %v1324
        %1396 = vst [vmem:[#allocation5 + $0x21c] sm:$0xff] %v1365
        %1397 = vst.msk [vmem:[#allocation5 + $0x224] sm:$0xf] %vm684, %v1328
        %1398 = vst [vmem:[#allocation5 + $0x228] sm:$0xff] %v1367
        %1399 = vst.msk [vmem:[#allocation5 + $0x230] sm:$0xf] %vm684, %v1332
        %1400 = vst [vmem:[#allocation5 + $0x234] sm:$0xff] %v1369
        %1401 = vst.msk [vmem:[#allocation5 + $0x23c] sm:$0xf] %vm684, %v1336
        %v1402 = vld [vmem:[#allocation2 + $0x4] sm:$0xff]
        %v1403 = vld [vmem:[#allocation2 + $0xc] sm:$0xf]
        %v1404 = vld [vmem:[#allocation2 + $0x14] sm:$0xff]
        %v1405 = vld [vmem:[#allocation2 + $0x1c] sm:$0xf]
        %v1406 = vld [vmem:[#allocation2 + $0x24] sm:$0xff]
        %v1407 = vld [vmem:[#allocation2 + $0x2c] sm:$0xf]
        %v1408 = vld [vmem:[#allocation2 + $0x34] sm:$0xff]
        %v1409 = vld [vmem:[#allocation2 + $0x3c] sm:$0xf]
        %v1410 = vld [vmem:[#allocation2 + $0x44] sm:$0xff]
        %v1411 = vld [vmem:[#allocation2 + $0x4c] sm:$0xf]
        %v1412 = vld [vmem:[#allocation2 + $0x54] sm:$0xff]
        %v1413 = vld [vmem:[#allocation2 + $0x5c] sm:$0xf]
        %v1414 = vld [vmem:[#allocation2 + $0x64] sm:$0xff]
        %v1415 = vld [vmem:[#allocation2 + $0x6c] sm:$0xf]
        %v1416 = vld [vmem:[#allocation2 + $0x74] sm:$0xff]
        %v1417 = vld [vmem:[#allocation2 + $0x7c] sm:$0xf]
        %1434 = vrot.lane.b32.xlu0 %v1402, 111
        %v1435 = vpop.permute.xlu0 %1434
        %1436 = vrot.lane.b32.xlu0 %v1403, 111
        %v1437 = vpop.permute.xlu0 %1436
        %1438 = vrot.lane.b32.xlu0 %v1404, 111
        %v1439 = vpop.permute.xlu0 %1438
        %1440 = vrot.lane.b32.xlu0 %v1405, 111
        %v1441 = vpop.permute.xlu0 %1440
        %1442 = vrot.lane.b32.xlu0 %v1406, 111
        %v1443 = vpop.permute.xlu0 %1442
        %1444 = vrot.lane.b32.xlu0 %v1407, 111
        %v1445 = vpop.permute.xlu0 %1444
        %1446 = vrot.lane.b32.xlu0 %v1408, 111
        %v1447 = vpop.permute.xlu0 %1446
        %1448 = vrot.lane.b32.xlu0 %v1409, 111
        %v1449 = vpop.permute.xlu0 %1448
        %1450 = vrot.lane.b32.xlu0 %v1410, 111
        %v1451 = vpop.permute.xlu0 %1450
        %1452 = vrot.lane.b32.xlu0 %v1411, 111
        %v1453 = vpop.permute.xlu0 %1452
        %1454 = vrot.lane.b32.xlu0 %v1412, 111
        %v1455 = vpop.permute.xlu0 %1454
        %1456 = vrot.lane.b32.xlu0 %v1413, 111
        %v1457 = vpop.permute.xlu0 %1456
        %1458 = vrot.lane.b32.xlu0 %v1414, 111
        %v1459 = vpop.permute.xlu0 %1458
        %1460 = vrot.lane.b32.xlu0 %v1415, 111
        %v1461 = vpop.permute.xlu0 %1460
        %1462 = vrot.lane.b32.xlu0 %v1416, 111
        %v1463 = vpop.permute.xlu0 %1462
        %1464 = vrot.lane.b32.xlu0 %v1417, 111
        %v1465 = vpop.permute.xlu0 %1464
        %v1466 = vrot.slane %v1435, 4
        %v1467 = vrot.slane %v1437, 4
        %v1468 = vrot.slane %v1439, 4
        %v1469 = vrot.slane %v1441, 4
        %v1470 = vrot.slane %v1443, 4
        %v1471 = vrot.slane %v1445, 4
        %v1472 = vrot.slane %v1447, 4
        %v1473 = vrot.slane %v1449, 4
        %v1474 = vrot.slane %v1451, 4
        %v1475 = vrot.slane %v1453, 4
        %v1476 = vrot.slane %v1455, 4
        %v1477 = vrot.slane %v1457, 4
        %v1478 = vrot.slane %v1459, 4
        %v1479 = vrot.slane %v1461, 4
        %v1480 = vrot.slane %v1463, 4
        %v1481 = vrot.slane %v1465, 4
        %v1482 = vsel %vm772, %v1466, %v1467
        %vm1483 = vcmask 908288
        %v1484 = vsel %vm1483, %v1435, %v1482
        %v1485 = vsel %vm772, %v1468, %v1469
        %v1486 = vsel %vm1483, %v1439, %v1485
        %v1487 = vsel %vm772, %v1470, %v1471
        %v1488 = vsel %vm1483, %v1443, %v1487
        %v1489 = vsel %vm772, %v1472, %v1473
        %v1490 = vsel %vm1483, %v1447, %v1489
        %v1491 = vsel %vm772, %v1474, %v1475
        %v1492 = vsel %vm1483, %v1451, %v1491
        %v1493 = vsel %vm772, %v1476, %v1477
        %v1494 = vsel %vm1483, %v1455, %v1493
        %v1495 = vsel %vm772, %v1478, %v1479
        %v1496 = vsel %vm1483, %v1459, %v1495
        %v1497 = vsel %vm772, %v1480, %v1481
        %v1498 = vsel %vm1483, %v1463, %v1497
        %1515 = vst [vmem:[#allocation5 + $0x240] sm:$0xff] %v1484
        %1516 = vst.msk [vmem:[#allocation5 + $0x248] sm:$0xf] %vm684, %v1437
        %1517 = vst [vmem:[#allocation5 + $0x24c] sm:$0xff] %v1486
        %1518 = vst.msk [vmem:[#allocation5 + $0x254] sm:$0xf] %vm684, %v1441
        %1519 = vst [vmem:[#allocation5 + $0x258] sm:$0xff] %v1488
        %1520 = vst.msk [vmem:[#allocation5 + $0x260] sm:$0xf] %vm684, %v1445
        %1521 = vst [vmem:[#allocation5 + $0x264] sm:$0xff] %v1490
        %1522 = vst.msk [vmem:[#allocation5 + $0x26c] sm:$0xf] %vm684, %v1449
        %1523 = vst [vmem:[#allocation5 + $0x270] sm:$0xff] %v1492
        %1524 = vst.msk [vmem:[#allocation5 + $0x278] sm:$0xf] %vm684, %v1453
        %1525 = vst [vmem:[#allocation5 + $0x27c] sm:$0xff] %v1494
        %1526 = vst.msk [vmem:[#allocation5 + $0x284] sm:$0xf] %vm684, %v1457
        %1527 = vst [vmem:[#allocation5 + $0x288] sm:$0xff] %v1496
        %1528 = vst.msk [vmem:[#allocation5 + $0x290] sm:$0xf] %vm684, %v1461
        %1529 = vst [vmem:[#allocation5 + $0x294] sm:$0xff] %v1498
        %1530 = vst.msk [vmem:[#allocation5 + $0x29c] sm:$0xf] %vm684, %v1465
        %v1531 = vld [vmem:[#allocation2 + $0x4] sm:$0xff]
        %v1532 = vld [vmem:[#allocation2 + $0xc] sm:$0xf]
        %v1533 = vld [vmem:[#allocation2 + $0x14] sm:$0xff]
        %v1534 = vld [vmem:[#allocation2 + $0x1c] sm:$0xf]
        %v1535 = vld [vmem:[#allocation2 + $0x24] sm:$0xff]
        %v1536 = vld [vmem:[#allocation2 + $0x2c] sm:$0xf]
        %v1537 = vld [vmem:[#allocation2 + $0x34] sm:$0xff]
        %v1538 = vld [vmem:[#allocation2 + $0x3c] sm:$0xf]
        %v1539 = vld [vmem:[#allocation2 + $0x44] sm:$0xff]
        %v1540 = vld [vmem:[#allocation2 + $0x4c] sm:$0xf]
        %v1541 = vld [vmem:[#allocation2 + $0x54] sm:$0xff]
        %v1542 = vld [vmem:[#allocation2 + $0x5c] sm:$0xf]
        %v1543 = vld [vmem:[#allocation2 + $0x64] sm:$0xff]
        %v1544 = vld [vmem:[#allocation2 + $0x6c] sm:$0xf]
        %v1545 = vld [vmem:[#allocation2 + $0x74] sm:$0xff]
        %v1546 = vld [vmem:[#allocation2 + $0x7c] sm:$0xf]
        %1563 = vrot.lane.b32.xlu0 %v1531, 110
        %v1564 = vpop.permute.xlu0 %1563
        %1565 = vrot.lane.b32.xlu0 %v1532, 110
        %v1566 = vpop.permute.xlu0 %1565
        %1567 = vrot.lane.b32.xlu0 %v1533, 110
        %v1568 = vpop.permute.xlu0 %1567
        %1569 = vrot.lane.b32.xlu0 %v1534, 110
        %v1570 = vpop.permute.xlu0 %1569
        %1571 = vrot.lane.b32.xlu0 %v1535, 110
        %v1572 = vpop.permute.xlu0 %1571
        %1573 = vrot.lane.b32.xlu0 %v1536, 110
        %v1574 = vpop.permute.xlu0 %1573
        %1575 = vrot.lane.b32.xlu0 %v1537, 110
        %v1576 = vpop.permute.xlu0 %1575
        %1577 = vrot.lane.b32.xlu0 %v1538, 110
        %v1578 = vpop.permute.xlu0 %1577
        %1579 = vrot.lane.b32.xlu0 %v1539, 110
        %v1580 = vpop.permute.xlu0 %1579
        %1581 = vrot.lane.b32.xlu0 %v1540, 110
        %v1582 = vpop.permute.xlu0 %1581
        %1583 = vrot.lane.b32.xlu0 %v1541, 110
        %v1584 = vpop.permute.xlu0 %1583
        %1585 = vrot.lane.b32.xlu0 %v1542, 110
        %v1586 = vpop.permute.xlu0 %1585
        %1587 = vrot.lane.b32.xlu0 %v1543, 110
        %v1588 = vpop.permute.xlu0 %1587
        %1589 = vrot.lane.b32.xlu0 %v1544, 110
        %v1590 = vpop.permute.xlu0 %1589
        %1591 = vrot.lane.b32.xlu0 %v1545, 110
        %v1592 = vpop.permute.xlu0 %1591
        %1593 = vrot.lane.b32.xlu0 %v1546, 110
        %v1594 = vpop.permute.xlu0 %1593
        %v1595 = vrot.slane %v1564, 4
        %v1596 = vrot.slane %v1566, 4
        %v1597 = vrot.slane %v1568, 4
        %v1598 = vrot.slane %v1570, 4
        %v1599 = vrot.slane %v1572, 4
        %v1600 = vrot.slane %v1574, 4
        %v1601 = vrot.slane %v1576, 4
        %v1602 = vrot.slane %v1578, 4
        %v1603 = vrot.slane %v1580, 4
        %v1604 = vrot.slane %v1582, 4
        %v1605 = vrot.slane %v1584, 4
        %v1606 = vrot.slane %v1586, 4
        %v1607 = vrot.slane %v1588, 4
        %v1608 = vrot.slane %v1590, 4
        %v1609 = vrot.slane %v1592, 4
        %v1610 = vrot.slane %v1594, 4
        %v1611 = vsel %vm772, %v1595, %v1596
        %vm1612 = vcmask 900096
        %v1613 = vsel %vm1612, %v1564, %v1611
        %v1614 = vsel %vm772, %v1597, %v1598
        %v1615 = vsel %vm1612, %v1568, %v1614
        %v1616 = vsel %vm772, %v1599, %v1600
        %v1617 = vsel %vm1612, %v1572, %v1616
        %v1618 = vsel %vm772, %v1601, %v1602
        %v1619 = vsel %vm1612, %v1576, %v1618
        %v1620 = vsel %vm772, %v1603, %v1604
        %v1621 = vsel %vm1612, %v1580, %v1620
        %v1622 = vsel %vm772, %v1605, %v1606
        %v1623 = vsel %vm1612, %v1584, %v1622
        %v1624 = vsel %vm772, %v1607, %v1608
        %v1625 = vsel %vm1612, %v1588, %v1624
        %v1626 = vsel %vm772, %v1609, %v1610
        %v1627 = vsel %vm1612, %v1592, %v1626
        %1644 = vst [vmem:[#allocation5 + $0x2a0] sm:$0xff] %v1613
        %1645 = vst.msk [vmem:[#allocation5 + $0x2a8] sm:$0xf] %vm684, %v1566
        %1646 = vst [vmem:[#allocation5 + $0x2ac] sm:$0xff] %v1615
        %1647 = vst.msk [vmem:[#allocation5 + $0x2b4] sm:$0xf] %vm684, %v1570
        %1648 = vst [vmem:[#allocation5 + $0x2b8] sm:$0xff] %v1617
        %1649 = vst.msk [vmem:[#allocation5 + $0x2c0] sm:$0xf] %vm684, %v1574
        %1650 = vst [vmem:[#allocation5 + $0x2c4] sm:$0xff] %v1619
        %1651 = vst.msk [vmem:[#allocation5 + $0x2cc] sm:$0xf] %vm684, %v1578
        %1652 = vst [vmem:[#allocation5 + $0x2d0] sm:$0xff] %v1621
        %1653 = vst.msk [vmem:[#allocation5 + $0x2d8] sm:$0xf] %vm684, %v1582
        %1654 = vst [vmem:[#allocation5 + $0x2dc] sm:$0xff] %v1623
        %1655 = vst.msk [vmem:[#allocation5 + $0x2e4] sm:$0xf] %vm684, %v1586
        %1656 = vst [vmem:[#allocation5 + $0x2e8] sm:$0xff] %v1625
        %1657 = vst.msk [vmem:[#allocation5 + $0x2f0] sm:$0xf] %vm684, %v1590
        %1658 = vst [vmem:[#allocation5 + $0x2f4] sm:$0xff] %v1627
        %1659 = vst.msk [vmem:[#allocation5 + $0x2fc] sm:$0xf] %vm684, %v1594
        %v1660 = vld [vmem:[#allocation2 + $0x4] sm:$0xff]
        %v1661 = vld [vmem:[#allocation2 + $0xc] sm:$0xf]
        %v1662 = vld [vmem:[#allocation2 + $0x14] sm:$0xff]
        %v1663 = vld [vmem:[#allocation2 + $0x1c] sm:$0xf]
        %v1664 = vld [vmem:[#allocation2 + $0x24] sm:$0xff]
        %v1665 = vld [vmem:[#allocation2 + $0x2c] sm:$0xf]
        %v1666 = vld [vmem:[#allocation2 + $0x34] sm:$0xff]
        %v1667 = vld [vmem:[#allocation2 + $0x3c] sm:$0xf]
        %v1668 = vld [vmem:[#allocation2 + $0x44] sm:$0xff]
        %v1669 = vld [vmem:[#allocation2 + $0x4c] sm:$0xf]
        %v1670 = vld [vmem:[#allocation2 + $0x54] sm:$0xff]
        %v1671 = vld [vmem:[#allocation2 + $0x5c] sm:$0xf]
        %v1672 = vld [vmem:[#allocation2 + $0x64] sm:$0xff]
        %v1673 = vld [vmem:[#allocation2 + $0x6c] sm:$0xf]
        %v1674 = vld [vmem:[#allocation2 + $0x74] sm:$0xff]
        %v1675 = vld [vmem:[#allocation2 + $0x7c] sm:$0xf]
        %1692 = vrot.lane.b32.xlu0 %v1660, 109
        %v1693 = vpop.permute.xlu0 %1692
        %1694 = vrot.lane.b32.xlu0 %v1661, 109
        %v1695 = vpop.permute.xlu0 %1694
        %1696 = vrot.lane.b32.xlu0 %v1662, 109
        %v1697 = vpop.permute.xlu0 %1696
        %1698 = vrot.lane.b32.xlu0 %v1663, 109
        %v1699 = vpop.permute.xlu0 %1698
        %1700 = vrot.lane.b32.xlu0 %v1664, 109
        %v1701 = vpop.permute.xlu0 %1700
        %1702 = vrot.lane.b32.xlu0 %v1665, 109
        %v1703 = vpop.permute.xlu0 %1702
        %1704 = vrot.lane.b32.xlu0 %v1666, 109
        %v1705 = vpop.permute.xlu0 %1704
        %1706 = vrot.lane.b32.xlu0 %v1667, 109
        %v1707 = vpop.permute.xlu0 %1706
        %1708 = vrot.lane.b32.xlu0 %v1668, 109
        %v1709 = vpop.permute.xlu0 %1708
        %1710 = vrot.lane.b32.xlu0 %v1669, 109
        %v1711 = vpop.permute.xlu0 %1710
        %1712 = vrot.lane.b32.xlu0 %v1670, 109
        %v1713 = vpop.permute.xlu0 %1712
        %1714 = vrot.lane.b32.xlu0 %v1671, 109
        %v1715 = vpop.permute.xlu0 %1714
        %1716 = vrot.lane.b32.xlu0 %v1672, 109
        %v1717 = vpop.permute.xlu0 %1716
        %1718 = vrot.lane.b32.xlu0 %v1673, 109
        %v1719 = vpop.permute.xlu0 %1718
        %1720 = vrot.lane.b32.xlu0 %v1674, 109
        %v1721 = vpop.permute.xlu0 %1720
        %1722 = vrot.lane.b32.xlu0 %v1675, 109
        %v1723 = vpop.permute.xlu0 %1722
        %v1724 = vrot.slane %v1693, 4
        %v1725 = vrot.slane %v1695, 4
        %v1726 = vrot.slane %v1697, 4
        %v1727 = vrot.slane %v1699, 4
        %v1728 = vrot.slane %v1701, 4
        %v1729 = vrot.slane %v1703, 4
        %v1730 = vrot.slane %v1705, 4
        %v1731 = vrot.slane %v1707, 4
        %v1732 = vrot.slane %v1709, 4
        %v1733 = vrot.slane %v1711, 4
        %v1734 = vrot.slane %v1713, 4
        %v1735 = vrot.slane %v1715, 4
        %v1736 = vrot.slane %v1717, 4
        %v1737 = vrot.slane %v1719, 4
        %v1738 = vrot.slane %v1721, 4
        %v1739 = vrot.slane %v1723, 4
        %v1740 = vsel %vm772, %v1724, %v1725
        %vm1741 = vcmask 891904
        %v1742 = vsel %vm1741, %v1693, %v1740
        %v1743 = vsel %vm772, %v1726, %v1727
        %v1744 = vsel %vm1741, %v1697, %v1743
        %v1745 = vsel %vm772, %v1728, %v1729
        %v1746 = vsel %vm1741, %v1701, %v1745
        %v1747 = vsel %vm772, %v1730, %v1731
        %v1748 = vsel %vm1741, %v1705, %v1747
        %v1749 = vsel %vm772, %v1732, %v1733
        %v1750 = vsel %vm1741, %v1709, %v1749
        %v1751 = vsel %vm772, %v1734, %v1735
        %v1752 = vsel %vm1741, %v1713, %v1751
        %v1753 = vsel %vm772, %v1736, %v1737
        %v1754 = vsel %vm1741, %v1717, %v1753
        %v1755 = vsel %vm772, %v1738, %v1739
        %v1756 = vsel %vm1741, %v1721, %v1755
        %1773 = vst [vmem:[#allocation5 + $0x300] sm:$0xff] %v1742
        %1774 = vst.msk [vmem:[#allocation5 + $0x308] sm:$0xf] %vm684, %v1695
        %1775 = vst [vmem:[#allocation5 + $0x30c] sm:$0xff] %v1744
        %1776 = vst.msk [vmem:[#allocation5 + $0x314] sm:$0xf] %vm684, %v1699
        %1777 = vst [vmem:[#allocation5 + $0x318] sm:$0xff] %v1746
        %1778 = vst.msk [vmem:[#allocation5 + $0x320] sm:$0xf] %vm684, %v1703
        %1779 = vst [vmem:[#allocation5 + $0x324] sm:$0xff] %v1748
        %1780 = vst.msk [vmem:[#allocation5 + $0x32c] sm:$0xf] %vm684, %v1707
        %1781 = vst [vmem:[#allocation5 + $0x330] sm:$0xff] %v1750
        %1782 = vst.msk [vmem:[#allocation5 + $0x338] sm:$0xf] %vm684, %v1711
        %1783 = vst [vmem:[#allocation5 + $0x33c] sm:$0xff] %v1752
        %1784 = vst.msk [vmem:[#allocation5 + $0x344] sm:$0xf] %vm684, %v1715
        %1785 = vst [vmem:[#allocation5 + $0x348] sm:$0xff] %v1754
        %1786 = vst.msk [vmem:[#allocation5 + $0x350] sm:$0xf] %vm684, %v1719
        %1787 = vst [vmem:[#allocation5 + $0x354] sm:$0xff] %v1756
        %1788 = vst.msk [vmem:[#allocation5 + $0x35c] sm:$0xf] %vm684, %v1723
        %v1789 = vld [vmem:[%s4] sm:$0xff]
        %v1790 = vld [vmem:[%s4 + $0x8] sm:$0xff]
        %v1791 = vld [vmem:[%s4 + $0x10] sm:$0xf]
        %v1792 = vld [vmem:[%s4 + $0x14] sm:$0xff]
        %v1793 = vld [vmem:[%s4 + $0x1c] sm:$0xff]
        %v1794 = vld [vmem:[%s4 + $0x24] sm:$0xf]
        %v1795 = vld [vmem:[%s4 + $0x28] sm:$0xff]
        %v1796 = vld [vmem:[%s4 + $0x30] sm:$0xff]
        %v1797 = vld [vmem:[%s4 + $0x38] sm:$0xf]
        %v1798 = vld [vmem:[%s4 + $0x3c] sm:$0xff]
        %v1799 = vld [vmem:[%s4 + $0x44] sm:$0xff]
        %v1800 = vld [vmem:[%s4 + $0x4c] sm:$0xf]
        %v1801 = vld [vmem:[%s4 + $0x50] sm:$0xff]
        %v1802 = vld [vmem:[%s4 + $0x58] sm:$0xff]
        %v1803 = vld [vmem:[%s4 + $0x60] sm:$0xf]
        %v1804 = vld [vmem:[%s4 + $0x64] sm:$0xff]
        %v1805 = vld [vmem:[%s4 + $0x6c] sm:$0xff]
        %v1806 = vld [vmem:[%s4 + $0x74] sm:$0xf]
        %v1807 = vld [vmem:[%s4 + $0x78] sm:$0xff]
        %v1808 = vld [vmem:[%s4 + $0x80] sm:$0xff]
        %v1809 = vld [vmem:[%s4 + $0x88] sm:$0xf]
        %v1810 = vld [vmem:[%s4 + $0x8c] sm:$0xff]
        %v1811 = vld [vmem:[%s4 + $0x94] sm:$0xff]
        %v1812 = vld [vmem:[%s4 + $0x9c] sm:$0xf]
        %v1813 = vld [vmem:[%s4 + $0xa0] sm:$0xff]
        %v1814 = vld [vmem:[%s4 + $0xa8] sm:$0xff]
        %v1815 = vld [vmem:[%s4 + $0xb0] sm:$0xf]
        %v1816 = vld [vmem:[%s4 + $0xb4] sm:$0xff]
        %v1817 = vld [vmem:[%s4 + $0xbc] sm:$0xff]
        %v1818 = vld [vmem:[%s4 + $0xc4] sm:$0xf]
        %v1819 = vld [vmem:[%s4 + $0xc8] sm:$0xff]
        %v1820 = vld [vmem:[%s4 + $0xd0] sm:$0xff]
        %v1821 = vld [vmem:[%s4 + $0xd8] sm:$0xf]
        %v1822 = vld [vmem:[%s4 + $0xdc] sm:$0xff]
        %v1823 = vld [vmem:[%s4 + $0xe4] sm:$0xff]
        %v1824 = vld [vmem:[%s4 + $0xec] sm:$0xf]
        %v1825 = vld [vmem:[%s4 + $0xf0] sm:$0xff]
        %v1826 = vld [vmem:[%s4 + $0xf8] sm:$0xff]
        %v1827 = vld [vmem:[%s4 + $0x100] sm:$0xf]
        %v1828 = vld [vmem:[%s4 + $0x104] sm:$0xff]
        %v1829 = vld [vmem:[%s4 + $0x10c] sm:$0xff]
        %v1830 = vld [vmem:[%s4 + $0x114] sm:$0xf]
        %v1831 = vld [vmem:[%s4 + $0x118] sm:$0xff]
        %v1832 = vld [vmem:[%s4 + $0x120] sm:$0xff]
        %v1833 = vld [vmem:[%s4 + $0x128] sm:$0xf]
        %v1834 = vld [vmem:[%s4 + $0x12c] sm:$0xff]
        %v1835 = vld [vmem:[%s4 + $0x134] sm:$0xff]
        %v1836 = vld [vmem:[%s4 + $0x13c] sm:$0xf]
        %v1837 = vld [vmem:[#allocation5] sm:$0xff]
        %v1838 = vld [vmem:[#allocation5 + $0x8] sm:$0xf]
        %v1839 = vld [vmem:[#allocation5 + $0xc] sm:$0xff]
        %v1840 = vld [vmem:[#allocation5 + $0x14] sm:$0xf]
        %v1841 = vld [vmem:[#allocation5 + $0x18] sm:$0xff]
        %v1842 = vld [vmem:[#allocation5 + $0x20] sm:$0xf]
        %v1843 = vld [vmem:[#allocation5 + $0x24] sm:$0xff]
        %v1844 = vld [vmem:[#allocation5 + $0x2c] sm:$0xf]
        %v1845 = vld [vmem:[#allocation5 + $0x30] sm:$0xff]
        %v1846 = vld [vmem:[#allocation5 + $0x38] sm:$0xf]
        %v1847 = vld [vmem:[#allocation5 + $0x3c] sm:$0xff]
        %v1848 = vld [vmem:[#allocation5 + $0x44] sm:$0xf]
        %v1849 = vld [vmem:[#allocation5 + $0x48] sm:$0xff]
        %v1850 = vld [vmem:[#allocation5 + $0x50] sm:$0xf]
        %v1851 = vld [vmem:[#allocation5 + $0x54] sm:$0xff]
        %v1852 = vld [vmem:[#allocation5 + $0x5c] sm:$0xf]
        %v1853 = vld [vmem:[#allocation5 + $0x60] sm:$0xff]
        %v1854 = vld [vmem:[#allocation5 + $0x68] sm:$0xf]
        %v1855 = vld [vmem:[#allocation5 + $0x6c] sm:$0xff]
        %v1856 = vld [vmem:[#allocation5 + $0x74] sm:$0xf]
        %v1857 = vld [vmem:[#allocation5 + $0x78] sm:$0xff]
        %v1858 = vld [vmem:[#allocation5 + $0x80] sm:$0xf]
        %v1859 = vld [vmem:[#allocation5 + $0x84] sm:$0xff]
        %v1860 = vld [vmem:[#allocation5 + $0x8c] sm:$0xf]
        %v1861 = vld [vmem:[#allocation5 + $0x90] sm:$0xff]
        %v1862 = vld [vmem:[#allocation5 + $0x98] sm:$0xf]
        %v1863 = vld [vmem:[#allocation5 + $0x9c] sm:$0xff]
        %v1864 = vld [vmem:[#allocation5 + $0xa4] sm:$0xf]
        %v1865 = vld [vmem:[#allocation5 + $0xa8] sm:$0xff]
        %v1866 = vld [vmem:[#allocation5 + $0xb0] sm:$0xf]
        %v1867 = vld [vmem:[#allocation5 + $0xb4] sm:$0xff]
        %v1868 = vld [vmem:[#allocation5 + $0xbc] sm:$0xf]
        %v1869 = vld [vmem:[#allocation5 + $0xc0] sm:$0xff]
        %v1870 = vld [vmem:[#allocation5 + $0xc8] sm:$0xf]
        %v1871 = vld [vmem:[#allocation5 + $0xcc] sm:$0xff]
        %v1872 = vld [vmem:[#allocation5 + $0xd4] sm:$0xf]
        %v1873 = vld [vmem:[#allocation5 + $0xd8] sm:$0xff]
        %v1874 = vld [vmem:[#allocation5 + $0xe0] sm:$0xf]
        %v1875 = vld [vmem:[#allocation5 + $0xe4] sm:$0xff]
        %v1876 = vld [vmem:[#allocation5 + $0xec] sm:$0xf]
        %v1877 = vld [vmem:[#allocation5 + $0xf0] sm:$0xff]
        %v1878 = vld [vmem:[#allocation5 + $0xf8] sm:$0xf]
        %v1879 = vld [vmem:[#allocation5 + $0xfc] sm:$0xff]
        %v1880 = vld [vmem:[#allocation5 + $0x104] sm:$0xf]
        %v1881 = vld [vmem:[#allocation5 + $0x108] sm:$0xff]
        %v1882 = vld [vmem:[#allocation5 + $0x110] sm:$0xf]
        %v1883 = vld [vmem:[#allocation5 + $0x114] sm:$0xff]
        %v1884 = vld [vmem:[#allocation5 + $0x11c] sm:$0xf]
        %v1885 = vld [vmem:[#allocation5 + $0x120] sm:$0xff]
        %v1886 = vld [vmem:[#allocation5 + $0x128] sm:$0xf]
        %v1887 = vld [vmem:[#allocation5 + $0x12c] sm:$0xff]
        %v1888 = vld [vmem:[#allocation5 + $0x134] sm:$0xf]
        %v1889 = vld [vmem:[#allocation5 + $0x138] sm:$0xff]
        %v1890 = vld [vmem:[#allocation5 + $0x140] sm:$0xf]
        %v1891 = vld [vmem:[#allocation5 + $0x144] sm:$0xff]
        %v1892 = vld [vmem:[#allocation5 + $0x14c] sm:$0xf]
        %v1893 = vld [vmem:[#allocation5 + $0x150] sm:$0xff]
        %v1894 = vld [vmem:[#allocation5 + $0x158] sm:$0xf]
        %v1895 = vld [vmem:[#allocation5 + $0x15c] sm:$0xff]
        %v1896 = vld [vmem:[#allocation5 + $0x164] sm:$0xf]
        %v1897 = vld [vmem:[#allocation5 + $0x168] sm:$0xff]
        %v1898 = vld [vmem:[#allocation5 + $0x170] sm:$0xf]
        %v1899 = vld [vmem:[#allocation5 + $0x174] sm:$0xff]
        %v1900 = vld [vmem:[#allocation5 + $0x17c] sm:$0xf]
        %v1901 = vld [vmem:[#allocation5 + $0x180] sm:$0xff]
        %v1902 = vld [vmem:[#allocation5 + $0x188] sm:$0xf]
        %v1903 = vld [vmem:[#allocation5 + $0x18c] sm:$0xff]
        %v1904 = vld [vmem:[#allocation5 + $0x194] sm:$0xf]
        %v1905 = vld [vmem:[#allocation5 + $0x198] sm:$0xff]
        %v1906 = vld [vmem:[#allocation5 + $0x1a0] sm:$0xf]
        %v1907 = vld [vmem:[#allocation5 + $0x1a4] sm:$0xff]
        %v1908 = vld [vmem:[#allocation5 + $0x1ac] sm:$0xf]
        %v1909 = vld [vmem:[#allocation5 + $0x1b0] sm:$0xff]
        %v1910 = vld [vmem:[#allocation5 + $0x1b8] sm:$0xf]
        %v1911 = vld [vmem:[#allocation5 + $0x1bc] sm:$0xff]
        %v1912 = vld [vmem:[#allocation5 + $0x1c4] sm:$0xf]
        %v1913 = vld [vmem:[#allocation5 + $0x1c8] sm:$0xff]
        %v1914 = vld [vmem:[#allocation5 + $0x1d0] sm:$0xf]
        %v1915 = vld [vmem:[#allocation5 + $0x1d4] sm:$0xff]
        %v1916 = vld [vmem:[#allocation5 + $0x1dc] sm:$0xf]
        %v1917 = vld [vmem:[#allocation5 + $0x1e0] sm:$0xff]
        %v1918 = vld [vmem:[#allocation5 + $0x1e8] sm:$0xf]
        %v1919 = vld [vmem:[#allocation5 + $0x1ec] sm:$0xff]
        %v1920 = vld [vmem:[#allocation5 + $0x1f4] sm:$0xf]
        %v1921 = vld [vmem:[#allocation5 + $0x1f8] sm:$0xff]
        %v1922 = vld [vmem:[#allocation5 + $0x200] sm:$0xf]
        %v1923 = vld [vmem:[#allocation5 + $0x204] sm:$0xff]
        %v1924 = vld [vmem:[#allocation5 + $0x20c] sm:$0xf]
        %v1925 = vld [vmem:[#allocation5 + $0x210] sm:$0xff]
        %v1926 = vld [vmem:[#allocation5 + $0x218] sm:$0xf]
        %v1927 = vld [vmem:[#allocation5 + $0x21c] sm:$0xff]
        %v1928 = vld [vmem:[#allocation5 + $0x224] sm:$0xf]
        %v1929 = vld [vmem:[#allocation5 + $0x228] sm:$0xff]
        %v1930 = vld [vmem:[#allocation5 + $0x230] sm:$0xf]
        %v1931 = vld [vmem:[#allocation5 + $0x234] sm:$0xff]
        %v1932 = vld [vmem:[#allocation5 + $0x23c] sm:$0xf]
        %v1933 = vld [vmem:[#allocation5 + $0x240] sm:$0xff]
        %v1934 = vld [vmem:[#allocation5 + $0x248] sm:$0xf]
        %v1935 = vld [vmem:[#allocation5 + $0x24c] sm:$0xff]
        %v1936 = vld [vmem:[#allocation5 + $0x254] sm:$0xf]
        %v1937 = vld [vmem:[#allocation5 + $0x258] sm:$0xff]
        %v1938 = vld [vmem:[#allocation5 + $0x260] sm:$0xf]
        %v1939 = vld [vmem:[#allocation5 + $0x264] sm:$0xff]
        %v1940 = vld [vmem:[#allocation5 + $0x26c] sm:$0xf]
        %v1941 = vld [vmem:[#allocation5 + $0x270] sm:$0xff]
        %v1942 = vld [vmem:[#allocation5 + $0x278] sm:$0xf]
        %v1943 = vld [vmem:[#allocation5 + $0x27c] sm:$0xff]
        %v1944 = vld [vmem:[#allocation5 + $0x284] sm:$0xf]
        %v1945 = vld [vmem:[#allocation5 + $0x288] sm:$0xff]
        %v1946 = vld [vmem:[#allocation5 + $0x290] sm:$0xf]
        %v1947 = vld [vmem:[#allocation5 + $0x294] sm:$0xff]
        %v1948 = vld [vmem:[#allocation5 + $0x29c] sm:$0xf]
        %v1949 = vld [vmem:[#allocation5 + $0x2a0] sm:$0xff]
        %v1950 = vld [vmem:[#allocation5 + $0x2a8] sm:$0xf]
        %v1951 = vld [vmem:[#allocation5 + $0x2ac] sm:$0xff]
        %v1952 = vld [vmem:[#allocation5 + $0x2b4] sm:$0xf]
        %v1953 = vld [vmem:[#allocation5 + $0x2b8] sm:$0xff]
        %v1954 = vld [vmem:[#allocation5 + $0x2c0] sm:$0xf]
        %v1955 = vld [vmem:[#allocation5 + $0x2c4] sm:$0xff]
        %v1956 = vld [vmem:[#allocation5 + $0x2cc] sm:$0xf]
        %v1957 = vld [vmem:[#allocation5 + $0x2d0] sm:$0xff]
        %v1958 = vld [vmem:[#allocation5 + $0x2d8] sm:$0xf]
        %v1959 = vld [vmem:[#allocation5 + $0x2dc] sm:$0xff]
        %v1960 = vld [vmem:[#allocation5 + $0x2e4] sm:$0xf]
        %v1961 = vld [vmem:[#allocation5 + $0x2e8] sm:$0xff]
        %v1962 = vld [vmem:[#allocation5 + $0x2f0] sm:$0xf]
        %v1963 = vld [vmem:[#allocation5 + $0x2f4] sm:$0xff]
        %v1964 = vld [vmem:[#allocation5 + $0x2fc] sm:$0xf]
        %v1965 = vld [vmem:[#allocation5 + $0x300] sm:$0xff]
        %v1966 = vld [vmem:[#allocation5 + $0x308] sm:$0xf]
        %v1967 = vld [vmem:[#allocation5 + $0x30c] sm:$0xff]
        %v1968 = vld [vmem:[#allocation5 + $0x314] sm:$0xf]
        %v1969 = vld [vmem:[#allocation5 + $0x318] sm:$0xff]
        %v1970 = vld [vmem:[#allocation5 + $0x320] sm:$0xf]
        %v1971 = vld [vmem:[#allocation5 + $0x324] sm:$0xff]
        %v1972 = vld [vmem:[#allocation5 + $0x32c] sm:$0xf]
        %v1973 = vld [vmem:[#allocation5 + $0x330] sm:$0xff]
        %v1974 = vld [vmem:[#allocation5 + $0x338] sm:$0xf]
        %v1975 = vld [vmem:[#allocation5 + $0x33c] sm:$0xff]
        %v1976 = vld [vmem:[#allocation5 + $0x344] sm:$0xf]
        %v1977 = vld [vmem:[#allocation5 + $0x348] sm:$0xff]
        %v1978 = vld [vmem:[#allocation5 + $0x350] sm:$0xf]
        %v1979 = vld [vmem:[#allocation5 + $0x354] sm:$0xff]
        %v1980 = vld [vmem:[#allocation5 + $0x35c] sm:$0xf]
        %v1981 = vld [vmem:[%s5] sm:$0xff]
        %v1982 = vld [vmem:[%s5 + $0x8] sm:$0xff]
        %v1983 = vld [vmem:[%s5 + $0x10] sm:$0xff]
        %v1984 = vld [vmem:[%s5 + $0x18] sm:$0xff]
        %v1985 = vld [vmem:[%s5 + $0x20] sm:$0xff]
        %v1986 = vld [vmem:[%s5 + $0x28] sm:$0xff]
        %v1987 = vld [vmem:[%s5 + $0x30] sm:$0xff]
        %v1988 = vld [vmem:[%s5 + $0x38] sm:$0xff]
        %v1989 = vld [vmem:[%s5 + $0x40] sm:$0xff]
        %v1990 = vld [vmem:[%s5 + $0x48] sm:$0xff]
        %v1991 = vld [vmem:[%s5 + $0x50] sm:$0xff]
        %v1992 = vld [vmem:[%s5 + $0x58] sm:$0xff]
        %v1993 = vld [vmem:[%s5 + $0x60] sm:$0xff]
        %v1994 = vld [vmem:[%s5 + $0x68] sm:$0xff]
        %v1995 = vld [vmem:[%s5 + $0x70] sm:$0xff]
        %v1996 = vld [vmem:[%s5 + $0x78] sm:$0xff]
        %1998 = vset.pattern.permute.xlu0 0
        %1999 = vperm.xlu0 %1998, %v1981
        %v2000 = vpop.permute.xlu0 %1999
        %2003 = vset.pattern.permute.xlu0 0
        %2004 = vperm.xlu0 %2003, %v1982
        %v2005 = vpop.permute.xlu0 %2004
        %2008 = vset.pattern.permute.xlu0 0
        %2009 = vperm.xlu0 %2008, %v1983
        %v2010 = vpop.permute.xlu0 %2009
        %2013 = vset.pattern.permute.xlu0 0
        %2014 = vperm.xlu0 %2013, %v1984
        %v2015 = vpop.permute.xlu0 %2014
        %2018 = vset.pattern.permute.xlu0 0
        %2019 = vperm.xlu0 %2018, %v1985
        %v2020 = vpop.permute.xlu0 %2019
        %2023 = vset.pattern.permute.xlu0 0
        %2024 = vperm.xlu0 %2023, %v1986
        %v2025 = vpop.permute.xlu0 %2024
        %2028 = vset.pattern.permute.xlu0 0
        %2029 = vperm.xlu0 %2028, %v1987
        %v2030 = vpop.permute.xlu0 %2029
        %2033 = vset.pattern.permute.xlu0 0
        %2034 = vperm.xlu0 %2033, %v1988
        %v2035 = vpop.permute.xlu0 %2034
        %2038 = vset.pattern.permute.xlu0 0
        %2039 = vperm.xlu0 %2038, %v1989
        %v2040 = vpop.permute.xlu0 %2039
        %2043 = vset.pattern.permute.xlu0 0
        %2044 = vperm.xlu0 %2043, %v1990
        %v2045 = vpop.permute.xlu0 %2044
        %2048 = vset.pattern.permute.xlu0 0
        %2049 = vperm.xlu0 %2048, %v1991
        %v2050 = vpop.permute.xlu0 %2049
        %2053 = vset.pattern.permute.xlu0 0
        %2054 = vperm.xlu0 %2053, %v1992
        %v2055 = vpop.permute.xlu0 %2054
        %2058 = vset.pattern.permute.xlu0 0
        %2059 = vperm.xlu0 %2058, %v1993
        %v2060 = vpop.permute.xlu0 %2059
        %2063 = vset.pattern.permute.xlu0 0
        %2064 = vperm.xlu0 %2063, %v1994
        %v2065 = vpop.permute.xlu0 %2064
        %2068 = vset.pattern.permute.xlu0 0
        %2069 = vperm.xlu0 %2068, %v1995
        %v2070 = vpop.permute.xlu0 %2069
        %2073 = vset.pattern.permute.xlu0 0
        %2074 = vperm.xlu0 %2073, %v1996
        %v2075 = vpop.permute.xlu0 %2074
        %v2125 = vunpack.c.l.b16 %v1789
        %v2126 = vunpack.c.h.b16 %v1789
        %v2127 = vunpack.c.l.b16 %v1790
        %v2128 = vunpack.c.h.b16 %v1790
        %v2129 = vunpack.c.l.b16 %v1791
        %v2130 = vunpack.c.l.b16 %v1792
        %v2131 = vunpack.c.h.b16 %v1792
        %v2132 = vunpack.c.l.b16 %v1793
        %v2133 = vunpack.c.h.b16 %v1793
        %v2134 = vunpack.c.l.b16 %v1794
        %v2135 = vunpack.c.l.b16 %v1795
        %v2136 = vunpack.c.h.b16 %v1795
        %v2137 = vunpack.c.l.b16 %v1796
        %v2138 = vunpack.c.h.b16 %v1796
        %v2139 = vunpack.c.l.b16 %v1797
        %v2140 = vunpack.c.l.b16 %v1798
        %v2141 = vunpack.c.h.b16 %v1798
        %v2142 = vunpack.c.l.b16 %v1799
        %v2143 = vunpack.c.h.b16 %v1799
        %v2144 = vunpack.c.l.b16 %v1800
        %v2145 = vunpack.c.l.b16 %v1801
        %v2146 = vunpack.c.h.b16 %v1801
        %v2147 = vunpack.c.l.b16 %v1802
        %v2148 = vunpack.c.h.b16 %v1802
        %v2149 = vunpack.c.l.b16 %v1803
        %v2150 = vunpack.c.l.b16 %v1804
        %v2151 = vunpack.c.h.b16 %v1804
        %v2152 = vunpack.c.l.b16 %v1805
        %v2153 = vunpack.c.h.b16 %v1805
        %v2154 = vunpack.c.l.b16 %v1806
        %v2155 = vunpack.c.l.b16 %v1807
        %v2156 = vunpack.c.h.b16 %v1807
        %v2157 = vunpack.c.l.b16 %v1808
        %v2158 = vunpack.c.h.b16 %v1808
        %v2159 = vunpack.c.l.b16 %v1809
        %v2160 = vunpack.c.l.b16 %v1810
        %v2161 = vunpack.c.h.b16 %v1810
        %v2162 = vunpack.c.l.b16 %v1811
        %v2163 = vunpack.c.h.b16 %v1811
        %v2164 = vunpack.c.l.b16 %v1812
        %v2165 = vunpack.c.l.b16 %v1813
        %v2166 = vunpack.c.h.b16 %v1813
        %v2167 = vunpack.c.l.b16 %v1814
        %v2168 = vunpack.c.h.b16 %v1814
        %v2169 = vunpack.c.l.b16 %v1815
        %v2170 = vunpack.c.l.b16 %v1816
        %v2171 = vunpack.c.h.b16 %v1816
        %v2172 = vunpack.c.l.b16 %v1817
        %v2173 = vunpack.c.h.b16 %v1817
        %v2174 = vunpack.c.l.b16 %v1818
        %v2175 = vunpack.c.l.b16 %v1819
        %v2176 = vunpack.c.h.b16 %v1819
        %v2177 = vunpack.c.l.b16 %v1820
        %v2178 = vunpack.c.h.b16 %v1820
        %v2179 = vunpack.c.l.b16 %v1821
        %v2180 = vunpack.c.l.b16 %v1822
        %v2181 = vunpack.c.h.b16 %v1822
        %v2182 = vunpack.c.l.b16 %v1823
        %v2183 = vunpack.c.h.b16 %v1823
        %v2184 = vunpack.c.l.b16 %v1824
        %v2185 = vunpack.c.l.b16 %v1825
        %v2186 = vunpack.c.h.b16 %v1825
        %v2187 = vunpack.c.l.b16 %v1826
        %v2188 = vunpack.c.h.b16 %v1826
        %v2189 = vunpack.c.l.b16 %v1827
        %v2190 = vunpack.c.l.b16 %v1828
        %v2191 = vunpack.c.h.b16 %v1828
        %v2192 = vunpack.c.l.b16 %v1829
        %v2193 = vunpack.c.h.b16 %v1829
        %v2194 = vunpack.c.l.b16 %v1830
        %v2195 = vunpack.c.l.b16 %v1831
        %v2196 = vunpack.c.h.b16 %v1831
        %v2197 = vunpack.c.l.b16 %v1832
        %v2198 = vunpack.c.h.b16 %v1832
        %v2199 = vunpack.c.l.b16 %v1833
        %v2200 = vunpack.c.l.b16 %v1834
        %v2201 = vunpack.c.h.b16 %v1834
        %v2202 = vunpack.c.l.b16 %v1835
        %v2203 = vunpack.c.h.b16 %v1835
        %v2204 = vunpack.c.l.b16 %v1836
        %v2205 = vpack.c.b16 %v2130, %v2125
        %v2206 = vpack.c.b16 %v2131, %v2126
        %v2207 = vpack.c.b16 %v2132, %v2127
        %v2208 = vpack.c.b16 %v2133, %v2128
        %v2209 = vpack.c.b16 %v2134, %v2129
        %v2210 = vpack.c.b16 %v2140, %v2135
        %v2211 = vpack.c.b16 %v2141, %v2136
        %v2212 = vpack.c.b16 %v2142, %v2137
        %v2213 = vpack.c.b16 %v2143, %v2138
        %v2214 = vpack.c.b16 %v2144, %v2139
        %v2215 = vpack.c.b16 %v2150, %v2145
        %v2216 = vpack.c.b16 %v2151, %v2146
        %v2217 = vpack.c.b16 %v2152, %v2147
        %v2218 = vpack.c.b16 %v2153, %v2148
        %v2219 = vpack.c.b16 %v2154, %v2149
        %v2220 = vpack.c.b16 %v2160, %v2155
        %v2221 = vpack.c.b16 %v2161, %v2156
        %v2222 = vpack.c.b16 %v2162, %v2157
        %v2223 = vpack.c.b16 %v2163, %v2158
        %v2224 = vpack.c.b16 %v2164, %v2159
        %v2225 = vpack.c.b16 %v2170, %v2165
        %v2226 = vpack.c.b16 %v2171, %v2166
        %v2227 = vpack.c.b16 %v2172, %v2167
        %v2228 = vpack.c.b16 %v2173, %v2168
        %v2229 = vpack.c.b16 %v2174, %v2169
        %v2230 = vpack.c.b16 %v2180, %v2175
        %v2231 = vpack.c.b16 %v2181, %v2176
        %v2232 = vpack.c.b16 %v2182, %v2177
        %v2233 = vpack.c.b16 %v2183, %v2178
        %v2234 = vpack.c.b16 %v2184, %v2179
        %v2235 = vpack.c.b16 %v2190, %v2185
        %v2236 = vpack.c.b16 %v2191, %v2186
        %v2237 = vpack.c.b16 %v2192, %v2187
        %v2238 = vpack.c.b16 %v2193, %v2188
        %v2239 = vpack.c.b16 %v2194, %v2189
        %v2240 = vpack.c.b16 %v2200, %v2195
        %v2241 = vpack.c.b16 %v2201, %v2196
        %v2242 = vpack.c.b16 %v2202, %v2197
        %v2243 = vpack.c.b16 %v2203, %v2198
        %v2244 = vpack.c.b16 %v2204, %v2199
        %v2421 = vunpack.c.l.b16 %v1837
        %v2422 = vunpack.c.h.b16 %v1837
        %v2423 = vunpack.c.l.b16 %v1838
        %v2424 = vunpack.c.l.b16 %v1839
        %v2425 = vunpack.c.h.b16 %v1839
        %v2426 = vunpack.c.l.b16 %v1840
        %v2427 = vunpack.c.l.b16 %v1841
        %v2428 = vunpack.c.h.b16 %v1841
        %v2429 = vunpack.c.l.b16 %v1842
        %v2430 = vunpack.c.l.b16 %v1843
        %v2431 = vunpack.c.h.b16 %v1843
        %v2432 = vunpack.c.l.b16 %v1844
        %v2433 = vunpack.c.l.b16 %v1845
        %v2434 = vunpack.c.h.b16 %v1845
        %v2435 = vunpack.c.l.b16 %v1846
        %v2436 = vunpack.c.l.b16 %v1847
        %v2437 = vunpack.c.h.b16 %v1847
        %v2438 = vunpack.c.l.b16 %v1848
        %v2439 = vunpack.c.l.b16 %v1849
        %v2440 = vunpack.c.h.b16 %v1849
        %v2441 = vunpack.c.l.b16 %v1850
        %v2442 = vunpack.c.l.b16 %v1851
        %v2443 = vunpack.c.h.b16 %v1851
        %v2444 = vunpack.c.l.b16 %v1852
        %v2445 = vunpack.c.l.b16 %v1853
        %v2446 = vunpack.c.h.b16 %v1853
        %v2447 = vunpack.c.l.b16 %v1854
        %v2448 = vunpack.c.l.b16 %v1855
        %v2449 = vunpack.c.h.b16 %v1855
        %v2450 = vunpack.c.l.b16 %v1856
        %v2451 = vunpack.c.l.b16 %v1857
        %v2452 = vunpack.c.h.b16 %v1857
        %v2453 = vunpack.c.l.b16 %v1858
        %v2454 = vunpack.c.l.b16 %v1859
        %v2455 = vunpack.c.h.b16 %v1859
        %v2456 = vunpack.c.l.b16 %v1860
        %v2457 = vunpack.c.l.b16 %v1861
        %v2458 = vunpack.c.h.b16 %v1861
        %v2459 = vunpack.c.l.b16 %v1862
        %v2460 = vunpack.c.l.b16 %v1863
        %v2461 = vunpack.c.h.b16 %v1863
        %v2462 = vunpack.c.l.b16 %v1864
        %v2463 = vunpack.c.l.b16 %v1865
        %v2464 = vunpack.c.h.b16 %v1865
        %v2465 = vunpack.c.l.b16 %v1866
        %v2466 = vunpack.c.l.b16 %v1867
        %v2467 = vunpack.c.h.b16 %v1867
        %v2468 = vunpack.c.l.b16 %v1868
        %v2469 = vunpack.c.l.b16 %v1869
        %v2470 = vunpack.c.h.b16 %v1869
        %v2471 = vunpack.c.l.b16 %v1870
        %v2472 = vunpack.c.l.b16 %v1871
        %v2473 = vunpack.c.h.b16 %v1871
        %v2474 = vunpack.c.l.b16 %v1872
        %v2475 = vunpack.c.l.b16 %v1873
        %v2476 = vunpack.c.h.b16 %v1873
        %v2477 = vunpack.c.l.b16 %v1874
        %v2478 = vunpack.c.l.b16 %v1875
        %v2479 = vunpack.c.h.b16 %v1875
        %v2480 = vunpack.c.l.b16 %v1876
        %v2481 = vunpack.c.l.b16 %v1877
        %v2482 = vunpack.c.h.b16 %v1877
        %v2483 = vunpack.c.l.b16 %v1878
        %v2484 = vunpack.c.l.b16 %v1879
        %v2485 = vunpack.c.h.b16 %v1879
        %v2486 = vunpack.c.l.b16 %v1880
        %v2487 = vunpack.c.l.b16 %v1881
        %v2488 = vunpack.c.h.b16 %v1881
        %v2489 = vunpack.c.l.b16 %v1882
        %v2490 = vunpack.c.l.b16 %v1883
        %v2491 = vunpack.c.h.b16 %v1883
        %v2492 = vunpack.c.l.b16 %v1884
        %v2493 = vunpack.c.l.b16 %v1885
        %v2494 = vunpack.c.h.b16 %v1885
        %v2495 = vunpack.c.l.b16 %v1886
        %v2496 = vunpack.c.l.b16 %v1887
        %v2497 = vunpack.c.h.b16 %v1887
        %v2498 = vunpack.c.l.b16 %v1888
        %v2499 = vunpack.c.l.b16 %v1889
        %v2500 = vunpack.c.h.b16 %v1889
        %v2501 = vunpack.c.l.b16 %v1890
        %v2502 = vunpack.c.l.b16 %v1891
        %v2503 = vunpack.c.h.b16 %v1891
        %v2504 = vunpack.c.l.b16 %v1892
        %v2505 = vunpack.c.l.b16 %v1893
        %v2506 = vunpack.c.h.b16 %v1893
        %v2507 = vunpack.c.l.b16 %v1894
        %v2508 = vunpack.c.l.b16 %v1895
        %v2509 = vunpack.c.h.b16 %v1895
        %v2510 = vunpack.c.l.b16 %v1896
        %v2511 = vunpack.c.l.b16 %v1897
        %v2512 = vunpack.c.h.b16 %v1897
        %v2513 = vunpack.c.l.b16 %v1898
        %v2514 = vunpack.c.l.b16 %v1899
        %v2515 = vunpack.c.h.b16 %v1899
        %v2516 = vunpack.c.l.b16 %v1900
        %v2517 = vunpack.c.l.b16 %v1901
        %v2518 = vunpack.c.h.b16 %v1901
        %v2519 = vunpack.c.l.b16 %v1902
        %v2520 = vunpack.c.l.b16 %v1903
        %v2521 = vunpack.c.h.b16 %v1903
        %v2522 = vunpack.c.l.b16 %v1904
        %v2523 = vunpack.c.l.b16 %v1905
        %v2524 = vunpack.c.h.b16 %v1905
        %v2525 = vunpack.c.l.b16 %v1906
        %v2526 = vunpack.c.l.b16 %v1907
        %v2527 = vunpack.c.h.b16 %v1907
        %v2528 = vunpack.c.l.b16 %v1908
        %v2529 = vunpack.c.l.b16 %v1909
        %v2530 = vunpack.c.h.b16 %v1909
        %v2531 = vunpack.c.l.b16 %v1910
        %v2532 = vunpack.c.l.b16 %v1911
        %v2533 = vunpack.c.h.b16 %v1911
        %v2534 = vunpack.c.l.b16 %v1912
        %v2535 = vunpack.c.l.b16 %v1913
        %v2536 = vunpack.c.h.b16 %v1913
        %v2537 = vunpack.c.l.b16 %v1914
        %v2538 = vunpack.c.l.b16 %v1915
        %v2539 = vunpack.c.h.b16 %v1915
        %v2540 = vunpack.c.l.b16 %v1916
        %v2541 = vunpack.c.l.b16 %v1917
        %v2542 = vunpack.c.h.b16 %v1917
        %v2543 = vunpack.c.l.b16 %v1918
        %v2544 = vunpack.c.l.b16 %v1919
        %v2545 = vunpack.c.h.b16 %v1919
        %v2546 = vunpack.c.l.b16 %v1920
        %v2547 = vunpack.c.l.b16 %v1921
        %v2548 = vunpack.c.h.b16 %v1921
        %v2549 = vunpack.c.l.b16 %v1922
        %v2550 = vunpack.c.l.b16 %v1923
        %v2551 = vunpack.c.h.b16 %v1923
        %v2552 = vunpack.c.l.b16 %v1924
        %v2553 = vunpack.c.l.b16 %v1925
        %v2554 = vunpack.c.h.b16 %v1925
        %v2555 = vunpack.c.l.b16 %v1926
        %v2556 = vunpack.c.l.b16 %v1927
        %v2557 = vunpack.c.h.b16 %v1927
        %v2558 = vunpack.c.l.b16 %v1928
        %v2559 = vunpack.c.l.b16 %v1929
        %v2560 = vunpack.c.h.b16 %v1929
        %v2561 = vunpack.c.l.b16 %v1930
        %v2562 = vunpack.c.l.b16 %v1931
        %v2563 = vunpack.c.h.b16 %v1931
        %v2564 = vunpack.c.l.b16 %v1932
        %v2565 = vunpack.c.l.b16 %v1933
        %v2566 = vunpack.c.h.b16 %v1933
        %v2567 = vunpack.c.l.b16 %v1934
        %v2568 = vunpack.c.l.b16 %v1935
        %v2569 = vunpack.c.h.b16 %v1935
        %v2570 = vunpack.c.l.b16 %v1936
        %v2571 = vunpack.c.l.b16 %v1937
        %v2572 = vunpack.c.h.b16 %v1937
        %v2573 = vunpack.c.l.b16 %v1938
        %v2574 = vunpack.c.l.b16 %v1939
        %v2575 = vunpack.c.h.b16 %v1939
        %v2576 = vunpack.c.l.b16 %v1940
        %v2577 = vunpack.c.l.b16 %v1941
        %v2578 = vunpack.c.h.b16 %v1941
        %v2579 = vunpack.c.l.b16 %v1942
        %v2580 = vunpack.c.l.b16 %v1943
        %v2581 = vunpack.c.h.b16 %v1943
        %v2582 = vunpack.c.l.b16 %v1944
        %v2583 = vunpack.c.l.b16 %v1945
        %v2584 = vunpack.c.h.b16 %v1945
        %v2585 = vunpack.c.l.b16 %v1946
        %v2586 = vunpack.c.l.b16 %v1947
        %v2587 = vunpack.c.h.b16 %v1947
        %v2588 = vunpack.c.l.b16 %v1948
        %v2589 = vunpack.c.l.b16 %v1949
        %v2590 = vunpack.c.h.b16 %v1949
        %v2591 = vunpack.c.l.b16 %v1950
        %v2592 = vunpack.c.l.b16 %v1951
        %v2593 = vunpack.c.h.b16 %v1951
        %v2594 = vunpack.c.l.b16 %v1952
        %v2595 = vunpack.c.l.b16 %v1953
        %v2596 = vunpack.c.h.b16 %v1953
        %v2597 = vunpack.c.l.b16 %v1954
        %v2598 = vunpack.c.l.b16 %v1955
        %v2599 = vunpack.c.h.b16 %v1955
        %v2600 = vunpack.c.l.b16 %v1956
        %v2601 = vunpack.c.l.b16 %v1957
        %v2602 = vunpack.c.h.b16 %v1957
        %v2603 = vunpack.c.l.b16 %v1958
        %v2604 = vunpack.c.l.b16 %v1959
        %v2605 = vunpack.c.h.b16 %v1959
        %v2606 = vunpack.c.l.b16 %v1960
        %v2607 = vunpack.c.l.b16 %v1961
        %v2608 = vunpack.c.h.b16 %v1961
        %v2609 = vunpack.c.l.b16 %v1962
        %v2610 = vunpack.c.l.b16 %v1963
        %v2611 = vunpack.c.h.b16 %v1963
        %v2612 = vunpack.c.l.b16 %v1964
        %v2613 = vunpack.c.l.b16 %v1965
        %v2614 = vunpack.c.h.b16 %v1965
        %v2615 = vunpack.c.l.b16 %v1966
        %v2616 = vunpack.c.l.b16 %v1967
        %v2617 = vunpack.c.h.b16 %v1967
        %v2618 = vunpack.c.l.b16 %v1968
        %v2619 = vunpack.c.l.b16 %v1969
        %v2620 = vunpack.c.h.b16 %v1969
        %v2621 = vunpack.c.l.b16 %v1970
        %v2622 = vunpack.c.l.b16 %v1971
        %v2623 = vunpack.c.h.b16 %v1971
        %v2624 = vunpack.c.l.b16 %v1972
        %v2625 = vunpack.c.l.b16 %v1973
        %v2626 = vunpack.c.h.b16 %v1973
        %v2627 = vunpack.c.l.b16 %v1974
        %v2628 = vunpack.c.l.b16 %v1975
        %v2629 = vunpack.c.h.b16 %v1975
        %v2630 = vunpack.c.l.b16 %v1976
        %v2631 = vunpack.c.l.b16 %v1977
        %v2632 = vunpack.c.h.b16 %v1977
        %v2633 = vunpack.c.l.b16 %v1978
        %v2634 = vunpack.c.l.b16 %v1979
        %v2635 = vunpack.c.h.b16 %v1979
        %v2636 = vunpack.c.l.b16 %v1980
        %v2637 = vpack.c.b16 %v2424, %v2421
        %v2638 = vpack.c.b16 %v2425, %v2422
        %v2639 = vpack.c.b16 %v2426, %v2423
        %v2640 = vpack.c.b16 %v2430, %v2427
        %v2641 = vpack.c.b16 %v2431, %v2428
        %v2642 = vpack.c.b16 %v2432, %v2429
        %v2643 = vpack.c.b16 %v2436, %v2433
        %v2644 = vpack.c.b16 %v2437, %v2434
        %v2645 = vpack.c.b16 %v2438, %v2435
        %v2646 = vpack.c.b16 %v2442, %v2439
        %v2647 = vpack.c.b16 %v2443, %v2440
        %v2648 = vpack.c.b16 %v2444, %v2441
        %v2649 = vpack.c.b16 %v2448, %v2445
        %v2650 = vpack.c.b16 %v2449, %v2446
        %v2651 = vpack.c.b16 %v2450, %v2447
        %v2652 = vpack.c.b16 %v2454, %v2451
        %v2653 = vpack.c.b16 %v2455, %v2452
        %v2654 = vpack.c.b16 %v2456, %v2453
        %v2655 = vpack.c.b16 %v2460, %v2457
        %v2656 = vpack.c.b16 %v2461, %v2458
        %v2657 = vpack.c.b16 %v2462, %v2459
        %v2658 = vpack.c.b16 %v2466, %v2463
        %v2659 = vpack.c.b16 %v2467, %v2464
        %v2660 = vpack.c.b16 %v2468, %v2465
        %v2661 = vpack.c.b16 %v2472, %v2469
        %v2662 = vpack.c.b16 %v2473, %v2470
        %v2663 = vpack.c.b16 %v2474, %v2471
        %v2664 = vpack.c.b16 %v2478, %v2475
        %v2665 = vpack.c.b16 %v2479, %v2476
        %v2666 = vpack.c.b16 %v2480, %v2477
        %v2667 = vpack.c.b16 %v2484, %v2481
        %v2668 = vpack.c.b16 %v2485, %v2482
        %v2669 = vpack.c.b16 %v2486, %v2483
        %v2670 = vpack.c.b16 %v2490, %v2487
        %v2671 = vpack.c.b16 %v2491, %v2488
        %v2672 = vpack.c.b16 %v2492, %v2489
        %v2673 = vpack.c.b16 %v2496, %v2493
        %v2674 = vpack.c.b16 %v2497, %v2494
        %v2675 = vpack.c.b16 %v2498, %v2495
        %v2676 = vpack.c.b16 %v2502, %v2499
        %v2677 = vpack.c.b16 %v2503, %v2500
        %v2678 = vpack.c.b16 %v2504, %v2501
        %v2679 = vpack.c.b16 %v2508, %v2505
        %v2680 = vpack.c.b16 %v2509, %v2506
        %v2681 = vpack.c.b16 %v2510, %v2507
        %v2682 = vpack.c.b16 %v2514, %v2511
        %v2683 = vpack.c.b16 %v2515, %v2512
        %v2684 = vpack.c.b16 %v2516, %v2513
        %v2685 = vpack.c.b16 %v2520, %v2517
        %v2686 = vpack.c.b16 %v2521, %v2518
        %v2687 = vpack.c.b16 %v2522, %v2519
        %v2688 = vpack.c.b16 %v2526, %v2523
        %v2689 = vpack.c.b16 %v2527, %v2524
        %v2690 = vpack.c.b16 %v2528, %v2525
        %v2691 = vpack.c.b16 %v2532, %v2529
        %v2692 = vpack.c.b16 %v2533, %v2530
        %v2693 = vpack.c.b16 %v2534, %v2531
        %v2694 = vpack.c.b16 %v2538, %v2535
        %v2695 = vpack.c.b16 %v2539, %v2536
        %v2696 = vpack.c.b16 %v2540, %v2537
        %v2697 = vpack.c.b16 %v2544, %v2541
        %v2698 = vpack.c.b16 %v2545, %v2542
        %v2699 = vpack.c.b16 %v2546, %v2543
        %v2700 = vpack.c.b16 %v2550, %v2547
        %v2701 = vpack.c.b16 %v2551, %v2548
        %v2702 = vpack.c.b16 %v2552, %v2549
        %v2703 = vpack.c.b16 %v2556, %v2553
        %v2704 = vpack.c.b16 %v2557, %v2554
        %v2705 = vpack.c.b16 %v2558, %v2555
        %v2706 = vpack.c.b16 %v2562, %v2559
        %v2707 = vpack.c.b16 %v2563, %v2560
        %v2708 = vpack.c.b16 %v2564, %v2561
        %v2709 = vpack.c.b16 %v2568, %v2565
        %v2710 = vpack.c.b16 %v2569, %v2566
        %v2711 = vpack.c.b16 %v2570, %v2567
        %v2712 = vpack.c.b16 %v2574, %v2571
        %v2713 = vpack.c.b16 %v2575, %v2572
        %v2714 = vpack.c.b16 %v2576, %v2573
        %v2715 = vpack.c.b16 %v2580, %v2577
        %v2716 = vpack.c.b16 %v2581, %v2578
        %v2717 = vpack.c.b16 %v2582, %v2579
        %v2718 = vpack.c.b16 %v2586, %v2583
        %v2719 = vpack.c.b16 %v2587, %v2584
        %v2720 = vpack.c.b16 %v2588, %v2585
        %v2721 = vpack.c.b16 %v2592, %v2589
        %v2722 = vpack.c.b16 %v2593, %v2590
        %v2723 = vpack.c.b16 %v2594, %v2591
        %v2724 = vpack.c.b16 %v2598, %v2595
        %v2725 = vpack.c.b16 %v2599, %v2596
        %v2726 = vpack.c.b16 %v2600, %v2597
        %v2727 = vpack.c.b16 %v2604, %v2601
        %v2728 = vpack.c.b16 %v2605, %v2602
        %v2729 = vpack.c.b16 %v2606, %v2603
        %v2730 = vpack.c.b16 %v2610, %v2607
        %v2731 = vpack.c.b16 %v2611, %v2608
        %v2732 = vpack.c.b16 %v2612, %v2609
        %v2733 = vpack.c.b16 %v2616, %v2613
        %v2734 = vpack.c.b16 %v2617, %v2614
        %v2735 = vpack.c.b16 %v2618, %v2615
        %v2736 = vpack.c.b16 %v2622, %v2619
        %v2737 = vpack.c.b16 %v2623, %v2620
        %v2738 = vpack.c.b16 %v2624, %v2621
        %v2739 = vpack.c.b16 %v2628, %v2625
        %v2740 = vpack.c.b16 %v2629, %v2626
        %v2741 = vpack.c.b16 %v2630, %v2627
        %v2742 = vpack.c.b16 %v2634, %v2631
        %v2743 = vpack.c.b16 %v2635, %v2632
        %v2744 = vpack.c.b16 %v2636, %v2633
        %vm2853 = vcmask 523264
        %v2855 = vsel %vm2853, %v2209, 0
        %v2858 = vsel %vm2853, %v2214, 0
        %v2861 = vsel %vm2853, %v2219, 0
        %v2864 = vsel %vm2853, %v2224, 0
        %v2867 = vsel %vm2853, %v2229, 0
        %v2870 = vsel %vm2853, %v2234, 0
        %v2873 = vsel %vm2853, %v2239, 0
        %v2876 = vsel %vm2853, %v2244, 0
        %2878 = vmatprep.subr.bf16.mxu0 %v2659
        %2879 = vmatpush1.bf16.msra.mxu0 %v2658
        %2880 = vmatprep.subr.bf16.mxu0 %v2656
        %2881 = vmatpush1.bf16.msra.mxu0 %v2655
        %2882 = vmatprep.subr.bf16.mxu0 %v2653
        %2883 = vmatpush1.bf16.msra.mxu0 %v2652
        %2884 = vmatprep.subr.bf16.mxu0 %v2650
        %2885 = vmatpush1.bf16.msra.mxu0 %v2649
        %2886 = vmatprep.subr.bf16.mxu0 %v2647
        %2887 = vmatpush1.bf16.msra.mxu0 %v2646
        %2888 = vmatprep.subr.bf16.mxu0 %v2644
        %2889 = vmatpush1.bf16.msra.mxu0 %v2643
        %2890 = vmatprep.subr.bf16.mxu0 %v2641
        %2891 = vmatpush1.bf16.msra.mxu0 %v2640
        %2892 = vmatprep.subr.bf16.mxu0 %v2638
        %2893 = vmatpush1.bf16.msra.mxu0 %v2637
        %2894 = vmatprep.subr.bf16.mxu0 %v2683
        %2895 = vmatpush2.bf16.msra.mxu0 %v2682
        %2896 = vmatprep.subr.bf16.mxu0 %v2680
        %2897 = vmatpush2.bf16.msra.mxu0 %v2679
        %2898 = vmatprep.subr.bf16.mxu0 %v2677
        %2899 = vmatpush2.bf16.msra.mxu0 %v2676
        %2900 = vmatprep.subr.bf16.mxu0 %v2674
        %2901 = vmatpush2.bf16.msra.mxu0 %v2673
        %2902 = vmatprep.subr.bf16.mxu0 %v2671
        %2903 = vmatpush2.bf16.msra.mxu0 %v2670
        %2904 = vmatprep.subr.bf16.mxu0 %v2668
        %2905 = vmatpush2.bf16.msra.mxu0 %v2667
        %2906 = vmatprep.subr.bf16.mxu0 %v2665
        %2907 = vmatpush2.bf16.msra.mxu0 %v2664
        %2908 = vmatprep.subr.bf16.mxu0 %v2662
        %2909 = vmatpush2.bf16.msra.mxu0 %v2661
        %2910 = vmatprep.mubr.bf16.mxu0 %v2206
        %2911 = vmatmul.mubr.bf16.gmra.mxu0 %v2205
        %v2912 = vpop.f32.mrf.mxu0
        %v2913 = vadd.f32 %v2000, %v2912
        %v2914 = vpop.f32.mrf.mxu0
        %v2915 = vadd.f32 %v2000, %v2914
        %v2916 = vpop.f32.mrf.mxu0
        %v2917 = vadd.f32 %v2005, %v2916
        %v2918 = vpop.f32.mrf.mxu0
        %v2919 = vadd.f32 %v2005, %v2918
        %2920 = vmatprep.mubr.bf16.mxu0 %v2211
        %2921 = vmatmul.mubr.bf16.gmra.mxu0 %v2210
        %v2922 = vpop.f32.mrf.mxu0
        %v2923 = vadd.f32 %v2010, %v2922
        %v2924 = vpop.f32.mrf.mxu0
        %v2925 = vadd.f32 %v2010, %v2924
        %v2926 = vpop.f32.mrf.mxu0
        %v2927 = vadd.f32 %v2015, %v2926
        %v2928 = vpop.f32.mrf.mxu0
        %v2929 = vadd.f32 %v2015, %v2928
        %2930 = vmatprep.mubr.bf16.mxu0 %v2216
        %2931 = vmatmul.mubr.bf16.gmra.mxu0 %v2215
        %v2932 = vpop.f32.mrf.mxu0
        %v2933 = vadd.f32 %v2020, %v2932
        %v2934 = vpop.f32.mrf.mxu0
        %v2935 = vadd.f32 %v2020, %v2934
        %v2936 = vpop.f32.mrf.mxu0
        %v2937 = vadd.f32 %v2025, %v2936
        %v2938 = vpop.f32.mrf.mxu0
        %v2939 = vadd.f32 %v2025, %v2938
        %2940 = vmatprep.mubr.bf16.mxu0 %v2221
        %2941 = vmatmul.mubr.bf16.gmra.mxu0 %v2220
        %v2942 = vpop.f32.mrf.mxu0
        %v2943 = vadd.f32 %v2030, %v2942
        %v2944 = vpop.f32.mrf.mxu0
        %v2945 = vadd.f32 %v2030, %v2944
        %v2946 = vpop.f32.mrf.mxu0
        %v2947 = vadd.f32 %v2035, %v2946
        %v2948 = vpop.f32.mrf.mxu0
        %v2949 = vadd.f32 %v2035, %v2948
        %2950 = vmatprep.mubr.bf16.mxu0 %v2226
        %2951 = vmatmul.mubr.bf16.gmra.mxu0 %v2225
        %v2952 = vpop.f32.mrf.mxu0
        %v2953 = vadd.f32 %v2040, %v2952
        %v2954 = vpop.f32.mrf.mxu0
        %v2955 = vadd.f32 %v2040, %v2954
        %v2956 = vpop.f32.mrf.mxu0
        %v2957 = vadd.f32 %v2045, %v2956
        %v2958 = vpop.f32.mrf.mxu0
        %v2959 = vadd.f32 %v2045, %v2958
        %2960 = vmatprep.mubr.bf16.mxu0 %v2231
        %2961 = vmatmul.mubr.bf16.gmra.mxu0 %v2230
        %v2962 = vpop.f32.mrf.mxu0
        %v2963 = vadd.f32 %v2050, %v2962
        %v2964 = vpop.f32.mrf.mxu0
        %v2965 = vadd.f32 %v2050, %v2964
        %v2966 = vpop.f32.mrf.mxu0
        %v2967 = vadd.f32 %v2055, %v2966
        %v2968 = vpop.f32.mrf.mxu0
        %v2969 = vadd.f32 %v2055, %v2968
        %2970 = vmatprep.mubr.bf16.mxu0 %v2236
        %2971 = vmatmul.mubr.bf16.gmra.mxu0 %v2235
        %v2972 = vpop.f32.mrf.mxu0
        %v2973 = vadd.f32 %v2060, %v2972
        %v2974 = vpop.f32.mrf.mxu0
        %v2975 = vadd.f32 %v2060, %v2974
        %v2976 = vpop.f32.mrf.mxu0
        %v2977 = vadd.f32 %v2065, %v2976
        %v2978 = vpop.f32.mrf.mxu0
        %v2979 = vadd.f32 %v2065, %v2978
        %2980 = vmatprep.mubr.bf16.mxu0 %v2241
        %2981 = vmatmul.mubr.bf16.gmra.mxu0 %v2240
        %v2982 = vpop.f32.mrf.mxu0
        %v2983 = vadd.f32 %v2070, %v2982
        %v2984 = vpop.f32.mrf.mxu0
        %v2985 = vadd.f32 %v2070, %v2984
        %v2986 = vpop.f32.mrf.mxu0
        %v2987 = vadd.f32 %v2075, %v2986
        %v2988 = vpop.f32.mrf.mxu0
        %v2989 = vadd.f32 %v2075, %v2988
        %2990 = vdwg.mxu0
        %2991 = vmatprep.subr.bf16.mxu0 %v2707
        %2992 = vmatpush1.bf16.msra.mxu0 %v2706
        %2993 = vmatprep.subr.bf16.mxu0 %v2704
        %2994 = vmatpush1.bf16.msra.mxu0 %v2703
        %2995 = vmatprep.subr.bf16.mxu0 %v2701
        %2996 = vmatpush1.bf16.msra.mxu0 %v2700
        %2997 = vmatprep.subr.bf16.mxu0 %v2698
        %2998 = vmatpush1.bf16.msra.mxu0 %v2697
        %2999 = vmatprep.subr.bf16.mxu0 %v2695
        %3000 = vmatpush1.bf16.msra.mxu0 %v2694
        %3001 = vmatprep.subr.bf16.mxu0 %v2692
        %3002 = vmatpush1.bf16.msra.mxu0 %v2691
        %3003 = vmatprep.subr.bf16.mxu0 %v2689
        %3004 = vmatpush1.bf16.msra.mxu0 %v2688
        %3005 = vmatprep.subr.bf16.mxu0 %v2686
        %3006 = vmatpush1.bf16.msra.mxu0 %v2685
        %3007 = vmatprep.subr.bf16.mxu0 %v2731
        %3008 = vmatpush2.bf16.msra.mxu0 %v2730
        %3009 = vmatprep.subr.bf16.mxu0 %v2728
        %3010 = vmatpush2.bf16.msra.mxu0 %v2727
        %3011 = vmatprep.subr.bf16.mxu0 %v2725
        %3012 = vmatpush2.bf16.msra.mxu0 %v2724
        %3013 = vmatprep.subr.bf16.mxu0 %v2722
        %3014 = vmatpush2.bf16.msra.mxu0 %v2721
        %3015 = vmatprep.subr.bf16.mxu0 %v2719
        %3016 = vmatpush2.bf16.msra.mxu0 %v2718
        %3017 = vmatprep.subr.bf16.mxu0 %v2716
        %3018 = vmatpush2.bf16.msra.mxu0 %v2715
        %3019 = vmatprep.subr.bf16.mxu0 %v2713
        %3020 = vmatpush2.bf16.msra.mxu0 %v2712
        %3021 = vmatprep.subr.bf16.mxu0 %v2710
        %3022 = vmatpush2.bf16.msra.mxu0 %v2709
        %3023 = vmatprep.mubr.bf16.mxu0 %v2208
        %3024 = vmatmul.mubr.bf16.gmra.mxu0 %v2207
        %v3025 = vpop.f32.mrf.mxu0
        %v3026 = vadd.f32 %v2913, %v3025
        %v3027 = vpop.f32.mrf.mxu0
        %v3028 = vadd.f32 %v2915, %v3027
        %v3029 = vpop.f32.mrf.mxu0
        %v3030 = vadd.f32 %v2917, %v3029
        %v3031 = vpop.f32.mrf.mxu0
        %v3032 = vadd.f32 %v2919, %v3031
        %3033 = vmatprep.mubr.bf16.mxu0 %v2213
        %3034 = vmatmul.mubr.bf16.gmra.mxu0 %v2212
        %v3035 = vpop.f32.mrf.mxu0
        %v3036 = vadd.f32 %v2923, %v3035
        %v3037 = vpop.f32.mrf.mxu0
        %v3038 = vadd.f32 %v2925, %v3037
        %v3039 = vpop.f32.mrf.mxu0
        %v3040 = vadd.f32 %v2927, %v3039
        %v3041 = vpop.f32.mrf.mxu0
        %v3042 = vadd.f32 %v2929, %v3041
        %3043 = vmatprep.mubr.bf16.mxu0 %v2218
        %3044 = vmatmul.mubr.bf16.gmra.mxu0 %v2217
        %v3045 = vpop.f32.mrf.mxu0
        %v3046 = vadd.f32 %v2933, %v3045
        %v3047 = vpop.f32.mrf.mxu0
        %v3048 = vadd.f32 %v2935, %v3047
        %v3049 = vpop.f32.mrf.mxu0
        %v3050 = vadd.f32 %v2937, %v3049
        %v3051 = vpop.f32.mrf.mxu0
        %v3052 = vadd.f32 %v2939, %v3051
        %3053 = vmatprep.mubr.bf16.mxu0 %v2223
        %3054 = vmatmul.mubr.bf16.gmra.mxu0 %v2222
        %v3055 = vpop.f32.mrf.mxu0
        %v3056 = vadd.f32 %v2943, %v3055
        %v3057 = vpop.f32.mrf.mxu0
        %v3058 = vadd.f32 %v2945, %v3057
        %v3059 = vpop.f32.mrf.mxu0
        %v3060 = vadd.f32 %v2947, %v3059
        %v3061 = vpop.f32.mrf.mxu0
        %v3062 = vadd.f32 %v2949, %v3061
        %3063 = vmatprep.mubr.bf16.mxu0 %v2228
        %3064 = vmatmul.mubr.bf16.gmra.mxu0 %v2227
        %v3065 = vpop.f32.mrf.mxu0
        %v3066 = vadd.f32 %v2953, %v3065
        %v3067 = vpop.f32.mrf.mxu0
        %v3068 = vadd.f32 %v2955, %v3067
        %v3069 = vpop.f32.mrf.mxu0
        %v3070 = vadd.f32 %v2957, %v3069
        %v3071 = vpop.f32.mrf.mxu0
        %v3072 = vadd.f32 %v2959, %v3071
        %3073 = vmatprep.mubr.bf16.mxu0 %v2233
        %3074 = vmatmul.mubr.bf16.gmra.mxu0 %v2232
        %v3075 = vpop.f32.mrf.mxu0
        %v3076 = vadd.f32 %v2963, %v3075
        %v3077 = vpop.f32.mrf.mxu0
        %v3078 = vadd.f32 %v2965, %v3077
        %v3079 = vpop.f32.mrf.mxu0
        %v3080 = vadd.f32 %v2967, %v3079
        %v3081 = vpop.f32.mrf.mxu0
        %v3082 = vadd.f32 %v2969, %v3081
        %3083 = vmatprep.mubr.bf16.mxu0 %v2238
        %3084 = vmatmul.mubr.bf16.gmra.mxu0 %v2237
        %v3085 = vpop.f32.mrf.mxu0
        %v3086 = vadd.f32 %v2973, %v3085
        %v3087 = vpop.f32.mrf.mxu0
        %v3088 = vadd.f32 %v2975, %v3087
        %v3089 = vpop.f32.mrf.mxu0
        %v3090 = vadd.f32 %v2977, %v3089
        %v3091 = vpop.f32.mrf.mxu0
        %v3092 = vadd.f32 %v2979, %v3091
        %3093 = vmatprep.mubr.bf16.mxu0 %v2243
        %3094 = vmatmul.mubr.bf16.gmra.mxu0 %v2242
        %v3095 = vpop.f32.mrf.mxu0
        %v3096 = vadd.f32 %v2983, %v3095
        %v3097 = vpop.f32.mrf.mxu0
        %v3098 = vadd.f32 %v2985, %v3097
        %v3099 = vpop.f32.mrf.mxu0
        %v3100 = vadd.f32 %v2987, %v3099
        %v3101 = vpop.f32.mrf.mxu0
        %v3102 = vadd.f32 %v2989, %v3101
        %3103 = vdwg.mxu0
        %3104 = vmatprep.subr.bf16.mxu0 0
        %3105 = vmatpush1.bf16.msra.mxu0 0
        %3106 = vmatprep.subr.bf16.mxu0 0
        %3107 = vmatpush1.bf16.msra.mxu0 0
        %3108 = vmatprep.subr.bf16.mxu0 0
        %3109 = vmatpush1.bf16.msra.mxu0 0
        %3110 = vmatprep.subr.bf16.mxu0 0
        %3111 = vmatpush1.bf16.msra.mxu0 0
        %3112 = vmatprep.subr.bf16.mxu0 %v2743
        %3113 = vmatpush1.bf16.msra.mxu0 %v2742
        %3114 = vmatprep.subr.bf16.mxu0 %v2740
        %3115 = vmatpush1.bf16.msra.mxu0 %v2739
        %3116 = vmatprep.subr.bf16.mxu0 %v2737
        %3117 = vmatpush1.bf16.msra.mxu0 %v2736
        %3118 = vmatprep.subr.bf16.mxu0 %v2734
        %3119 = vmatpush1.bf16.msra.mxu0 %v2733
        %3120 = vmatprep.subr.bf16.mxu0 0
        %3121 = vmatpush2.bf16.msra.mxu0 0
        %3122 = vmatprep.subr.bf16.mxu0 0
        %3123 = vmatpush2.bf16.msra.mxu0 0
        %3124 = vmatprep.subr.bf16.mxu0 0
        %3125 = vmatpush2.bf16.msra.mxu0 0
        %3126 = vmatprep.subr.bf16.mxu0 0
        %3127 = vmatpush2.bf16.msra.mxu0 0
        %3128 = vmatprep.subr.bf16.mxu0 0
        %3129 = vmatpush2.bf16.msra.mxu0 0
        %3130 = vmatprep.subr.bf16.mxu0 0
        %3131 = vmatpush2.bf16.msra.mxu0 0
        %3132 = vmatprep.subr.bf16.mxu0 0
        %3133 = vmatpush2.bf16.msra.mxu0 0
        %3134 = vmatprep.subr.bf16.mxu0 0
        %3135 = vmatpush2.bf16.msra.mxu0 0
        %3136 = vmatprep.mubr.bf16.mxu0 0
        %3137 = vmatmul.mubr.bf16.gmra.mxu0 %v2855
        %v3138 = vpop.f32.mrf.mxu0
        %v3139 = vadd.f32 %v3026, %v3138
        %v3140 = vpop.f32.mrf.mxu0
        %v3141 = vadd.f32 %v3028, %v3140
        %v3142 = vpop.f32.mrf.mxu0
        %v3143 = vadd.f32 %v3030, %v3142
        %v3144 = vpop.f32.mrf.mxu0
        %v3145 = vadd.f32 %v3032, %v3144
        %3146 = vmatprep.mubr.bf16.mxu0 0
        %3147 = vmatmul.mubr.bf16.gmra.mxu0 %v2858
        %v3148 = vpop.f32.mrf.mxu0
        %v3149 = vadd.f32 %v3036, %v3148
        %v3150 = vpop.f32.mrf.mxu0
        %v3151 = vadd.f32 %v3038, %v3150
        %v3152 = vpop.f32.mrf.mxu0
        %v3153 = vadd.f32 %v3040, %v3152
        %v3154 = vpop.f32.mrf.mxu0
        %v3155 = vadd.f32 %v3042, %v3154
        %3156 = vmatprep.mubr.bf16.mxu0 0
        %3157 = vmatmul.mubr.bf16.gmra.mxu0 %v2861
        %v3158 = vpop.f32.mrf.mxu0
        %v3159 = vadd.f32 %v3046, %v3158
        %v3160 = vpop.f32.mrf.mxu0
        %v3161 = vadd.f32 %v3048, %v3160
        %v3162 = vpop.f32.mrf.mxu0
        %v3163 = vadd.f32 %v3050, %v3162
        %v3164 = vpop.f32.mrf.mxu0
        %v3165 = vadd.f32 %v3052, %v3164
        %3166 = vmatprep.mubr.bf16.mxu0 0
        %3167 = vmatmul.mubr.bf16.gmra.mxu0 %v2864
        %v3168 = vpop.f32.mrf.mxu0
        %v3169 = vadd.f32 %v3056, %v3168
        %v3170 = vpop.f32.mrf.mxu0
        %v3171 = vadd.f32 %v3058, %v3170
        %v3172 = vpop.f32.mrf.mxu0
        %v3173 = vadd.f32 %v3060, %v3172
        %v3174 = vpop.f32.mrf.mxu0
        %v3175 = vadd.f32 %v3062, %v3174
        %3176 = vmatprep.mubr.bf16.mxu0 0
        %3177 = vmatmul.mubr.bf16.gmra.mxu0 %v2867
        %v3178 = vpop.f32.mrf.mxu0
        %v3179 = vadd.f32 %v3066, %v3178
        %v3180 = vpop.f32.mrf.mxu0
        %v3181 = vadd.f32 %v3068, %v3180
        %v3182 = vpop.f32.mrf.mxu0
        %v3183 = vadd.f32 %v3070, %v3182
        %v3184 = vpop.f32.mrf.mxu0
        %v3185 = vadd.f32 %v3072, %v3184
        %3186 = vmatprep.mubr.bf16.mxu0 0
        %3187 = vmatmul.mubr.bf16.gmra.mxu0 %v2870
        %v3188 = vpop.f32.mrf.mxu0
        %v3189 = vadd.f32 %v3076, %v3188
        %v3190 = vpop.f32.mrf.mxu0
        %v3191 = vadd.f32 %v3078, %v3190
        %v3192 = vpop.f32.mrf.mxu0
        %v3193 = vadd.f32 %v3080, %v3192
        %v3194 = vpop.f32.mrf.mxu0
        %v3195 = vadd.f32 %v3082, %v3194
        %3196 = vmatprep.mubr.bf16.mxu0 0
        %3197 = vmatmul.mubr.bf16.gmra.mxu0 %v2873
        %v3198 = vpop.f32.mrf.mxu0
        %v3199 = vadd.f32 %v3086, %v3198
        %v3200 = vpop.f32.mrf.mxu0
        %v3201 = vadd.f32 %v3088, %v3200
        %v3202 = vpop.f32.mrf.mxu0
        %v3203 = vadd.f32 %v3090, %v3202
        %v3204 = vpop.f32.mrf.mxu0
        %v3205 = vadd.f32 %v3092, %v3204
        %3206 = vmatprep.mubr.bf16.mxu0 0
        %3207 = vmatmul.mubr.bf16.gmra.mxu0 %v2876
        %v3208 = vpop.f32.mrf.mxu0
        %v3209 = vadd.f32 %v3096, %v3208
        %v3210 = vpop.f32.mrf.mxu0
        %v3211 = vadd.f32 %v3098, %v3210
        %v3212 = vpop.f32.mrf.mxu0
        %v3213 = vadd.f32 %v3100, %v3212
        %v3214 = vpop.f32.mrf.mxu0
        %v3215 = vadd.f32 %v3102, %v3214
        %3216 = vdwg.mxu0
        %3217 = vmatprep.subr.bf16.mxu0 0
        %3218 = vmatpush1.bf16.msra.mxu0 %v2660
        %3219 = vmatprep.subr.bf16.mxu0 0
        %3220 = vmatpush1.bf16.msra.mxu0 %v2657
        %3221 = vmatprep.subr.bf16.mxu0 0
        %3222 = vmatpush1.bf16.msra.mxu0 %v2654
        %3223 = vmatprep.subr.bf16.mxu0 0
        %3224 = vmatpush1.bf16.msra.mxu0 %v2651
        %3225 = vmatprep.subr.bf16.mxu0 0
        %3226 = vmatpush1.bf16.msra.mxu0 %v2648
        %3227 = vmatprep.subr.bf16.mxu0 0
        %3228 = vmatpush1.bf16.msra.mxu0 %v2645
        %3229 = vmatprep.subr.bf16.mxu0 0
        %3230 = vmatpush1.bf16.msra.mxu0 %v2642
        %3231 = vmatprep.subr.bf16.mxu0 0
        %3232 = vmatpush1.bf16.msra.mxu0 %v2639
        %3233 = vmatprep.subr.bf16.mxu0 0
        %3234 = vmatpush2.bf16.msra.mxu0 %v2684
        %3235 = vmatprep.subr.bf16.mxu0 0
        %3236 = vmatpush2.bf16.msra.mxu0 %v2681
        %3237 = vmatprep.subr.bf16.mxu0 0
        %3238 = vmatpush2.bf16.msra.mxu0 %v2678
        %3239 = vmatprep.subr.bf16.mxu0 0
        %3240 = vmatpush2.bf16.msra.mxu0 %v2675
        %3241 = vmatprep.subr.bf16.mxu0 0
        %3242 = vmatpush2.bf16.msra.mxu0 %v2672
        %3243 = vmatprep.subr.bf16.mxu0 0
        %3244 = vmatpush2.bf16.msra.mxu0 %v2669
        %3245 = vmatprep.subr.bf16.mxu0 0
        %3246 = vmatpush2.bf16.msra.mxu0 %v2666
        %3247 = vmatprep.subr.bf16.mxu0 0
        %3248 = vmatpush2.bf16.msra.mxu0 %v2663
        %3249 = vmatprep.mubr.bf16.mxu0 %v2206
        %3250 = vmatmul.mubr.bf16.gmra.mxu0 %v2205
        %v3251 = vpop.f32.mrf.mxu0
        %v3252 = vadd.f32 %v2000, %v3251
        %v3253 = vpop.f32.mrf.mxu0
        %v3254 = vpop.f32.mrf.mxu0
        %v3255 = vadd.f32 %v2005, %v3254
        %v3256 = vpop.f32.mrf.mxu0
        %3257 = vmatprep.mubr.bf16.mxu0 %v2211
        %3258 = vmatmul.mubr.bf16.gmra.mxu0 %v2210
        %v3259 = vpop.f32.mrf.mxu0
        %v3260 = vadd.f32 %v2010, %v3259
        %v3261 = vpop.f32.mrf.mxu0
        %v3262 = vpop.f32.mrf.mxu0
        %v3263 = vadd.f32 %v2015, %v3262
        %v3264 = vpop.f32.mrf.mxu0
        %3265 = vmatprep.mubr.bf16.mxu0 %v2216
        %3266 = vmatmul.mubr.bf16.gmra.mxu0 %v2215
        %v3267 = vpop.f32.mrf.mxu0
        %v3268 = vadd.f32 %v2020, %v3267
        %v3269 = vpop.f32.mrf.mxu0
        %v3270 = vpop.f32.mrf.mxu0
        %v3271 = vadd.f32 %v2025, %v3270
        %v3272 = vpop.f32.mrf.mxu0
        %3273 = vmatprep.mubr.bf16.mxu0 %v2221
        %3274 = vmatmul.mubr.bf16.gmra.mxu0 %v2220
        %v3275 = vpop.f32.mrf.mxu0
        %v3276 = vadd.f32 %v2030, %v3275
        %v3277 = vpop.f32.mrf.mxu0
        %v3278 = vpop.f32.mrf.mxu0
        %v3279 = vadd.f32 %v2035, %v3278
        %v3280 = vpop.f32.mrf.mxu0
        %3281 = vmatprep.mubr.bf16.mxu0 %v2226
        %3282 = vmatmul.mubr.bf16.gmra.mxu0 %v2225
        %v3283 = vpop.f32.mrf.mxu0
        %v3284 = vadd.f32 %v2040, %v3283
        %v3285 = vpop.f32.mrf.mxu0
        %v3286 = vpop.f32.mrf.mxu0
        %v3287 = vadd.f32 %v2045, %v3286
        %v3288 = vpop.f32.mrf.mxu0
        %3289 = vmatprep.mubr.bf16.mxu0 %v2231
        %3290 = vmatmul.mubr.bf16.gmra.mxu0 %v2230
        %v3291 = vpop.f32.mrf.mxu0
        %v3292 = vadd.f32 %v2050, %v3291
        %v3293 = vpop.f32.mrf.mxu0
        %v3294 = vpop.f32.mrf.mxu0
        %v3295 = vadd.f32 %v2055, %v3294
        %v3296 = vpop.f32.mrf.mxu0
        %3297 = vmatprep.mubr.bf16.mxu0 %v2236
        %3298 = vmatmul.mubr.bf16.gmra.mxu0 %v2235
        %v3299 = vpop.f32.mrf.mxu0
        %v3300 = vadd.f32 %v2060, %v3299
        %v3301 = vpop.f32.mrf.mxu0
        %v3302 = vpop.f32.mrf.mxu0
        %v3303 = vadd.f32 %v2065, %v3302
        %v3304 = vpop.f32.mrf.mxu0
        %3305 = vmatprep.mubr.bf16.mxu0 %v2241
        %3306 = vmatmul.mubr.bf16.gmra.mxu0 %v2240
        %v3307 = vpop.f32.mrf.mxu0
        %v3308 = vadd.f32 %v2070, %v3307
        %v3309 = vpop.f32.mrf.mxu0
        %v3310 = vpop.f32.mrf.mxu0
        %v3311 = vadd.f32 %v2075, %v3310
        %v3312 = vpop.f32.mrf.mxu0
        %3313 = vdwg.mxu0
        %3314 = vmatprep.subr.bf16.mxu0 0
        %3315 = vmatpush1.bf16.msra.mxu0 %v2708
        %3316 = vmatprep.subr.bf16.mxu0 0
        %3317 = vmatpush1.bf16.msra.mxu0 %v2705
        %3318 = vmatprep.subr.bf16.mxu0 0
        %3319 = vmatpush1.bf16.msra.mxu0 %v2702
        %3320 = vmatprep.subr.bf16.mxu0 0
        %3321 = vmatpush1.bf16.msra.mxu0 %v2699
        %3322 = vmatprep.subr.bf16.mxu0 0
        %3323 = vmatpush1.bf16.msra.mxu0 %v2696
        %3324 = vmatprep.subr.bf16.mxu0 0
        %3325 = vmatpush1.bf16.msra.mxu0 %v2693
        %3326 = vmatprep.subr.bf16.mxu0 0
        %3327 = vmatpush1.bf16.msra.mxu0 %v2690
        %3328 = vmatprep.subr.bf16.mxu0 0
        %3329 = vmatpush1.bf16.msra.mxu0 %v2687
        %3330 = vmatprep.subr.bf16.mxu0 0
        %3331 = vmatpush2.bf16.msra.mxu0 %v2732
        %3332 = vmatprep.subr.bf16.mxu0 0
        %3333 = vmatpush2.bf16.msra.mxu0 %v2729
        %3334 = vmatprep.subr.bf16.mxu0 0
        %3335 = vmatpush2.bf16.msra.mxu0 %v2726
        %3336 = vmatprep.subr.bf16.mxu0 0
        %3337 = vmatpush2.bf16.msra.mxu0 %v2723
        %3338 = vmatprep.subr.bf16.mxu0 0
        %3339 = vmatpush2.bf16.msra.mxu0 %v2720
        %3340 = vmatprep.subr.bf16.mxu0 0
        %3341 = vmatpush2.bf16.msra.mxu0 %v2717
        %3342 = vmatprep.subr.bf16.mxu0 0
        %3343 = vmatpush2.bf16.msra.mxu0 %v2714
        %3344 = vmatprep.subr.bf16.mxu0 0
        %3345 = vmatpush2.bf16.msra.mxu0 %v2711
        %3346 = vmatprep.mubr.bf16.mxu0 %v2208
        %3347 = vmatmul.mubr.bf16.gmra.mxu0 %v2207
        %v3348 = vpop.f32.mrf.mxu0
        %v3349 = vadd.f32 %v3252, %v3348
        %v3350 = vpop.f32.mrf.mxu0
        %v3351 = vpop.f32.mrf.mxu0
        %v3352 = vadd.f32 %v3255, %v3351
        %v3353 = vpop.f32.mrf.mxu0
        %3354 = vmatprep.mubr.bf16.mxu0 %v2213
        %3355 = vmatmul.mubr.bf16.gmra.mxu0 %v2212
        %v3356 = vpop.f32.mrf.mxu0
        %v3357 = vadd.f32 %v3260, %v3356
        %v3358 = vpop.f32.mrf.mxu0
        %v3359 = vpop.f32.mrf.mxu0
        %v3360 = vadd.f32 %v3263, %v3359
        %v3361 = vpop.f32.mrf.mxu0
        %3362 = vmatprep.mubr.bf16.mxu0 %v2218
        %3363 = vmatmul.mubr.bf16.gmra.mxu0 %v2217
        %v3364 = vpop.f32.mrf.mxu0
        %v3365 = vadd.f32 %v3268, %v3364
        %v3366 = vpop.f32.mrf.mxu0
        %v3367 = vpop.f32.mrf.mxu0
        %v3368 = vadd.f32 %v3271, %v3367
        %v3369 = vpop.f32.mrf.mxu0
        %3370 = vmatprep.mubr.bf16.mxu0 %v2223
        %3371 = vmatmul.mubr.bf16.gmra.mxu0 %v2222
        %v3372 = vpop.f32.mrf.mxu0
        %v3373 = vadd.f32 %v3276, %v3372
        %v3374 = vpop.f32.mrf.mxu0
        %v3375 = vpop.f32.mrf.mxu0
        %v3376 = vadd.f32 %v3279, %v3375
        %v3377 = vpop.f32.mrf.mxu0
        %3378 = vmatprep.mubr.bf16.mxu0 %v2228
        %3379 = vmatmul.mubr.bf16.gmra.mxu0 %v2227
        %v3380 = vpop.f32.mrf.mxu0
        %v3381 = vadd.f32 %v3284, %v3380
        %v3382 = vpop.f32.mrf.mxu0
        %v3383 = vpop.f32.mrf.mxu0
        %v3384 = vadd.f32 %v3287, %v3383
        %v3385 = vpop.f32.mrf.mxu0
        %3386 = vmatprep.mubr.bf16.mxu0 %v2233
        %3387 = vmatmul.mubr.bf16.gmra.mxu0 %v2232
        %v3388 = vpop.f32.mrf.mxu0
        %v3389 = vadd.f32 %v3292, %v3388
        %v3390 = vpop.f32.mrf.mxu0
        %v3391 = vpop.f32.mrf.mxu0
        %v3392 = vadd.f32 %v3295, %v3391
        %v3393 = vpop.f32.mrf.mxu0
        %3394 = vmatprep.mubr.bf16.mxu0 %v2238
        %3395 = vmatmul.mubr.bf16.gmra.mxu0 %v2237
        %v3396 = vpop.f32.mrf.mxu0
        %v3397 = vadd.f32 %v3300, %v3396
        %v3398 = vpop.f32.mrf.mxu0
        %v3399 = vpop.f32.mrf.mxu0
        %v3400 = vadd.f32 %v3303, %v3399
        %v3401 = vpop.f32.mrf.mxu0
        %3402 = vmatprep.mubr.bf16.mxu0 %v2243
        %3403 = vmatmul.mubr.bf16.gmra.mxu0 %v2242
        %v3404 = vpop.f32.mrf.mxu0
        %v3405 = vadd.f32 %v3308, %v3404
        %v3406 = vpop.f32.mrf.mxu0
        %v3407 = vpop.f32.mrf.mxu0
        %v3408 = vadd.f32 %v3311, %v3407
        %v3409 = vpop.f32.mrf.mxu0
        %3410 = vdwg.mxu0
        %3411 = vmatprep.subr.bf16.mxu0 0
        %3412 = vmatpush1.bf16.msra.mxu0 0
        %3413 = vmatprep.subr.bf16.mxu0 0
        %3414 = vmatpush1.bf16.msra.mxu0 0
        %3415 = vmatprep.subr.bf16.mxu0 0
        %3416 = vmatpush1.bf16.msra.mxu0 0
        %3417 = vmatprep.subr.bf16.mxu0 0
        %3418 = vmatpush1.bf16.msra.mxu0 0
        %3419 = vmatprep.subr.bf16.mxu0 0
        %3420 = vmatpush1.bf16.msra.mxu0 %v2744
        %3421 = vmatprep.subr.bf16.mxu0 0
        %3422 = vmatpush1.bf16.msra.mxu0 %v2741
        %3423 = vmatprep.subr.bf16.mxu0 0
        %3424 = vmatpush1.bf16.msra.mxu0 %v2738
        %3425 = vmatprep.subr.bf16.mxu0 0
        %3426 = vmatpush1.bf16.msra.mxu0 %v2735
        %3427 = vmatprep.subr.bf16.mxu0 0
        %3428 = vmatpush2.bf16.msra.mxu0 0
        %3429 = vmatprep.subr.bf16.mxu0 0
        %3430 = vmatpush2.bf16.msra.mxu0 0
        %3431 = vmatprep.subr.bf16.mxu0 0
        %3432 = vmatpush2.bf16.msra.mxu0 0
        %3433 = vmatprep.subr.bf16.mxu0 0
        %3434 = vmatpush2.bf16.msra.mxu0 0
        %3435 = vmatprep.subr.bf16.mxu0 0
        %3436 = vmatpush2.bf16.msra.mxu0 0
        %3437 = vmatprep.subr.bf16.mxu0 0
        %3438 = vmatpush2.bf16.msra.mxu0 0
        %3439 = vmatprep.subr.bf16.mxu0 0
        %3440 = vmatpush2.bf16.msra.mxu0 0
        %3441 = vmatprep.subr.bf16.mxu0 0
        %3442 = vmatpush2.bf16.msra.mxu0 0
        %3443 = vmatprep.mubr.bf16.mxu0 0
        %3444 = vmatmul.mubr.bf16.gmra.mxu0 %v2855
        %v3445 = vpop.f32.mrf.mxu0
        %v3446 = vadd.f32 %v3349, %v3445
        %v3447 = vpop.f32.mrf.mxu0
        %v3448 = vpop.f32.mrf.mxu0
        %v3449 = vadd.f32 %v3352, %v3448
        %v3450 = vpop.f32.mrf.mxu0
        %3451 = vmatprep.mubr.bf16.mxu0 0
        %3452 = vmatmul.mubr.bf16.gmra.mxu0 %v2858
        %v3453 = vpop.f32.mrf.mxu0
        %v3454 = vadd.f32 %v3357, %v3453
        %v3455 = vpop.f32.mrf.mxu0
        %v3456 = vpop.f32.mrf.mxu0
        %v3457 = vadd.f32 %v3360, %v3456
        %v3458 = vpop.f32.mrf.mxu0
        %3459 = vmatprep.mubr.bf16.mxu0 0
        %3460 = vmatmul.mubr.bf16.gmra.mxu0 %v2861
        %v3461 = vpop.f32.mrf.mxu0
        %v3462 = vadd.f32 %v3365, %v3461
        %v3463 = vpop.f32.mrf.mxu0
        %v3464 = vpop.f32.mrf.mxu0
        %v3465 = vadd.f32 %v3368, %v3464
        %v3466 = vpop.f32.mrf.mxu0
        %3467 = vmatprep.mubr.bf16.mxu0 0
        %3468 = vmatmul.mubr.bf16.gmra.mxu0 %v2864
        %v3469 = vpop.f32.mrf.mxu0
        %v3470 = vadd.f32 %v3373, %v3469
        %v3471 = vpop.f32.mrf.mxu0
        %v3472 = vpop.f32.mrf.mxu0
        %v3473 = vadd.f32 %v3376, %v3472
        %v3474 = vpop.f32.mrf.mxu0
        %3475 = vmatprep.mubr.bf16.mxu0 0
        %3476 = vmatmul.mubr.bf16.gmra.mxu0 %v2867
        %v3477 = vpop.f32.mrf.mxu0
        %v3478 = vadd.f32 %v3381, %v3477
        %v3479 = vpop.f32.mrf.mxu0
        %v3480 = vpop.f32.mrf.mxu0
        %v3481 = vadd.f32 %v3384, %v3480
        %v3482 = vpop.f32.mrf.mxu0
        %3483 = vmatprep.mubr.bf16.mxu0 0
        %3484 = vmatmul.mubr.bf16.gmra.mxu0 %v2870
        %v3485 = vpop.f32.mrf.mxu0
        %v3486 = vadd.f32 %v3389, %v3485
        %v3487 = vpop.f32.mrf.mxu0
        %v3488 = vpop.f32.mrf.mxu0
        %v3489 = vadd.f32 %v3392, %v3488
        %v3490 = vpop.f32.mrf.mxu0
        %3491 = vmatprep.mubr.bf16.mxu0 0
        %3492 = vmatmul.mubr.bf16.gmra.mxu0 %v2873
        %v3493 = vpop.f32.mrf.mxu0
        %v3494 = vadd.f32 %v3397, %v3493
        %v3495 = vpop.f32.mrf.mxu0
        %v3496 = vpop.f32.mrf.mxu0
        %v3497 = vadd.f32 %v3400, %v3496
        %v3498 = vpop.f32.mrf.mxu0
        %3499 = vmatprep.mubr.bf16.mxu0 0
        %3500 = vmatmul.mubr.bf16.gmra.mxu0 %v2876
        %v3501 = vpop.f32.mrf.mxu0
        %v3502 = vadd.f32 %v3405, %v3501
        %v3503 = vpop.f32.mrf.mxu0
        %v3504 = vpop.f32.mrf.mxu0
        %v3505 = vadd.f32 %v3408, %v3504
        %v3506 = vpop.f32.mrf.mxu0
        %3507 = vdwg.mxu0
        %v3508 = vxor.u32 %v3139, 2147483648
        %v3509 = vxor.u32 %v3141, 2147483648
        %v3510 = vxor.u32 %v3446, 2147483648
        %v3511 = vxor.u32 %v3143, 2147483648
        %v3512 = vxor.u32 %v3145, 2147483648
        %v3513 = vxor.u32 %v3449, 2147483648
        %v3514 = vxor.u32 %v3149, 2147483648
        %v3515 = vxor.u32 %v3151, 2147483648
        %v3516 = vxor.u32 %v3454, 2147483648
        %v3517 = vxor.u32 %v3153, 2147483648
        %v3518 = vxor.u32 %v3155, 2147483648
        %v3519 = vxor.u32 %v3457, 2147483648
        %v3520 = vmul.f32 %v3508, 1.442695
        %v3521 = vpow.pop %v3520
        %v3522 = vmul.f32 %v3509, 1.442695
        %v3523 = vpow.pop %v3522
        %v3524 = vmul.f32 %v3510, 1.442695
        %v3525 = vpow.pop %v3524
        %v3526 = vmul.f32 %v3511, 1.442695
        %v3527 = vpow.pop %v3526
        %v3528 = vmul.f32 %v3512, 1.442695
        %v3529 = vpow.pop %v3528
        %v3530 = vmul.f32 %v3513, 1.442695
        %v3531 = vpow.pop %v3530
        %v3532 = vmul.f32 %v3514, 1.442695
        %v3533 = vpow.pop %v3532
        %v3534 = vmul.f32 %v3515, 1.442695
        %v3535 = vpow.pop %v3534
        %v3536 = vmul.f32 %v3516, 1.442695
        %v3537 = vpow.pop %v3536
        %v3538 = vmul.f32 %v3517, 1.442695
        %v3539 = vpow.pop %v3538
        %v3540 = vmul.f32 %v3518, 1.442695
        %v3541 = vpow.pop %v3540
        %v3542 = vmul.f32 %v3519, 1.442695
        %v3543 = vpow.pop %v3542
        %v3544 = vadd.f32 %v3521, 1.0
        %v3545 = vadd.f32 %v3523, 1.0
        %v3546 = vadd.f32 %v3525, 1.0
        %v3547 = vadd.f32 %v3527, 1.0
        %v3548 = vadd.f32 %v3529, 1.0
        %v3549 = vadd.f32 %v3531, 1.0
        %v3550 = vadd.f32 %v3533, 1.0
        %v3551 = vadd.f32 %v3535, 1.0
        %v3552 = vadd.f32 %v3537, 1.0
        %v3553 = vadd.f32 %v3539, 1.0
        %v3554 = vadd.f32 %v3541, 1.0
        %v3555 = vadd.f32 %v3543, 1.0
        %v3556 = vrcp.pop %v3544
        %v3557 = vmul.f32 1.0, %v3556
        %v3558 = vrcp.pop %v3545
        %v3559 = vmul.f32 1.0, %v3558
        %v3560 = vrcp.pop %v3546
        %v3561 = vmul.f32 1.0, %v3560
        %v3562 = vrcp.pop %v3547
        %v3563 = vmul.f32 1.0, %v3562
        %v3564 = vrcp.pop %v3548
        %v3565 = vmul.f32 1.0, %v3564
        %v3566 = vrcp.pop %v3549
        %v3567 = vmul.f32 1.0, %v3566
        %v3568 = vrcp.pop %v3550
        %v3569 = vmul.f32 1.0, %v3568
        %v3570 = vrcp.pop %v3551
        %v3571 = vmul.f32 1.0, %v3570
        %v3572 = vrcp.pop %v3552
        %v3573 = vmul.f32 1.0, %v3572
        %v3574 = vrcp.pop %v3553
        %v3575 = vmul.f32 1.0, %v3574
        %v3576 = vrcp.pop %v3554
        %v3577 = vmul.f32 1.0, %v3576
        %v3578 = vrcp.pop %v3555
        %v3579 = vmul.f32 1.0, %v3578
        %v3580 = vxor.u32 %v3159, 2147483648
        %v3581 = vxor.u32 %v3161, 2147483648
        %v3582 = vxor.u32 %v3462, 2147483648
        %v3583 = vxor.u32 %v3163, 2147483648
        %v3584 = vxor.u32 %v3165, 2147483648
        %v3585 = vxor.u32 %v3465, 2147483648
        %v3586 = vxor.u32 %v3169, 2147483648
        %v3587 = vxor.u32 %v3171, 2147483648
        %v3588 = vxor.u32 %v3470, 2147483648
        %v3589 = vxor.u32 %v3173, 2147483648
        %v3590 = vxor.u32 %v3175, 2147483648
        %v3591 = vxor.u32 %v3473, 2147483648
        %v3592 = vmul.f32 %v3580, 1.442695
        %v3593 = vpow.pop %v3592
        %v3594 = vmul.f32 %v3581, 1.442695
        %v3595 = vpow.pop %v3594
        %v3596 = vmul.f32 %v3582, 1.442695
        %v3597 = vpow.pop %v3596
        %v3598 = vmul.f32 %v3583, 1.442695
        %v3599 = vpow.pop %v3598
        %v3600 = vmul.f32 %v3584, 1.442695
        %v3601 = vpow.pop %v3600
        %v3602 = vmul.f32 %v3585, 1.442695
        %v3603 = vpow.pop %v3602
        %v3604 = vmul.f32 %v3586, 1.442695
        %v3605 = vpow.pop %v3604
        %v3606 = vmul.f32 %v3587, 1.442695
        %v3607 = vpow.pop %v3606
        %v3608 = vmul.f32 %v3588, 1.442695
        %v3609 = vpow.pop %v3608
        %v3610 = vmul.f32 %v3589, 1.442695
        %v3611 = vpow.pop %v3610
        %v3612 = vmul.f32 %v3590, 1.442695
        %v3613 = vpow.pop %v3612
        %v3614 = vmul.f32 %v3591, 1.442695
        %v3615 = vpow.pop %v3614
        %v3616 = vadd.f32 %v3593, 1.0
        %v3617 = vadd.f32 %v3595, 1.0
        %v3618 = vadd.f32 %v3597, 1.0
        %v3619 = vadd.f32 %v3599, 1.0
        %v3620 = vadd.f32 %v3601, 1.0
        %v3621 = vadd.f32 %v3603, 1.0
        %v3622 = vadd.f32 %v3605, 1.0
        %v3623 = vadd.f32 %v3607, 1.0
        %v3624 = vadd.f32 %v3609, 1.0
        %v3625 = vadd.f32 %v3611, 1.0
        %v3626 = vadd.f32 %v3613, 1.0
        %v3627 = vadd.f32 %v3615, 1.0
        %v3628 = vrcp.pop %v3616
        %v3629 = vmul.f32 1.0, %v3628
        %v3630 = vrcp.pop %v3617
        %v3631 = vmul.f32 1.0, %v3630
        %v3632 = vrcp.pop %v3618
        %v3633 = vmul.f32 1.0, %v3632
        %v3634 = vrcp.pop %v3619
        %v3635 = vmul.f32 1.0, %v3634
        %v3636 = vrcp.pop %v3620
        %v3637 = vmul.f32 1.0, %v3636
        %v3638 = vrcp.pop %v3621
        %v3639 = vmul.f32 1.0, %v3638
        %v3640 = vrcp.pop %v3622
        %v3641 = vmul.f32 1.0, %v3640
        %v3642 = vrcp.pop %v3623
        %v3643 = vmul.f32 1.0, %v3642
        %v3644 = vrcp.pop %v3624
        %v3645 = vmul.f32 1.0, %v3644
        %v3646 = vrcp.pop %v3625
        %v3647 = vmul.f32 1.0, %v3646
        %v3648 = vrcp.pop %v3626
        %v3649 = vmul.f32 1.0, %v3648
        %v3650 = vrcp.pop %v3627
        %v3651 = vmul.f32 1.0, %v3650
        %v3652 = vxor.u32 %v3179, 2147483648
        %v3653 = vxor.u32 %v3181, 2147483648
        %v3654 = vxor.u32 %v3478, 2147483648
        %v3655 = vxor.u32 %v3183, 2147483648
        %v3656 = vxor.u32 %v3185, 2147483648
        %v3657 = vxor.u32 %v3481, 2147483648
        %v3658 = vxor.u32 %v3189, 2147483648
        %v3659 = vxor.u32 %v3191, 2147483648
        %v3660 = vxor.u32 %v3486, 2147483648
        %v3661 = vxor.u32 %v3193, 2147483648
        %v3662 = vxor.u32 %v3195, 2147483648
        %v3663 = vxor.u32 %v3489, 2147483648
        %v3664 = vmul.f32 %v3652, 1.442695
        %v3665 = vpow.pop %v3664
        %v3666 = vmul.f32 %v3653, 1.442695
        %v3667 = vpow.pop %v3666
        %v3668 = vmul.f32 %v3654, 1.442695
        %v3669 = vpow.pop %v3668
        %v3670 = vmul.f32 %v3655, 1.442695
        %v3671 = vpow.pop %v3670
        %v3672 = vmul.f32 %v3656, 1.442695
        %v3673 = vpow.pop %v3672
        %v3674 = vmul.f32 %v3657, 1.442695
        %v3675 = vpow.pop %v3674
        %v3676 = vmul.f32 %v3658, 1.442695
        %v3677 = vpow.pop %v3676
        %v3678 = vmul.f32 %v3659, 1.442695
        %v3679 = vpow.pop %v3678
        %v3680 = vmul.f32 %v3660, 1.442695
        %v3681 = vpow.pop %v3680
        %v3682 = vmul.f32 %v3661, 1.442695
        %v3683 = vpow.pop %v3682
        %v3684 = vmul.f32 %v3662, 1.442695
        %v3685 = vpow.pop %v3684
        %v3686 = vmul.f32 %v3663, 1.442695
        %v3687 = vpow.pop %v3686
        %v3688 = vadd.f32 %v3665, 1.0
        %v3689 = vadd.f32 %v3667, 1.0
        %v3690 = vadd.f32 %v3669, 1.0
        %v3691 = vadd.f32 %v3671, 1.0
        %v3692 = vadd.f32 %v3673, 1.0
        %v3693 = vadd.f32 %v3675, 1.0
        %v3694 = vadd.f32 %v3677, 1.0
        %v3695 = vadd.f32 %v3679, 1.0
        %v3696 = vadd.f32 %v3681, 1.0
        %v3697 = vadd.f32 %v3683, 1.0
        %v3698 = vadd.f32 %v3685, 1.0
        %v3699 = vadd.f32 %v3687, 1.0
        %v3700 = vrcp.pop %v3688
        %v3701 = vmul.f32 1.0, %v3700
        %v3702 = vrcp.pop %v3689
        %v3703 = vmul.f32 1.0, %v3702
        %v3704 = vrcp.pop %v3690
        %v3705 = vmul.f32 1.0, %v3704
        %v3706 = vrcp.pop %v3691
        %v3707 = vmul.f32 1.0, %v3706
        %v3708 = vrcp.pop %v3692
        %v3709 = vmul.f32 1.0, %v3708
        %v3710 = vrcp.pop %v3693
        %v3711 = vmul.f32 1.0, %v3710
        %v3712 = vrcp.pop %v3694
        %v3713 = vmul.f32 1.0, %v3712
        %v3714 = vrcp.pop %v3695
        %v3715 = vmul.f32 1.0, %v3714
        %v3716 = vrcp.pop %v3696
        %v3717 = vmul.f32 1.0, %v3716
        %v3718 = vrcp.pop %v3697
        %v3719 = vmul.f32 1.0, %v3718
        %v3720 = vrcp.pop %v3698
        %v3721 = vmul.f32 1.0, %v3720
        %v3722 = vrcp.pop %v3699
        %v3723 = vmul.f32 1.0, %v3722
        %v3724 = vtanh.pop %v3199
        %v3725 = vtanh.pop %v3201
        %v3726 = vtanh.pop %v3494
        %v3727 = vtanh.pop %v3203
        %v3728 = vtanh.pop %v3205
        %v3729 = vtanh.pop %v3497
        %v3730 = vtanh.pop %v3209
        %v3731 = vtanh.pop %v3211
        %v3732 = vtanh.pop %v3502
        %v3733 = vtanh.pop %v3213
        %v3734 = vtanh.pop %v3215
        %v3735 = vtanh.pop %v3505
        %v3736 = vld [vmem:[#allocation3] sm:$0xff]
        %v3737 = vld [vmem:[#allocation3 + $0x8] sm:$0xff]
        %v3738 = vld [vmem:[#allocation3 + $0x10] sm:$0xff]
        %v3739 = vld [vmem:[#allocation3 + $0x18] sm:$0xff]
        %v3740 = vld [vmem:[#allocation3 + $0x20] sm:$0xff]
        %v3741 = vld [vmem:[#allocation3 + $0x28] sm:$0xff]
        %v3742 = vld [vmem:[#allocation3 + $0x30] sm:$0xff]
        %v3743 = vld [vmem:[#allocation3 + $0x38] sm:$0xff]
        %v3744 = vld [vmem:[#allocation3 + $0x40] sm:$0xff]
        %v3745 = vld [vmem:[#allocation3 + $0x48] sm:$0xff]
        %v3746 = vld [vmem:[#allocation3 + $0x50] sm:$0xff]
        %v3747 = vld [vmem:[#allocation3 + $0x58] sm:$0xff]
        %v3748 = vmul.f32 %v3629, %v3736
        %v3749 = vmul.f32 %v3631, %v3737
        %v3750 = vmul.f32 %v3633, %v3738
        %v3751 = vmul.f32 %v3635, %v3739
        %v3752 = vmul.f32 %v3637, %v3740
        %v3753 = vmul.f32 %v3639, %v3741
        %v3754 = vmul.f32 %v3641, %v3742
        %v3755 = vmul.f32 %v3643, %v3743
        %v3756 = vmul.f32 %v3645, %v3744
        %v3757 = vmul.f32 %v3647, %v3745
        %v3758 = vmul.f32 %v3649, %v3746
        %v3759 = vmul.f32 %v3651, %v3747
        %v3760 = vmul.f32 %v3557, %v3724
        %v3761 = vmul.f32 %v3559, %v3725
        %v3762 = vmul.f32 %v3561, %v3726
        %v3763 = vmul.f32 %v3563, %v3727
        %v3764 = vmul.f32 %v3565, %v3728
        %v3765 = vmul.f32 %v3567, %v3729
        %v3766 = vmul.f32 %v3569, %v3730
        %v3767 = vmul.f32 %v3571, %v3731
        %v3768 = vmul.f32 %v3573, %v3732
        %v3769 = vmul.f32 %v3575, %v3733
        %v3770 = vmul.f32 %v3577, %v3734
        %v3771 = vmul.f32 %v3579, %v3735
        %v3772 = vadd.f32 %v3748, %v3760
        %v3773 = vadd.f32 %v3749, %v3761
        %v3774 = vadd.f32 %v3750, %v3762
        %v3775 = vadd.f32 %v3751, %v3763
        %v3776 = vadd.f32 %v3752, %v3764
        %v3777 = vadd.f32 %v3753, %v3765
        %v3778 = vadd.f32 %v3754, %v3766
        %v3779 = vadd.f32 %v3755, %v3767
        %v3780 = vadd.f32 %v3756, %v3768
        %v3781 = vadd.f32 %v3757, %v3769
        %v3782 = vadd.f32 %v3758, %v3770
        %v3783 = vadd.f32 %v3759, %v3771
        %v3784 = vtanh.pop %v3772
        %v3785 = vtanh.pop %v3773
        %v3786 = vtanh.pop %v3774
        %v3787 = vtanh.pop %v3775
        %v3788 = vtanh.pop %v3776
        %v3789 = vtanh.pop %v3777
        %v3790 = vtanh.pop %v3778
        %v3791 = vtanh.pop %v3779
        %v3792 = vtanh.pop %v3780
        %v3793 = vtanh.pop %v3781
        %v3794 = vtanh.pop %v3782
        %v3795 = vtanh.pop %v3783
        %v3796 = vmul.f32 %v3701, %v3784
        %v3797 = vmul.f32 %v3703, %v3785
        %v3798 = vmul.f32 %v3705, %v3786
        %v3799 = vmul.f32 %v3707, %v3787
        %v3800 = vmul.f32 %v3709, %v3788
        %v3801 = vmul.f32 %v3711, %v3789
        %v3802 = vmul.f32 %v3713, %v3790
        %v3803 = vmul.f32 %v3715, %v3791
        %v3804 = vmul.f32 %v3717, %v3792
        %v3805 = vmul.f32 %v3719, %v3793
        %v3806 = vmul.f32 %v3721, %v3794
        %v3807 = vmul.f32 %v3723, %v3795
        %v3808 = vmul.f32 %v3796, %v619
        %v3809 = vmul.f32 %v3797, %v623
        %v3810 = vmul.f32 %v3798, %v627
        %v3811 = vmul.f32 %v3799, %v619
        %v3812 = vmul.f32 %v3800, %v623
        %v3813 = vmul.f32 %v3801, %v627
        %v3814 = vmul.f32 %v3802, %v619
        %v3815 = vmul.f32 %v3803, %v623
        %v3816 = vmul.f32 %v3804, %v627
        %v3817 = vmul.f32 %v3805, %v619
        %v3818 = vmul.f32 %v3806, %v623
        %v3819 = vmul.f32 %v3807, %v627
        %3820 = vst [vmem:[#allocation3] sm:$0xff] %v3772
        %3821 = vst [vmem:[#allocation3 + $0x8] sm:$0xff] %v3773
        %3822 = vst.msk [vmem:[#allocation3 + $0x10] sm:$0xff] %vm344, %v3774
        %3823 = vst [vmem:[#allocation3 + $0x18] sm:$0xff] %v3775
        %3824 = vst [vmem:[#allocation3 + $0x20] sm:$0xff] %v3776
        %3825 = vst.msk [vmem:[#allocation3 + $0x28] sm:$0xff] %vm344, %v3777
        %3826 = vst [vmem:[#allocation3 + $0x30] sm:$0xff] %v3778
        %3827 = vst [vmem:[#allocation3 + $0x38] sm:$0xff] %v3779
        %3828 = vst.msk [vmem:[#allocation3 + $0x40] sm:$0xff] %vm344, %v3780
        %3829 = vst [vmem:[#allocation3 + $0x48] sm:$0xff] %v3781
        %3830 = vst [vmem:[#allocation3 + $0x50] sm:$0xff] %v3782
        %3831 = vst.msk [vmem:[#allocation3 + $0x58] sm:$0xff] %vm344, %v3783
        %v3832 = vpack.c.bf16 %v3811, %v3808
        %v3833 = vpack.c.bf16 %v3812, %v3809
        %v3834 = vpack.c.bf16 %v3813, %v3810
        %v3835 = vpack.c.bf16 %v3817, %v3814
        %v3836 = vpack.c.bf16 %v3818, %v3815
        %v3837 = vpack.c.bf16 %v3819, %v3816
        %v3844 = vunpack.c.l.b16 %v3832
        %v3845 = vunpack.c.l.b16 %v3833
        %v3846 = vunpack.c.l.b16 %v3834
        %v3847 = vunpack.c.h.b16 %v3832
        %v3848 = vunpack.c.h.b16 %v3833
        %v3849 = vunpack.c.h.b16 %v3834
        %v3850 = vunpack.c.l.b16 %v3835
        %v3851 = vunpack.c.l.b16 %v3836
        %v3852 = vunpack.c.l.b16 %v3837
        %v3853 = vunpack.c.h.b16 %v3835
        %v3854 = vunpack.c.h.b16 %v3836
        %v3855 = vunpack.c.h.b16 %v3837
        %v3856 = vpack.c.b16 %v3845, %v3844
        %v3857 = vpack.c.b16 %v3846, %v3846
        %v3858 = vpack.c.b16 %v3848, %v3847
        %v3859 = vpack.c.b16 %v3849, %v3849
        %v3860 = vpack.c.b16 %v3851, %v3850
        %v3861 = vpack.c.b16 %v3852, %v3852
        %v3862 = vpack.c.b16 %v3854, %v3853
        %v3863 = vpack.c.b16 %v3855, %v3855
        %3872 = vst [vmem:[#allocation2 + $0x44] sm:$0xff] %v3856
        %3873 = vst.msk [vmem:[#allocation2 + $0x4c] sm:$0xf] %vm684, %v3857
        %3874 = vst [vmem:[#allocation2 + $0x54] sm:$0xff] %v3858
        %3875 = vst.msk [vmem:[#allocation2 + $0x5c] sm:$0xf] %vm684, %v3859
        %3876 = vst [vmem:[#allocation2 + $0x64] sm:$0xff] %v3860
        %3877 = vst.msk [vmem:[#allocation2 + $0x6c] sm:$0xf] %vm684, %v3861
        %3878 = vst [vmem:[#allocation2 + $0x74] sm:$0xff] %v3862
        %3879 = vst.msk [vmem:[#allocation2 + $0x7c] sm:$0xf] %vm684, %v3863
        %s3880 = scalar_lea.vmem [#allocation2], 128
        %3881 = vst [vmem:[%s3880 + $0x4] sm:$0xff] %v3856
        %3882 = vst.msk [vmem:[%s3880 + $0xc] sm:$0xf] %vm684, %v3857
        %3883 = vst [vmem:[%s3880 + $0x14] sm:$0xff] %v3858
        %3884 = vst.msk [vmem:[%s3880 + $0x1c] sm:$0xf] %vm684, %v3859
        %3885 = vst [vmem:[%s3880 + $0x24] sm:$0xff] %v3860
        %3886 = vst.msk [vmem:[%s3880 + $0x2c] sm:$0xf] %vm684, %v3861
        %3887 = vst [vmem:[%s3880 + $0x34] sm:$0xff] %v3862
        %3888 = vst.msk [vmem:[%s3880 + $0x3c] sm:$0xf] %vm684, %v3863
        %v3889 = vld [vmem:[%s3880] sm:$0xff]
        %v3890 = vld [vmem:[%s3880 + $0x8] sm:$0xff]
        %v3891 = vld [vmem:[%s3880 + $0x10] sm:$0xff]
        %v3892 = vld [vmem:[%s3880 + $0x18] sm:$0xff]
        %v3893 = vld [vmem:[%s3880 + $0x20] sm:$0xff]
        %v3894 = vld [vmem:[%s3880 + $0x28] sm:$0xff]
        %v3895 = vld [vmem:[%s3880 + $0x30] sm:$0xff]
        %v3896 = vld [vmem:[%s3880 + $0x38] sm:$0xff]
        %v3897 = vld [vmem:[%s3880 + $0x40] sm:$0xff]
        %v3898 = vld [vmem:[%s3880 + $0x48] sm:$0xff]
        %v3899 = vld [vmem:[%s3880 + $0x50] sm:$0xff]
        %v3900 = vld [vmem:[%s3880 + $0x58] sm:$0xff]
        %v3901 = vld [vmem:[%s3880 + $0x60] sm:$0xff]
        %v3902 = vld [vmem:[%s3880 + $0x68] sm:$0xff]
        %v3903 = vld [vmem:[%s3880 + $0x70] sm:$0xff]
        %v3904 = vld [vmem:[%s3880 + $0x78] sm:$0xff]
        %3921 = vrot.lane.b32.xlu0 %v3889, 19
        %v3922 = vpop.permute.xlu0 %3921
        %3923 = vrot.lane.b32.xlu0 %v3890, 19
        %v3924 = vpop.permute.xlu0 %3923
        %3925 = vrot.lane.b32.xlu0 %v3891, 19
        %v3926 = vpop.permute.xlu0 %3925
        %3927 = vrot.lane.b32.xlu0 %v3892, 19
        %v3928 = vpop.permute.xlu0 %3927
        %3929 = vrot.lane.b32.xlu0 %v3893, 19
        %v3930 = vpop.permute.xlu0 %3929
        %3931 = vrot.lane.b32.xlu0 %v3894, 19
        %v3932 = vpop.permute.xlu0 %3931
        %3933 = vrot.lane.b32.xlu0 %v3895, 19
        %v3934 = vpop.permute.xlu0 %3933
        %3935 = vrot.lane.b32.xlu0 %v3896, 19
        %v3936 = vpop.permute.xlu0 %3935
        %3937 = vrot.lane.b32.xlu0 %v3897, 19
        %v3938 = vpop.permute.xlu0 %3937
        %3939 = vrot.lane.b32.xlu0 %v3898, 19
        %v3940 = vpop.permute.xlu0 %3939
        %3941 = vrot.lane.b32.xlu0 %v3899, 19
        %v3942 = vpop.permute.xlu0 %3941
        %3943 = vrot.lane.b32.xlu0 %v3900, 19
        %v3944 = vpop.permute.xlu0 %3943
        %3945 = vrot.lane.b32.xlu0 %v3901, 19
        %v3946 = vpop.permute.xlu0 %3945
        %3947 = vrot.lane.b32.xlu0 %v3902, 19
        %v3948 = vpop.permute.xlu0 %3947
        %3949 = vrot.lane.b32.xlu0 %v3903, 19
        %v3950 = vpop.permute.xlu0 %3949
        %3951 = vrot.lane.b32.xlu0 %v3904, 19
        %v3952 = vpop.permute.xlu0 %3951
        %v3953 = vrot.slane %v3922, 4
        %v3954 = vrot.slane %v3924, 4
        %v3955 = vrot.slane %v3926, 4
        %v3956 = vrot.slane %v3928, 4
        %v3957 = vrot.slane %v3930, 4
        %v3958 = vrot.slane %v3932, 4
        %v3959 = vrot.slane %v3934, 4
        %v3960 = vrot.slane %v3936, 4
        %v3961 = vrot.slane %v3938, 4
        %v3962 = vrot.slane %v3940, 4
        %v3963 = vrot.slane %v3942, 4
        %v3964 = vrot.slane %v3944, 4
        %v3965 = vrot.slane %v3946, 4
        %v3966 = vrot.slane %v3948, 4
        %v3967 = vrot.slane %v3950, 4
        %v3968 = vrot.slane %v3952, 4
        %v3969 = vsel %vm772, %v3953, %v3954
        %v3970 = vsel %vm774, %v3922, %v3969
        %v3971 = vsel %vm774, %v3924, %v3954
        %v3972 = vsel %vm772, %v3955, %v3956
        %v3973 = vsel %vm774, %v3926, %v3972
        %v3974 = vsel %vm774, %v3928, %v3956
        %v3975 = vsel %vm772, %v3957, %v3958
        %v3976 = vsel %vm774, %v3930, %v3975
        %v3977 = vsel %vm774, %v3932, %v3958
        %v3978 = vsel %vm772, %v3959, %v3960
        %v3979 = vsel %vm774, %v3934, %v3978
        %v3980 = vsel %vm774, %v3936, %v3960
        %v3981 = vsel %vm772, %v3961, %v3962
        %v3982 = vsel %vm774, %v3938, %v3981
        %v3983 = vsel %vm774, %v3940, %v3962
        %v3984 = vsel %vm772, %v3963, %v3964
        %v3985 = vsel %vm774, %v3942, %v3984
        %v3986 = vsel %vm774, %v3944, %v3964
        %v3987 = vsel %vm772, %v3965, %v3966
        %v3988 = vsel %vm774, %v3946, %v3987
        %v3989 = vsel %vm774, %v3948, %v3966
        %v3990 = vsel %vm772, %v3967, %v3968
        %v3991 = vsel %vm774, %v3950, %v3990
        %v3992 = vsel %vm774, %v3952, %v3968
        %4009 = vst [vmem:[#allocation5] sm:$0xff] %v3970
        %4010 = vst.msk [vmem:[#allocation5 + $0x8] sm:$0xf] %vm684, %v3971
        %4011 = vst [vmem:[#allocation5 + $0xc] sm:$0xff] %v3973
        %4012 = vst.msk [vmem:[#allocation5 + $0x14] sm:$0xf] %vm684, %v3974
        %4013 = vst [vmem:[#allocation5 + $0x18] sm:$0xff] %v3976
        %4014 = vst.msk [vmem:[#allocation5 + $0x20] sm:$0xf] %vm684, %v3977
        %4015 = vst [vmem:[#allocation5 + $0x24] sm:$0xff] %v3979
        %4016 = vst.msk [vmem:[#allocation5 + $0x2c] sm:$0xf] %vm684, %v3980
        %4017 = vst [vmem:[#allocation5 + $0x30] sm:$0xff] %v3982
        %4018 = vst.msk [vmem:[#allocation5 + $0x38] sm:$0xf] %vm684, %v3983
        %4019 = vst [vmem:[#allocation5 + $0x3c] sm:$0xff] %v3985
        %4020 = vst.msk [vmem:[#allocation5 + $0x44] sm:$0xf] %vm684, %v3986
        %4021 = vst [vmem:[#allocation5 + $0x48] sm:$0xff] %v3988
        %4022 = vst.msk [vmem:[#allocation5 + $0x50] sm:$0xf] %vm684, %v3989
        %4023 = vst [vmem:[#allocation5 + $0x54] sm:$0xff] %v3991
        %4024 = vst.msk [vmem:[#allocation5 + $0x5c] sm:$0xf] %vm684, %v3992
        %v4025 = vld [vmem:[%s3880] sm:$0xff]
        %v4026 = vld [vmem:[%s3880 + $0x8] sm:$0xff]
        %v4027 = vld [vmem:[%s3880 + $0x10] sm:$0xff]
        %v4028 = vld [vmem:[%s3880 + $0x18] sm:$0xff]
        %v4029 = vld [vmem:[%s3880 + $0x20] sm:$0xff]
        %v4030 = vld [vmem:[%s3880 + $0x28] sm:$0xff]
        %v4031 = vld [vmem:[%s3880 + $0x30] sm:$0xff]
        %v4032 = vld [vmem:[%s3880 + $0x38] sm:$0xff]
        %v4033 = vld [vmem:[%s3880 + $0x40] sm:$0xff]
        %v4034 = vld [vmem:[%s3880 + $0x48] sm:$0xff]
        %v4035 = vld [vmem:[%s3880 + $0x50] sm:$0xff]
        %v4036 = vld [vmem:[%s3880 + $0x58] sm:$0xff]
        %v4037 = vld [vmem:[%s3880 + $0x60] sm:$0xff]
        %v4038 = vld [vmem:[%s3880 + $0x68] sm:$0xff]
        %v4039 = vld [vmem:[%s3880 + $0x70] sm:$0xff]
        %v4040 = vld [vmem:[%s3880 + $0x78] sm:$0xff]
        %4057 = vrot.lane.b32.xlu0 %v4025, 18
        %v4058 = vpop.permute.xlu0 %4057
        %4059 = vrot.lane.b32.xlu0 %v4026, 18
        %v4060 = vpop.permute.xlu0 %4059
        %4061 = vrot.lane.b32.xlu0 %v4027, 18
        %v4062 = vpop.permute.xlu0 %4061
        %4063 = vrot.lane.b32.xlu0 %v4028, 18
        %v4064 = vpop.permute.xlu0 %4063
        %4065 = vrot.lane.b32.xlu0 %v4029, 18
        %v4066 = vpop.permute.xlu0 %4065
        %4067 = vrot.lane.b32.xlu0 %v4030, 18
        %v4068 = vpop.permute.xlu0 %4067
        %4069 = vrot.lane.b32.xlu0 %v4031, 18
        %v4070 = vpop.permute.xlu0 %4069
        %4071 = vrot.lane.b32.xlu0 %v4032, 18
        %v4072 = vpop.permute.xlu0 %4071
        %4073 = vrot.lane.b32.xlu0 %v4033, 18
        %v4074 = vpop.permute.xlu0 %4073
        %4075 = vrot.lane.b32.xlu0 %v4034, 18
        %v4076 = vpop.permute.xlu0 %4075
        %4077 = vrot.lane.b32.xlu0 %v4035, 18
        %v4078 = vpop.permute.xlu0 %4077
        %4079 = vrot.lane.b32.xlu0 %v4036, 18
        %v4080 = vpop.permute.xlu0 %4079
        %4081 = vrot.lane.b32.xlu0 %v4037, 18
        %v4082 = vpop.permute.xlu0 %4081
        %4083 = vrot.lane.b32.xlu0 %v4038, 18
        %v4084 = vpop.permute.xlu0 %4083
        %4085 = vrot.lane.b32.xlu0 %v4039, 18
        %v4086 = vpop.permute.xlu0 %4085
        %4087 = vrot.lane.b32.xlu0 %v4040, 18
        %v4088 = vpop.permute.xlu0 %4087
        %v4089 = vrot.slane %v4058, 4
        %v4090 = vrot.slane %v4060, 4
        %v4091 = vrot.slane %v4062, 4
        %v4092 = vrot.slane %v4064, 4
        %v4093 = vrot.slane %v4066, 4
        %v4094 = vrot.slane %v4068, 4
        %v4095 = vrot.slane %v4070, 4
        %v4096 = vrot.slane %v4072, 4
        %v4097 = vrot.slane %v4074, 4
        %v4098 = vrot.slane %v4076, 4
        %v4099 = vrot.slane %v4078, 4
        %v4100 = vrot.slane %v4080, 4
        %v4101 = vrot.slane %v4082, 4
        %v4102 = vrot.slane %v4084, 4
        %v4103 = vrot.slane %v4086, 4
        %v4104 = vrot.slane %v4088, 4
        %v4105 = vsel %vm772, %v4089, %v4090
        %v4106 = vsel %vm911, %v4058, %v4105
        %v4107 = vsel %vm911, %v4060, %v4090
        %v4108 = vsel %vm772, %v4091, %v4092
        %v4109 = vsel %vm911, %v4062, %v4108
        %v4110 = vsel %vm911, %v4064, %v4092
        %v4111 = vsel %vm772, %v4093, %v4094
        %v4112 = vsel %vm911, %v4066, %v4111
        %v4113 = vsel %vm911, %v4068, %v4094
        %v4114 = vsel %vm772, %v4095, %v4096
        %v4115 = vsel %vm911, %v4070, %v4114
        %v4116 = vsel %vm911, %v4072, %v4096
        %v4117 = vsel %vm772, %v4097, %v4098
        %v4118 = vsel %vm911, %v4074, %v4117
        %v4119 = vsel %vm911, %v4076, %v4098
        %v4120 = vsel %vm772, %v4099, %v4100
        %v4121 = vsel %vm911, %v4078, %v4120
        %v4122 = vsel %vm911, %v4080, %v4100
        %v4123 = vsel %vm772, %v4101, %v4102
        %v4124 = vsel %vm911, %v4082, %v4123
        %v4125 = vsel %vm911, %v4084, %v4102
        %v4126 = vsel %vm772, %v4103, %v4104
        %v4127 = vsel %vm911, %v4086, %v4126
        %v4128 = vsel %vm911, %v4088, %v4104
        %4145 = vst [vmem:[#allocation5 + $0x60] sm:$0xff] %v4106
        %4146 = vst.msk [vmem:[#allocation5 + $0x68] sm:$0xf] %vm684, %v4107
        %4147 = vst [vmem:[#allocation5 + $0x6c] sm:$0xff] %v4109
        %4148 = vst.msk [vmem:[#allocation5 + $0x74] sm:$0xf] %vm684, %v4110
        %4149 = vst [vmem:[#allocation5 + $0x78] sm:$0xff] %v4112
        %4150 = vst.msk [vmem:[#allocation5 + $0x80] sm:$0xf] %vm684, %v4113
        %4151 = vst [vmem:[#allocation5 + $0x84] sm:$0xff] %v4115
        %4152 = vst.msk [vmem:[#allocation5 + $0x8c] sm:$0xf] %vm684, %v4116
        %4153 = vst [vmem:[#allocation5 + $0x90] sm:$0xff] %v4118
        %4154 = vst.msk [vmem:[#allocation5 + $0x98] sm:$0xf] %vm684, %v4119
        %4155 = vst [vmem:[#allocation5 + $0x9c] sm:$0xff] %v4121
        %4156 = vst.msk [vmem:[#allocation5 + $0xa4] sm:$0xf] %vm684, %v4122
        %4157 = vst [vmem:[#allocation5 + $0xa8] sm:$0xff] %v4124
        %4158 = vst.msk [vmem:[#allocation5 + $0xb0] sm:$0xf] %vm684, %v4125
        %4159 = vst [vmem:[#allocation5 + $0xb4] sm:$0xff] %v4127
        %4160 = vst.msk [vmem:[#allocation5 + $0xbc] sm:$0xf] %vm684, %v4128
        %v4161 = vld [vmem:[%s3880] sm:$0xff]
        %v4162 = vld [vmem:[%s3880 + $0x8] sm:$0xff]
        %v4163 = vld [vmem:[%s3880 + $0x10] sm:$0xff]
        %v4164 = vld [vmem:[%s3880 + $0x18] sm:$0xff]
        %v4165 = vld [vmem:[%s3880 + $0x20] sm:$0xff]
        %v4166 = vld [vmem:[%s3880 + $0x28] sm:$0xff]
        %v4167 = vld [vmem:[%s3880 + $0x30] sm:$0xff]
        %v4168 = vld [vmem:[%s3880 + $0x38] sm:$0xff]
        %v4169 = vld [vmem:[%s3880 + $0x40] sm:$0xff]
        %v4170 = vld [vmem:[%s3880 + $0x48] sm:$0xff]
        %v4171 = vld [vmem:[%s3880 + $0x50] sm:$0xff]
        %v4172 = vld [vmem:[%s3880 + $0x58] sm:$0xff]
        %v4173 = vld [vmem:[%s3880 + $0x60] sm:$0xff]
        %v4174 = vld [vmem:[%s3880 + $0x68] sm:$0xff]
        %v4175 = vld [vmem:[%s3880 + $0x70] sm:$0xff]
        %v4176 = vld [vmem:[%s3880 + $0x78] sm:$0xff]
        %4193 = vrot.lane.b32.xlu0 %v4161, 17
        %v4194 = vpop.permute.xlu0 %4193
        %4195 = vrot.lane.b32.xlu0 %v4162, 17
        %v4196 = vpop.permute.xlu0 %4195
        %4197 = vrot.lane.b32.xlu0 %v4163, 17
        %v4198 = vpop.permute.xlu0 %4197
        %4199 = vrot.lane.b32.xlu0 %v4164, 17
        %v4200 = vpop.permute.xlu0 %4199
        %4201 = vrot.lane.b32.xlu0 %v4165, 17
        %v4202 = vpop.permute.xlu0 %4201
        %4203 = vrot.lane.b32.xlu0 %v4166, 17
        %v4204 = vpop.permute.xlu0 %4203
        %4205 = vrot.lane.b32.xlu0 %v4167, 17
        %v4206 = vpop.permute.xlu0 %4205
        %4207 = vrot.lane.b32.xlu0 %v4168, 17
        %v4208 = vpop.permute.xlu0 %4207
        %4209 = vrot.lane.b32.xlu0 %v4169, 17
        %v4210 = vpop.permute.xlu0 %4209
        %4211 = vrot.lane.b32.xlu0 %v4170, 17
        %v4212 = vpop.permute.xlu0 %4211
        %4213 = vrot.lane.b32.xlu0 %v4171, 17
        %v4214 = vpop.permute.xlu0 %4213
        %4215 = vrot.lane.b32.xlu0 %v4172, 17
        %v4216 = vpop.permute.xlu0 %4215
        %4217 = vrot.lane.b32.xlu0 %v4173, 17
        %v4218 = vpop.permute.xlu0 %4217
        %4219 = vrot.lane.b32.xlu0 %v4174, 17
        %v4220 = vpop.permute.xlu0 %4219
        %4221 = vrot.lane.b32.xlu0 %v4175, 17
        %v4222 = vpop.permute.xlu0 %4221
        %4223 = vrot.lane.b32.xlu0 %v4176, 17
        %v4224 = vpop.permute.xlu0 %4223
        %v4225 = vrot.slane %v4194, 4
        %v4226 = vrot.slane %v4196, 4
        %v4227 = vrot.slane %v4198, 4
        %v4228 = vrot.slane %v4200, 4
        %v4229 = vrot.slane %v4202, 4
        %v4230 = vrot.slane %v4204, 4
        %v4231 = vrot.slane %v4206, 4
        %v4232 = vrot.slane %v4208, 4
        %v4233 = vrot.slane %v4210, 4
        %v4234 = vrot.slane %v4212, 4
        %v4235 = vrot.slane %v4214, 4
        %v4236 = vrot.slane %v4216, 4
        %v4237 = vrot.slane %v4218, 4
        %v4238 = vrot.slane %v4220, 4
        %v4239 = vrot.slane %v4222, 4
        %v4240 = vrot.slane %v4224, 4
        %v4241 = vsel %vm772, %v4225, %v4226
        %v4242 = vsel %vm1048, %v4194, %v4241
        %v4243 = vsel %vm1048, %v4196, %v4226
        %v4244 = vsel %vm772, %v4227, %v4228
        %v4245 = vsel %vm1048, %v4198, %v4244
        %v4246 = vsel %vm1048, %v4200, %v4228
        %v4247 = vsel %vm772, %v4229, %v4230
        %v4248 = vsel %vm1048, %v4202, %v4247
        %v4249 = vsel %vm1048, %v4204, %v4230
        %v4250 = vsel %vm772, %v4231, %v4232
        %v4251 = vsel %vm1048, %v4206, %v4250
        %v4252 = vsel %vm1048, %v4208, %v4232
        %v4253 = vsel %vm772, %v4233, %v4234
        %v4254 = vsel %vm1048, %v4210, %v4253
        %v4255 = vsel %vm1048, %v4212, %v4234
        %v4256 = vsel %vm772, %v4235, %v4236
        %v4257 = vsel %vm1048, %v4214, %v4256
        %v4258 = vsel %vm1048, %v4216, %v4236
        %v4259 = vsel %vm772, %v4237, %v4238
        %v4260 = vsel %vm1048, %v4218, %v4259
        %v4261 = vsel %vm1048, %v4220, %v4238
        %v4262 = vsel %vm772, %v4239, %v4240
        %v4263 = vsel %vm1048, %v4222, %v4262
        %v4264 = vsel %vm1048, %v4224, %v4240
        %4281 = vst [vmem:[#allocation5 + $0xc0] sm:$0xff] %v4242
        %4282 = vst.msk [vmem:[#allocation5 + $0xc8] sm:$0xf] %vm684, %v4243
        %4283 = vst [vmem:[#allocation5 + $0xcc] sm:$0xff] %v4245
        %4284 = vst.msk [vmem:[#allocation5 + $0xd4] sm:$0xf] %vm684, %v4246
        %4285 = vst [vmem:[#allocation5 + $0xd8] sm:$0xff] %v4248
        %4286 = vst.msk [vmem:[#allocation5 + $0xe0] sm:$0xf] %vm684, %v4249
        %4287 = vst [vmem:[#allocation5 + $0xe4] sm:$0xff] %v4251
        %4288 = vst.msk [vmem:[#allocation5 + $0xec] sm:$0xf] %vm684, %v4252
        %4289 = vst [vmem:[#allocation5 + $0xf0] sm:$0xff] %v4254
        %4290 = vst.msk [vmem:[#allocation5 + $0xf8] sm:$0xf] %vm684, %v4255
        %4291 = vst [vmem:[#allocation5 + $0xfc] sm:$0xff] %v4257
        %4292 = vst.msk [vmem:[#allocation5 + $0x104] sm:$0xf] %vm684, %v4258
        %4293 = vst [vmem:[#allocation5 + $0x108] sm:$0xff] %v4260
        %4294 = vst.msk [vmem:[#allocation5 + $0x110] sm:$0xf] %vm684, %v4261
        %4295 = vst [vmem:[#allocation5 + $0x114] sm:$0xff] %v4263
        %4296 = vst.msk [vmem:[#allocation5 + $0x11c] sm:$0xf] %vm684, %v4264
        %v4297 = vld [vmem:[%s3880] sm:$0xff]
        %v4298 = vld [vmem:[%s3880 + $0x8] sm:$0xff]
        %v4299 = vld [vmem:[%s3880 + $0x10] sm:$0xff]
        %v4300 = vld [vmem:[%s3880 + $0x18] sm:$0xff]
        %v4301 = vld [vmem:[%s3880 + $0x20] sm:$0xff]
        %v4302 = vld [vmem:[%s3880 + $0x28] sm:$0xff]
        %v4303 = vld [vmem:[%s3880 + $0x30] sm:$0xff]
        %v4304 = vld [vmem:[%s3880 + $0x38] sm:$0xff]
        %v4305 = vld [vmem:[%s3880 + $0x40] sm:$0xff]
        %v4306 = vld [vmem:[%s3880 + $0x48] sm:$0xff]
        %v4307 = vld [vmem:[%s3880 + $0x50] sm:$0xff]
        %v4308 = vld [vmem:[%s3880 + $0x58] sm:$0xff]
        %v4309 = vld [vmem:[%s3880 + $0x60] sm:$0xff]
        %v4310 = vld [vmem:[%s3880 + $0x68] sm:$0xff]
        %v4311 = vld [vmem:[%s3880 + $0x70] sm:$0xff]
        %v4312 = vld [vmem:[%s3880 + $0x78] sm:$0xff]
        %4329 = vrot.lane.b32.xlu0 %v4297, 1
        %v4330 = vpop.permute.xlu0 %4329
        %4331 = vrot.lane.b32.xlu0 %v4298, 1
        %v4332 = vpop.permute.xlu0 %4331
        %4333 = vrot.lane.b32.xlu0 %v4299, 1
        %v4334 = vpop.permute.xlu0 %4333
        %4335 = vrot.lane.b32.xlu0 %v4300, 1
        %v4336 = vpop.permute.xlu0 %4335
        %4337 = vrot.lane.b32.xlu0 %v4301, 1
        %v4338 = vpop.permute.xlu0 %4337
        %4339 = vrot.lane.b32.xlu0 %v4302, 1
        %v4340 = vpop.permute.xlu0 %4339
        %4341 = vrot.lane.b32.xlu0 %v4303, 1
        %v4342 = vpop.permute.xlu0 %4341
        %4343 = vrot.lane.b32.xlu0 %v4304, 1
        %v4344 = vpop.permute.xlu0 %4343
        %4345 = vrot.lane.b32.xlu0 %v4305, 1
        %v4346 = vpop.permute.xlu0 %4345
        %4347 = vrot.lane.b32.xlu0 %v4306, 1
        %v4348 = vpop.permute.xlu0 %4347
        %4349 = vrot.lane.b32.xlu0 %v4307, 1
        %v4350 = vpop.permute.xlu0 %4349
        %4351 = vrot.lane.b32.xlu0 %v4308, 1
        %v4352 = vpop.permute.xlu0 %4351
        %4353 = vrot.lane.b32.xlu0 %v4309, 1
        %v4354 = vpop.permute.xlu0 %4353
        %4355 = vrot.lane.b32.xlu0 %v4310, 1
        %v4356 = vpop.permute.xlu0 %4355
        %4357 = vrot.lane.b32.xlu0 %v4311, 1
        %v4358 = vpop.permute.xlu0 %4357
        %4359 = vrot.lane.b32.xlu0 %v4312, 1
        %v4360 = vpop.permute.xlu0 %4359
        %v4361 = vrot.slane %v4330, 4
        %v4362 = vrot.slane %v4332, 4
        %v4363 = vrot.slane %v4334, 4
        %v4364 = vrot.slane %v4336, 4
        %v4365 = vrot.slane %v4338, 4
        %v4366 = vrot.slane %v4340, 4
        %v4367 = vrot.slane %v4342, 4
        %v4368 = vrot.slane %v4344, 4
        %v4369 = vrot.slane %v4346, 4
        %v4370 = vrot.slane %v4348, 4
        %v4371 = vrot.slane %v4350, 4
        %v4372 = vrot.slane %v4352, 4
        %v4373 = vrot.slane %v4354, 4
        %v4374 = vrot.slane %v4356, 4
        %v4375 = vrot.slane %v4358, 4
        %v4376 = vrot.slane %v4360, 4
        %v4377 = vsel %vm772, %v4361, %v4362
        %v4378 = vsel %vm1185, %v4330, %v4377
        %v4379 = vsel %vm1185, %v4332, %v4362
        %v4380 = vsel %vm772, %v4363, %v4364
        %v4381 = vsel %vm1185, %v4334, %v4380
        %v4382 = vsel %vm1185, %v4336, %v4364
        %v4383 = vsel %vm772, %v4365, %v4366
        %v4384 = vsel %vm1185, %v4338, %v4383
        %v4385 = vsel %vm1185, %v4340, %v4366
        %v4386 = vsel %vm772, %v4367, %v4368
        %v4387 = vsel %vm1185, %v4342, %v4386
        %v4388 = vsel %vm1185, %v4344, %v4368
        %v4389 = vsel %vm772, %v4369, %v4370
        %v4390 = vsel %vm1185, %v4346, %v4389
        %v4391 = vsel %vm1185, %v4348, %v4370
        %v4392 = vsel %vm772, %v4371, %v4372
        %v4393 = vsel %vm1185, %v4350, %v4392
        %v4394 = vsel %vm1185, %v4352, %v4372
        %v4395 = vsel %vm772, %v4373, %v4374
        %v4396 = vsel %vm1185, %v4354, %v4395
        %v4397 = vsel %vm1185, %v4356, %v4374
        %v4398 = vsel %vm772, %v4375, %v4376
        %v4399 = vsel %vm1185, %v4358, %v4398
        %v4400 = vsel %vm1185, %v4360, %v4376
        %4417 = vst [vmem:[#allocation5 + $0x120] sm:$0xff] %v4378
        %4418 = vst.msk [vmem:[#allocation5 + $0x128] sm:$0xf] %vm684, %v4379
        %4419 = vst [vmem:[#allocation5 + $0x12c] sm:$0xff] %v4381
        %4420 = vst.msk [vmem:[#allocation5 + $0x134] sm:$0xf] %vm684, %v4382
        %4421 = vst [vmem:[#allocation5 + $0x138] sm:$0xff] %v4384
        %4422 = vst.msk [vmem:[#allocation5 + $0x140] sm:$0xf] %vm684, %v4385
        %4423 = vst [vmem:[#allocation5 + $0x144] sm:$0xff] %v4387
        %4424 = vst.msk [vmem:[#allocation5 + $0x14c] sm:$0xf] %vm684, %v4388
        %4425 = vst [vmem:[#allocation5 + $0x150] sm:$0xff] %v4390
        %4426 = vst.msk [vmem:[#allocation5 + $0x158] sm:$0xf] %vm684, %v4391
        %4427 = vst [vmem:[#allocation5 + $0x15c] sm:$0xff] %v4393
        %4428 = vst.msk [vmem:[#allocation5 + $0x164] sm:$0xf] %vm684, %v4394
        %4429 = vst [vmem:[#allocation5 + $0x168] sm:$0xff] %v4396
        %4430 = vst.msk [vmem:[#allocation5 + $0x170] sm:$0xf] %vm684, %v4397
        %4431 = vst [vmem:[#allocation5 + $0x174] sm:$0xff] %v4399
        %4432 = vst.msk [vmem:[#allocation5 + $0x17c] sm:$0xf] %vm684, %v4400
        %v4433 = vld [vmem:[%s3880 + $0x4] sm:$0xff]
        %v4434 = vld [vmem:[%s3880 + $0xc] sm:$0xf]
        %v4435 = vld [vmem:[%s3880 + $0x14] sm:$0xff]
        %v4436 = vld [vmem:[%s3880 + $0x1c] sm:$0xf]
        %v4437 = vld [vmem:[%s3880 + $0x24] sm:$0xff]
        %v4438 = vld [vmem:[%s3880 + $0x2c] sm:$0xf]
        %v4439 = vld [vmem:[%s3880 + $0x34] sm:$0xff]
        %v4440 = vld [vmem:[%s3880 + $0x3c] sm:$0xf]
        %v4441 = vld [vmem:[%s3880 + $0x44] sm:$0xff]
        %v4442 = vld [vmem:[%s3880 + $0x4c] sm:$0xf]
        %v4443 = vld [vmem:[%s3880 + $0x54] sm:$0xff]
        %v4444 = vld [vmem:[%s3880 + $0x5c] sm:$0xf]
        %v4445 = vld [vmem:[%s3880 + $0x64] sm:$0xff]
        %v4446 = vld [vmem:[%s3880 + $0x6c] sm:$0xf]
        %v4447 = vld [vmem:[%s3880 + $0x74] sm:$0xff]
        %v4448 = vld [vmem:[%s3880 + $0x7c] sm:$0xf]
        %4449 = vst [vmem:[#allocation5 + $0x180] sm:$0xff] %v4433
        %4450 = vst.msk [vmem:[#allocation5 + $0x188] sm:$0xf] %vm684, %v4434
        %4451 = vst [vmem:[#allocation5 + $0x18c] sm:$0xff] %v4435
        %4452 = vst.msk [vmem:[#allocation5 + $0x194] sm:$0xf] %vm684, %v4436
        %4453 = vst [vmem:[#allocation5 + $0x198] sm:$0xff] %v4437
        %4454 = vst.msk [vmem:[#allocation5 + $0x1a0] sm:$0xf] %vm684, %v4438
        %4455 = vst [vmem:[#allocation5 + $0x1a4] sm:$0xff] %v4439
        %4456 = vst.msk [vmem:[#allocation5 + $0x1ac] sm:$0xf] %vm684, %v4440
        %4457 = vst [vmem:[#allocation5 + $0x1b0] sm:$0xff] %v4441
        %4458 = vst.msk [vmem:[#allocation5 + $0x1b8] sm:$0xf] %vm684, %v4442
        %4459 = vst [vmem:[#allocation5 + $0x1bc] sm:$0xff] %v4443
        %4460 = vst.msk [vmem:[#allocation5 + $0x1c4] sm:$0xf] %vm684, %v4444
        %4461 = vst [vmem:[#allocation5 + $0x1c8] sm:$0xff] %v4445
        %4462 = vst.msk [vmem:[#allocation5 + $0x1d0] sm:$0xf] %vm684, %v4446
        %4463 = vst [vmem:[#allocation5 + $0x1d4] sm:$0xff] %v4447
        %4464 = vst.msk [vmem:[#allocation5 + $0x1dc] sm:$0xf] %vm684, %v4448
        %v4465 = vld [vmem:[%s3880 + $0x4] sm:$0xff]
        %v4466 = vld [vmem:[%s3880 + $0xc] sm:$0xf]
        %v4467 = vld [vmem:[%s3880 + $0x14] sm:$0xff]
        %v4468 = vld [vmem:[%s3880 + $0x1c] sm:$0xf]
        %v4469 = vld [vmem:[%s3880 + $0x24] sm:$0xff]
        %v4470 = vld [vmem:[%s3880 + $0x2c] sm:$0xf]
        %v4471 = vld [vmem:[%s3880 + $0x34] sm:$0xff]
        %v4472 = vld [vmem:[%s3880 + $0x3c] sm:$0xf]
        %v4473 = vld [vmem:[%s3880 + $0x44] sm:$0xff]
        %v4474 = vld [vmem:[%s3880 + $0x4c] sm:$0xf]
        %v4475 = vld [vmem:[%s3880 + $0x54] sm:$0xff]
        %v4476 = vld [vmem:[%s3880 + $0x5c] sm:$0xf]
        %v4477 = vld [vmem:[%s3880 + $0x64] sm:$0xff]
        %v4478 = vld [vmem:[%s3880 + $0x6c] sm:$0xf]
        %v4479 = vld [vmem:[%s3880 + $0x74] sm:$0xff]
        %v4480 = vld [vmem:[%s3880 + $0x7c] sm:$0xf]
        %4497 = vrot.lane.b32.xlu0 %v4465, 127
        %v4498 = vpop.permute.xlu0 %4497
        %4499 = vrot.lane.b32.xlu0 %v4466, 127
        %v4500 = vpop.permute.xlu0 %4499
        %4501 = vrot.lane.b32.xlu0 %v4467, 127
        %v4502 = vpop.permute.xlu0 %4501
        %4503 = vrot.lane.b32.xlu0 %v4468, 127
        %v4504 = vpop.permute.xlu0 %4503
        %4505 = vrot.lane.b32.xlu0 %v4469, 127
        %v4506 = vpop.permute.xlu0 %4505
        %4507 = vrot.lane.b32.xlu0 %v4470, 127
        %v4508 = vpop.permute.xlu0 %4507
        %4509 = vrot.lane.b32.xlu0 %v4471, 127
        %v4510 = vpop.permute.xlu0 %4509
        %4511 = vrot.lane.b32.xlu0 %v4472, 127
        %v4512 = vpop.permute.xlu0 %4511
        %4513 = vrot.lane.b32.xlu0 %v4473, 127
        %v4514 = vpop.permute.xlu0 %4513
        %4515 = vrot.lane.b32.xlu0 %v4474, 127
        %v4516 = vpop.permute.xlu0 %4515
        %4517 = vrot.lane.b32.xlu0 %v4475, 127
        %v4518 = vpop.permute.xlu0 %4517
        %4519 = vrot.lane.b32.xlu0 %v4476, 127
        %v4520 = vpop.permute.xlu0 %4519
        %4521 = vrot.lane.b32.xlu0 %v4477, 127
        %v4522 = vpop.permute.xlu0 %4521
        %4523 = vrot.lane.b32.xlu0 %v4478, 127
        %v4524 = vpop.permute.xlu0 %4523
        %4525 = vrot.lane.b32.xlu0 %v4479, 127
        %v4526 = vpop.permute.xlu0 %4525
        %4527 = vrot.lane.b32.xlu0 %v4480, 127
        %v4528 = vpop.permute.xlu0 %4527
        %v4529 = vrot.slane %v4498, 4
        %v4530 = vrot.slane %v4500, 4
        %v4531 = vrot.slane %v4502, 4
        %v4532 = vrot.slane %v4504, 4
        %v4533 = vrot.slane %v4506, 4
        %v4534 = vrot.slane %v4508, 4
        %v4535 = vrot.slane %v4510, 4
        %v4536 = vrot.slane %v4512, 4
        %v4537 = vrot.slane %v4514, 4
        %v4538 = vrot.slane %v4516, 4
        %v4539 = vrot.slane %v4518, 4
        %v4540 = vrot.slane %v4520, 4
        %v4541 = vrot.slane %v4522, 4
        %v4542 = vrot.slane %v4524, 4
        %v4543 = vrot.slane %v4526, 4
        %v4544 = vrot.slane %v4528, 4
        %v4545 = vsel %vm772, %v4529, %v4530
        %v4546 = vsel %vm1354, %v4498, %v4545
        %v4547 = vsel %vm772, %v4531, %v4532
        %v4548 = vsel %vm1354, %v4502, %v4547
        %v4549 = vsel %vm772, %v4533, %v4534
        %v4550 = vsel %vm1354, %v4506, %v4549
        %v4551 = vsel %vm772, %v4535, %v4536
        %v4552 = vsel %vm1354, %v4510, %v4551
        %v4553 = vsel %vm772, %v4537, %v4538
        %v4554 = vsel %vm1354, %v4514, %v4553
        %v4555 = vsel %vm772, %v4539, %v4540
        %v4556 = vsel %vm1354, %v4518, %v4555
        %v4557 = vsel %vm772, %v4541, %v4542
        %v4558 = vsel %vm1354, %v4522, %v4557
        %v4559 = vsel %vm772, %v4543, %v4544
        %v4560 = vsel %vm1354, %v4526, %v4559
        %4577 = vst [vmem:[#allocation5 + $0x1e0] sm:$0xff] %v4546
        %4578 = vst.msk [vmem:[#allocation5 + $0x1e8] sm:$0xf] %vm684, %v4500
        %4579 = vst [vmem:[#allocation5 + $0x1ec] sm:$0xff] %v4548
        %4580 = vst.msk [vmem:[#allocation5 + $0x1f4] sm:$0xf] %vm684, %v4504
        %4581 = vst [vmem:[#allocation5 + $0x1f8] sm:$0xff] %v4550
        %4582 = vst.msk [vmem:[#allocation5 + $0x200] sm:$0xf] %vm684, %v4508
        %4583 = vst [vmem:[#allocation5 + $0x204] sm:$0xff] %v4552
        %4584 = vst.msk [vmem:[#allocation5 + $0x20c] sm:$0xf] %vm684, %v4512
        %4585 = vst [vmem:[#allocation5 + $0x210] sm:$0xff] %v4554
        %4586 = vst.msk [vmem:[#allocation5 + $0x218] sm:$0xf] %vm684, %v4516
        %4587 = vst [vmem:[#allocation5 + $0x21c] sm:$0xff] %v4556
        %4588 = vst.msk [vmem:[#allocation5 + $0x224] sm:$0xf] %vm684, %v4520
        %4589 = vst [vmem:[#allocation5 + $0x228] sm:$0xff] %v4558
        %4590 = vst.msk [vmem:[#allocation5 + $0x230] sm:$0xf] %vm684, %v4524
        %4591 = vst [vmem:[#allocation5 + $0x234] sm:$0xff] %v4560
        %4592 = vst.msk [vmem:[#allocation5 + $0x23c] sm:$0xf] %vm684, %v4528
        %v4593 = vld [vmem:[%s3880 + $0x4] sm:$0xff]
        %v4594 = vld [vmem:[%s3880 + $0xc] sm:$0xf]
        %v4595 = vld [vmem:[%s3880 + $0x14] sm:$0xff]
        %v4596 = vld [vmem:[%s3880 + $0x1c] sm:$0xf]
        %v4597 = vld [vmem:[%s3880 + $0x24] sm:$0xff]
        %v4598 = vld [vmem:[%s3880 + $0x2c] sm:$0xf]
        %v4599 = vld [vmem:[%s3880 + $0x34] sm:$0xff]
        %v4600 = vld [vmem:[%s3880 + $0x3c] sm:$0xf]
        %v4601 = vld [vmem:[%s3880 + $0x44] sm:$0xff]
        %v4602 = vld [vmem:[%s3880 + $0x4c] sm:$0xf]
        %v4603 = vld [vmem:[%s3880 + $0x54] sm:$0xff]
        %v4604 = vld [vmem:[%s3880 + $0x5c] sm:$0xf]
        %v4605 = vld [vmem:[%s3880 + $0x64] sm:$0xff]
        %v4606 = vld [vmem:[%s3880 + $0x6c] sm:$0xf]
        %v4607 = vld [vmem:[%s3880 + $0x74] sm:$0xff]
        %v4608 = vld [vmem:[%s3880 + $0x7c] sm:$0xf]
        %4625 = vrot.lane.b32.xlu0 %v4593, 111
        %v4626 = vpop.permute.xlu0 %4625
        %4627 = vrot.lane.b32.xlu0 %v4594, 111
        %v4628 = vpop.permute.xlu0 %4627
        %4629 = vrot.lane.b32.xlu0 %v4595, 111
        %v4630 = vpop.permute.xlu0 %4629
        %4631 = vrot.lane.b32.xlu0 %v4596, 111
        %v4632 = vpop.permute.xlu0 %4631
        %4633 = vrot.lane.b32.xlu0 %v4597, 111
        %v4634 = vpop.permute.xlu0 %4633
        %4635 = vrot.lane.b32.xlu0 %v4598, 111
        %v4636 = vpop.permute.xlu0 %4635
        %4637 = vrot.lane.b32.xlu0 %v4599, 111
        %v4638 = vpop.permute.xlu0 %4637
        %4639 = vrot.lane.b32.xlu0 %v4600, 111
        %v4640 = vpop.permute.xlu0 %4639
        %4641 = vrot.lane.b32.xlu0 %v4601, 111
        %v4642 = vpop.permute.xlu0 %4641
        %4643 = vrot.lane.b32.xlu0 %v4602, 111
        %v4644 = vpop.permute.xlu0 %4643
        %4645 = vrot.lane.b32.xlu0 %v4603, 111
        %v4646 = vpop.permute.xlu0 %4645
        %4647 = vrot.lane.b32.xlu0 %v4604, 111
        %v4648 = vpop.permute.xlu0 %4647
        %4649 = vrot.lane.b32.xlu0 %v4605, 111
        %v4650 = vpop.permute.xlu0 %4649
        %4651 = vrot.lane.b32.xlu0 %v4606, 111
        %v4652 = vpop.permute.xlu0 %4651
        %4653 = vrot.lane.b32.xlu0 %v4607, 111
        %v4654 = vpop.permute.xlu0 %4653
        %4655 = vrot.lane.b32.xlu0 %v4608, 111
        %v4656 = vpop.permute.xlu0 %4655
        %v4657 = vrot.slane %v4626, 4
        %v4658 = vrot.slane %v4628, 4
        %v4659 = vrot.slane %v4630, 4
        %v4660 = vrot.slane %v4632, 4
        %v4661 = vrot.slane %v4634, 4
        %v4662 = vrot.slane %v4636, 4
        %v4663 = vrot.slane %v4638, 4
        %v4664 = vrot.slane %v4640, 4
        %v4665 = vrot.slane %v4642, 4
        %v4666 = vrot.slane %v4644, 4
        %v4667 = vrot.slane %v4646, 4
        %v4668 = vrot.slane %v4648, 4
        %v4669 = vrot.slane %v4650, 4
        %v4670 = vrot.slane %v4652, 4
        %v4671 = vrot.slane %v4654, 4
        %v4672 = vrot.slane %v4656, 4
        %v4673 = vsel %vm772, %v4657, %v4658
        %v4674 = vsel %vm1483, %v4626, %v4673
        %v4675 = vsel %vm772, %v4659, %v4660
        %v4676 = vsel %vm1483, %v4630, %v4675
        %v4677 = vsel %vm772, %v4661, %v4662
        %v4678 = vsel %vm1483, %v4634, %v4677
        %v4679 = vsel %vm772, %v4663, %v4664
        %v4680 = vsel %vm1483, %v4638, %v4679
        %v4681 = vsel %vm772, %v4665, %v4666
        %v4682 = vsel %vm1483, %v4642, %v4681
        %v4683 = vsel %vm772, %v4667, %v4668
        %v4684 = vsel %vm1483, %v4646, %v4683
        %v4685 = vsel %vm772, %v4669, %v4670
        %v4686 = vsel %vm1483, %v4650, %v4685
        %v4687 = vsel %vm772, %v4671, %v4672
        %v4688 = vsel %vm1483, %v4654, %v4687
        %4705 = vst [vmem:[#allocation5 + $0x240] sm:$0xff] %v4674
        %4706 = vst.msk [vmem:[#allocation5 + $0x248] sm:$0xf] %vm684, %v4628
        %4707 = vst [vmem:[#allocation5 + $0x24c] sm:$0xff] %v4676
        %4708 = vst.msk [vmem:[#allocation5 + $0x254] sm:$0xf] %vm684, %v4632
        %4709 = vst [vmem:[#allocation5 + $0x258] sm:$0xff] %v4678
        %4710 = vst.msk [vmem:[#allocation5 + $0x260] sm:$0xf] %vm684, %v4636
        %4711 = vst [vmem:[#allocation5 + $0x264] sm:$0xff] %v4680
        %4712 = vst.msk [vmem:[#allocation5 + $0x26c] sm:$0xf] %vm684, %v4640
        %4713 = vst [vmem:[#allocation5 + $0x270] sm:$0xff] %v4682
        %4714 = vst.msk [vmem:[#allocation5 + $0x278] sm:$0xf] %vm684, %v4644
        %4715 = vst [vmem:[#allocation5 + $0x27c] sm:$0xff] %v4684
        %4716 = vst.msk [vmem:[#allocation5 + $0x284] sm:$0xf] %vm684, %v4648
        %4717 = vst [vmem:[#allocation5 + $0x288] sm:$0xff] %v4686
        %4718 = vst.msk [vmem:[#allocation5 + $0x290] sm:$0xf] %vm684, %v4652
        %4719 = vst [vmem:[#allocation5 + $0x294] sm:$0xff] %v4688
        %4720 = vst.msk [vmem:[#allocation5 + $0x29c] sm:$0xf] %vm684, %v4656
        %v4721 = vld [vmem:[%s3880 + $0x4] sm:$0xff]
        %v4722 = vld [vmem:[%s3880 + $0xc] sm:$0xf]
        %v4723 = vld [vmem:[%s3880 + $0x14] sm:$0xff]
        %v4724 = vld [vmem:[%s3880 + $0x1c] sm:$0xf]
        %v4725 = vld [vmem:[%s3880 + $0x24] sm:$0xff]
        %v4726 = vld [vmem:[%s3880 + $0x2c] sm:$0xf]
        %v4727 = vld [vmem:[%s3880 + $0x34] sm:$0xff]
        %v4728 = vld [vmem:[%s3880 + $0x3c] sm:$0xf]
        %v4729 = vld [vmem:[%s3880 + $0x44] sm:$0xff]
        %v4730 = vld [vmem:[%s3880 + $0x4c] sm:$0xf]
        %v4731 = vld [vmem:[%s3880 + $0x54] sm:$0xff]
        %v4732 = vld [vmem:[%s3880 + $0x5c] sm:$0xf]
        %v4733 = vld [vmem:[%s3880 + $0x64] sm:$0xff]
        %v4734 = vld [vmem:[%s3880 + $0x6c] sm:$0xf]
        %v4735 = vld [vmem:[%s3880 + $0x74] sm:$0xff]
        %v4736 = vld [vmem:[%s3880 + $0x7c] sm:$0xf]
        %4753 = vrot.lane.b32.xlu0 %v4721, 110
        %v4754 = vpop.permute.xlu0 %4753
        %4755 = vrot.lane.b32.xlu0 %v4722, 110
        %v4756 = vpop.permute.xlu0 %4755
        %4757 = vrot.lane.b32.xlu0 %v4723, 110
        %v4758 = vpop.permute.xlu0 %4757
        %4759 = vrot.lane.b32.xlu0 %v4724, 110
        %v4760 = vpop.permute.xlu0 %4759
        %4761 = vrot.lane.b32.xlu0 %v4725, 110
        %v4762 = vpop.permute.xlu0 %4761
        %4763 = vrot.lane.b32.xlu0 %v4726, 110
        %v4764 = vpop.permute.xlu0 %4763
        %4765 = vrot.lane.b32.xlu0 %v4727, 110
        %v4766 = vpop.permute.xlu0 %4765
        %4767 = vrot.lane.b32.xlu0 %v4728, 110
        %v4768 = vpop.permute.xlu0 %4767
        %4769 = vrot.lane.b32.xlu0 %v4729, 110
        %v4770 = vpop.permute.xlu0 %4769
        %4771 = vrot.lane.b32.xlu0 %v4730, 110
        %v4772 = vpop.permute.xlu0 %4771
        %4773 = vrot.lane.b32.xlu0 %v4731, 110
        %v4774 = vpop.permute.xlu0 %4773
        %4775 = vrot.lane.b32.xlu0 %v4732, 110
        %v4776 = vpop.permute.xlu0 %4775
        %4777 = vrot.lane.b32.xlu0 %v4733, 110
        %v4778 = vpop.permute.xlu0 %4777
        %4779 = vrot.lane.b32.xlu0 %v4734, 110
        %v4780 = vpop.permute.xlu0 %4779
        %4781 = vrot.lane.b32.xlu0 %v4735, 110
        %v4782 = vpop.permute.xlu0 %4781
        %4783 = vrot.lane.b32.xlu0 %v4736, 110
        %v4784 = vpop.permute.xlu0 %4783
        %v4785 = vrot.slane %v4754, 4
        %v4786 = vrot.slane %v4756, 4
        %v4787 = vrot.slane %v4758, 4
        %v4788 = vrot.slane %v4760, 4
        %v4789 = vrot.slane %v4762, 4
        %v4790 = vrot.slane %v4764, 4
        %v4791 = vrot.slane %v4766, 4
        %v4792 = vrot.slane %v4768, 4
        %v4793 = vrot.slane %v4770, 4
        %v4794 = vrot.slane %v4772, 4
        %v4795 = vrot.slane %v4774, 4
        %v4796 = vrot.slane %v4776, 4
        %v4797 = vrot.slane %v4778, 4
        %v4798 = vrot.slane %v4780, 4
        %v4799 = vrot.slane %v4782, 4
        %v4800 = vrot.slane %v4784, 4
        %v4801 = vsel %vm772, %v4785, %v4786
        %v4802 = vsel %vm1612, %v4754, %v4801
        %v4803 = vsel %vm772, %v4787, %v4788
        %v4804 = vsel %vm1612, %v4758, %v4803
        %v4805 = vsel %vm772, %v4789, %v4790
        %v4806 = vsel %vm1612, %v4762, %v4805
        %v4807 = vsel %vm772, %v4791, %v4792
        %v4808 = vsel %vm1612, %v4766, %v4807
        %v4809 = vsel %vm772, %v4793, %v4794
        %v4810 = vsel %vm1612, %v4770, %v4809
        %v4811 = vsel %vm772, %v4795, %v4796
        %v4812 = vsel %vm1612, %v4774, %v4811
        %v4813 = vsel %vm772, %v4797, %v4798
        %v4814 = vsel %vm1612, %v4778, %v4813
        %v4815 = vsel %vm772, %v4799, %v4800
        %v4816 = vsel %vm1612, %v4782, %v4815
        %4833 = vst [vmem:[#allocation5 + $0x2a0] sm:$0xff] %v4802
        %4834 = vst.msk [vmem:[#allocation5 + $0x2a8] sm:$0xf] %vm684, %v4756
        %4835 = vst [vmem:[#allocation5 + $0x2ac] sm:$0xff] %v4804
        %4836 = vst.msk [vmem:[#allocation5 + $0x2b4] sm:$0xf] %vm684, %v4760
        %4837 = vst [vmem:[#allocation5 + $0x2b8] sm:$0xff] %v4806
        %4838 = vst.msk [vmem:[#allocation5 + $0x2c0] sm:$0xf] %vm684, %v4764
        %4839 = vst [vmem:[#allocation5 + $0x2c4] sm:$0xff] %v4808
        %4840 = vst.msk [vmem:[#allocation5 + $0x2cc] sm:$0xf] %vm684, %v4768
        %4841 = vst [vmem:[#allocation5 + $0x2d0] sm:$0xff] %v4810
        %4842 = vst.msk [vmem:[#allocation5 + $0x2d8] sm:$0xf] %vm684, %v4772
        %4843 = vst [vmem:[#allocation5 + $0x2dc] sm:$0xff] %v4812
        %4844 = vst.msk [vmem:[#allocation5 + $0x2e4] sm:$0xf] %vm684, %v4776
        %4845 = vst [vmem:[#allocation5 + $0x2e8] sm:$0xff] %v4814
        %4846 = vst.msk [vmem:[#allocation5 + $0x2f0] sm:$0xf] %vm684, %v4780
        %4847 = vst [vmem:[#allocation5 + $0x2f4] sm:$0xff] %v4816
        %4848 = vst.msk [vmem:[#allocation5 + $0x2fc] sm:$0xf] %vm684, %v4784
        %v4849 = vld [vmem:[%s3880 + $0x4] sm:$0xff]
        %v4850 = vld [vmem:[%s3880 + $0xc] sm:$0xf]
        %v4851 = vld [vmem:[%s3880 + $0x14] sm:$0xff]
        %v4852 = vld [vmem:[%s3880 + $0x1c] sm:$0xf]
        %v4853 = vld [vmem:[%s3880 + $0x24] sm:$0xff]
        %v4854 = vld [vmem:[%s3880 + $0x2c] sm:$0xf]
        %v4855 = vld [vmem:[%s3880 + $0x34] sm:$0xff]
        %v4856 = vld [vmem:[%s3880 + $0x3c] sm:$0xf]
        %v4857 = vld [vmem:[%s3880 + $0x44] sm:$0xff]
        %v4858 = vld [vmem:[%s3880 + $0x4c] sm:$0xf]
        %v4859 = vld [vmem:[%s3880 + $0x54] sm:$0xff]
        %v4860 = vld [vmem:[%s3880 + $0x5c] sm:$0xf]
        %v4861 = vld [vmem:[%s3880 + $0x64] sm:$0xff]
        %v4862 = vld [vmem:[%s3880 + $0x6c] sm:$0xf]
        %v4863 = vld [vmem:[%s3880 + $0x74] sm:$0xff]
        %v4864 = vld [vmem:[%s3880 + $0x7c] sm:$0xf]
        %4881 = vrot.lane.b32.xlu0 %v4849, 109
        %v4882 = vpop.permute.xlu0 %4881
        %4883 = vrot.lane.b32.xlu0 %v4850, 109
        %v4884 = vpop.permute.xlu0 %4883
        %4885 = vrot.lane.b32.xlu0 %v4851, 109
        %v4886 = vpop.permute.xlu0 %4885
        %4887 = vrot.lane.b32.xlu0 %v4852, 109
        %v4888 = vpop.permute.xlu0 %4887
        %4889 = vrot.lane.b32.xlu0 %v4853, 109
        %v4890 = vpop.permute.xlu0 %4889
        %4891 = vrot.lane.b32.xlu0 %v4854, 109
        %v4892 = vpop.permute.xlu0 %4891
        %4893 = vrot.lane.b32.xlu0 %v4855, 109
        %v4894 = vpop.permute.xlu0 %4893
        %4895 = vrot.lane.b32.xlu0 %v4856, 109
        %v4896 = vpop.permute.xlu0 %4895
        %4897 = vrot.lane.b32.xlu0 %v4857, 109
        %v4898 = vpop.permute.xlu0 %4897
        %4899 = vrot.lane.b32.xlu0 %v4858, 109
        %v4900 = vpop.permute.xlu0 %4899
        %4901 = vrot.lane.b32.xlu0 %v4859, 109
        %v4902 = vpop.permute.xlu0 %4901
        %4903 = vrot.lane.b32.xlu0 %v4860, 109
        %v4904 = vpop.permute.xlu0 %4903
        %4905 = vrot.lane.b32.xlu0 %v4861, 109
        %v4906 = vpop.permute.xlu0 %4905
        %4907 = vrot.lane.b32.xlu0 %v4862, 109
        %v4908 = vpop.permute.xlu0 %4907
        %4909 = vrot.lane.b32.xlu0 %v4863, 109
        %v4910 = vpop.permute.xlu0 %4909
        %4911 = vrot.lane.b32.xlu0 %v4864, 109
        %v4912 = vpop.permute.xlu0 %4911
        %v4913 = vrot.slane %v4882, 4
        %v4914 = vrot.slane %v4884, 4
        %v4915 = vrot.slane %v4886, 4
        %v4916 = vrot.slane %v4888, 4
        %v4917 = vrot.slane %v4890, 4
        %v4918 = vrot.slane %v4892, 4
        %v4919 = vrot.slane %v4894, 4
        %v4920 = vrot.slane %v4896, 4
        %v4921 = vrot.slane %v4898, 4
        %v4922 = vrot.slane %v4900, 4
        %v4923 = vrot.slane %v4902, 4
        %v4924 = vrot.slane %v4904, 4
        %v4925 = vrot.slane %v4906, 4
        %v4926 = vrot.slane %v4908, 4
        %v4927 = vrot.slane %v4910, 4
        %v4928 = vrot.slane %v4912, 4
        %v4929 = vsel %vm772, %v4913, %v4914
        %v4930 = vsel %vm1741, %v4882, %v4929
        %v4931 = vsel %vm772, %v4915, %v4916
        %v4932 = vsel %vm1741, %v4886, %v4931
        %v4933 = vsel %vm772, %v4917, %v4918
        %v4934 = vsel %vm1741, %v4890, %v4933
        %v4935 = vsel %vm772, %v4919, %v4920
        %v4936 = vsel %vm1741, %v4894, %v4935
        %v4937 = vsel %vm772, %v4921, %v4922
        %v4938 = vsel %vm1741, %v4898, %v4937
        %v4939 = vsel %vm772, %v4923, %v4924
        %v4940 = vsel %vm1741, %v4902, %v4939
        %v4941 = vsel %vm772, %v4925, %v4926
        %v4942 = vsel %vm1741, %v4906, %v4941
        %v4943 = vsel %vm772, %v4927, %v4928
        %v4944 = vsel %vm1741, %v4910, %v4943
        %4961 = vst [vmem:[#allocation5 + $0x300] sm:$0xff] %v4930
        %4962 = vst.msk [vmem:[#allocation5 + $0x308] sm:$0xf] %vm684, %v4884
        %4963 = vst [vmem:[#allocation5 + $0x30c] sm:$0xff] %v4932
        %4964 = vst.msk [vmem:[#allocation5 + $0x314] sm:$0xf] %vm684, %v4888
        %4965 = vst [vmem:[#allocation5 + $0x318] sm:$0xff] %v4934
        %4966 = vst.msk [vmem:[#allocation5 + $0x320] sm:$0xf] %vm684, %v4892
        %4967 = vst [vmem:[#allocation5 + $0x324] sm:$0xff] %v4936
        %4968 = vst.msk [vmem:[#allocation5 + $0x32c] sm:$0xf] %vm684, %v4896
        %4969 = vst [vmem:[#allocation5 + $0x330] sm:$0xff] %v4938
        %4970 = vst.msk [vmem:[#allocation5 + $0x338] sm:$0xf] %vm684, %v4900
        %4971 = vst [vmem:[#allocation5 + $0x33c] sm:$0xff] %v4940
        %4972 = vst.msk [vmem:[#allocation5 + $0x344] sm:$0xf] %vm684, %v4904
        %4973 = vst [vmem:[#allocation5 + $0x348] sm:$0xff] %v4942
        %4974 = vst.msk [vmem:[#allocation5 + $0x350] sm:$0xf] %vm684, %v4908
        %4975 = vst [vmem:[#allocation5 + $0x354] sm:$0xff] %v4944
        %4976 = vst.msk [vmem:[#allocation5 + $0x35c] sm:$0xf] %vm684, %v4912
        %s4977 = scalar_lea.vmem %s4, 320
        %v4978 = vld [vmem:[%s4977] sm:$0xff]
        %v4979 = vld [vmem:[%s4977 + $0x8] sm:$0xff]
        %v4980 = vld [vmem:[%s4977 + $0x10] sm:$0xf]
        %v4981 = vld [vmem:[%s4977 + $0x14] sm:$0xff]
        %v4982 = vld [vmem:[%s4977 + $0x1c] sm:$0xff]
        %v4983 = vld [vmem:[%s4977 + $0x24] sm:$0xf]
        %v4984 = vld [vmem:[%s4977 + $0x28] sm:$0xff]
        %v4985 = vld [vmem:[%s4977 + $0x30] sm:$0xff]
        %v4986 = vld [vmem:[%s4977 + $0x38] sm:$0xf]
        %v4987 = vld [vmem:[%s4977 + $0x3c] sm:$0xff]
        %v4988 = vld [vmem:[%s4977 + $0x44] sm:$0xff]
        %v4989 = vld [vmem:[%s4977 + $0x4c] sm:$0xf]
        %v4990 = vld [vmem:[%s4977 + $0x50] sm:$0xff]
        %v4991 = vld [vmem:[%s4977 + $0x58] sm:$0xff]
        %v4992 = vld [vmem:[%s4977 + $0x60] sm:$0xf]
        %v4993 = vld [vmem:[%s4977 + $0x64] sm:$0xff]
        %v4994 = vld [vmem:[%s4977 + $0x6c] sm:$0xff]
        %v4995 = vld [vmem:[%s4977 + $0x74] sm:$0xf]
        %v4996 = vld [vmem:[%s4977 + $0x78] sm:$0xff]
        %v4997 = vld [vmem:[%s4977 + $0x80] sm:$0xff]
        %v4998 = vld [vmem:[%s4977 + $0x88] sm:$0xf]
        %v4999 = vld [vmem:[%s4977 + $0x8c] sm:$0xff]
        %v5000 = vld [vmem:[%s4977 + $0x94] sm:$0xff]
        %v5001 = vld [vmem:[%s4977 + $0x9c] sm:$0xf]
        %v5002 = vld [vmem:[%s4977 + $0xa0] sm:$0xff]
        %v5003 = vld [vmem:[%s4977 + $0xa8] sm:$0xff]
        %v5004 = vld [vmem:[%s4977 + $0xb0] sm:$0xf]
        %v5005 = vld [vmem:[%s4977 + $0xb4] sm:$0xff]
        %v5006 = vld [vmem:[%s4977 + $0xbc] sm:$0xff]
        %v5007 = vld [vmem:[%s4977 + $0xc4] sm:$0xf]
        %v5008 = vld [vmem:[%s4977 + $0xc8] sm:$0xff]
        %v5009 = vld [vmem:[%s4977 + $0xd0] sm:$0xff]
        %v5010 = vld [vmem:[%s4977 + $0xd8] sm:$0xf]
        %v5011 = vld [vmem:[%s4977 + $0xdc] sm:$0xff]
        %v5012 = vld [vmem:[%s4977 + $0xe4] sm:$0xff]
        %v5013 = vld [vmem:[%s4977 + $0xec] sm:$0xf]
        %v5014 = vld [vmem:[%s4977 + $0xf0] sm:$0xff]
        %v5015 = vld [vmem:[%s4977 + $0xf8] sm:$0xff]
        %v5016 = vld [vmem:[%s4977 + $0x100] sm:$0xf]
        %v5017 = vld [vmem:[%s4977 + $0x104] sm:$0xff]
        %v5018 = vld [vmem:[%s4977 + $0x10c] sm:$0xff]
        %v5019 = vld [vmem:[%s4977 + $0x114] sm:$0xf]
        %v5020 = vld [vmem:[%s4977 + $0x118] sm:$0xff]
        %v5021 = vld [vmem:[%s4977 + $0x120] sm:$0xff]
        %v5022 = vld [vmem:[%s4977 + $0x128] sm:$0xf]
        %v5023 = vld [vmem:[%s4977 + $0x12c] sm:$0xff]
        %v5024 = vld [vmem:[%s4977 + $0x134] sm:$0xff]
        %v5025 = vld [vmem:[%s4977 + $0x13c] sm:$0xf]
        %v5026 = vld [vmem:[#allocation5] sm:$0xff]
        %v5027 = vld [vmem:[#allocation5 + $0x8] sm:$0xf]
        %v5028 = vld [vmem:[#allocation5 + $0xc] sm:$0xff]
        %v5029 = vld [vmem:[#allocation5 + $0x14] sm:$0xf]
        %v5030 = vld [vmem:[#allocation5 + $0x18] sm:$0xff]
        %v5031 = vld [vmem:[#allocation5 + $0x20] sm:$0xf]
        %v5032 = vld [vmem:[#allocation5 + $0x24] sm:$0xff]
        %v5033 = vld [vmem:[#allocation5 + $0x2c] sm:$0xf]
        %v5034 = vld [vmem:[#allocation5 + $0x30] sm:$0xff]
        %v5035 = vld [vmem:[#allocation5 + $0x38] sm:$0xf]
        %v5036 = vld [vmem:[#allocation5 + $0x3c] sm:$0xff]
        %v5037 = vld [vmem:[#allocation5 + $0x44] sm:$0xf]
        %v5038 = vld [vmem:[#allocation5 + $0x48] sm:$0xff]
        %v5039 = vld [vmem:[#allocation5 + $0x50] sm:$0xf]
        %v5040 = vld [vmem:[#allocation5 + $0x54] sm:$0xff]
        %v5041 = vld [vmem:[#allocation5 + $0x5c] sm:$0xf]
        %v5042 = vld [vmem:[#allocation5 + $0x60] sm:$0xff]
        %v5043 = vld [vmem:[#allocation5 + $0x68] sm:$0xf]
        %v5044 = vld [vmem:[#allocation5 + $0x6c] sm:$0xff]
        %v5045 = vld [vmem:[#allocation5 + $0x74] sm:$0xf]
        %v5046 = vld [vmem:[#allocation5 + $0x78] sm:$0xff]
        %v5047 = vld [vmem:[#allocation5 + $0x80] sm:$0xf]
        %v5048 = vld [vmem:[#allocation5 + $0x84] sm:$0xff]
        %v5049 = vld [vmem:[#allocation5 + $0x8c] sm:$0xf]
        %v5050 = vld [vmem:[#allocation5 + $0x90] sm:$0xff]
        %v5051 = vld [vmem:[#allocation5 + $0x98] sm:$0xf]
        %v5052 = vld [vmem:[#allocation5 + $0x9c] sm:$0xff]
        %v5053 = vld [vmem:[#allocation5 + $0xa4] sm:$0xf]
        %v5054 = vld [vmem:[#allocation5 + $0xa8] sm:$0xff]
        %v5055 = vld [vmem:[#allocation5 + $0xb0] sm:$0xf]
        %v5056 = vld [vmem:[#allocation5 + $0xb4] sm:$0xff]
        %v5057 = vld [vmem:[#allocation5 + $0xbc] sm:$0xf]
        %v5058 = vld [vmem:[#allocation5 + $0xc0] sm:$0xff]
        %v5059 = vld [vmem:[#allocation5 + $0xc8] sm:$0xf]
        %v5060 = vld [vmem:[#allocation5 + $0xcc] sm:$0xff]
        %v5061 = vld [vmem:[#allocation5 + $0xd4] sm:$0xf]
        %v5062 = vld [vmem:[#allocation5 + $0xd8] sm:$0xff]
        %v5063 = vld [vmem:[#allocation5 + $0xe0] sm:$0xf]
        %v5064 = vld [vmem:[#allocation5 + $0xe4] sm:$0xff]
        %v5065 = vld [vmem:[#allocation5 + $0xec] sm:$0xf]
        %v5066 = vld [vmem:[#allocation5 + $0xf0] sm:$0xff]
        %v5067 = vld [vmem:[#allocation5 + $0xf8] sm:$0xf]
        %v5068 = vld [vmem:[#allocation5 + $0xfc] sm:$0xff]
        %v5069 = vld [vmem:[#allocation5 + $0x104] sm:$0xf]
        %v5070 = vld [vmem:[#allocation5 + $0x108] sm:$0xff]
        %v5071 = vld [vmem:[#allocation5 + $0x110] sm:$0xf]
        %v5072 = vld [vmem:[#allocation5 + $0x114] sm:$0xff]
        %v5073 = vld [vmem:[#allocation5 + $0x11c] sm:$0xf]
        %v5074 = vld [vmem:[#allocation5 + $0x120] sm:$0xff]
        %v5075 = vld [vmem:[#allocation5 + $0x128] sm:$0xf]
        %v5076 = vld [vmem:[#allocation5 + $0x12c] sm:$0xff]
        %v5077 = vld [vmem:[#allocation5 + $0x134] sm:$0xf]
        %v5078 = vld [vmem:[#allocation5 + $0x138] sm:$0xff]
        %v5079 = vld [vmem:[#allocation5 + $0x140] sm:$0xf]
        %v5080 = vld [vmem:[#allocation5 + $0x144] sm:$0xff]
        %v5081 = vld [vmem:[#allocation5 + $0x14c] sm:$0xf]
        %v5082 = vld [vmem:[#allocation5 + $0x150] sm:$0xff]
        %v5083 = vld [vmem:[#allocation5 + $0x158] sm:$0xf]
        %v5084 = vld [vmem:[#allocation5 + $0x15c] sm:$0xff]
        %v5085 = vld [vmem:[#allocation5 + $0x164] sm:$0xf]
        %v5086 = vld [vmem:[#allocation5 + $0x168] sm:$0xff]
        %v5087 = vld [vmem:[#allocation5 + $0x170] sm:$0xf]
        %v5088 = vld [vmem:[#allocation5 + $0x174] sm:$0xff]
        %v5089 = vld [vmem:[#allocation5 + $0x17c] sm:$0xf]
        %v5090 = vld [vmem:[#allocation5 + $0x180] sm:$0xff]
        %v5091 = vld [vmem:[#allocation5 + $0x188] sm:$0xf]
        %v5092 = vld [vmem:[#allocation5 + $0x18c] sm:$0xff]
        %v5093 = vld [vmem:[#allocation5 + $0x194] sm:$0xf]
        %v5094 = vld [vmem:[#allocation5 + $0x198] sm:$0xff]
        %v5095 = vld [vmem:[#allocation5 + $0x1a0] sm:$0xf]
        %v5096 = vld [vmem:[#allocation5 + $0x1a4] sm:$0xff]
        %v5097 = vld [vmem:[#allocation5 + $0x1ac] sm:$0xf]
        %v5098 = vld [vmem:[#allocation5 + $0x1b0] sm:$0xff]
        %v5099 = vld [vmem:[#allocation5 + $0x1b8] sm:$0xf]
        %v5100 = vld [vmem:[#allocation5 + $0x1bc] sm:$0xff]
        %v5101 = vld [vmem:[#allocation5 + $0x1c4] sm:$0xf]
        %v5102 = vld [vmem:[#allocation5 + $0x1c8] sm:$0xff]
        %v5103 = vld [vmem:[#allocation5 + $0x1d0] sm:$0xf]
        %v5104 = vld [vmem:[#allocation5 + $0x1d4] sm:$0xff]
        %v5105 = vld [vmem:[#allocation5 + $0x1dc] sm:$0xf]
        %v5106 = vld [vmem:[#allocation5 + $0x1e0] sm:$0xff]
        %v5107 = vld [vmem:[#allocation5 + $0x1e8] sm:$0xf]
        %v5108 = vld [vmem:[#allocation5 + $0x1ec] sm:$0xff]
        %v5109 = vld [vmem:[#allocation5 + $0x1f4] sm:$0xf]
        %v5110 = vld [vmem:[#allocation5 + $0x1f8] sm:$0xff]
        %v5111 = vld [vmem:[#allocation5 + $0x200] sm:$0xf]
        %v5112 = vld [vmem:[#allocation5 + $0x204] sm:$0xff]
        %v5113 = vld [vmem:[#allocation5 + $0x20c] sm:$0xf]
        %v5114 = vld [vmem:[#allocation5 + $0x210] sm:$0xff]
        %v5115 = vld [vmem:[#allocation5 + $0x218] sm:$0xf]
        %v5116 = vld [vmem:[#allocation5 + $0x21c] sm:$0xff]
        %v5117 = vld [vmem:[#allocation5 + $0x224] sm:$0xf]
        %v5118 = vld [vmem:[#allocation5 + $0x228] sm:$0xff]
        %v5119 = vld [vmem:[#allocation5 + $0x230] sm:$0xf]
        %v5120 = vld [vmem:[#allocation5 + $0x234] sm:$0xff]
        %v5121 = vld [vmem:[#allocation5 + $0x23c] sm:$0xf]
        %v5122 = vld [vmem:[#allocation5 + $0x240] sm:$0xff]
        %v5123 = vld [vmem:[#allocation5 + $0x248] sm:$0xf]
        %v5124 = vld [vmem:[#allocation5 + $0x24c] sm:$0xff]
        %v5125 = vld [vmem:[#allocation5 + $0x254] sm:$0xf]
        %v5126 = vld [vmem:[#allocation5 + $0x258] sm:$0xff]
        %v5127 = vld [vmem:[#allocation5 + $0x260] sm:$0xf]
        %v5128 = vld [vmem:[#allocation5 + $0x264] sm:$0xff]
        %v5129 = vld [vmem:[#allocation5 + $0x26c] sm:$0xf]
        %v5130 = vld [vmem:[#allocation5 + $0x270] sm:$0xff]
        %v5131 = vld [vmem:[#allocation5 + $0x278] sm:$0xf]
        %v5132 = vld [vmem:[#allocation5 + $0x27c] sm:$0xff]
        %v5133 = vld [vmem:[#allocation5 + $0x284] sm:$0xf]
        %v5134 = vld [vmem:[#allocation5 + $0x288] sm:$0xff]
        %v5135 = vld [vmem:[#allocation5 + $0x290] sm:$0xf]
        %v5136 = vld [vmem:[#allocation5 + $0x294] sm:$0xff]
        %v5137 = vld [vmem:[#allocation5 + $0x29c] sm:$0xf]
        %v5138 = vld [vmem:[#allocation5 + $0x2a0] sm:$0xff]
        %v5139 = vld [vmem:[#allocation5 + $0x2a8] sm:$0xf]
        %v5140 = vld [vmem:[#allocation5 + $0x2ac] sm:$0xff]
        %v5141 = vld [vmem:[#allocation5 + $0x2b4] sm:$0xf]
        %v5142 = vld [vmem:[#allocation5 + $0x2b8] sm:$0xff]
        %v5143 = vld [vmem:[#allocation5 + $0x2c0] sm:$0xf]
        %v5144 = vld [vmem:[#allocation5 + $0x2c4] sm:$0xff]
        %v5145 = vld [vmem:[#allocation5 + $0x2cc] sm:$0xf]
        %v5146 = vld [vmem:[#allocation5 + $0x2d0] sm:$0xff]
        %v5147 = vld [vmem:[#allocation5 + $0x2d8] sm:$0xf]
        %v5148 = vld [vmem:[#allocation5 + $0x2dc] sm:$0xff]
        %v5149 = vld [vmem:[#allocation5 + $0x2e4] sm:$0xf]
        %v5150 = vld [vmem:[#allocation5 + $0x2e8] sm:$0xff]
        %v5151 = vld [vmem:[#allocation5 + $0x2f0] sm:$0xf]
        %v5152 = vld [vmem:[#allocation5 + $0x2f4] sm:$0xff]
        %v5153 = vld [vmem:[#allocation5 + $0x2fc] sm:$0xf]
        %v5154 = vld [vmem:[#allocation5 + $0x300] sm:$0xff]
        %v5155 = vld [vmem:[#allocation5 + $0x308] sm:$0xf]
        %v5156 = vld [vmem:[#allocation5 + $0x30c] sm:$0xff]
        %v5157 = vld [vmem:[#allocation5 + $0x314] sm:$0xf]
        %v5158 = vld [vmem:[#allocation5 + $0x318] sm:$0xff]
        %v5159 = vld [vmem:[#allocation5 + $0x320] sm:$0xf]
        %v5160 = vld [vmem:[#allocation5 + $0x324] sm:$0xff]
        %v5161 = vld [vmem:[#allocation5 + $0x32c] sm:$0xf]
        %v5162 = vld [vmem:[#allocation5 + $0x330] sm:$0xff]
        %v5163 = vld [vmem:[#allocation5 + $0x338] sm:$0xf]
        %v5164 = vld [vmem:[#allocation5 + $0x33c] sm:$0xff]
        %v5165 = vld [vmem:[#allocation5 + $0x344] sm:$0xf]
        %v5166 = vld [vmem:[#allocation5 + $0x348] sm:$0xff]
        %v5167 = vld [vmem:[#allocation5 + $0x350] sm:$0xf]
        %v5168 = vld [vmem:[#allocation5 + $0x354] sm:$0xff]
        %v5169 = vld [vmem:[#allocation5 + $0x35c] sm:$0xf]
        %s5170 = scalar_lea.vmem %s5, 128
        %v5171 = vld [vmem:[%s5170] sm:$0xff]
        %v5172 = vld [vmem:[%s5170 + $0x8] sm:$0xff]
        %v5173 = vld [vmem:[%s5170 + $0x10] sm:$0xff]
        %v5174 = vld [vmem:[%s5170 + $0x18] sm:$0xff]
        %v5175 = vld [vmem:[%s5170 + $0x20] sm:$0xff]
        %v5176 = vld [vmem:[%s5170 + $0x28] sm:$0xff]
        %v5177 = vld [vmem:[%s5170 + $0x30] sm:$0xff]
        %v5178 = vld [vmem:[%s5170 + $0x38] sm:$0xff]
        %v5179 = vld [vmem:[%s5170 + $0x40] sm:$0xff]
        %v5180 = vld [vmem:[%s5170 + $0x48] sm:$0xff]
        %v5181 = vld [vmem:[%s5170 + $0x50] sm:$0xff]
        %v5182 = vld [vmem:[%s5170 + $0x58] sm:$0xff]
        %v5183 = vld [vmem:[%s5170 + $0x60] sm:$0xff]
        %v5184 = vld [vmem:[%s5170 + $0x68] sm:$0xff]
        %v5185 = vld [vmem:[%s5170 + $0x70] sm:$0xff]
        %v5186 = vld [vmem:[%s5170 + $0x78] sm:$0xff]
        %5188 = vset.pattern.permute.xlu0 0
        %5189 = vperm.xlu0 %5188, %v5171
        %v5190 = vpop.permute.xlu0 %5189
        %5193 = vset.pattern.permute.xlu0 0
        %5194 = vperm.xlu0 %5193, %v5172
        %v5195 = vpop.permute.xlu0 %5194
        %5198 = vset.pattern.permute.xlu0 0
        %5199 = vperm.xlu0 %5198, %v5173
        %v5200 = vpop.permute.xlu0 %5199
        %5203 = vset.pattern.permute.xlu0 0
        %5204 = vperm.xlu0 %5203, %v5174
        %v5205 = vpop.permute.xlu0 %5204
        %5208 = vset.pattern.permute.xlu0 0
        %5209 = vperm.xlu0 %5208, %v5175
        %v5210 = vpop.permute.xlu0 %5209
        %5213 = vset.pattern.permute.xlu0 0
        %5214 = vperm.xlu0 %5213, %v5176
        %v5215 = vpop.permute.xlu0 %5214
        %5218 = vset.pattern.permute.xlu0 0
        %5219 = vperm.xlu0 %5218, %v5177
        %v5220 = vpop.permute.xlu0 %5219
        %5223 = vset.pattern.permute.xlu0 0
        %5224 = vperm.xlu0 %5223, %v5178
        %v5225 = vpop.permute.xlu0 %5224
        %5228 = vset.pattern.permute.xlu0 0
        %5229 = vperm.xlu0 %5228, %v5179
        %v5230 = vpop.permute.xlu0 %5229
        %5233 = vset.pattern.permute.xlu0 0
        %5234 = vperm.xlu0 %5233, %v5180
        %v5235 = vpop.permute.xlu0 %5234
        %5238 = vset.pattern.permute.xlu0 0
        %5239 = vperm.xlu0 %5238, %v5181
        %v5240 = vpop.permute.xlu0 %5239
        %5243 = vset.pattern.permute.xlu0 0
        %5244 = vperm.xlu0 %5243, %v5182
        %v5245 = vpop.permute.xlu0 %5244
        %5248 = vset.pattern.permute.xlu0 0
        %5249 = vperm.xlu0 %5248, %v5183
        %v5250 = vpop.permute.xlu0 %5249
        %5253 = vset.pattern.permute.xlu0 0
        %5254 = vperm.xlu0 %5253, %v5184
        %v5255 = vpop.permute.xlu0 %5254
        %5258 = vset.pattern.permute.xlu0 0
        %5259 = vperm.xlu0 %5258, %v5185
        %v5260 = vpop.permute.xlu0 %5259
        %5263 = vset.pattern.permute.xlu0 0
        %5264 = vperm.xlu0 %5263, %v5186
        %v5265 = vpop.permute.xlu0 %5264
        %v5315 = vunpack.c.l.b16 %v4978
        %v5316 = vunpack.c.h.b16 %v4978
        %v5317 = vunpack.c.l.b16 %v4979
        %v5318 = vunpack.c.h.b16 %v4979
        %v5319 = vunpack.c.l.b16 %v4980
        %v5320 = vunpack.c.l.b16 %v4981
        %v5321 = vunpack.c.h.b16 %v4981
        %v5322 = vunpack.c.l.b16 %v4982
        %v5323 = vunpack.c.h.b16 %v4982
        %v5324 = vunpack.c.l.b16 %v4983
        %v5325 = vunpack.c.l.b16 %v4984
        %v5326 = vunpack.c.h.b16 %v4984
        %v5327 = vunpack.c.l.b16 %v4985
        %v5328 = vunpack.c.h.b16 %v4985
        %v5329 = vunpack.c.l.b16 %v4986
        %v5330 = vunpack.c.l.b16 %v4987
        %v5331 = vunpack.c.h.b16 %v4987
        %v5332 = vunpack.c.l.b16 %v4988
        %v5333 = vunpack.c.h.b16 %v4988
        %v5334 = vunpack.c.l.b16 %v4989
        %v5335 = vunpack.c.l.b16 %v4990
        %v5336 = vunpack.c.h.b16 %v4990
        %v5337 = vunpack.c.l.b16 %v4991
        %v5338 = vunpack.c.h.b16 %v4991
        %v5339 = vunpack.c.l.b16 %v4992
        %v5340 = vunpack.c.l.b16 %v4993
        %v5341 = vunpack.c.h.b16 %v4993
        %v5342 = vunpack.c.l.b16 %v4994
        %v5343 = vunpack.c.h.b16 %v4994
        %v5344 = vunpack.c.l.b16 %v4995
        %v5345 = vunpack.c.l.b16 %v4996
        %v5346 = vunpack.c.h.b16 %v4996
        %v5347 = vunpack.c.l.b16 %v4997
        %v5348 = vunpack.c.h.b16 %v4997
        %v5349 = vunpack.c.l.b16 %v4998
        %v5350 = vunpack.c.l.b16 %v4999
        %v5351 = vunpack.c.h.b16 %v4999
        %v5352 = vunpack.c.l.b16 %v5000
        %v5353 = vunpack.c.h.b16 %v5000
        %v5354 = vunpack.c.l.b16 %v5001
        %v5355 = vunpack.c.l.b16 %v5002
        %v5356 = vunpack.c.h.b16 %v5002
        %v5357 = vunpack.c.l.b16 %v5003
        %v5358 = vunpack.c.h.b16 %v5003
        %v5359 = vunpack.c.l.b16 %v5004
        %v5360 = vunpack.c.l.b16 %v5005
        %v5361 = vunpack.c.h.b16 %v5005
        %v5362 = vunpack.c.l.b16 %v5006
        %v5363 = vunpack.c.h.b16 %v5006
        %v5364 = vunpack.c.l.b16 %v5007
        %v5365 = vunpack.c.l.b16 %v5008
        %v5366 = vunpack.c.h.b16 %v5008
        %v5367 = vunpack.c.l.b16 %v5009
        %v5368 = vunpack.c.h.b16 %v5009
        %v5369 = vunpack.c.l.b16 %v5010
        %v5370 = vunpack.c.l.b16 %v5011
        %v5371 = vunpack.c.h.b16 %v5011
        %v5372 = vunpack.c.l.b16 %v5012
        %v5373 = vunpack.c.h.b16 %v5012
        %v5374 = vunpack.c.l.b16 %v5013
        %v5375 = vunpack.c.l.b16 %v5014
        %v5376 = vunpack.c.h.b16 %v5014
        %v5377 = vunpack.c.l.b16 %v5015
        %v5378 = vunpack.c.h.b16 %v5015
        %v5379 = vunpack.c.l.b16 %v5016
        %v5380 = vunpack.c.l.b16 %v5017
        %v5381 = vunpack.c.h.b16 %v5017
        %v5382 = vunpack.c.l.b16 %v5018
        %v5383 = vunpack.c.h.b16 %v5018
        %v5384 = vunpack.c.l.b16 %v5019
        %v5385 = vunpack.c.l.b16 %v5020
        %v5386 = vunpack.c.h.b16 %v5020
        %v5387 = vunpack.c.l.b16 %v5021
        %v5388 = vunpack.c.h.b16 %v5021
        %v5389 = vunpack.c.l.b16 %v5022
        %v5390 = vunpack.c.l.b16 %v5023
        %v5391 = vunpack.c.h.b16 %v5023
        %v5392 = vunpack.c.l.b16 %v5024
        %v5393 = vunpack.c.h.b16 %v5024
        %v5394 = vunpack.c.l.b16 %v5025
        %v5395 = vpack.c.b16 %v5320, %v5315
        %v5396 = vpack.c.b16 %v5321, %v5316
        %v5397 = vpack.c.b16 %v5322, %v5317
        %v5398 = vpack.c.b16 %v5323, %v5318
        %v5399 = vpack.c.b16 %v5324, %v5319
        %v5400 = vpack.c.b16 %v5330, %v5325
        %v5401 = vpack.c.b16 %v5331, %v5326
        %v5402 = vpack.c.b16 %v5332, %v5327
        %v5403 = vpack.c.b16 %v5333, %v5328
        %v5404 = vpack.c.b16 %v5334, %v5329
        %v5405 = vpack.c.b16 %v5340, %v5335
        %v5406 = vpack.c.b16 %v5341, %v5336
        %v5407 = vpack.c.b16 %v5342, %v5337
        %v5408 = vpack.c.b16 %v5343, %v5338
        %v5409 = vpack.c.b16 %v5344, %v5339
        %v5410 = vpack.c.b16 %v5350, %v5345
        %v5411 = vpack.c.b16 %v5351, %v5346
        %v5412 = vpack.c.b16 %v5352, %v5347
        %v5413 = vpack.c.b16 %v5353, %v5348
        %v5414 = vpack.c.b16 %v5354, %v5349
        %v5415 = vpack.c.b16 %v5360, %v5355
        %v5416 = vpack.c.b16 %v5361, %v5356
        %v5417 = vpack.c.b16 %v5362, %v5357
        %v5418 = vpack.c.b16 %v5363, %v5358
        %v5419 = vpack.c.b16 %v5364, %v5359
        %v5420 = vpack.c.b16 %v5370, %v5365
        %v5421 = vpack.c.b16 %v5371, %v5366
        %v5422 = vpack.c.b16 %v5372, %v5367
        %v5423 = vpack.c.b16 %v5373, %v5368
        %v5424 = vpack.c.b16 %v5374, %v5369
        %v5425 = vpack.c.b16 %v5380, %v5375
        %v5426 = vpack.c.b16 %v5381, %v5376
        %v5427 = vpack.c.b16 %v5382, %v5377
        %v5428 = vpack.c.b16 %v5383, %v5378
        %v5429 = vpack.c.b16 %v5384, %v5379
        %v5430 = vpack.c.b16 %v5390, %v5385
        %v5431 = vpack.c.b16 %v5391, %v5386
        %v5432 = vpack.c.b16 %v5392, %v5387
        %v5433 = vpack.c.b16 %v5393, %v5388
        %v5434 = vpack.c.b16 %v5394, %v5389
        %v5611 = vunpack.c.l.b16 %v5026
        %v5612 = vunpack.c.h.b16 %v5026
        %v5613 = vunpack.c.l.b16 %v5027
        %v5614 = vunpack.c.l.b16 %v5028
        %v5615 = vunpack.c.h.b16 %v5028
        %v5616 = vunpack.c.l.b16 %v5029
        %v5617 = vunpack.c.l.b16 %v5030
        %v5618 = vunpack.c.h.b16 %v5030
        %v5619 = vunpack.c.l.b16 %v5031
        %v5620 = vunpack.c.l.b16 %v5032
        %v5621 = vunpack.c.h.b16 %v5032
        %v5622 = vunpack.c.l.b16 %v5033
        %v5623 = vunpack.c.l.b16 %v5034
        %v5624 = vunpack.c.h.b16 %v5034
        %v5625 = vunpack.c.l.b16 %v5035
        %v5626 = vunpack.c.l.b16 %v5036
        %v5627 = vunpack.c.h.b16 %v5036
        %v5628 = vunpack.c.l.b16 %v5037
        %v5629 = vunpack.c.l.b16 %v5038
        %v5630 = vunpack.c.h.b16 %v5038
        %v5631 = vunpack.c.l.b16 %v5039
        %v5632 = vunpack.c.l.b16 %v5040
        %v5633 = vunpack.c.h.b16 %v5040
        %v5634 = vunpack.c.l.b16 %v5041
        %v5635 = vunpack.c.l.b16 %v5042
        %v5636 = vunpack.c.h.b16 %v5042
        %v5637 = vunpack.c.l.b16 %v5043
        %v5638 = vunpack.c.l.b16 %v5044
        %v5639 = vunpack.c.h.b16 %v5044
        %v5640 = vunpack.c.l.b16 %v5045
        %v5641 = vunpack.c.l.b16 %v5046
        %v5642 = vunpack.c.h.b16 %v5046
        %v5643 = vunpack.c.l.b16 %v5047
        %v5644 = vunpack.c.l.b16 %v5048
        %v5645 = vunpack.c.h.b16 %v5048
        %v5646 = vunpack.c.l.b16 %v5049
        %v5647 = vunpack.c.l.b16 %v5050
        %v5648 = vunpack.c.h.b16 %v5050
        %v5649 = vunpack.c.l.b16 %v5051
        %v5650 = vunpack.c.l.b16 %v5052
        %v5651 = vunpack.c.h.b16 %v5052
        %v5652 = vunpack.c.l.b16 %v5053
        %v5653 = vunpack.c.l.b16 %v5054
        %v5654 = vunpack.c.h.b16 %v5054
        %v5655 = vunpack.c.l.b16 %v5055
        %v5656 = vunpack.c.l.b16 %v5056
        %v5657 = vunpack.c.h.b16 %v5056
        %v5658 = vunpack.c.l.b16 %v5057
        %v5659 = vunpack.c.l.b16 %v5058
        %v5660 = vunpack.c.h.b16 %v5058
        %v5661 = vunpack.c.l.b16 %v5059
        %v5662 = vunpack.c.l.b16 %v5060
        %v5663 = vunpack.c.h.b16 %v5060
        %v5664 = vunpack.c.l.b16 %v5061
        %v5665 = vunpack.c.l.b16 %v5062
        %v5666 = vunpack.c.h.b16 %v5062
        %v5667 = vunpack.c.l.b16 %v5063
        %v5668 = vunpack.c.l.b16 %v5064
        %v5669 = vunpack.c.h.b16 %v5064
        %v5670 = vunpack.c.l.b16 %v5065
        %v5671 = vunpack.c.l.b16 %v5066
        %v5672 = vunpack.c.h.b16 %v5066
        %v5673 = vunpack.c.l.b16 %v5067
        %v5674 = vunpack.c.l.b16 %v5068
        %v5675 = vunpack.c.h.b16 %v5068
        %v5676 = vunpack.c.l.b16 %v5069
        %v5677 = vunpack.c.l.b16 %v5070
        %v5678 = vunpack.c.h.b16 %v5070
        %v5679 = vunpack.c.l.b16 %v5071
        %v5680 = vunpack.c.l.b16 %v5072
        %v5681 = vunpack.c.h.b16 %v5072
        %v5682 = vunpack.c.l.b16 %v5073
        %v5683 = vunpack.c.l.b16 %v5074
        %v5684 = vunpack.c.h.b16 %v5074
        %v5685 = vunpack.c.l.b16 %v5075
        %v5686 = vunpack.c.l.b16 %v5076
        %v5687 = vunpack.c.h.b16 %v5076
        %v5688 = vunpack.c.l.b16 %v5077
        %v5689 = vunpack.c.l.b16 %v5078
        %v5690 = vunpack.c.h.b16 %v5078
        %v5691 = vunpack.c.l.b16 %v5079
        %v5692 = vunpack.c.l.b16 %v5080
        %v5693 = vunpack.c.h.b16 %v5080
        %v5694 = vunpack.c.l.b16 %v5081
        %v5695 = vunpack.c.l.b16 %v5082
        %v5696 = vunpack.c.h.b16 %v5082
        %v5697 = vunpack.c.l.b16 %v5083
        %v5698 = vunpack.c.l.b16 %v5084
        %v5699 = vunpack.c.h.b16 %v5084
        %v5700 = vunpack.c.l.b16 %v5085
        %v5701 = vunpack.c.l.b16 %v5086
        %v5702 = vunpack.c.h.b16 %v5086
        %v5703 = vunpack.c.l.b16 %v5087
        %v5704 = vunpack.c.l.b16 %v5088
        %v5705 = vunpack.c.h.b16 %v5088
        %v5706 = vunpack.c.l.b16 %v5089
        %v5707 = vunpack.c.l.b16 %v5090
        %v5708 = vunpack.c.h.b16 %v5090
        %v5709 = vunpack.c.l.b16 %v5091
        %v5710 = vunpack.c.l.b16 %v5092
        %v5711 = vunpack.c.h.b16 %v5092
        %v5712 = vunpack.c.l.b16 %v5093
        %v5713 = vunpack.c.l.b16 %v5094
        %v5714 = vunpack.c.h.b16 %v5094
        %v5715 = vunpack.c.l.b16 %v5095
        %v5716 = vunpack.c.l.b16 %v5096
        %v5717 = vunpack.c.h.b16 %v5096
        %v5718 = vunpack.c.l.b16 %v5097
        %v5719 = vunpack.c.l.b16 %v5098
        %v5720 = vunpack.c.h.b16 %v5098
        %v5721 = vunpack.c.l.b16 %v5099
        %v5722 = vunpack.c.l.b16 %v5100
        %v5723 = vunpack.c.h.b16 %v5100
        %v5724 = vunpack.c.l.b16 %v5101
        %v5725 = vunpack.c.l.b16 %v5102
        %v5726 = vunpack.c.h.b16 %v5102
        %v5727 = vunpack.c.l.b16 %v5103
        %v5728 = vunpack.c.l.b16 %v5104
        %v5729 = vunpack.c.h.b16 %v5104
        %v5730 = vunpack.c.l.b16 %v5105
        %v5731 = vunpack.c.l.b16 %v5106
        %v5732 = vunpack.c.h.b16 %v5106
        %v5733 = vunpack.c.l.b16 %v5107
        %v5734 = vunpack.c.l.b16 %v5108
        %v5735 = vunpack.c.h.b16 %v5108
        %v5736 = vunpack.c.l.b16 %v5109
        %v5737 = vunpack.c.l.b16 %v5110
        %v5738 = vunpack.c.h.b16 %v5110
        %v5739 = vunpack.c.l.b16 %v5111
        %v5740 = vunpack.c.l.b16 %v5112
        %v5741 = vunpack.c.h.b16 %v5112
        %v5742 = vunpack.c.l.b16 %v5113
        %v5743 = vunpack.c.l.b16 %v5114
        %v5744 = vunpack.c.h.b16 %v5114
        %v5745 = vunpack.c.l.b16 %v5115
        %v5746 = vunpack.c.l.b16 %v5116
        %v5747 = vunpack.c.h.b16 %v5116
        %v5748 = vunpack.c.l.b16 %v5117
        %v5749 = vunpack.c.l.b16 %v5118
        %v5750 = vunpack.c.h.b16 %v5118
        %v5751 = vunpack.c.l.b16 %v5119
        %v5752 = vunpack.c.l.b16 %v5120
        %v5753 = vunpack.c.h.b16 %v5120
        %v5754 = vunpack.c.l.b16 %v5121
        %v5755 = vunpack.c.l.b16 %v5122
        %v5756 = vunpack.c.h.b16 %v5122
        %v5757 = vunpack.c.l.b16 %v5123
        %v5758 = vunpack.c.l.b16 %v5124
        %v5759 = vunpack.c.h.b16 %v5124
        %v5760 = vunpack.c.l.b16 %v5125
        %v5761 = vunpack.c.l.b16 %v5126
        %v5762 = vunpack.c.h.b16 %v5126
        %v5763 = vunpack.c.l.b16 %v5127
        %v5764 = vunpack.c.l.b16 %v5128
        %v5765 = vunpack.c.h.b16 %v5128
        %v5766 = vunpack.c.l.b16 %v5129
        %v5767 = vunpack.c.l.b16 %v5130
        %v5768 = vunpack.c.h.b16 %v5130
        %v5769 = vunpack.c.l.b16 %v5131
        %v5770 = vunpack.c.l.b16 %v5132
        %v5771 = vunpack.c.h.b16 %v5132
        %v5772 = vunpack.c.l.b16 %v5133
        %v5773 = vunpack.c.l.b16 %v5134
        %v5774 = vunpack.c.h.b16 %v5134
        %v5775 = vunpack.c.l.b16 %v5135
        %v5776 = vunpack.c.l.b16 %v5136
        %v5777 = vunpack.c.h.b16 %v5136
        %v5778 = vunpack.c.l.b16 %v5137
        %v5779 = vunpack.c.l.b16 %v5138
        %v5780 = vunpack.c.h.b16 %v5138
        %v5781 = vunpack.c.l.b16 %v5139
        %v5782 = vunpack.c.l.b16 %v5140
        %v5783 = vunpack.c.h.b16 %v5140
        %v5784 = vunpack.c.l.b16 %v5141
        %v5785 = vunpack.c.l.b16 %v5142
        %v5786 = vunpack.c.h.b16 %v5142
        %v5787 = vunpack.c.l.b16 %v5143
        %v5788 = vunpack.c.l.b16 %v5144
        %v5789 = vunpack.c.h.b16 %v5144
        %v5790 = vunpack.c.l.b16 %v5145
        %v5791 = vunpack.c.l.b16 %v5146
        %v5792 = vunpack.c.h.b16 %v5146
        %v5793 = vunpack.c.l.b16 %v5147
        %v5794 = vunpack.c.l.b16 %v5148
        %v5795 = vunpack.c.h.b16 %v5148
        %v5796 = vunpack.c.l.b16 %v5149
        %v5797 = vunpack.c.l.b16 %v5150
        %v5798 = vunpack.c.h.b16 %v5150
        %v5799 = vunpack.c.l.b16 %v5151
        %v5800 = vunpack.c.l.b16 %v5152
        %v5801 = vunpack.c.h.b16 %v5152
        %v5802 = vunpack.c.l.b16 %v5153
        %v5803 = vunpack.c.l.b16 %v5154
        %v5804 = vunpack.c.h.b16 %v5154
        %v5805 = vunpack.c.l.b16 %v5155
        %v5806 = vunpack.c.l.b16 %v5156
        %v5807 = vunpack.c.h.b16 %v5156
        %v5808 = vunpack.c.l.b16 %v5157
        %v5809 = vunpack.c.l.b16 %v5158
        %v5810 = vunpack.c.h.b16 %v5158
        %v5811 = vunpack.c.l.b16 %v5159
        %v5812 = vunpack.c.l.b16 %v5160
        %v5813 = vunpack.c.h.b16 %v5160
        %v5814 = vunpack.c.l.b16 %v5161
        %v5815 = vunpack.c.l.b16 %v5162
        %v5816 = vunpack.c.h.b16 %v5162
        %v5817 = vunpack.c.l.b16 %v5163
        %v5818 = vunpack.c.l.b16 %v5164
        %v5819 = vunpack.c.h.b16 %v5164
        %v5820 = vunpack.c.l.b16 %v5165
        %v5821 = vunpack.c.l.b16 %v5166
        %v5822 = vunpack.c.h.b16 %v5166
        %v5823 = vunpack.c.l.b16 %v5167
        %v5824 = vunpack.c.l.b16 %v5168
        %v5825 = vunpack.c.h.b16 %v5168
        %v5826 = vunpack.c.l.b16 %v5169
        %v5827 = vpack.c.b16 %v5614, %v5611
        %v5828 = vpack.c.b16 %v5615, %v5612
        %v5829 = vpack.c.b16 %v5616, %v5613
        %v5830 = vpack.c.b16 %v5620, %v5617
        %v5831 = vpack.c.b16 %v5621, %v5618
        %v5832 = vpack.c.b16 %v5622, %v5619
        %v5833 = vpack.c.b16 %v5626, %v5623
        %v5834 = vpack.c.b16 %v5627, %v5624
        %v5835 = vpack.c.b16 %v5628, %v5625
        %v5836 = vpack.c.b16 %v5632, %v5629
        %v5837 = vpack.c.b16 %v5633, %v5630
        %v5838 = vpack.c.b16 %v5634, %v5631
        %v5839 = vpack.c.b16 %v5638, %v5635
        %v5840 = vpack.c.b16 %v5639, %v5636
        %v5841 = vpack.c.b16 %v5640, %v5637
        %v5842 = vpack.c.b16 %v5644, %v5641
        %v5843 = vpack.c.b16 %v5645, %v5642
        %v5844 = vpack.c.b16 %v5646, %v5643
        %v5845 = vpack.c.b16 %v5650, %v5647
        %v5846 = vpack.c.b16 %v5651, %v5648
        %v5847 = vpack.c.b16 %v5652, %v5649
        %v5848 = vpack.c.b16 %v5656, %v5653
        %v5849 = vpack.c.b16 %v5657, %v5654
        %v5850 = vpack.c.b16 %v5658, %v5655
        %v5851 = vpack.c.b16 %v5662, %v5659
        %v5852 = vpack.c.b16 %v5663, %v5660
        %v5853 = vpack.c.b16 %v5664, %v5661
        %v5854 = vpack.c.b16 %v5668, %v5665
        %v5855 = vpack.c.b16 %v5669, %v5666
        %v5856 = vpack.c.b16 %v5670, %v5667
        %v5857 = vpack.c.b16 %v5674, %v5671
        %v5858 = vpack.c.b16 %v5675, %v5672
        %v5859 = vpack.c.b16 %v5676, %v5673
        %v5860 = vpack.c.b16 %v5680, %v5677
        %v5861 = vpack.c.b16 %v5681, %v5678
        %v5862 = vpack.c.b16 %v5682, %v5679
        %v5863 = vpack.c.b16 %v5686, %v5683
        %v5864 = vpack.c.b16 %v5687, %v5684
        %v5865 = vpack.c.b16 %v5688, %v5685
        %v5866 = vpack.c.b16 %v5692, %v5689
        %v5867 = vpack.c.b16 %v5693, %v5690
        %v5868 = vpack.c.b16 %v5694, %v5691
        %v5869 = vpack.c.b16 %v5698, %v5695
        %v5870 = vpack.c.b16 %v5699, %v5696
        %v5871 = vpack.c.b16 %v5700, %v5697
        %v5872 = vpack.c.b16 %v5704, %v5701
        %v5873 = vpack.c.b16 %v5705, %v5702
        %v5874 = vpack.c.b16 %v5706, %v5703
        %v5875 = vpack.c.b16 %v5710, %v5707
        %v5876 = vpack.c.b16 %v5711, %v5708
        %v5877 = vpack.c.b16 %v5712, %v5709
        %v5878 = vpack.c.b16 %v5716, %v5713
        %v5879 = vpack.c.b16 %v5717, %v5714
        %v5880 = vpack.c.b16 %v5718, %v5715
        %v5881 = vpack.c.b16 %v5722, %v5719
        %v5882 = vpack.c.b16 %v5723, %v5720
        %v5883 = vpack.c.b16 %v5724, %v5721
        %v5884 = vpack.c.b16 %v5728, %v5725
        %v5885 = vpack.c.b16 %v5729, %v5726
        %v5886 = vpack.c.b16 %v5730, %v5727
        %v5887 = vpack.c.b16 %v5734, %v5731
        %v5888 = vpack.c.b16 %v5735, %v5732
        %v5889 = vpack.c.b16 %v5736, %v5733
        %v5890 = vpack.c.b16 %v5740, %v5737
        %v5891 = vpack.c.b16 %v5741, %v5738
        %v5892 = vpack.c.b16 %v5742, %v5739
        %v5893 = vpack.c.b16 %v5746, %v5743
        %v5894 = vpack.c.b16 %v5747, %v5744
        %v5895 = vpack.c.b16 %v5748, %v5745
        %v5896 = vpack.c.b16 %v5752, %v5749
        %v5897 = vpack.c.b16 %v5753, %v5750
        %v5898 = vpack.c.b16 %v5754, %v5751
        %v5899 = vpack.c.b16 %v5758, %v5755
        %v5900 = vpack.c.b16 %v5759, %v5756
        %v5901 = vpack.c.b16 %v5760, %v5757
        %v5902 = vpack.c.b16 %v5764, %v5761
        %v5903 = vpack.c.b16 %v5765, %v5762
        %v5904 = vpack.c.b16 %v5766, %v5763
        %v5905 = vpack.c.b16 %v5770, %v5767
        %v5906 = vpack.c.b16 %v5771, %v5768
        %v5907 = vpack.c.b16 %v5772, %v5769
        %v5908 = vpack.c.b16 %v5776, %v5773
        %v5909 = vpack.c.b16 %v5777, %v5774
        %v5910 = vpack.c.b16 %v5778, %v5775
        %v5911 = vpack.c.b16 %v5782, %v5779
        %v5912 = vpack.c.b16 %v5783, %v5780
        %v5913 = vpack.c.b16 %v5784, %v5781
        %v5914 = vpack.c.b16 %v5788, %v5785
        %v5915 = vpack.c.b16 %v5789, %v5786
        %v5916 = vpack.c.b16 %v5790, %v5787
        %v5917 = vpack.c.b16 %v5794, %v5791
        %v5918 = vpack.c.b16 %v5795, %v5792
        %v5919 = vpack.c.b16 %v5796, %v5793
        %v5920 = vpack.c.b16 %v5800, %v5797
        %v5921 = vpack.c.b16 %v5801, %v5798
        %v5922 = vpack.c.b16 %v5802, %v5799
        %v5923 = vpack.c.b16 %v5806, %v5803
        %v5924 = vpack.c.b16 %v5807, %v5804
        %v5925 = vpack.c.b16 %v5808, %v5805
        %v5926 = vpack.c.b16 %v5812, %v5809
        %v5927 = vpack.c.b16 %v5813, %v5810
        %v5928 = vpack.c.b16 %v5814, %v5811
        %v5929 = vpack.c.b16 %v5818, %v5815
        %v5930 = vpack.c.b16 %v5819, %v5816
        %v5931 = vpack.c.b16 %v5820, %v5817
        %v5932 = vpack.c.b16 %v5824, %v5821
        %v5933 = vpack.c.b16 %v5825, %v5822
        %v5934 = vpack.c.b16 %v5826, %v5823
        %v6044 = vsel %vm2853, %v5399, 0
        %v6047 = vsel %vm2853, %v5404, 0
        %v6050 = vsel %vm2853, %v5409, 0
        %v6053 = vsel %vm2853, %v5414, 0
        %v6056 = vsel %vm2853, %v5419, 0
        %v6059 = vsel %vm2853, %v5424, 0
        %v6062 = vsel %vm2853, %v5429, 0
        %v6065 = vsel %vm2853, %v5434, 0
        %6067 = vmatprep.subr.bf16.mxu0 %v5849
        %6068 = vmatpush1.bf16.msra.mxu0 %v5848
        %6069 = vmatprep.subr.bf16.mxu0 %v5846
        %6070 = vmatpush1.bf16.msra.mxu0 %v5845
        %6071 = vmatprep.subr.bf16.mxu0 %v5843
        %6072 = vmatpush1.bf16.msra.mxu0 %v5842
        %6073 = vmatprep.subr.bf16.mxu0 %v5840
        %6074 = vmatpush1.bf16.msra.mxu0 %v5839
        %6075 = vmatprep.subr.bf16.mxu0 %v5837
        %6076 = vmatpush1.bf16.msra.mxu0 %v5836
        %6077 = vmatprep.subr.bf16.mxu0 %v5834
        %6078 = vmatpush1.bf16.msra.mxu0 %v5833
        %6079 = vmatprep.subr.bf16.mxu0 %v5831
        %6080 = vmatpush1.bf16.msra.mxu0 %v5830
        %6081 = vmatprep.subr.bf16.mxu0 %v5828
        %6082 = vmatpush1.bf16.msra.mxu0 %v5827
        %6083 = vmatprep.subr.bf16.mxu0 %v5873
        %6084 = vmatpush2.bf16.msra.mxu0 %v5872
        %6085 = vmatprep.subr.bf16.mxu0 %v5870
        %6086 = vmatpush2.bf16.msra.mxu0 %v5869
        %6087 = vmatprep.subr.bf16.mxu0 %v5867
        %6088 = vmatpush2.bf16.msra.mxu0 %v5866
        %6089 = vmatprep.subr.bf16.mxu0 %v5864
        %6090 = vmatpush2.bf16.msra.mxu0 %v5863
        %6091 = vmatprep.subr.bf16.mxu0 %v5861
        %6092 = vmatpush2.bf16.msra.mxu0 %v5860
        %6093 = vmatprep.subr.bf16.mxu0 %v5858
        %6094 = vmatpush2.bf16.msra.mxu0 %v5857
        %6095 = vmatprep.subr.bf16.mxu0 %v5855
        %6096 = vmatpush2.bf16.msra.mxu0 %v5854
        %6097 = vmatprep.subr.bf16.mxu0 %v5852
        %6098 = vmatpush2.bf16.msra.mxu0 %v5851
        %6099 = vmatprep.mubr.bf16.mxu0 %v5396
        %6100 = vmatmul.mubr.bf16.gmra.mxu0 %v5395
        %v6101 = vpop.f32.mrf.mxu0
        %v6102 = vadd.f32 %v5190, %v6101
        %v6103 = vpop.f32.mrf.mxu0
        %v6104 = vadd.f32 %v5190, %v6103
        %v6105 = vpop.f32.mrf.mxu0
        %v6106 = vadd.f32 %v5195, %v6105
        %v6107 = vpop.f32.mrf.mxu0
        %v6108 = vadd.f32 %v5195, %v6107
        %6109 = vmatprep.mubr.bf16.mxu0 %v5401
        %6110 = vmatmul.mubr.bf16.gmra.mxu0 %v5400
        %v6111 = vpop.f32.mrf.mxu0
        %v6112 = vadd.f32 %v5200, %v6111
        %v6113 = vpop.f32.mrf.mxu0
        %v6114 = vadd.f32 %v5200, %v6113
        %v6115 = vpop.f32.mrf.mxu0
        %v6116 = vadd.f32 %v5205, %v6115
        %v6117 = vpop.f32.mrf.mxu0
        %v6118 = vadd.f32 %v5205, %v6117
        %6119 = vmatprep.mubr.bf16.mxu0 %v5406
        %6120 = vmatmul.mubr.bf16.gmra.mxu0 %v5405
        %v6121 = vpop.f32.mrf.mxu0
        %v6122 = vadd.f32 %v5210, %v6121
        %v6123 = vpop.f32.mrf.mxu0
        %v6124 = vadd.f32 %v5210, %v6123
        %v6125 = vpop.f32.mrf.mxu0
        %v6126 = vadd.f32 %v5215, %v6125
        %v6127 = vpop.f32.mrf.mxu0
        %v6128 = vadd.f32 %v5215, %v6127
        %6129 = vmatprep.mubr.bf16.mxu0 %v5411
        %6130 = vmatmul.mubr.bf16.gmra.mxu0 %v5410
        %v6131 = vpop.f32.mrf.mxu0
        %v6132 = vadd.f32 %v5220, %v6131
        %v6133 = vpop.f32.mrf.mxu0
        %v6134 = vadd.f32 %v5220, %v6133
        %v6135 = vpop.f32.mrf.mxu0
        %v6136 = vadd.f32 %v5225, %v6135
        %v6137 = vpop.f32.mrf.mxu0
        %v6138 = vadd.f32 %v5225, %v6137
        %6139 = vmatprep.mubr.bf16.mxu0 %v5416
        %6140 = vmatmul.mubr.bf16.gmra.mxu0 %v5415
        %v6141 = vpop.f32.mrf.mxu0
        %v6142 = vadd.f32 %v5230, %v6141
        %v6143 = vpop.f32.mrf.mxu0
        %v6144 = vadd.f32 %v5230, %v6143
        %v6145 = vpop.f32.mrf.mxu0
        %v6146 = vadd.f32 %v5235, %v6145
        %v6147 = vpop.f32.mrf.mxu0
        %v6148 = vadd.f32 %v5235, %v6147
        %6149 = vmatprep.mubr.bf16.mxu0 %v5421
        %6150 = vmatmul.mubr.bf16.gmra.mxu0 %v5420
        %v6151 = vpop.f32.mrf.mxu0
        %v6152 = vadd.f32 %v5240, %v6151
        %v6153 = vpop.f32.mrf.mxu0
        %v6154 = vadd.f32 %v5240, %v6153
        %v6155 = vpop.f32.mrf.mxu0
        %v6156 = vadd.f32 %v5245, %v6155
        %v6157 = vpop.f32.mrf.mxu0
        %v6158 = vadd.f32 %v5245, %v6157
        %6159 = vmatprep.mubr.bf16.mxu0 %v5426
        %6160 = vmatmul.mubr.bf16.gmra.mxu0 %v5425
        %v6161 = vpop.f32.mrf.mxu0
        %v6162 = vadd.f32 %v5250, %v6161
        %v6163 = vpop.f32.mrf.mxu0
        %v6164 = vadd.f32 %v5250, %v6163
        %v6165 = vpop.f32.mrf.mxu0
        %v6166 = vadd.f32 %v5255, %v6165
        %v6167 = vpop.f32.mrf.mxu0
        %v6168 = vadd.f32 %v5255, %v6167
        %6169 = vmatprep.mubr.bf16.mxu0 %v5431
        %6170 = vmatmul.mubr.bf16.gmra.mxu0 %v5430
        %v6171 = vpop.f32.mrf.mxu0
        %v6172 = vadd.f32 %v5260, %v6171
        %v6173 = vpop.f32.mrf.mxu0
        %v6174 = vadd.f32 %v5260, %v6173
        %v6175 = vpop.f32.mrf.mxu0
        %v6176 = vadd.f32 %v5265, %v6175
        %v6177 = vpop.f32.mrf.mxu0
        %v6178 = vadd.f32 %v5265, %v6177
        %6179 = vdwg.mxu0
        %6180 = vmatprep.subr.bf16.mxu0 %v5897
        %6181 = vmatpush1.bf16.msra.mxu0 %v5896
        %6182 = vmatprep.subr.bf16.mxu0 %v5894
        %6183 = vmatpush1.bf16.msra.mxu0 %v5893
        %6184 = vmatprep.subr.bf16.mxu0 %v5891
        %6185 = vmatpush1.bf16.msra.mxu0 %v5890
        %6186 = vmatprep.subr.bf16.mxu0 %v5888
        %6187 = vmatpush1.bf16.msra.mxu0 %v5887
        %6188 = vmatprep.subr.bf16.mxu0 %v5885
        %6189 = vmatpush1.bf16.msra.mxu0 %v5884
        %6190 = vmatprep.subr.bf16.mxu0 %v5882
        %6191 = vmatpush1.bf16.msra.mxu0 %v5881
        %6192 = vmatprep.subr.bf16.mxu0 %v5879
        %6193 = vmatpush1.bf16.msra.mxu0 %v5878
        %6194 = vmatprep.subr.bf16.mxu0 %v5876
        %6195 = vmatpush1.bf16.msra.mxu0 %v5875
        %6196 = vmatprep.subr.bf16.mxu0 %v5921
        %6197 = vmatpush2.bf16.msra.mxu0 %v5920
        %6198 = vmatprep.subr.bf16.mxu0 %v5918
        %6199 = vmatpush2.bf16.msra.mxu0 %v5917
        %6200 = vmatprep.subr.bf16.mxu0 %v5915
        %6201 = vmatpush2.bf16.msra.mxu0 %v5914
        %6202 = vmatprep.subr.bf16.mxu0 %v5912
        %6203 = vmatpush2.bf16.msra.mxu0 %v5911
        %6204 = vmatprep.subr.bf16.mxu0 %v5909
        %6205 = vmatpush2.bf16.msra.mxu0 %v5908
        %6206 = vmatprep.subr.bf16.mxu0 %v5906
        %6207 = vmatpush2.bf16.msra.mxu0 %v5905
        %6208 = vmatprep.subr.bf16.mxu0 %v5903
        %6209 = vmatpush2.bf16.msra.mxu0 %v5902
        %6210 = vmatprep.subr.bf16.mxu0 %v5900
        %6211 = vmatpush2.bf16.msra.mxu0 %v5899
        %6212 = vmatprep.mubr.bf16.mxu0 %v5398
        %6213 = vmatmul.mubr.bf16.gmra.mxu0 %v5397
        %v6214 = vpop.f32.mrf.mxu0
        %v6215 = vadd.f32 %v6102, %v6214
        %v6216 = vpop.f32.mrf.mxu0
        %v6217 = vadd.f32 %v6104, %v6216
        %v6218 = vpop.f32.mrf.mxu0
        %v6219 = vadd.f32 %v6106, %v6218
        %v6220 = vpop.f32.mrf.mxu0
        %v6221 = vadd.f32 %v6108, %v6220
        %6222 = vmatprep.mubr.bf16.mxu0 %v5403
        %6223 = vmatmul.mubr.bf16.gmra.mxu0 %v5402
        %v6224 = vpop.f32.mrf.mxu0
        %v6225 = vadd.f32 %v6112, %v6224
        %v6226 = vpop.f32.mrf.mxu0
        %v6227 = vadd.f32 %v6114, %v6226
        %v6228 = vpop.f32.mrf.mxu0
        %v6229 = vadd.f32 %v6116, %v6228
        %v6230 = vpop.f32.mrf.mxu0
        %v6231 = vadd.f32 %v6118, %v6230
        %6232 = vmatprep.mubr.bf16.mxu0 %v5408
        %6233 = vmatmul.mubr.bf16.gmra.mxu0 %v5407
        %v6234 = vpop.f32.mrf.mxu0
        %v6235 = vadd.f32 %v6122, %v6234
        %v6236 = vpop.f32.mrf.mxu0
        %v6237 = vadd.f32 %v6124, %v6236
        %v6238 = vpop.f32.mrf.mxu0
        %v6239 = vadd.f32 %v6126, %v6238
        %v6240 = vpop.f32.mrf.mxu0
        %v6241 = vadd.f32 %v6128, %v6240
        %6242 = vmatprep.mubr.bf16.mxu0 %v5413
        %6243 = vmatmul.mubr.bf16.gmra.mxu0 %v5412
        %v6244 = vpop.f32.mrf.mxu0
        %v6245 = vadd.f32 %v6132, %v6244
        %v6246 = vpop.f32.mrf.mxu0
        %v6247 = vadd.f32 %v6134, %v6246
        %v6248 = vpop.f32.mrf.mxu0
        %v6249 = vadd.f32 %v6136, %v6248
        %v6250 = vpop.f32.mrf.mxu0
        %v6251 = vadd.f32 %v6138, %v6250
        %6252 = vmatprep.mubr.bf16.mxu0 %v5418
        %6253 = vmatmul.mubr.bf16.gmra.mxu0 %v5417
        %v6254 = vpop.f32.mrf.mxu0
        %v6255 = vadd.f32 %v6142, %v6254
        %v6256 = vpop.f32.mrf.mxu0
        %v6257 = vadd.f32 %v6144, %v6256
        %v6258 = vpop.f32.mrf.mxu0
        %v6259 = vadd.f32 %v6146, %v6258
        %v6260 = vpop.f32.mrf.mxu0
        %v6261 = vadd.f32 %v6148, %v6260
        %6262 = vmatprep.mubr.bf16.mxu0 %v5423
        %6263 = vmatmul.mubr.bf16.gmra.mxu0 %v5422
        %v6264 = vpop.f32.mrf.mxu0
        %v6265 = vadd.f32 %v6152, %v6264
        %v6266 = vpop.f32.mrf.mxu0
        %v6267 = vadd.f32 %v6154, %v6266
        %v6268 = vpop.f32.mrf.mxu0
        %v6269 = vadd.f32 %v6156, %v6268
        %v6270 = vpop.f32.mrf.mxu0
        %v6271 = vadd.f32 %v6158, %v6270
        %6272 = vmatprep.mubr.bf16.mxu0 %v5428
        %6273 = vmatmul.mubr.bf16.gmra.mxu0 %v5427
        %v6274 = vpop.f32.mrf.mxu0
        %v6275 = vadd.f32 %v6162, %v6274
        %v6276 = vpop.f32.mrf.mxu0
        %v6277 = vadd.f32 %v6164, %v6276
        %v6278 = vpop.f32.mrf.mxu0
        %v6279 = vadd.f32 %v6166, %v6278
        %v6280 = vpop.f32.mrf.mxu0
        %v6281 = vadd.f32 %v6168, %v6280
        %6282 = vmatprep.mubr.bf16.mxu0 %v5433
        %6283 = vmatmul.mubr.bf16.gmra.mxu0 %v5432
        %v6284 = vpop.f32.mrf.mxu0
        %v6285 = vadd.f32 %v6172, %v6284
        %v6286 = vpop.f32.mrf.mxu0
        %v6287 = vadd.f32 %v6174, %v6286
        %v6288 = vpop.f32.mrf.mxu0
        %v6289 = vadd.f32 %v6176, %v6288
        %v6290 = vpop.f32.mrf.mxu0
        %v6291 = vadd.f32 %v6178, %v6290
        %6292 = vdwg.mxu0
        %6293 = vmatprep.subr.bf16.mxu0 0
        %6294 = vmatpush1.bf16.msra.mxu0 0
        %6295 = vmatprep.subr.bf16.mxu0 0
        %6296 = vmatpush1.bf16.msra.mxu0 0
        %6297 = vmatprep.subr.bf16.mxu0 0
        %6298 = vmatpush1.bf16.msra.mxu0 0
        %6299 = vmatprep.subr.bf16.mxu0 0
        %6300 = vmatpush1.bf16.msra.mxu0 0
        %6301 = vmatprep.subr.bf16.mxu0 %v5933
        %6302 = vmatpush1.bf16.msra.mxu0 %v5932
        %6303 = vmatprep.subr.bf16.mxu0 %v5930
        %6304 = vmatpush1.bf16.msra.mxu0 %v5929
        %6305 = vmatprep.subr.bf16.mxu0 %v5927
        %6306 = vmatpush1.bf16.msra.mxu0 %v5926
        %6307 = vmatprep.subr.bf16.mxu0 %v5924
        %6308 = vmatpush1.bf16.msra.mxu0 %v5923
        %6309 = vmatprep.subr.bf16.mxu0 0
        %6310 = vmatpush2.bf16.msra.mxu0 0
        %6311 = vmatprep.subr.bf16.mxu0 0
        %6312 = vmatpush2.bf16.msra.mxu0 0
        %6313 = vmatprep.subr.bf16.mxu0 0
        %6314 = vmatpush2.bf16.msra.mxu0 0
        %6315 = vmatprep.subr.bf16.mxu0 0
        %6316 = vmatpush2.bf16.msra.mxu0 0
        %6317 = vmatprep.subr.bf16.mxu0 0
        %6318 = vmatpush2.bf16.msra.mxu0 0
        %6319 = vmatprep.subr.bf16.mxu0 0
        %6320 = vmatpush2.bf16.msra.mxu0 0
        %6321 = vmatprep.subr.bf16.mxu0 0
        %6322 = vmatpush2.bf16.msra.mxu0 0
        %6323 = vmatprep.subr.bf16.mxu0 0
        %6324 = vmatpush2.bf16.msra.mxu0 0
        %6325 = vmatprep.mubr.bf16.mxu0 0
        %6326 = vmatmul.mubr.bf16.gmra.mxu0 %v6044
        %v6327 = vpop.f32.mrf.mxu0
        %v6328 = vadd.f32 %v6215, %v6327
        %v6329 = vpop.f32.mrf.mxu0
        %v6330 = vadd.f32 %v6217, %v6329
        %v6331 = vpop.f32.mrf.mxu0
        %v6332 = vadd.f32 %v6219, %v6331
        %v6333 = vpop.f32.mrf.mxu0
        %v6334 = vadd.f32 %v6221, %v6333
        %6335 = vmatprep.mubr.bf16.mxu0 0
        %6336 = vmatmul.mubr.bf16.gmra.mxu0 %v6047
        %v6337 = vpop.f32.mrf.mxu0
        %v6338 = vadd.f32 %v6225, %v6337
        %v6339 = vpop.f32.mrf.mxu0
        %v6340 = vadd.f32 %v6227, %v6339
        %v6341 = vpop.f32.mrf.mxu0
        %v6342 = vadd.f32 %v6229, %v6341
        %v6343 = vpop.f32.mrf.mxu0
        %v6344 = vadd.f32 %v6231, %v6343
        %6345 = vmatprep.mubr.bf16.mxu0 0
        %6346 = vmatmul.mubr.bf16.gmra.mxu0 %v6050
        %v6347 = vpop.f32.mrf.mxu0
        %v6348 = vadd.f32 %v6235, %v6347
        %v6349 = vpop.f32.mrf.mxu0
        %v6350 = vadd.f32 %v6237, %v6349
        %v6351 = vpop.f32.mrf.mxu0
        %v6352 = vadd.f32 %v6239, %v6351
        %v6353 = vpop.f32.mrf.mxu0
        %v6354 = vadd.f32 %v6241, %v6353
        %6355 = vmatprep.mubr.bf16.mxu0 0
        %6356 = vmatmul.mubr.bf16.gmra.mxu0 %v6053
        %v6357 = vpop.f32.mrf.mxu0
        %v6358 = vadd.f32 %v6245, %v6357
        %v6359 = vpop.f32.mrf.mxu0
        %v6360 = vadd.f32 %v6247, %v6359
        %v6361 = vpop.f32.mrf.mxu0
        %v6362 = vadd.f32 %v6249, %v6361
        %v6363 = vpop.f32.mrf.mxu0
        %v6364 = vadd.f32 %v6251, %v6363
        %6365 = vmatprep.mubr.bf16.mxu0 0
        %6366 = vmatmul.mubr.bf16.gmra.mxu0 %v6056
        %v6367 = vpop.f32.mrf.mxu0
        %v6368 = vadd.f32 %v6255, %v6367
        %v6369 = vpop.f32.mrf.mxu0
        %v6370 = vadd.f32 %v6257, %v6369
        %v6371 = vpop.f32.mrf.mxu0
        %v6372 = vadd.f32 %v6259, %v6371
        %v6373 = vpop.f32.mrf.mxu0
        %v6374 = vadd.f32 %v6261, %v6373
        %6375 = vmatprep.mubr.bf16.mxu0 0
        %6376 = vmatmul.mubr.bf16.gmra.mxu0 %v6059
        %v6377 = vpop.f32.mrf.mxu0
        %v6378 = vadd.f32 %v6265, %v6377
        %v6379 = vpop.f32.mrf.mxu0
        %v6380 = vadd.f32 %v6267, %v6379
        %v6381 = vpop.f32.mrf.mxu0
        %v6382 = vadd.f32 %v6269, %v6381
        %v6383 = vpop.f32.mrf.mxu0
        %v6384 = vadd.f32 %v6271, %v6383
        %6385 = vmatprep.mubr.bf16.mxu0 0
        %6386 = vmatmul.mubr.bf16.gmra.mxu0 %v6062
        %v6387 = vpop.f32.mrf.mxu0
        %v6388 = vadd.f32 %v6275, %v6387
        %v6389 = vpop.f32.mrf.mxu0
        %v6390 = vadd.f32 %v6277, %v6389
        %v6391 = vpop.f32.mrf.mxu0
        %v6392 = vadd.f32 %v6279, %v6391
        %v6393 = vpop.f32.mrf.mxu0
        %v6394 = vadd.f32 %v6281, %v6393
        %6395 = vmatprep.mubr.bf16.mxu0 0
        %6396 = vmatmul.mubr.bf16.gmra.mxu0 %v6065
        %v6397 = vpop.f32.mrf.mxu0
        %v6398 = vadd.f32 %v6285, %v6397
        %v6399 = vpop.f32.mrf.mxu0
        %v6400 = vadd.f32 %v6287, %v6399
        %v6401 = vpop.f32.mrf.mxu0
        %v6402 = vadd.f32 %v6289, %v6401
        %v6403 = vpop.f32.mrf.mxu0
        %v6404 = vadd.f32 %v6291, %v6403
        %6405 = vdwg.mxu0
        %6406 = vmatprep.subr.bf16.mxu0 0
        %6407 = vmatpush1.bf16.msra.mxu0 %v5850
        %6408 = vmatprep.subr.bf16.mxu0 0
        %6409 = vmatpush1.bf16.msra.mxu0 %v5847
        %6410 = vmatprep.subr.bf16.mxu0 0
        %6411 = vmatpush1.bf16.msra.mxu0 %v5844
        %6412 = vmatprep.subr.bf16.mxu0 0
        %6413 = vmatpush1.bf16.msra.mxu0 %v5841
        %6414 = vmatprep.subr.bf16.mxu0 0
        %6415 = vmatpush1.bf16.msra.mxu0 %v5838
        %6416 = vmatprep.subr.bf16.mxu0 0
        %6417 = vmatpush1.bf16.msra.mxu0 %v5835
        %6418 = vmatprep.subr.bf16.mxu0 0
        %6419 = vmatpush1.bf16.msra.mxu0 %v5832
        %6420 = vmatprep.subr.bf16.mxu0 0
        %6421 = vmatpush1.bf16.msra.mxu0 %v5829
        %6422 = vmatprep.subr.bf16.mxu0 0
        %6423 = vmatpush2.bf16.msra.mxu0 %v5874
        %6424 = vmatprep.subr.bf16.mxu0 0
        %6425 = vmatpush2.bf16.msra.mxu0 %v5871
        %6426 = vmatprep.subr.bf16.mxu0 0
        %6427 = vmatpush2.bf16.msra.mxu0 %v5868
        %6428 = vmatprep.subr.bf16.mxu0 0
        %6429 = vmatpush2.bf16.msra.mxu0 %v5865
        %6430 = vmatprep.subr.bf16.mxu0 0
        %6431 = vmatpush2.bf16.msra.mxu0 %v5862
        %6432 = vmatprep.subr.bf16.mxu0 0
        %6433 = vmatpush2.bf16.msra.mxu0 %v5859
        %6434 = vmatprep.subr.bf16.mxu0 0
        %6435 = vmatpush2.bf16.msra.mxu0 %v5856
        %6436 = vmatprep.subr.bf16.mxu0 0
        %6437 = vmatpush2.bf16.msra.mxu0 %v5853
        %6438 = vmatprep.mubr.bf16.mxu0 %v5396
        %6439 = vmatmul.mubr.bf16.gmra.mxu0 %v5395
        %v6440 = vpop.f32.mrf.mxu0
        %v6441 = vadd.f32 %v5190, %v6440
        %v6442 = vpop.f32.mrf.mxu0
        %v6443 = vpop.f32.mrf.mxu0
        %v6444 = vadd.f32 %v5195, %v6443
        %v6445 = vpop.f32.mrf.mxu0
        %6446 = vmatprep.mubr.bf16.mxu0 %v5401
        %6447 = vmatmul.mubr.bf16.gmra.mxu0 %v5400
        %v6448 = vpop.f32.mrf.mxu0
        %v6449 = vadd.f32 %v5200, %v6448
        %v6450 = vpop.f32.mrf.mxu0
        %v6451 = vpop.f32.mrf.mxu0
        %v6452 = vadd.f32 %v5205, %v6451
        %v6453 = vpop.f32.mrf.mxu0
        %6454 = vmatprep.mubr.bf16.mxu0 %v5406
        %6455 = vmatmul.mubr.bf16.gmra.mxu0 %v5405
        %v6456 = vpop.f32.mrf.mxu0
        %v6457 = vadd.f32 %v5210, %v6456
        %v6458 = vpop.f32.mrf.mxu0
        %v6459 = vpop.f32.mrf.mxu0
        %v6460 = vadd.f32 %v5215, %v6459
        %v6461 = vpop.f32.mrf.mxu0
        %6462 = vmatprep.mubr.bf16.mxu0 %v5411
        %6463 = vmatmul.mubr.bf16.gmra.mxu0 %v5410
        %v6464 = vpop.f32.mrf.mxu0
        %v6465 = vadd.f32 %v5220, %v6464
        %v6466 = vpop.f32.mrf.mxu0
        %v6467 = vpop.f32.mrf.mxu0
        %v6468 = vadd.f32 %v5225, %v6467
        %v6469 = vpop.f32.mrf.mxu0
        %6470 = vmatprep.mubr.bf16.mxu0 %v5416
        %6471 = vmatmul.mubr.bf16.gmra.mxu0 %v5415
        %v6472 = vpop.f32.mrf.mxu0
        %v6473 = vadd.f32 %v5230, %v6472
        %v6474 = vpop.f32.mrf.mxu0
        %v6475 = vpop.f32.mrf.mxu0
        %v6476 = vadd.f32 %v5235, %v6475
        %v6477 = vpop.f32.mrf.mxu0
        %6478 = vmatprep.mubr.bf16.mxu0 %v5421
        %6479 = vmatmul.mubr.bf16.gmra.mxu0 %v5420
        %v6480 = vpop.f32.mrf.mxu0
        %v6481 = vadd.f32 %v5240, %v6480
        %v6482 = vpop.f32.mrf.mxu0
        %v6483 = vpop.f32.mrf.mxu0
        %v6484 = vadd.f32 %v5245, %v6483
        %v6485 = vpop.f32.mrf.mxu0
        %6486 = vmatprep.mubr.bf16.mxu0 %v5426
        %6487 = vmatmul.mubr.bf16.gmra.mxu0 %v5425
        %v6488 = vpop.f32.mrf.mxu0
        %v6489 = vadd.f32 %v5250, %v6488
        %v6490 = vpop.f32.mrf.mxu0
        %v6491 = vpop.f32.mrf.mxu0
        %v6492 = vadd.f32 %v5255, %v6491
        %v6493 = vpop.f32.mrf.mxu0
        %6494 = vmatprep.mubr.bf16.mxu0 %v5431
        %6495 = vmatmul.mubr.bf16.gmra.mxu0 %v5430
        %v6496 = vpop.f32.mrf.mxu0
        %v6497 = vadd.f32 %v5260, %v6496
        %v6498 = vpop.f32.mrf.mxu0
        %v6499 = vpop.f32.mrf.mxu0
        %v6500 = vadd.f32 %v5265, %v6499
        %v6501 = vpop.f32.mrf.mxu0
        %6502 = vdwg.mxu0
        %6503 = vmatprep.subr.bf16.mxu0 0
        %6504 = vmatpush1.bf16.msra.mxu0 %v5898
        %6505 = vmatprep.subr.bf16.mxu0 0
        %6506 = vmatpush1.bf16.msra.mxu0 %v5895
        %6507 = vmatprep.subr.bf16.mxu0 0
        %6508 = vmatpush1.bf16.msra.mxu0 %v5892
        %6509 = vmatprep.subr.bf16.mxu0 0
        %6510 = vmatpush1.bf16.msra.mxu0 %v5889
        %6511 = vmatprep.subr.bf16.mxu0 0
        %6512 = vmatpush1.bf16.msra.mxu0 %v5886
        %6513 = vmatprep.subr.bf16.mxu0 0
        %6514 = vmatpush1.bf16.msra.mxu0 %v5883
        %6515 = vmatprep.subr.bf16.mxu0 0
        %6516 = vmatpush1.bf16.msra.mxu0 %v5880
        %6517 = vmatprep.subr.bf16.mxu0 0
        %6518 = vmatpush1.bf16.msra.mxu0 %v5877
        %6519 = vmatprep.subr.bf16.mxu0 0
        %6520 = vmatpush2.bf16.msra.mxu0 %v5922
        %6521 = vmatprep.subr.bf16.mxu0 0
        %6522 = vmatpush2.bf16.msra.mxu0 %v5919
        %6523 = vmatprep.subr.bf16.mxu0 0
        %6524 = vmatpush2.bf16.msra.mxu0 %v5916
        %6525 = vmatprep.subr.bf16.mxu0 0
        %6526 = vmatpush2.bf16.msra.mxu0 %v5913
        %6527 = vmatprep.subr.bf16.mxu0 0
        %6528 = vmatpush2.bf16.msra.mxu0 %v5910
        %6529 = vmatprep.subr.bf16.mxu0 0
        %6530 = vmatpush2.bf16.msra.mxu0 %v5907
        %6531 = vmatprep.subr.bf16.mxu0 0
        %6532 = vmatpush2.bf16.msra.mxu0 %v5904
        %6533 = vmatprep.subr.bf16.mxu0 0
        %6534 = vmatpush2.bf16.msra.mxu0 %v5901
        %6535 = vmatprep.mubr.bf16.mxu0 %v5398
        %6536 = vmatmul.mubr.bf16.gmra.mxu0 %v5397
        %v6537 = vpop.f32.mrf.mxu0
        %v6538 = vadd.f32 %v6441, %v6537
        %v6539 = vpop.f32.mrf.mxu0
        %v6540 = vpop.f32.mrf.mxu0
        %v6541 = vadd.f32 %v6444, %v6540
        %v6542 = vpop.f32.mrf.mxu0
        %6543 = vmatprep.mubr.bf16.mxu0 %v5403
        %6544 = vmatmul.mubr.bf16.gmra.mxu0 %v5402
        %v6545 = vpop.f32.mrf.mxu0
        %v6546 = vadd.f32 %v6449, %v6545
        %v6547 = vpop.f32.mrf.mxu0
        %v6548 = vpop.f32.mrf.mxu0
        %v6549 = vadd.f32 %v6452, %v6548
        %v6550 = vpop.f32.mrf.mxu0
        %6551 = vmatprep.mubr.bf16.mxu0 %v5408
        %6552 = vmatmul.mubr.bf16.gmra.mxu0 %v5407
        %v6553 = vpop.f32.mrf.mxu0
        %v6554 = vadd.f32 %v6457, %v6553
        %v6555 = vpop.f32.mrf.mxu0
        %v6556 = vpop.f32.mrf.mxu0
        %v6557 = vadd.f32 %v6460, %v6556
        %v6558 = vpop.f32.mrf.mxu0
        %6559 = vmatprep.mubr.bf16.mxu0 %v5413
        %6560 = vmatmul.mubr.bf16.gmra.mxu0 %v5412
        %v6561 = vpop.f32.mrf.mxu0
        %v6562 = vadd.f32 %v6465, %v6561
        %v6563 = vpop.f32.mrf.mxu0
        %v6564 = vpop.f32.mrf.mxu0
        %v6565 = vadd.f32 %v6468, %v6564
        %v6566 = vpop.f32.mrf.mxu0
        %6567 = vmatprep.mubr.bf16.mxu0 %v5418
        %6568 = vmatmul.mubr.bf16.gmra.mxu0 %v5417
        %v6569 = vpop.f32.mrf.mxu0
        %v6570 = vadd.f32 %v6473, %v6569
        %v6571 = vpop.f32.mrf.mxu0
        %v6572 = vpop.f32.mrf.mxu0
        %v6573 = vadd.f32 %v6476, %v6572
        %v6574 = vpop.f32.mrf.mxu0
        %6575 = vmatprep.mubr.bf16.mxu0 %v5423
        %6576 = vmatmul.mubr.bf16.gmra.mxu0 %v5422
        %v6577 = vpop.f32.mrf.mxu0
        %v6578 = vadd.f32 %v6481, %v6577
        %v6579 = vpop.f32.mrf.mxu0
        %v6580 = vpop.f32.mrf.mxu0
        %v6581 = vadd.f32 %v6484, %v6580
        %v6582 = vpop.f32.mrf.mxu0
        %6583 = vmatprep.mubr.bf16.mxu0 %v5428
        %6584 = vmatmul.mubr.bf16.gmra.mxu0 %v5427
        %v6585 = vpop.f32.mrf.mxu0
        %v6586 = vadd.f32 %v6489, %v6585
        %v6587 = vpop.f32.mrf.mxu0
        %v6588 = vpop.f32.mrf.mxu0
        %v6589 = vadd.f32 %v6492, %v6588
        %v6590 = vpop.f32.mrf.mxu0
        %6591 = vmatprep.mubr.bf16.mxu0 %v5433
        %6592 = vmatmul.mubr.bf16.gmra.mxu0 %v5432
        %v6593 = vpop.f32.mrf.mxu0
        %v6594 = vadd.f32 %v6497, %v6593
        %v6595 = vpop.f32.mrf.mxu0
        %v6596 = vpop.f32.mrf.mxu0
        %v6597 = vadd.f32 %v6500, %v6596
        %v6598 = vpop.f32.mrf.mxu0
        %6599 = vdwg.mxu0
        %6600 = vmatprep.subr.bf16.mxu0 0
        %6601 = vmatpush1.bf16.msra.mxu0 0
        %6602 = vmatprep.subr.bf16.mxu0 0
        %6603 = vmatpush1.bf16.msra.mxu0 0
        %6604 = vmatprep.subr.bf16.mxu0 0
        %6605 = vmatpush1.bf16.msra.mxu0 0
        %6606 = vmatprep.subr.bf16.mxu0 0
        %6607 = vmatpush1.bf16.msra.mxu0 0
        %6608 = vmatprep.subr.bf16.mxu0 0
        %6609 = vmatpush1.bf16.msra.mxu0 %v5934
        %6610 = vmatprep.subr.bf16.mxu0 0
        %6611 = vmatpush1.bf16.msra.mxu0 %v5931
        %6612 = vmatprep.subr.bf16.mxu0 0
        %6613 = vmatpush1.bf16.msra.mxu0 %v5928
        %6614 = vmatprep.subr.bf16.mxu0 0
        %6615 = vmatpush1.bf16.msra.mxu0 %v5925
        %6616 = vmatprep.subr.bf16.mxu0 0
        %6617 = vmatpush2.bf16.msra.mxu0 0
        %6618 = vmatprep.subr.bf16.mxu0 0
        %6619 = vmatpush2.bf16.msra.mxu0 0
        %6620 = vmatprep.subr.bf16.mxu0 0
        %6621 = vmatpush2.bf16.msra.mxu0 0
        %6622 = vmatprep.subr.bf16.mxu0 0
        %6623 = vmatpush2.bf16.msra.mxu0 0
        %6624 = vmatprep.subr.bf16.mxu0 0
        %6625 = vmatpush2.bf16.msra.mxu0 0
        %6626 = vmatprep.subr.bf16.mxu0 0
        %6627 = vmatpush2.bf16.msra.mxu0 0
        %6628 = vmatprep.subr.bf16.mxu0 0
        %6629 = vmatpush2.bf16.msra.mxu0 0
        %6630 = vmatprep.subr.bf16.mxu0 0
        %6631 = vmatpush2.bf16.msra.mxu0 0
        %6632 = vmatprep.mubr.bf16.mxu0 0
        %6633 = vmatmul.mubr.bf16.gmra.mxu0 %v6044
        %v6634 = vpop.f32.mrf.mxu0
        %v6635 = vadd.f32 %v6538, %v6634
        %v6636 = vpop.f32.mrf.mxu0
        %v6637 = vpop.f32.mrf.mxu0
        %v6638 = vadd.f32 %v6541, %v6637
        %v6639 = vpop.f32.mrf.mxu0
        %6640 = vmatprep.mubr.bf16.mxu0 0
        %6641 = vmatmul.mubr.bf16.gmra.mxu0 %v6047
        %v6642 = vpop.f32.mrf.mxu0
        %v6643 = vadd.f32 %v6546, %v6642
        %v6644 = vpop.f32.mrf.mxu0
        %v6645 = vpop.f32.mrf.mxu0
        %v6646 = vadd.f32 %v6549, %v6645
        %v6647 = vpop.f32.mrf.mxu0
        %6648 = vmatprep.mubr.bf16.mxu0 0
        %6649 = vmatmul.mubr.bf16.gmra.mxu0 %v6050
        %v6650 = vpop.f32.mrf.mxu0
        %v6651 = vadd.f32 %v6554, %v6650
        %v6652 = vpop.f32.mrf.mxu0
        %v6653 = vpop.f32.mrf.mxu0
        %v6654 = vadd.f32 %v6557, %v6653
        %v6655 = vpop.f32.mrf.mxu0
        %6656 = vmatprep.mubr.bf16.mxu0 0
        %6657 = vmatmul.mubr.bf16.gmra.mxu0 %v6053
        %v6658 = vpop.f32.mrf.mxu0
        %v6659 = vadd.f32 %v6562, %v6658
        %v6660 = vpop.f32.mrf.mxu0
        %v6661 = vpop.f32.mrf.mxu0
        %v6662 = vadd.f32 %v6565, %v6661
        %v6663 = vpop.f32.mrf.mxu0
        %6664 = vmatprep.mubr.bf16.mxu0 0
        %6665 = vmatmul.mubr.bf16.gmra.mxu0 %v6056
        %v6666 = vpop.f32.mrf.mxu0
        %v6667 = vadd.f32 %v6570, %v6666
        %v6668 = vpop.f32.mrf.mxu0
        %v6669 = vpop.f32.mrf.mxu0
        %v6670 = vadd.f32 %v6573, %v6669
        %v6671 = vpop.f32.mrf.mxu0
        %6672 = vmatprep.mubr.bf16.mxu0 0
        %6673 = vmatmul.mubr.bf16.gmra.mxu0 %v6059
        %v6674 = vpop.f32.mrf.mxu0
        %v6675 = vadd.f32 %v6578, %v6674
        %v6676 = vpop.f32.mrf.mxu0
        %v6677 = vpop.f32.mrf.mxu0
        %v6678 = vadd.f32 %v6581, %v6677
        %v6679 = vpop.f32.mrf.mxu0
        %6680 = vmatprep.mubr.bf16.mxu0 0
        %6681 = vmatmul.mubr.bf16.gmra.mxu0 %v6062
        %v6682 = vpop.f32.mrf.mxu0
        %v6683 = vadd.f32 %v6586, %v6682
        %v6684 = vpop.f32.mrf.mxu0
        %v6685 = vpop.f32.mrf.mxu0
        %v6686 = vadd.f32 %v6589, %v6685
        %v6687 = vpop.f32.mrf.mxu0
        %6688 = vmatprep.mubr.bf16.mxu0 0
        %6689 = vmatmul.mubr.bf16.gmra.mxu0 %v6065
        %v6690 = vpop.f32.mrf.mxu0
        %v6691 = vadd.f32 %v6594, %v6690
        %v6692 = vpop.f32.mrf.mxu0
        %v6693 = vpop.f32.mrf.mxu0
        %v6694 = vadd.f32 %v6597, %v6693
        %v6695 = vpop.f32.mrf.mxu0
        %6696 = vdwg.mxu0
        %v6697 = vxor.u32 %v6328, 2147483648
        %v6698 = vxor.u32 %v6330, 2147483648
        %v6699 = vxor.u32 %v6635, 2147483648
        %v6700 = vxor.u32 %v6332, 2147483648
        %v6701 = vxor.u32 %v6334, 2147483648
        %v6702 = vxor.u32 %v6638, 2147483648
        %v6703 = vxor.u32 %v6338, 2147483648
        %v6704 = vxor.u32 %v6340, 2147483648
        %v6705 = vxor.u32 %v6643, 2147483648
        %v6706 = vxor.u32 %v6342, 2147483648
        %v6707 = vxor.u32 %v6344, 2147483648
        %v6708 = vxor.u32 %v6646, 2147483648
        %v6709 = vmul.f32 %v6697, 1.442695
        %v6710 = vpow.pop %v6709
        %v6711 = vmul.f32 %v6698, 1.442695
        %v6712 = vpow.pop %v6711
        %v6713 = vmul.f32 %v6699, 1.442695
        %v6714 = vpow.pop %v6713
        %v6715 = vmul.f32 %v6700, 1.442695
        %v6716 = vpow.pop %v6715
        %v6717 = vmul.f32 %v6701, 1.442695
        %v6718 = vpow.pop %v6717
        %v6719 = vmul.f32 %v6702, 1.442695
        %v6720 = vpow.pop %v6719
        %v6721 = vmul.f32 %v6703, 1.442695
        %v6722 = vpow.pop %v6721
        %v6723 = vmul.f32 %v6704, 1.442695
        %v6724 = vpow.pop %v6723
        %v6725 = vmul.f32 %v6705, 1.442695
        %v6726 = vpow.pop %v6725
        %v6727 = vmul.f32 %v6706, 1.442695
        %v6728 = vpow.pop %v6727
        %v6729 = vmul.f32 %v6707, 1.442695
        %v6730 = vpow.pop %v6729
        %v6731 = vmul.f32 %v6708, 1.442695
        %v6732 = vpow.pop %v6731
        %v6733 = vadd.f32 %v6710, 1.0
        %v6734 = vadd.f32 %v6712, 1.0
        %v6735 = vadd.f32 %v6714, 1.0
        %v6736 = vadd.f32 %v6716, 1.0
        %v6737 = vadd.f32 %v6718, 1.0
        %v6738 = vadd.f32 %v6720, 1.0
        %v6739 = vadd.f32 %v6722, 1.0
        %v6740 = vadd.f32 %v6724, 1.0
        %v6741 = vadd.f32 %v6726, 1.0
        %v6742 = vadd.f32 %v6728, 1.0
        %v6743 = vadd.f32 %v6730, 1.0
        %v6744 = vadd.f32 %v6732, 1.0
        %v6745 = vrcp.pop %v6733
        %v6746 = vmul.f32 1.0, %v6745
        %v6747 = vrcp.pop %v6734
        %v6748 = vmul.f32 1.0, %v6747
        %v6749 = vrcp.pop %v6735
        %v6750 = vmul.f32 1.0, %v6749
        %v6751 = vrcp.pop %v6736
        %v6752 = vmul.f32 1.0, %v6751
        %v6753 = vrcp.pop %v6737
        %v6754 = vmul.f32 1.0, %v6753
        %v6755 = vrcp.pop %v6738
        %v6756 = vmul.f32 1.0, %v6755
        %v6757 = vrcp.pop %v6739
        %v6758 = vmul.f32 1.0, %v6757
        %v6759 = vrcp.pop %v6740
        %v6760 = vmul.f32 1.0, %v6759
        %v6761 = vrcp.pop %v6741
        %v6762 = vmul.f32 1.0, %v6761
        %v6763 = vrcp.pop %v6742
        %v6764 = vmul.f32 1.0, %v6763
        %v6765 = vrcp.pop %v6743
        %v6766 = vmul.f32 1.0, %v6765
        %v6767 = vrcp.pop %v6744
        %v6768 = vmul.f32 1.0, %v6767
        %v6769 = vxor.u32 %v6348, 2147483648
        %v6770 = vxor.u32 %v6350, 2147483648
        %v6771 = vxor.u32 %v6651, 2147483648
        %v6772 = vxor.u32 %v6352, 2147483648
        %v6773 = vxor.u32 %v6354, 2147483648
        %v6774 = vxor.u32 %v6654, 2147483648
        %v6775 = vxor.u32 %v6358, 2147483648
        %v6776 = vxor.u32 %v6360, 2147483648
        %v6777 = vxor.u32 %v6659, 2147483648
        %v6778 = vxor.u32 %v6362, 2147483648
        %v6779 = vxor.u32 %v6364, 2147483648
        %v6780 = vxor.u32 %v6662, 2147483648
        %v6781 = vmul.f32 %v6769, 1.442695
        %v6782 = vpow.pop %v6781
        %v6783 = vmul.f32 %v6770, 1.442695
        %v6784 = vpow.pop %v6783
        %v6785 = vmul.f32 %v6771, 1.442695
        %v6786 = vpow.pop %v6785
        %v6787 = vmul.f32 %v6772, 1.442695
        %v6788 = vpow.pop %v6787
        %v6789 = vmul.f32 %v6773, 1.442695
        %v6790 = vpow.pop %v6789
        %v6791 = vmul.f32 %v6774, 1.442695
        %v6792 = vpow.pop %v6791
        %v6793 = vmul.f32 %v6775, 1.442695
        %v6794 = vpow.pop %v6793
        %v6795 = vmul.f32 %v6776, 1.442695
        %v6796 = vpow.pop %v6795
        %v6797 = vmul.f32 %v6777, 1.442695
        %v6798 = vpow.pop %v6797
        %v6799 = vmul.f32 %v6778, 1.442695
        %v6800 = vpow.pop %v6799
        %v6801 = vmul.f32 %v6779, 1.442695
        %v6802 = vpow.pop %v6801
        %v6803 = vmul.f32 %v6780, 1.442695
        %v6804 = vpow.pop %v6803
        %v6805 = vadd.f32 %v6782, 1.0
        %v6806 = vadd.f32 %v6784, 1.0
        %v6807 = vadd.f32 %v6786, 1.0
        %v6808 = vadd.f32 %v6788, 1.0
        %v6809 = vadd.f32 %v6790, 1.0
        %v6810 = vadd.f32 %v6792, 1.0
        %v6811 = vadd.f32 %v6794, 1.0
        %v6812 = vadd.f32 %v6796, 1.0
        %v6813 = vadd.f32 %v6798, 1.0
        %v6814 = vadd.f32 %v6800, 1.0
        %v6815 = vadd.f32 %v6802, 1.0
        %v6816 = vadd.f32 %v6804, 1.0
        %v6817 = vrcp.pop %v6805
        %v6818 = vmul.f32 1.0, %v6817
        %v6819 = vrcp.pop %v6806
        %v6820 = vmul.f32 1.0, %v6819
        %v6821 = vrcp.pop %v6807
        %v6822 = vmul.f32 1.0, %v6821
        %v6823 = vrcp.pop %v6808
        %v6824 = vmul.f32 1.0, %v6823
        %v6825 = vrcp.pop %v6809
        %v6826 = vmul.f32 1.0, %v6825
        %v6827 = vrcp.pop %v6810
        %v6828 = vmul.f32 1.0, %v6827
        %v6829 = vrcp.pop %v6811
        %v6830 = vmul.f32 1.0, %v6829
        %v6831 = vrcp.pop %v6812
        %v6832 = vmul.f32 1.0, %v6831
        %v6833 = vrcp.pop %v6813
        %v6834 = vmul.f32 1.0, %v6833
        %v6835 = vrcp.pop %v6814
        %v6836 = vmul.f32 1.0, %v6835
        %v6837 = vrcp.pop %v6815
        %v6838 = vmul.f32 1.0, %v6837
        %v6839 = vrcp.pop %v6816
        %v6840 = vmul.f32 1.0, %v6839
        %v6841 = vxor.u32 %v6368, 2147483648
        %v6842 = vxor.u32 %v6370, 2147483648
        %v6843 = vxor.u32 %v6667, 2147483648
        %v6844 = vxor.u32 %v6372, 2147483648
        %v6845 = vxor.u32 %v6374, 2147483648
        %v6846 = vxor.u32 %v6670, 2147483648
        %v6847 = vxor.u32 %v6378, 2147483648
        %v6848 = vxor.u32 %v6380, 2147483648
        %v6849 = vxor.u32 %v6675, 2147483648
        %v6850 = vxor.u32 %v6382, 2147483648
        %v6851 = vxor.u32 %v6384, 2147483648
        %v6852 = vxor.u32 %v6678, 2147483648
        %v6853 = vmul.f32 %v6841, 1.442695
        %v6854 = vpow.pop %v6853
        %v6855 = vmul.f32 %v6842, 1.442695
        %v6856 = vpow.pop %v6855
        %v6857 = vmul.f32 %v6843, 1.442695
        %v6858 = vpow.pop %v6857
        %v6859 = vmul.f32 %v6844, 1.442695
        %v6860 = vpow.pop %v6859
        %v6861 = vmul.f32 %v6845, 1.442695
        %v6862 = vpow.pop %v6861
        %v6863 = vmul.f32 %v6846, 1.442695
        %v6864 = vpow.pop %v6863
        %v6865 = vmul.f32 %v6847, 1.442695
        %v6866 = vpow.pop %v6865
        %v6867 = vmul.f32 %v6848, 1.442695
        %v6868 = vpow.pop %v6867
        %v6869 = vmul.f32 %v6849, 1.442695
        %v6870 = vpow.pop %v6869
        %v6871 = vmul.f32 %v6850, 1.442695
        %v6872 = vpow.pop %v6871
        %v6873 = vmul.f32 %v6851, 1.442695
        %v6874 = vpow.pop %v6873
        %v6875 = vmul.f32 %v6852, 1.442695
        %v6876 = vpow.pop %v6875
        %v6877 = vadd.f32 %v6854, 1.0
        %v6878 = vadd.f32 %v6856, 1.0
        %v6879 = vadd.f32 %v6858, 1.0
        %v6880 = vadd.f32 %v6860, 1.0
        %v6881 = vadd.f32 %v6862, 1.0
        %v6882 = vadd.f32 %v6864, 1.0
        %v6883 = vadd.f32 %v6866, 1.0
        %v6884 = vadd.f32 %v6868, 1.0
        %v6885 = vadd.f32 %v6870, 1.0
        %v6886 = vadd.f32 %v6872, 1.0
        %v6887 = vadd.f32 %v6874, 1.0
        %v6888 = vadd.f32 %v6876, 1.0
        %v6889 = vrcp.pop %v6877
        %v6890 = vmul.f32 1.0, %v6889
        %v6891 = vrcp.pop %v6878
        %v6892 = vmul.f32 1.0, %v6891
        %v6893 = vrcp.pop %v6879
        %v6894 = vmul.f32 1.0, %v6893
        %v6895 = vrcp.pop %v6880
        %v6896 = vmul.f32 1.0, %v6895
        %v6897 = vrcp.pop %v6881
        %v6898 = vmul.f32 1.0, %v6897
        %v6899 = vrcp.pop %v6882
        %v6900 = vmul.f32 1.0, %v6899
        %v6901 = vrcp.pop %v6883
        %v6902 = vmul.f32 1.0, %v6901
        %v6903 = vrcp.pop %v6884
        %v6904 = vmul.f32 1.0, %v6903
        %v6905 = vrcp.pop %v6885
        %v6906 = vmul.f32 1.0, %v6905
        %v6907 = vrcp.pop %v6886
        %v6908 = vmul.f32 1.0, %v6907
        %v6909 = vrcp.pop %v6887
        %v6910 = vmul.f32 1.0, %v6909
        %v6911 = vrcp.pop %v6888
        %v6912 = vmul.f32 1.0, %v6911
        %v6913 = vtanh.pop %v6388
        %v6914 = vtanh.pop %v6390
        %v6915 = vtanh.pop %v6683
        %v6916 = vtanh.pop %v6392
        %v6917 = vtanh.pop %v6394
        %v6918 = vtanh.pop %v6686
        %v6919 = vtanh.pop %v6398
        %v6920 = vtanh.pop %v6400
        %v6921 = vtanh.pop %v6691
        %v6922 = vtanh.pop %v6402
        %v6923 = vtanh.pop %v6404
        %v6924 = vtanh.pop %v6694
        %s6925 = scalar_lea.vmem [#allocation3], 96
        %v6926 = vld [vmem:[%s6925] sm:$0xff]
        %v6927 = vld [vmem:[%s6925 + $0x8] sm:$0xff]
        %v6928 = vld [vmem:[%s6925 + $0x10] sm:$0xff]
        %v6929 = vld [vmem:[%s6925 + $0x18] sm:$0xff]
        %v6930 = vld [vmem:[%s6925 + $0x20] sm:$0xff]
        %v6931 = vld [vmem:[%s6925 + $0x28] sm:$0xff]
        %v6932 = vld [vmem:[%s6925 + $0x30] sm:$0xff]
        %v6933 = vld [vmem:[%s6925 + $0x38] sm:$0xff]
        %v6934 = vld [vmem:[%s6925 + $0x40] sm:$0xff]
        %v6935 = vld [vmem:[%s6925 + $0x48] sm:$0xff]
        %v6936 = vld [vmem:[%s6925 + $0x50] sm:$0xff]
        %v6937 = vld [vmem:[%s6925 + $0x58] sm:$0xff]
        %v6938 = vmul.f32 %v6818, %v6926
        %v6939 = vmul.f32 %v6820, %v6927
        %v6940 = vmul.f32 %v6822, %v6928
        %v6941 = vmul.f32 %v6824, %v6929
        %v6942 = vmul.f32 %v6826, %v6930
        %v6943 = vmul.f32 %v6828, %v6931
        %v6944 = vmul.f32 %v6830, %v6932
        %v6945 = vmul.f32 %v6832, %v6933
        %v6946 = vmul.f32 %v6834, %v6934
        %v6947 = vmul.f32 %v6836, %v6935
        %v6948 = vmul.f32 %v6838, %v6936
        %v6949 = vmul.f32 %v6840, %v6937
        %v6950 = vmul.f32 %v6746, %v6913
        %v6951 = vmul.f32 %v6748, %v6914
        %v6952 = vmul.f32 %v6750, %v6915
        %v6953 = vmul.f32 %v6752, %v6916
        %v6954 = vmul.f32 %v6754, %v6917
        %v6955 = vmul.f32 %v6756, %v6918
        %v6956 = vmul.f32 %v6758, %v6919
        %v6957 = vmul.f32 %v6760, %v6920
        %v6958 = vmul.f32 %v6762, %v6921
        %v6959 = vmul.f32 %v6764, %v6922
        %v6960 = vmul.f32 %v6766, %v6923
        %v6961 = vmul.f32 %v6768, %v6924
        %v6962 = vadd.f32 %v6938, %v6950
        %v6963 = vadd.f32 %v6939, %v6951
        %v6964 = vadd.f32 %v6940, %v6952
        %v6965 = vadd.f32 %v6941, %v6953
        %v6966 = vadd.f32 %v6942, %v6954
        %v6967 = vadd.f32 %v6943, %v6955
        %v6968 = vadd.f32 %v6944, %v6956
        %v6969 = vadd.f32 %v6945, %v6957
        %v6970 = vadd.f32 %v6946, %v6958
        %v6971 = vadd.f32 %v6947, %v6959
        %v6972 = vadd.f32 %v6948, %v6960
        %v6973 = vadd.f32 %v6949, %v6961
        %v6974 = vtanh.pop %v6962
        %v6975 = vtanh.pop %v6963
        %v6976 = vtanh.pop %v6964
        %v6977 = vtanh.pop %v6965
        %v6978 = vtanh.pop %v6966
        %v6979 = vtanh.pop %v6967
        %v6980 = vtanh.pop %v6968
        %v6981 = vtanh.pop %v6969
        %v6982 = vtanh.pop %v6970
        %v6983 = vtanh.pop %v6971
        %v6984 = vtanh.pop %v6972
        %v6985 = vtanh.pop %v6973
        %v6986 = vmul.f32 %v6890, %v6974
        %v6987 = vmul.f32 %v6892, %v6975
        %v6988 = vmul.f32 %v6894, %v6976
        %v6989 = vmul.f32 %v6896, %v6977
        %v6990 = vmul.f32 %v6898, %v6978
        %v6991 = vmul.f32 %v6900, %v6979
        %v6992 = vmul.f32 %v6902, %v6980
        %v6993 = vmul.f32 %v6904, %v6981
        %v6994 = vmul.f32 %v6906, %v6982
        %v6995 = vmul.f32 %v6908, %v6983
        %v6996 = vmul.f32 %v6910, %v6984
        %v6997 = vmul.f32 %v6912, %v6985
        %v6998 = vmul.f32 %v6986, %v619
        %v6999 = vmul.f32 %v6987, %v623
        %v7000 = vmul.f32 %v6988, %v627
        %v7001 = vmul.f32 %v6989, %v619
        %v7002 = vmul.f32 %v6990, %v623
        %v7003 = vmul.f32 %v6991, %v627
        %v7004 = vmul.f32 %v6992, %v619
        %v7005 = vmul.f32 %v6993, %v623
        %v7006 = vmul.f32 %v6994, %v627
        %v7007 = vmul.f32 %v6995, %v619
        %v7008 = vmul.f32 %v6996, %v623
        %v7009 = vmul.f32 %v6997, %v627
        %7010 = vst [vmem:[%s6925] sm:$0xff] %v6962
        %7011 = vst [vmem:[%s6925 + $0x8] sm:$0xff] %v6963
        %7012 = vst.msk [vmem:[%s6925 + $0x10] sm:$0xff] %vm344, %v6964
        %7013 = vst [vmem:[%s6925 + $0x18] sm:$0xff] %v6965
        %7014 = vst [vmem:[%s6925 + $0x20] sm:$0xff] %v6966
        %7015 = vst.msk [vmem:[%s6925 + $0x28] sm:$0xff] %vm344, %v6967
        %7016 = vst [vmem:[%s6925 + $0x30] sm:$0xff] %v6968
        %7017 = vst [vmem:[%s6925 + $0x38] sm:$0xff] %v6969
        %7018 = vst.msk [vmem:[%s6925 + $0x40] sm:$0xff] %vm344, %v6970
        %7019 = vst [vmem:[%s6925 + $0x48] sm:$0xff] %v6971
        %7020 = vst [vmem:[%s6925 + $0x50] sm:$0xff] %v6972
        %7021 = vst.msk [vmem:[%s6925 + $0x58] sm:$0xff] %vm344, %v6973
        %v7022 = vpack.c.bf16 %v7001, %v6998
        %v7023 = vpack.c.bf16 %v7002, %v6999
        %v7024 = vpack.c.bf16 %v7003, %v7000
        %v7025 = vpack.c.bf16 %v7007, %v7004
        %v7026 = vpack.c.bf16 %v7008, %v7005
        %v7027 = vpack.c.bf16 %v7009, %v7006
        %v7034 = vunpack.c.l.b16 %v7022
        %v7035 = vunpack.c.l.b16 %v7023
        %v7036 = vunpack.c.l.b16 %v7024
        %v7037 = vunpack.c.h.b16 %v7022
        %v7038 = vunpack.c.h.b16 %v7023
        %v7039 = vunpack.c.h.b16 %v7024
        %v7040 = vunpack.c.l.b16 %v7025
        %v7041 = vunpack.c.l.b16 %v7026
        %v7042 = vunpack.c.l.b16 %v7027
        %v7043 = vunpack.c.h.b16 %v7025
        %v7044 = vunpack.c.h.b16 %v7026
        %v7045 = vunpack.c.h.b16 %v7027
        %v7046 = vpack.c.b16 %v7035, %v7034
        %v7047 = vpack.c.b16 %v7036, %v7036
        %v7048 = vpack.c.b16 %v7038, %v7037
        %v7049 = vpack.c.b16 %v7039, %v7039
        %v7050 = vpack.c.b16 %v7041, %v7040
        %v7051 = vpack.c.b16 %v7042, %v7042
        %v7052 = vpack.c.b16 %v7044, %v7043
        %v7053 = vpack.c.b16 %v7045, %v7045
        %7062 = vst [vmem:[%s3880 + $0x44] sm:$0xff] %v7046
        %7063 = vst.msk [vmem:[%s3880 + $0x4c] sm:$0xf] %vm684, %v7047
        %7064 = vst [vmem:[%s3880 + $0x54] sm:$0xff] %v7048
        %7065 = vst.msk [vmem:[%s3880 + $0x5c] sm:$0xf] %vm684, %v7049
        %7066 = vst [vmem:[%s3880 + $0x64] sm:$0xff] %v7050
        %7067 = vst.msk [vmem:[%s3880 + $0x6c] sm:$0xf] %vm684, %v7051
        %7068 = vst [vmem:[%s3880 + $0x74] sm:$0xff] %v7052
        %7069 = vst.msk [vmem:[%s3880 + $0x7c] sm:$0xf] %vm684, %v7053
        %v7070 = vld [vmem:[#allocation4] sm:$0xff]
        %v7071 = vld [vmem:[#allocation4 + $0x8] sm:$0xff]
        %v7072 = vld [vmem:[#allocation4 + $0x10] sm:$0xff]
        %v7073 = vld [vmem:[#allocation4 + $0x18] sm:$0xff]
        %v7074 = vld [vmem:[#allocation4 + $0x20] sm:$0xff]
        %v7075 = vld [vmem:[#allocation4 + $0x28] sm:$0xff]
        %v7076 = vld [vmem:[#allocation4 + $0x30] sm:$0xff]
        %v7077 = vld [vmem:[#allocation4 + $0x38] sm:$0xff]
        %v7078 = vld [vmem:[#allocation4 + $0x40] sm:$0xff]
        %v7079 = vld [vmem:[#allocation4 + $0x48] sm:$0xff]
        %v7080 = vld [vmem:[#allocation4 + $0x50] sm:$0xff]
        %v7081 = vld [vmem:[#allocation4 + $0x58] sm:$0xff]
        %v7082 = vadd.f32 %v7070, %v6998
        %v7083 = vadd.f32 %v7071, %v6999
        %v7084 = vadd.f32 %v7072, %v7000
        %v7085 = vadd.f32 %v7073, %v7001
        %v7086 = vadd.f32 %v7074, %v7002
        %v7087 = vadd.f32 %v7075, %v7003
        %v7088 = vadd.f32 %v7076, %v7004
        %v7089 = vadd.f32 %v7077, %v7005
        %v7090 = vadd.f32 %v7078, %v7006
        %v7091 = vadd.f32 %v7079, %v7007
        %v7092 = vadd.f32 %v7080, %v7008
        %v7093 = vadd.f32 %v7081, %v7009
        %7094 = vst [vmem:[#allocation4] sm:$0xff] %v7082
        %7095 = vst [vmem:[#allocation4 + $0x8] sm:$0xff] %v7083
        %7096 = vst.msk [vmem:[#allocation4 + $0x10] sm:$0xff] %vm344, %v7084
        %7097 = vst [vmem:[#allocation4 + $0x18] sm:$0xff] %v7085
        %7098 = vst [vmem:[#allocation4 + $0x20] sm:$0xff] %v7086
        %7099 = vst.msk [vmem:[#allocation4 + $0x28] sm:$0xff] %vm344, %v7087
        %7100 = vst [vmem:[#allocation4 + $0x30] sm:$0xff] %v7088
        %7101 = vst [vmem:[#allocation4 + $0x38] sm:$0xff] %v7089
        %7102 = vst.msk [vmem:[#allocation4 + $0x40] sm:$0xff] %vm344, %v7090
        %7103 = vst [vmem:[#allocation4 + $0x48] sm:$0xff] %v7091
        %7104 = vst [vmem:[#allocation4 + $0x50] sm:$0xff] %v7092
        %7105 = vst.msk [vmem:[#allocation4 + $0x58] sm:$0xff] %vm344, %v7093
      $region57: #{convlstm_forward.1} parent=51 // loop_footer
        %s384 = sadd.s32 1, %s380
      $region58: #{convlstm_forward.1} parent=51 // loop_footer_branch
        %379 = sbr.rel target = $region54
      $region59: #{convlstm_forward.1} parent=51 // loop_exit
        _
      %v7106 = vld [vmem:[#allocation4] sm:$0xff]
      %v7107 = vld [vmem:[#allocation4 + $0x8] sm:$0xff]
      %v7108 = vld [vmem:[#allocation4 + $0x10] sm:$0xff]
      %v7109 = vld [vmem:[#allocation4 + $0x18] sm:$0xff]
      %v7110 = vld [vmem:[#allocation4 + $0x20] sm:$0xff]
      %v7111 = vld [vmem:[#allocation4 + $0x28] sm:$0xff]
      %v7112 = vld [vmem:[#allocation4 + $0x30] sm:$0xff]
      %v7113 = vld [vmem:[#allocation4 + $0x38] sm:$0xff]
      %v7114 = vld [vmem:[#allocation4 + $0x40] sm:$0xff]
      %v7115 = vld [vmem:[#allocation4 + $0x48] sm:$0xff]
      %v7116 = vld [vmem:[#allocation4 + $0x50] sm:$0xff]
      %v7117 = vld [vmem:[#allocation4 + $0x58] sm:$0xff]
      %v7118 = vmul.f32 %v7106, 0.125
      %v7119 = vmul.f32 %v7107, 0.125
      %v7120 = vmul.f32 %v7108, 0.125
      %v7121 = vmul.f32 %v7109, 0.125
      %v7122 = vmul.f32 %v7110, 0.125
      %v7123 = vmul.f32 %v7111, 0.125
      %v7124 = vmul.f32 %v7112, 0.125
      %v7125 = vmul.f32 %v7113, 0.125
      %v7126 = vmul.f32 %v7114, 0.125
      %v7127 = vmul.f32 %v7115, 0.125
      %v7128 = vmul.f32 %v7116, 0.125
      %v7129 = vmul.f32 %v7117, 0.125
      %v7130 = vld [vmem:[%s6] sm:$0xf]
      %v7131 = vld [vmem:[%s7] sm:$0xf]
      %7133 = vset.pattern.permute.xlu0 0
      %7134 = vperm.xlu0 %7133, %v7131
      %v7135 = vpop.permute.xlu0 %7134
      %v7138 = vsel %vm344, %v7130, 0
      %7140 = vmatprep.subr.mxu0 0.0
      %7141 = vmatpush1.msra.mxu0 0.0
      %7142 = vmatprep.subr.mxu0 0.0
      %7143 = vmatpush1.msra.mxu0 0.0
      %7144 = vmatprep.subr.mxu0 0.0
      %7145 = vmatpush1.msra.mxu0 0.0
      %7146 = vmatprep.subr.mxu0 0.0
      %7147 = vmatpush1.msra.mxu0 0.0
      %7148 = vmatprep.subr.mxu0 0.0
      %7149 = vmatpush1.msra.mxu0 0.0
      %7150 = vmatprep.subr.mxu0 0.0
      %7151 = vmatpush1.msra.mxu0 0.0
      %7152 = vmatprep.subr.mxu0 0.0
      %7153 = vmatpush1.msra.mxu0 0.0
      %7154 = vmatprep.subr.mxu0 0.0
      %7155 = vmatpush1.msra.mxu0 0.0
      %7156 = vmatprep.subr.mxu0 0.0
      %7157 = vmatpush1.msra.mxu0 0.0
      %7158 = vmatprep.subr.mxu0 0.0
      %7159 = vmatpush1.msra.mxu0 0.0
      %7160 = vmatprep.subr.mxu0 0.0
      %7161 = vmatpush1.msra.mxu0 0.0
      %7162 = vmatprep.subr.mxu0 0.0
      %7163 = vmatpush1.msra.mxu0 0.0
      %7164 = vmatprep.subr.mxu0 %v7128
      %7165 = vmatpush1.msra.mxu0 %v7127
      %7166 = vmatprep.subr.mxu0 %v7125
      %7167 = vmatpush1.msra.mxu0 %v7124
      %7168 = vmatprep.subr.mxu0 %v7122
      %7169 = vmatpush1.msra.mxu0 %v7121
      %7170 = vmatprep.subr.mxu0 %v7119
      %7171 = vmatpush1.msra.mxu0 %v7118
      %7172 = vmatprep.subr.mxu0 0.0
      %7173 = vmatpush2.msra.mxu0 0.0
      %7174 = vmatprep.subr.mxu0 0.0
      %7175 = vmatpush2.msra.mxu0 0.0
      %7176 = vmatprep.subr.mxu0 0.0
      %7177 = vmatpush2.msra.mxu0 0.0
      %7178 = vmatprep.subr.mxu0 0.0
      %7179 = vmatpush2.msra.mxu0 0.0
      %7180 = vmatprep.subr.mxu0 0.0
      %7181 = vmatpush2.msra.mxu0 0.0
      %7182 = vmatprep.subr.mxu0 0.0
      %7183 = vmatpush2.msra.mxu0 0.0
      %7184 = vmatprep.subr.mxu0 0.0
      %7185 = vmatpush2.msra.mxu0 0.0
      %7186 = vmatprep.subr.mxu0 0.0
      %7187 = vmatpush2.msra.mxu0 0.0
      %7188 = vmatprep.subr.mxu0 0.0
      %7189 = vmatpush2.msra.mxu0 0.0
      %7190 = vmatprep.subr.mxu0 0.0
      %7191 = vmatpush2.msra.mxu0 0.0
      %7192 = vmatprep.subr.mxu0 0.0
      %7193 = vmatpush2.msra.mxu0 0.0
      %7194 = vmatprep.subr.mxu0 0.0
      %7195 = vmatpush2.msra.mxu0 0.0
      %7196 = vmatprep.subr.mxu0 0.0
      %7197 = vmatpush2.msra.mxu0 0.0
      %7198 = vmatprep.subr.mxu0 0.0
      %7199 = vmatpush2.msra.mxu0 0.0
      %7200 = vmatprep.subr.mxu0 0.0
      %7201 = vmatpush2.msra.mxu0 0.0
      %7202 = vmatprep.subr.mxu0 0.0
      %7203 = vmatpush2.msra.mxu0 0.0
      %7204 = vmatprep.mubr.f32.mxu0 0.0
      %7205 = vmatmul.mubr.f32.gmra.mxu0 %v7138
      %v7206 = vpop.f32.mrf.mxu0
      %v7207 = vadd.f32 %v7135, %v7206
      %v7208 = vpop.f32.mrf.mxu0
      %v7209 = vadd.f32 %v7135, %v7208
      %7210 = vdwg.mxu0
      %7211 = vmatprep.subr.mxu0 0.0
      %7212 = vmatpush1.msra.mxu0 0.0
      %7213 = vmatprep.subr.mxu0 0.0
      %7214 = vmatpush1.msra.mxu0 0.0
      %7215 = vmatprep.subr.mxu0 0.0
      %7216 = vmatpush1.msra.mxu0 0.0
      %7217 = vmatprep.subr.mxu0 0.0
      %7218 = vmatpush1.msra.mxu0 0.0
      %7219 = vmatprep.subr.mxu0 0.0
      %7220 = vmatpush1.msra.mxu0 0.0
      %7221 = vmatprep.subr.mxu0 0.0
      %7222 = vmatpush1.msra.mxu0 0.0
      %7223 = vmatprep.subr.mxu0 0.0
      %7224 = vmatpush1.msra.mxu0 0.0
      %7225 = vmatprep.subr.mxu0 0.0
      %7226 = vmatpush1.msra.mxu0 0.0
      %7227 = vmatprep.subr.mxu0 0.0
      %7228 = vmatpush1.msra.mxu0 0.0
      %7229 = vmatprep.subr.mxu0 0.0
      %7230 = vmatpush1.msra.mxu0 0.0
      %7231 = vmatprep.subr.mxu0 0.0
      %7232 = vmatpush1.msra.mxu0 0.0
      %7233 = vmatprep.subr.mxu0 0.0
      %7234 = vmatpush1.msra.mxu0 0.0
      %7235 = vmatprep.subr.mxu0 0.0
      %7236 = vmatpush1.msra.mxu0 %v7129
      %7237 = vmatprep.subr.mxu0 0.0
      %7238 = vmatpush1.msra.mxu0 %v7126
      %7239 = vmatprep.subr.mxu0 0.0
      %7240 = vmatpush1.msra.mxu0 %v7123
      %7241 = vmatprep.subr.mxu0 0.0
      %7242 = vmatpush1.msra.mxu0 %v7120
      %7243 = vmatprep.subr.mxu0 0.0
      %7244 = vmatpush2.msra.mxu0 0.0
      %7245 = vmatprep.subr.mxu0 0.0
      %7246 = vmatpush2.msra.mxu0 0.0
      %7247 = vmatprep.subr.mxu0 0.0
      %7248 = vmatpush2.msra.mxu0 0.0
      %7249 = vmatprep.subr.mxu0 0.0
      %7250 = vmatpush2.msra.mxu0 0.0
      %7251 = vmatprep.subr.mxu0 0.0
      %7252 = vmatpush2.msra.mxu0 0.0
      %7253 = vmatprep.subr.mxu0 0.0
      %7254 = vmatpush2.msra.mxu0 0.0
      %7255 = vmatprep.subr.mxu0 0.0
      %7256 = vmatpush2.msra.mxu0 0.0
      %7257 = vmatprep.subr.mxu0 0.0
      %7258 = vmatpush2.msra.mxu0 0.0
      %7259 = vmatprep.subr.mxu0 0.0
      %7260 = vmatpush2.msra.mxu0 0.0
      %7261 = vmatprep.subr.mxu0 0.0
      %7262 = vmatpush2.msra.mxu0 0.0
      %7263 = vmatprep.subr.mxu0 0.0
      %7264 = vmatpush2.msra.mxu0 0.0
      %7265 = vmatprep.subr.mxu0 0.0
      %7266 = vmatpush2.msra.mxu0 0.0
      %7267 = vmatprep.subr.mxu0 0.0
      %7268 = vmatpush2.msra.mxu0 0.0
      %7269 = vmatprep.subr.mxu0 0.0
      %7270 = vmatpush2.msra.mxu0 0.0
      %7271 = vmatprep.subr.mxu0 0.0
      %7272 = vmatpush2.msra.mxu0 0.0
      %7273 = vmatprep.subr.mxu0 0.0
      %7274 = vmatpush2.msra.mxu0 0.0
      %7275 = vmatprep.mubr.f32.mxu0 0.0
      %7276 = vmatmul.mubr.f32.gmra.mxu0 %v7138
      %v7277 = vpop.f32.mrf.mxu0
      %v7278 = vadd.f32 %v7135, %v7277
      %v7279 = vpop.f32.mrf.mxu0
      %7280 = vdwg.mxu0
      %v7283 = vcombine.low %v7207, %v7209
      %7285 = vst [vmem:[%s305] sm:$0xff] %v7283
      %vm7286 = vcmask 257024
      %7287 = vst.msk [vmem:[%s305 + $0x8] sm:$0xf] %vm7286, %v7278
      %p7288 = scmp.lt.s32.totalorder %s19, 1
      %s7289 = scalar_select %p7288, %s19, 1
      %s7290 = smul.addr %s7289, 3
      %s7291 = smul.addr %s7290, 4
      %s7292 = scalar_lea.vmem %s8, %s7291
      // Predicated region
      $region60: #{convlstm_forward.1} parent=51 // pred_check
        %p7293 = pneg %p210
      $region61: #{convlstm_forward.1} parent=51 // pred_check_branch
        %7295 = sbr.rel (%p7293) target = $region63
      $region62: #{convlstm_forward.1} parent=51 // pred_region
        _
      $region63: #{convlstm_forward.1} parent=51 // pred_fallthru
        _
    $region52: #{convlstm_forward.1} parent=5 // pred_fallthru
      _
    %p7296 = scmp.le.s32.totalorder 2, %s14
    // Predicated region
    $region64: #{convlstm_forward.1} parent=5 // pred_check
      %p7297 = pneg %p7296
    $region65: #{convlstm_forward.1} parent=5 // pred_check_branch
      %7299 = sbr.rel (%p7297) target = $region67
    $region66: #{convlstm_forward.1} parent=5 // pred_region
      %s7300 = ssub.s32 %s14, 2
      // Predicated region
      $region68: #{convlstm_forward.1} parent=66 // pred_check
        %p7301 = pneg %p216
      $region69: #{convlstm_forward.1} parent=66 // pred_check_branch
        %7303 = sbr.rel (%p7301) target = $region71
      $region70: #{convlstm_forward.1} parent=66 // pred_region
        %p7304 = scmp.lt.s32.totalorder %s20, 1
        %s7305 = scalar_select %p7304, %s20, 1
        %s7306 = smul.addr %s7305, 3
        %s7307 = smul.addr %s7306, 4
        %s7308 = scalar_lea.vmem %s8, %s7307
      $region71: #{convlstm_forward.1} parent=66 // pred_fallthru
        _
    $region67: #{convlstm_forward.1} parent=5 // pred_fallthru
      _
  $region6: #{convlstm_forward.1} parent=0 // loop_footer
    %s18 = sadd.s32 1, %s14
  $region7: #{convlstm_forward.1} parent=0 // loop_footer_branch
    %13 = sbr.rel target = $region3
  $region8: #{convlstm_forward.1} parent=0 // loop_exit
    _

</llo_original>
